<compile_context>
chip_gen: v7x
topology: tpu7x:2x2x1
jax: 0.10.0
libtpu: 0.0.40
codegen_flags: <defaults>
</compile_context>

<pallas_src>
import jax
import jax.numpy as jnp
from jax.experimental import pallas as pl
from jax.experimental.pallas import tpu as pltpu

EPS = 1e-10

# ----------------------------- hyper-params ---------------------------------
B = 2            # batch
T = 8            # question length (tokens)
VOCAB = 100      # no_words
N_ANS = 10       # no_answers
EMB = 16         # nn.Embedding size
GLOVE = 16       # glove embedding size
LSTM_IN = EMB + GLOVE
LSTM_H = 32      # lstm_size == no_hidden_LSTM
MLP_D = 32       # no_question_mlp == no_image_mlp == no_hidden_final_mlp
IMG_C = 3
IMG_HW = 16
PATCH = 8
NPATCH = (IMG_HW // PATCH) ** 2          # 4 spatial positions
PATCH_DIM = IMG_C * PATCH * PATCH        # 192
CFEAT = 2048                             # resnet feature channels (img_mlp in-dim)
ATTN_D = 32                              # attention hidden size

assert MLP_D == LSTM_H, "merged cond/img weight assumes no_image_mlp == lstm hidden"


def _vmem():
    return pl.BlockSpec(memory_space=pltpu.MemorySpace.VMEM)


def _any():
    return pl.BlockSpec(memory_space=pl.ANY)


# ------------------------------ fused kernel ---------------------------------

def _net_kernel(emb_ref, patch_ref,
                wx_ref, wh_ref, lb_ref,
                pw_hbm, pb_ref,
                wf_hbm, wq_ref, v_ref,
                ci_hbm, cib_ref,
                qw_ref, qb_ref,
                fw_ref, fb_ref,
                out_ref,
                pw_vmem, wf_vmem, ci_vmem, dma_sem):
    f32 = jnp.float32
    bf16 = jnp.bfloat16
    H = LSTM_H

    # --- start the CFEAT-weight DMAs immediately; they overlap LSTM pass 1.
    cp_pw = pltpu.make_async_copy(pw_hbm, pw_vmem, dma_sem.at[0])
    cp_wf = pltpu.make_async_copy(wf_hbm, wf_vmem, dma_sem.at[1])
    cp_ci = pltpu.make_async_copy(ci_hbm, ci_vmem, dma_sem.at[2])
    cp_pw.start()
    cp_wf.start()
    cp_ci.start()

    # --- question input projection: hoisted out of the recurrence, computed
    # once (bf16 MXU, f32 accumulate) and reused by BOTH LSTM passes.
    # Inputs arrive time-major [T*B, EMB+GLOVE] (torch.cat folded in wrapper).
    x_proj = (jnp.dot(emb_ref[...], wx_ref[...], preferred_element_type=f32)
              + lb_ref[...])                                   # [T*B, 4H] f32
    x_proj = x_proj.reshape(T, B, 4 * H)                       # leading-dim pick per step

    wh = wh_ref[...]                                           # bf16 [H, 4H]

    # Hoisted per-lane gate vectors: sigmoid(x)=0.5*(tanh(x/2)+1) on i/f/o
    # lanes, plain tanh on the g lanes -> ONE tanh per step on [B, 4H].
    lane = jax.lax.broadcasted_iota(jnp.int32, (B, 4 * H), 1)
    is_g = (lane >= 2 * H) & (lane < 3 * H)
    gscale = jnp.where(is_g, 1.0, 0.5).astype(f32)             # pre & post scale
    goff = jnp.where(is_g, 0.0, 0.5).astype(f32)               # post offset

    def lstm_last_hidden(h0):
        # TODO(synk): VariableLengthLSTM is undefined in the reference;
        # modeled as a single-layer LSTM returning the last hidden state.
        h = h0
        c = jnp.zeros((B, H), f32)
        for t in range(T):                                     # static unroll, T=8
            gates = (x_proj[t]
                     + jnp.dot(h.astype(bf16), wh,
                               preferred_element_type=f32))    # [B, 4H] f32
            act = jnp.tanh(gates * gscale) * gscale + goff     # sigmoid/tanh fused
            i_g = act[:, 0 * H:1 * H]
            f_g = act[:, 1 * H:2 * H]
            g_g = act[:, 2 * H:3 * H]
            o_g = act[:, 3 * H:4 * H]
            c = f_g * c + i_g * g_g
            h = o_g * jnp.tanh(c)
        return h

    # --- LSTM pass 1 (unconditioned) ---
    lstm_emb = lstm_last_hidden(jnp.zeros((B, H), f32))        # [B, H] f32

    # --- image features (stand-in for CBN-ResNet) + channel L2-norm epilogue
    # TODO(synk): create_resnet / CBN backbone not reproducible (undefined
    # deps); stand-in is a patch-embed linear to 2048 channels, ignoring the
    # lstm_emb conditioning of CBN.
    cp_pw.wait()                                               # patch_w needed now
    feat = (jnp.dot(patch_ref[...], pw_vmem[...],
                    preferred_element_type=f32) + pb_ref[...])  # [B*N, CFEAT] f32
    feat = jnp.maximum(feat, 0.0)
    # reference:  feature / sqrt(sum_c feature^2 + EPS)   (rsqrt -> EUP)
    feat = feat * jax.lax.rsqrt(
        jnp.sum(feat * feat, axis=-1, keepdims=True) + EPS)

    # --- attention over spatial positions (batched, no per-sample loop) ---
    cp_wf.wait()                                               # attn_wf needed now
    hf = jnp.dot(feat.astype(bf16), wf_vmem[...],
                 preferred_element_type=f32)                    # [B*N, D]
    hq = jnp.dot(lstm_emb, wq_ref[...], preferred_element_type=f32)  # [B, D]
    h_sum = jnp.tanh(hf.reshape(B, NPATCH, ATTN_D) + hq[:, None, :])
    # score: VPU multiply + lane reduce instead of an N=1 MXU matvec.
    v_row = v_ref[...].reshape(1, 1, ATTN_D)
    s = jnp.sum(h_sum * v_row, axis=-1, keepdims=True)          # [B, N, 1]
    s = s - jnp.max(s, axis=1, keepdims=True)
    p = jnp.exp(s)
    p = p * pl.reciprocal(jnp.sum(p, axis=1, keepdims=True), approx=True)
    attn_feature = jnp.sum(p * feat.reshape(B, NPATCH, CFEAT), axis=1)  # [B, CFEAT]
    attn_bf16 = attn_feature.astype(bf16)                       # cast exactly once

    # --- merged cond / img_mlp matmul: [B, CFEAT] @ [CFEAT, 2H], one tanh ---
    cp_ci.wait()                                               # cond_img_w needed now
    ci = jnp.tanh(jnp.dot(attn_bf16, ci_vmem[...],
                          preferred_element_type=f32) + cib_ref[...])   # [B, 2H]
    h0_2 = ci[:, :H]                                           # conditioning of pass 2
    img_e = ci[:, H:2 * H]                                      # img_mlp output

    # --- LSTM pass 2, conditioned on the attended image feature ---
    # TODO(synk): the attn_feature conditioning of VariableLengthLSTM is
    # undefined; modeled as a learned projection to the initial hidden state
    # (cell state starts at zero).
    lstm_emb2 = lstm_last_hidden(h0_2)                          # [B, H]

    # --- MLP heads, multiplicative fusion, final linear + log_softmax ---
    que_e = jnp.tanh(jnp.dot(lstm_emb2, qw_ref[...],
                             preferred_element_type=f32) + qb_ref[...])
    full = que_e * img_e                        # nn.Dropout is identity in eval
    logits = (jnp.dot(full, fw_ref[...], preferred_element_type=f32)
              + fb_ref[...])                                    # [B, N_ANS]
    m = jnp.max(logits, axis=-1, keepdims=True)
    lse = jnp.log(jnp.sum(jnp.exp(logits - m), axis=-1, keepdims=True))
    out_ref[...] = logits - m - lse                             # log_softmax


def _net_pallas(params, emb2d, patches):
    args = (emb2d, patches,
            params["wx"], params["wh"], params["lstm_b"],
            params["patch_w"], params["patch_b"],
            params["attn_wf"], params["attn_wq"], params["attn_v"],
            params["cond_img_w"], params["cond_img_b"],
            params["que_w"], params["que_b"],
            params["final_w"], params["final_b"])
    in_specs = [_vmem()] * len(args)
    in_specs[5] = _any()    # patch_w     -> HBM, manual overlapped DMA
    in_specs[7] = _any()    # attn_wf     -> HBM, manual overlapped DMA
    in_specs[10] = _any()   # cond_img_w  -> HBM, manual overlapped DMA
    return pl.pallas_call(
        _net_kernel,
        out_shape=jax.ShapeDtypeStruct((B, N_ANS), jnp.float32),
        in_specs=in_specs,
        out_specs=_vmem(),
        scratch_shapes=[
            pltpu.VMEM((PATCH_DIM, CFEAT), jnp.bfloat16),
            pltpu.VMEM((CFEAT, ATTN_D), jnp.bfloat16),
            pltpu.VMEM((CFEAT, 2 * LSTM_H), jnp.bfloat16),
            pltpu.SemaphoreType.DMA((3,)),
        ],
    )(*args)


# ------------------------------ glue (plain JAX) ------------------------------

def image_to_patches(image):
    # image: [B, C, H, W] NCHW  ->  [B*NPATCH, C*PATCH*PATCH]
    b, c, h, w = image.shape
    gh, gw = h // PATCH, w // PATCH
    x = image.reshape(b, c, gh, PATCH, gw, PATCH)
    x = jnp.transpose(x, (0, 2, 4, 1, 3, 5))           # [B, gh, gw, C, P, P]
    return x.reshape(b * gh * gw, c * PATCH * PATCH)


def init_params():
    key = jax.random.PRNGKey(42)

    def nrm(k, shape, scale, dtype=jnp.float32):
        return (scale * jax.random.normal(jax.random.fold_in(key, k), shape)
                ).astype(dtype)

    bf16 = jnp.bfloat16
    p = {}
    p["embedding"] = nrm(0, (VOCAB, EMB), 0.1)
    # VariableLengthLSTM (single layer); wx fused over [que_emb | glove_emb]
    # so torch.cat is a single XLA concat + one matmul.  Recurrence weights
    # stored bf16 (f32 accumulation in-kernel).
    p["wx"] = nrm(1, (LSTM_IN, 4 * LSTM_H), 0.1, bf16)
    p["wh"] = nrm(2, (LSTM_H, 4 * LSTM_H), 0.1, bf16)
    p["lstm_b"] = jnp.zeros((1, 4 * LSTM_H), jnp.float32)
    # Stand-in patch-embed "conv" producing a 2048-channel feature map.
    # Large (CFEAT-sized) weights stored bf16 -> bf16 MXU inputs, f32 accum.
    p["patch_w"] = nrm(3, (PATCH_DIM, CFEAT), 0.05, bf16)
    p["patch_b"] = jnp.zeros((1, CFEAT), jnp.float32)
    # Attention module (additive tanh attention); score vector used as a
    # VPU broadcast row, stored [1, ATTN_D].
    p["attn_wf"] = nrm(4, (CFEAT, ATTN_D), 0.05, bf16)
    p["attn_wq"] = nrm(5, (LSTM_H, ATTN_D), 0.1)
    p["attn_v"] = nrm(6, (1, ATTN_D), 0.1)
    # Merged [cond_w | img_w] (both consume the same K=2048 attn_feature LHS).
    p["cond_img_w"] = jnp.concatenate(
        [nrm(7, (CFEAT, LSTM_H), 0.05, bf16),
         nrm(9, (CFEAT, MLP_D), 0.05, bf16)], axis=1)            # [CFEAT, 2H]
    p["cond_img_b"] = jnp.zeros((1, LSTM_H + MLP_D), jnp.float32)
    # que_mlp / final_mlp
    p["que_w"] = nrm(8, (LSTM_H, MLP_D), 0.1)
    p["que_b"] = jnp.zeros((1, MLP_D), jnp.float32)
    p["final_w"] = nrm(10, (MLP_D, N_ANS), 0.1)
    p["final_b"] = jnp.zeros((1, N_ANS), jnp.float32)
    return p


@jax.jit
def net_forward(params, image, tokens, glove_emb):
    # Token-embedding gather, torch.cat and patch layout stay in XLA (pure
    # gather / concat / transpose); everything else is one fused pallas_call.
    # TODO(synk): tokens could be moved in-kernel via scalar prefetch + SMEM
    # gather, but the XLA gather is a single tiny op — kept outside.
    que_emb = params["embedding"][tokens]                       # [B, T, EMB]
    emb = jnp.concatenate([que_emb, glove_emb], axis=-1)        # [B, T, EMB+GLOVE]
    # time-major, flattened, bf16 (MXU operand only; kernel math stays f32).
    emb2d = jnp.transpose(emb, (1, 0, 2)).reshape(T * B, LSTM_IN).astype(jnp.bfloat16)
    patches = image_to_patches(image).astype(jnp.bfloat16)      # [B*N, PATCH_DIM]
    return _net_pallas(params, emb2d, patches)                  # [B, N_ANS]


if __name__ == "__main__":
    key = jax.random.PRNGKey(0)
    k_img, k_tok, k_glove = jax.random.split(key, 3)
    image = jax.random.normal(k_img, (B, IMG_C, IMG_HW, IMG_HW), jnp.float32)
    tokens = jax.random.randint(k_tok, (B, T), 0, VOCAB)
    glove_emb = jax.random.normal(k_glove, (B, T, GLOVE), jnp.float32)

    params = init_params()
    out = net_forward(params, image, tokens, glove_emb)
    out = jax.block_until_ready(out)

    assert out.shape == (B, N_ANS)
    # log_softmax rows must (approximately) exponentiate-sum to 1
    assert jnp.allclose(jnp.sum(jnp.exp(out), axis=1), 1.0, atol=1e-4)
    print("KERNEL_OK")
</pallas_src>

<mosaic_0001>
module attributes {stable_mosaic.version = 11 : i64} {
  func.func @_net_kernel(%arg0: memref<16x32xbf16, #tpu.memory_space<vmem>>, %arg1: memref<8x192xbf16, #tpu.memory_space<vmem>>, %arg2: memref<32x128xbf16, #tpu.memory_space<vmem>>, %arg3: memref<32x128xbf16, #tpu.memory_space<vmem>>, %arg4: memref<1x128xf32, #tpu.memory_space<vmem>>, %arg5: memref<192x2048xbf16, #tpu.memory_space<any>>, %arg6: memref<1x2048xf32, #tpu.memory_space<vmem>>, %arg7: memref<2048x32xbf16, #tpu.memory_space<any>>, %arg8: memref<32x32xf32, #tpu.memory_space<vmem>>, %arg9: memref<1x32xf32, #tpu.memory_space<vmem>>, %arg10: memref<2048x64xbf16, #tpu.memory_space<any>>, %arg11: memref<1x64xf32, #tpu.memory_space<vmem>>, %arg12: memref<32x32xf32, #tpu.memory_space<vmem>>, %arg13: memref<1x32xf32, #tpu.memory_space<vmem>>, %arg14: memref<32x10xf32, #tpu.memory_space<vmem>>, %arg15: memref<1x10xf32, #tpu.memory_space<vmem>>, %arg16: memref<2x10xf32, #tpu.memory_space<vmem>>, %arg17: memref<192x2048xbf16, #tpu.memory_space<vmem>>, %arg18: memref<2048x32xbf16, #tpu.memory_space<vmem>>, %arg19: memref<2048x64xbf16, #tpu.memory_space<vmem>>, %arg20: memref<3x!tpu.dma_semaphore, #tpu.memory_space<semaphore_mem>>) attributes {dimension_semantics = [], scalar_prefetch = 0 : i64, scratch_operands = 4 : i64, tpu.core_type = #tpu.core_type<tc>} {
    %c0_i32 = arith.constant 0 : i32
    %0 = tpu.memref_slice %arg20[%c0_i32] : memref<3x!tpu.dma_semaphore, #tpu.memory_space<semaphore_mem>> -> memref<1x!tpu.dma_semaphore, #tpu.memory_space<semaphore_mem>>
    %1 = tpu.memref_squeeze %0 : memref<1x!tpu.dma_semaphore, #tpu.memory_space<semaphore_mem>> -> memref<!tpu.dma_semaphore, #tpu.memory_space<semaphore_mem>>
    tpu.enqueue_dma source(%arg5 : memref<192x2048xbf16, #tpu.memory_space<any>>) target(%arg17 : memref<192x2048xbf16, #tpu.memory_space<vmem>>) target_semaphore(%1 : memref<!tpu.dma_semaphore, #tpu.memory_space<semaphore_mem>>)
    %c1_i32 = arith.constant 1 : i32
    %2 = tpu.memref_slice %arg20[%c1_i32] : memref<3x!tpu.dma_semaphore, #tpu.memory_space<semaphore_mem>> -> memref<1x!tpu.dma_semaphore, #tpu.memory_space<semaphore_mem>>
    %3 = tpu.memref_squeeze %2 : memref<1x!tpu.dma_semaphore, #tpu.memory_space<semaphore_mem>> -> memref<!tpu.dma_semaphore, #tpu.memory_space<semaphore_mem>>
    tpu.enqueue_dma source(%arg7 : memref<2048x32xbf16, #tpu.memory_space<any>>) target(%arg18 : memref<2048x32xbf16, #tpu.memory_space<vmem>>) target_semaphore(%3 : memref<!tpu.dma_semaphore, #tpu.memory_space<semaphore_mem>>)
    %c2_i32 = arith.constant 2 : i32
    %4 = tpu.memref_slice %arg20[%c2_i32] : memref<3x!tpu.dma_semaphore, #tpu.memory_space<semaphore_mem>> -> memref<1x!tpu.dma_semaphore, #tpu.memory_space<semaphore_mem>>
    %5 = tpu.memref_squeeze %4 : memref<1x!tpu.dma_semaphore, #tpu.memory_space<semaphore_mem>> -> memref<!tpu.dma_semaphore, #tpu.memory_space<semaphore_mem>>
    tpu.enqueue_dma source(%arg10 : memref<2048x64xbf16, #tpu.memory_space<any>>) target(%arg19 : memref<2048x64xbf16, #tpu.memory_space<vmem>>) target_semaphore(%5 : memref<!tpu.dma_semaphore, #tpu.memory_space<semaphore_mem>>)
    %c0 = arith.constant 0 : index
    %c0_0 = arith.constant 0 : index
    %6 = vector.load %arg0[%c0, %c0_0] : memref<16x32xbf16, #tpu.memory_space<vmem>>, vector<16x32xbf16>
    %c0_1 = arith.constant 0 : index
    %c0_2 = arith.constant 0 : index
    %7 = vector.load %arg2[%c0_1, %c0_2] : memref<32x128xbf16, #tpu.memory_space<vmem>>, vector<32x128xbf16>
    %cst = arith.constant dense<0.000000e+00> : vector<16x128xf32>
    %8 = tpu.matmul %6, %7, %cst {dimension_numbers = #tpu.dot_dimension_numbers<[1], [0], [0], [1], [0, 0, 1, 1], [], []>} : vector<16x32xbf16>, vector<32x128xbf16>, vector<16x128xf32> -> vector<16x128xf32>
    %c0_3 = arith.constant 0 : index
    %c0_4 = arith.constant 0 : index
    %9 = vector.load %arg4[%c0_3, %c0_4] : memref<1x128xf32, #tpu.memory_space<vmem>>, vector<1x128xf32>
    %10 = vector.broadcast %9 : vector<1x128xf32> to vector<16x128xf32>
    %11 = arith.addf %8, %10 : vector<16x128xf32>
    %12 = vector.shape_cast %11 : vector<16x128xf32> to vector<8x2x128xf32>
    %c0_5 = arith.constant 0 : index
    %c0_6 = arith.constant 0 : index
    %13 = vector.load %arg3[%c0_5, %c0_6] : memref<32x128xbf16, #tpu.memory_space<vmem>>, vector<32x128xbf16>
    %14 = tpu.iota {dimensions = array<i32: 1>} : vector<2x128xi32>
    %c64_i32 = arith.constant 64 : i32
    %15 = vector.broadcast %c64_i32 : i32 to vector<2x128xi32>
    %16 = arith.cmpi sge, %14, %15 : vector<2x128xi32>
    %c96_i32 = arith.constant 96 : i32
    %17 = vector.broadcast %c96_i32 : i32 to vector<2x128xi32>
    %18 = arith.cmpi slt, %14, %17 : vector<2x128xi32>
    %19 = arith.andi %16, %18 : vector<2x128xi1>
    %cst_7 = arith.constant 1.000000e+00 : f32
    %cst_8 = arith.constant 5.000000e-01 : f32
    %20 = vector.broadcast %cst_7 : f32 to vector<2x128xf32>
    %21 = vector.broadcast %cst_8 : f32 to vector<2x128xf32>
    %22 = arith.select %19, %20, %21 : vector<2x128xi1>, vector<2x128xf32>
    %cst_9 = arith.constant 0.000000e+00 : f32
    %cst_10 = arith.constant 5.000000e-01 : f32
    %23 = vector.broadcast %cst_9 : f32 to vector<2x128xf32>
    %24 = vector.broadcast %cst_10 : f32 to vector<2x128xf32>
    %25 = arith.select %19, %23, %24 : vector<2x128xi1>, vector<2x128xf32>
    %cst_11 = arith.constant 0.000000e+00 : f32
    %26 = vector.broadcast %cst_11 : f32 to vector<2x32xf32>
    %cst_12 = arith.constant 0.000000e+00 : f32
    %27 = vector.broadcast %cst_12 : f32 to vector<2x32xf32>
    %28 = vector.extract_strided_slice %12 {offsets = [0, 0, 0], sizes = [1, 2, 128], strides = [1, 1, 1]} : vector<8x2x128xf32> to vector<1x2x128xf32>
    %29 = vector.shape_cast %28 : vector<1x2x128xf32> to vector<2x128xf32>
    %30 = arith.truncf %26 : vector<2x32xf32> to vector<2x32xbf16>
    %cst_13 = arith.constant dense<0.000000e+00> : vector<2x128xf32>
    %31 = tpu.matmul %30, %13, %cst_13 {dimension_numbers = #tpu.dot_dimension_numbers<[1], [0], [0], [1], [0, 0, 1, 1], [], []>} : vector<2x32xbf16>, vector<32x128xbf16>, vector<2x128xf32> -> vector<2x128xf32>
    %32 = arith.addf %29, %31 : vector<2x128xf32>
    %33 = arith.mulf %32, %22 : vector<2x128xf32>
    %34 = math.tanh %33 : vector<2x128xf32>
    %35 = arith.mulf %34, %22 : vector<2x128xf32>
    %36 = arith.addf %35, %25 : vector<2x128xf32>
    %37 = vector.extract_strided_slice %36 {offsets = [0, 0], sizes = [2, 32], strides = [1, 1]} : vector<2x128xf32> to vector<2x32xf32>
    %38 = vector.extract_strided_slice %36 {offsets = [0, 32], sizes = [2, 32], strides = [1, 1]} : vector<2x128xf32> to vector<2x32xf32>
    %39 = vector.extract_strided_slice %36 {offsets = [0, 64], sizes = [2, 32], strides = [1, 1]} : vector<2x128xf32> to vector<2x32xf32>
    %40 = vector.extract_strided_slice %36 {offsets = [0, 96], sizes = [2, 32], strides = [1, 1]} : vector<2x128xf32> to vector<2x32xf32>
    %41 = arith.mulf %38, %27 : vector<2x32xf32>
    %42 = arith.mulf %37, %39 : vector<2x32xf32>
    %43 = arith.addf %41, %42 : vector<2x32xf32>
    %44 = math.tanh %43 : vector<2x32xf32>
    %45 = arith.mulf %40, %44 : vector<2x32xf32>
    %46 = vector.extract_strided_slice %12 {offsets = [1, 0, 0], sizes = [1, 2, 128], strides = [1, 1, 1]} : vector<8x2x128xf32> to vector<1x2x128xf32>
    %47 = vector.shape_cast %46 : vector<1x2x128xf32> to vector<2x128xf32>
    %48 = arith.truncf %45 : vector<2x32xf32> to vector<2x32xbf16>
    %cst_14 = arith.constant dense<0.000000e+00> : vector<2x128xf32>
    %49 = tpu.matmul %48, %13, %cst_14 {dimension_numbers = #tpu.dot_dimension_numbers<[1], [0], [0], [1], [0, 0, 1, 1], [], []>} : vector<2x32xbf16>, vector<32x128xbf16>, vector<2x128xf32> -> vector<2x128xf32>
    %50 = arith.addf %47, %49 : vector<2x128xf32>
    %51 = arith.mulf %50, %22 : vector<2x128xf32>
    %52 = math.tanh %51 : vector<2x128xf32>
    %53 = arith.mulf %52, %22 : vector<2x128xf32>
    %54 = arith.addf %53, %25 : vector<2x128xf32>
    %55 = vector.extract_strided_slice %54 {offsets = [0, 0], sizes = [2, 32], strides = [1, 1]} : vector<2x128xf32> to vector<2x32xf32>
    %56 = vector.extract_strided_slice %54 {offsets = [0, 32], sizes = [2, 32], strides = [1, 1]} : vector<2x128xf32> to vector<2x32xf32>
    %57 = vector.extract_strided_slice %54 {offsets = [0, 64], sizes = [2, 32], strides = [1, 1]} : vector<2x128xf32> to vector<2x32xf32>
    %58 = vector.extract_strided_slice %54 {offsets = [0, 96], sizes = [2, 32], strides = [1, 1]} : vector<2x128xf32> to vector<2x32xf32>
    %59 = arith.mulf %56, %43 : vector<2x32xf32>
    %60 = arith.mulf %55, %57 : vector<2x32xf32>
    %61 = arith.addf %59, %60 : vector<2x32xf32>
    %62 = math.tanh %61 : vector<2x32xf32>
    %63 = arith.mulf %58, %62 : vector<2x32xf32>
    %64 = vector.extract_strided_slice %12 {offsets = [2, 0, 0], sizes = [1, 2, 128], strides = [1, 1, 1]} : vector<8x2x128xf32> to vector<1x2x128xf32>
    %65 = vector.shape_cast %64 : vector<1x2x128xf32> to vector<2x128xf32>
    %66 = arith.truncf %63 : vector<2x32xf32> to vector<2x32xbf16>
    %cst_15 = arith.constant dense<0.000000e+00> : vector<2x128xf32>
    %67 = tpu.matmul %66, %13, %cst_15 {dimension_numbers = #tpu.dot_dimension_numbers<[1], [0], [0], [1], [0, 0, 1, 1], [], []>} : vector<2x32xbf16>, vector<32x128xbf16>, vector<2x128xf32> -> vector<2x128xf32>
    %68 = arith.addf %65, %67 : vector<2x128xf32>
    %69 = arith.mulf %68, %22 : vector<2x128xf32>
    %70 = math.tanh %69 : vector<2x128xf32>
    %71 = arith.mulf %70, %22 : vector<2x128xf32>
    %72 = arith.addf %71, %25 : vector<2x128xf32>
    %73 = vector.extract_strided_slice %72 {offsets = [0, 0], sizes = [2, 32], strides = [1, 1]} : vector<2x128xf32> to vector<2x32xf32>
    %74 = vector.extract_strided_slice %72 {offsets = [0, 32], sizes = [2, 32], strides = [1, 1]} : vector<2x128xf32> to vector<2x32xf32>
    %75 = vector.extract_strided_slice %72 {offsets = [0, 64], sizes = [2, 32], strides = [1, 1]} : vector<2x128xf32> to vector<2x32xf32>
    %76 = vector.extract_strided_slice %72 {offsets = [0, 96], sizes = [2, 32], strides = [1, 1]} : vector<2x128xf32> to vector<2x32xf32>
    %77 = arith.mulf %74, %61 : vector<2x32xf32>
    %78 = arith.mulf %73, %75 : vector<2x32xf32>
    %79 = arith.addf %77, %78 : vector<2x32xf32>
    %80 = math.tanh %79 : vector<2x32xf32>
    %81 = arith.mulf %76, %80 : vector<2x32xf32>
    %82 = vector.extract_strided_slice %12 {offsets = [3, 0, 0], sizes = [1, 2, 128], strides = [1, 1, 1]} : vector<8x2x128xf32> to vector<1x2x128xf32>
    %83 = vector.shape_cast %82 : vector<1x2x128xf32> to vector<2x128xf32>
    %84 = arith.truncf %81 : vector<2x32xf32> to vector<2x32xbf16>
    %cst_16 = arith.constant dense<0.000000e+00> : vector<2x128xf32>
    %85 = tpu.matmul %84, %13, %cst_16 {dimension_numbers = #tpu.dot_dimension_numbers<[1], [0], [0], [1], [0, 0, 1, 1], [], []>} : vector<2x32xbf16>, vector<32x128xbf16>, vector<2x128xf32> -> vector<2x128xf32>
    %86 = arith.addf %83, %85 : vector<2x128xf32>
    %87 = arith.mulf %86, %22 : vector<2x128xf32>
    %88 = math.tanh %87 : vector<2x128xf32>
    %89 = arith.mulf %88, %22 : vector<2x128xf32>
    %90 = arith.addf %89, %25 : vector<2x128xf32>
    %91 = vector.extract_strided_slice %90 {offsets = [0, 0], sizes = [2, 32], strides = [1, 1]} : vector<2x128xf32> to vector<2x32xf32>
    %92 = vector.extract_strided_slice %90 {offsets = [0, 32], sizes = [2, 32], strides = [1, 1]} : vector<2x128xf32> to vector<2x32xf32>
    %93 = vector.extract_strided_slice %90 {offsets = [0, 64], sizes = [2, 32], strides = [1, 1]} : vector<2x128xf32> to vector<2x32xf32>
    %94 = vector.extract_strided_slice %90 {offsets = [0, 96], sizes = [2, 32], strides = [1, 1]} : vector<2x128xf32> to vector<2x32xf32>
    %95 = arith.mulf %92, %79 : vector<2x32xf32>
    %96 = arith.mulf %91, %93 : vector<2x32xf32>
    %97 = arith.addf %95, %96 : vector<2x32xf32>
    %98 = math.tanh %97 : vector<2x32xf32>
    %99 = arith.mulf %94, %98 : vector<2x32xf32>
    %100 = vector.extract_strided_slice %12 {offsets = [4, 0, 0], sizes = [1, 2, 128], strides = [1, 1, 1]} : vector<8x2x128xf32> to vector<1x2x128xf32>
    %101 = vector.shape_cast %100 : vector<1x2x128xf32> to vector<2x128xf32>
    %102 = arith.truncf %99 : vector<2x32xf32> to vector<2x32xbf16>
    %cst_17 = arith.constant dense<0.000000e+00> : vector<2x128xf32>
    %103 = tpu.matmul %102, %13, %cst_17 {dimension_numbers = #tpu.dot_dimension_numbers<[1], [0], [0], [1], [0, 0, 1, 1], [], []>} : vector<2x32xbf16>, vector<32x128xbf16>, vector<2x128xf32> -> vector<2x128xf32>
    %104 = arith.addf %101, %103 : vector<2x128xf32>
    %105 = arith.mulf %104, %22 : vector<2x128xf32>
    %106 = math.tanh %105 : vector<2x128xf32>
    %107 = arith.mulf %106, %22 : vector<2x128xf32>
    %108 = arith.addf %107, %25 : vector<2x128xf32>
    %109 = vector.extract_strided_slice %108 {offsets = [0, 0], sizes = [2, 32], strides = [1, 1]} : vector<2x128xf32> to vector<2x32xf32>
    %110 = vector.extract_strided_slice %108 {offsets = [0, 32], sizes = [2, 32], strides = [1, 1]} : vector<2x128xf32> to vector<2x32xf32>
    %111 = vector.extract_strided_slice %108 {offsets = [0, 64], sizes = [2, 32], strides = [1, 1]} : vector<2x128xf32> to vector<2x32xf32>
    %112 = vector.extract_strided_slice %108 {offsets = [0, 96], sizes = [2, 32], strides = [1, 1]} : vector<2x128xf32> to vector<2x32xf32>
    %113 = arith.mulf %110, %97 : vector<2x32xf32>
    %114 = arith.mulf %109, %111 : vector<2x32xf32>
    %115 = arith.addf %113, %114 : vector<2x32xf32>
    %116 = math.tanh %115 : vector<2x32xf32>
    %117 = arith.mulf %112, %116 : vector<2x32xf32>
    %118 = vector.extract_strided_slice %12 {offsets = [5, 0, 0], sizes = [1, 2, 128], strides = [1, 1, 1]} : vector<8x2x128xf32> to vector<1x2x128xf32>
    %119 = vector.shape_cast %118 : vector<1x2x128xf32> to vector<2x128xf32>
    %120 = arith.truncf %117 : vector<2x32xf32> to vector<2x32xbf16>
    %cst_18 = arith.constant dense<0.000000e+00> : vector<2x128xf32>
    %121 = tpu.matmul %120, %13, %cst_18 {dimension_numbers = #tpu.dot_dimension_numbers<[1], [0], [0], [1], [0, 0, 1, 1], [], []>} : vector<2x32xbf16>, vector<32x128xbf16>, vector<2x128xf32> -> vector<2x128xf32>
    %122 = arith.addf %119, %121 : vector<2x128xf32>
    %123 = arith.mulf %122, %22 : vector<2x128xf32>
    %124 = math.tanh %123 : vector<2x128xf32>
    %125 = arith.mulf %124, %22 : vector<2x128xf32>
    %126 = arith.addf %125, %25 : vector<2x128xf32>
    %127 = vector.extract_strided_slice %126 {offsets = [0, 0], sizes = [2, 32], strides = [1, 1]} : vector<2x128xf32> to vector<2x32xf32>
    %128 = vector.extract_strided_slice %126 {offsets = [0, 32], sizes = [2, 32], strides = [1, 1]} : vector<2x128xf32> to vector<2x32xf32>
    %129 = vector.extract_strided_slice %126 {offsets = [0, 64], sizes = [2, 32], strides = [1, 1]} : vector<2x128xf32> to vector<2x32xf32>
    %130 = vector.extract_strided_slice %126 {offsets = [0, 96], sizes = [2, 32], strides = [1, 1]} : vector<2x128xf32> to vector<2x32xf32>
    %131 = arith.mulf %128, %115 : vector<2x32xf32>
    %132 = arith.mulf %127, %129 : vector<2x32xf32>
    %133 = arith.addf %131, %132 : vector<2x32xf32>
    %134 = math.tanh %133 : vector<2x32xf32>
    %135 = arith.mulf %130, %134 : vector<2x32xf32>
    %136 = vector.extract_strided_slice %12 {offsets = [6, 0, 0], sizes = [1, 2, 128], strides = [1, 1, 1]} : vector<8x2x128xf32> to vector<1x2x128xf32>
    %137 = vector.shape_cast %136 : vector<1x2x128xf32> to vector<2x128xf32>
    %138 = arith.truncf %135 : vector<2x32xf32> to vector<2x32xbf16>
    %cst_19 = arith.constant dense<0.000000e+00> : vector<2x128xf32>
    %139 = tpu.matmul %138, %13, %cst_19 {dimension_numbers = #tpu.dot_dimension_numbers<[1], [0], [0], [1], [0, 0, 1, 1], [], []>} : vector<2x32xbf16>, vector<32x128xbf16>, vector<2x128xf32> -> vector<2x128xf32>
    %140 = arith.addf %137, %139 : vector<2x128xf32>
    %141 = arith.mulf %140, %22 : vector<2x128xf32>
    %142 = math.tanh %141 : vector<2x128xf32>
    %143 = arith.mulf %142, %22 : vector<2x128xf32>
    %144 = arith.addf %143, %25 : vector<2x128xf32>
    %145 = vector.extract_strided_slice %144 {offsets = [0, 0], sizes = [2, 32], strides = [1, 1]} : vector<2x128xf32> to vector<2x32xf32>
    %146 = vector.extract_strided_slice %144 {offsets = [0, 32], sizes = [2, 32], strides = [1, 1]} : vector<2x128xf32> to vector<2x32xf32>
    %147 = vector.extract_strided_slice %144 {offsets = [0, 64], sizes = [2, 32], strides = [1, 1]} : vector<2x128xf32> to vector<2x32xf32>
    %148 = vector.extract_strided_slice %144 {offsets = [0, 96], sizes = [2, 32], strides = [1, 1]} : vector<2x128xf32> to vector<2x32xf32>
    %149 = arith.mulf %146, %133 : vector<2x32xf32>
    %150 = arith.mulf %145, %147 : vector<2x32xf32>
    %151 = arith.addf %149, %150 : vector<2x32xf32>
    %152 = math.tanh %151 : vector<2x32xf32>
    %153 = arith.mulf %148, %152 : vector<2x32xf32>
    %154 = vector.extract_strided_slice %12 {offsets = [7, 0, 0], sizes = [1, 2, 128], strides = [1, 1, 1]} : vector<8x2x128xf32> to vector<1x2x128xf32>
    %155 = vector.shape_cast %154 : vector<1x2x128xf32> to vector<2x128xf32>
    %156 = arith.truncf %153 : vector<2x32xf32> to vector<2x32xbf16>
    %cst_20 = arith.constant dense<0.000000e+00> : vector<2x128xf32>
    %157 = tpu.matmul %156, %13, %cst_20 {dimension_numbers = #tpu.dot_dimension_numbers<[1], [0], [0], [1], [0, 0, 1, 1], [], []>} : vector<2x32xbf16>, vector<32x128xbf16>, vector<2x128xf32> -> vector<2x128xf32>
    %158 = arith.addf %155, %157 : vector<2x128xf32>
    %159 = arith.mulf %158, %22 : vector<2x128xf32>
    %160 = math.tanh %159 : vector<2x128xf32>
    %161 = arith.mulf %160, %22 : vector<2x128xf32>
    %162 = arith.addf %161, %25 : vector<2x128xf32>
    %163 = vector.extract_strided_slice %162 {offsets = [0, 0], sizes = [2, 32], strides = [1, 1]} : vector<2x128xf32> to vector<2x32xf32>
    %164 = vector.extract_strided_slice %162 {offsets = [0, 32], sizes = [2, 32], strides = [1, 1]} : vector<2x128xf32> to vector<2x32xf32>
    %165 = vector.extract_strided_slice %162 {offsets = [0, 64], sizes = [2, 32], strides = [1, 1]} : vector<2x128xf32> to vector<2x32xf32>
    %166 = vector.extract_strided_slice %162 {offsets = [0, 96], sizes = [2, 32], strides = [1, 1]} : vector<2x128xf32> to vector<2x32xf32>
    %167 = arith.mulf %164, %151 : vector<2x32xf32>
    %168 = arith.mulf %163, %165 : vector<2x32xf32>
    %169 = arith.addf %167, %168 : vector<2x32xf32>
    %170 = math.tanh %169 : vector<2x32xf32>
    %171 = arith.mulf %166, %170 : vector<2x32xf32>
    %c0_i32_21 = arith.constant 0 : i32
    %172 = tpu.memref_slice %arg20[%c0_i32_21] : memref<3x!tpu.dma_semaphore, #tpu.memory_space<semaphore_mem>> -> memref<1x!tpu.dma_semaphore, #tpu.memory_space<semaphore_mem>>
    %173 = tpu.memref_squeeze %172 : memref<1x!tpu.dma_semaphore, #tpu.memory_space<semaphore_mem>> -> memref<!tpu.dma_semaphore, #tpu.memory_space<semaphore_mem>>
    tpu.wait_dma2 semaphore(%173 : memref<!tpu.dma_semaphore, #tpu.memory_space<semaphore_mem>>) src(%arg5 : memref<192x2048xbf16, #tpu.memory_space<any>>) dst(%arg17 : memref<192x2048xbf16, #tpu.memory_space<vmem>>)
    %c0_22 = arith.constant 0 : index
    %c0_23 = arith.constant 0 : index
    %174 = vector.load %arg1[%c0_22, %c0_23] : memref<8x192xbf16, #tpu.memory_space<vmem>>, vector<8x192xbf16>
    %c0_24 = arith.constant 0 : index
    %c0_25 = arith.constant 0 : index
    %175 = vector.load %arg17[%c0_24, %c0_25] : memref<192x2048xbf16, #tpu.memory_space<vmem>>, vector<192x2048xbf16>
    %cst_26 = arith.constant dense<0.000000e+00> : vector<8x2048xf32>
    %176 = tpu.matmul %174, %175, %cst_26 {dimension_numbers = #tpu.dot_dimension_numbers<[1], [0], [0], [1], [0, 0, 1, 1], [], []>} : vector<8x192xbf16>, vector<192x2048xbf16>, vector<8x2048xf32> -> vector<8x2048xf32>
    %c0_27 = arith.constant 0 : index
    %c0_28 = arith.constant 0 : index
    %177 = vector.load %arg6[%c0_27, %c0_28] : memref<1x2048xf32, #tpu.memory_space<vmem>>, vector<1x2048xf32>
    %178 = vector.broadcast %177 : vector<1x2048xf32> to vector<8x2048xf32>
    %179 = arith.addf %176, %178 : vector<8x2048xf32>
    %cst_29 = arith.constant 0.000000e+00 : f32
    %180 = vector.broadcast %cst_29 : f32 to vector<8x2048xf32>
    %181 = arith.maximumf %179, %180 : vector<8x2048xf32>
    %182 = arith.mulf %181, %181 : vector<8x2048xf32>
    %cst_30 = arith.constant dense<0.000000e+00> : vector<8xf32>
    %183 = vector.multi_reduction <add>, %182, %cst_30 [1] : vector<8x2048xf32> to vector<8xf32>
    %184 = vector.shape_cast %183 : vector<8xf32> to vector<8x1xf32>
    %cst_31 = arith.constant 1.000000e-10 : f32
    %185 = vector.broadcast %cst_31 : f32 to vector<8x1xf32>
    %186 = arith.addf %184, %185 : vector<8x1xf32>
    %187 = math.rsqrt %186 : vector<8x1xf32>
    %188 = vector.broadcast %187 : vector<8x1xf32> to vector<8x2048xf32>
    %189 = arith.mulf %181, %188 : vector<8x2048xf32>
    %c1_i32_32 = arith.constant 1 : i32
    %190 = tpu.memref_slice %arg20[%c1_i32_32] : memref<3x!tpu.dma_semaphore, #tpu.memory_space<semaphore_mem>> -> memref<1x!tpu.dma_semaphore, #tpu.memory_space<semaphore_mem>>
    %191 = tpu.memref_squeeze %190 : memref<1x!tpu.dma_semaphore, #tpu.memory_space<semaphore_mem>> -> memref<!tpu.dma_semaphore, #tpu.memory_space<semaphore_mem>>
    tpu.wait_dma2 semaphore(%191 : memref<!tpu.dma_semaphore, #tpu.memory_space<semaphore_mem>>) src(%arg7 : memref<2048x32xbf16, #tpu.memory_space<any>>) dst(%arg18 : memref<2048x32xbf16, #tpu.memory_space<vmem>>)
    %192 = arith.truncf %189 : vector<8x2048xf32> to vector<8x2048xbf16>
    %c0_33 = arith.constant 0 : index
    %c0_34 = arith.constant 0 : index
    %193 = vector.load %arg18[%c0_33, %c0_34] : memref<2048x32xbf16, #tpu.memory_space<vmem>>, vector<2048x32xbf16>
    %cst_35 = arith.constant dense<0.000000e+00> : vector<8x32xf32>
    %194 = tpu.matmul %192, %193, %cst_35 {dimension_numbers = #tpu.dot_dimension_numbers<[1], [0], [0], [1], [0, 0, 1, 1], [], []>} : vector<8x2048xbf16>, vector<2048x32xbf16>, vector<8x32xf32> -> vector<8x32xf32>
    %c0_36 = arith.constant 0 : index
    %c0_37 = arith.constant 0 : index
    %195 = vector.load %arg8[%c0_36, %c0_37] : memref<32x32xf32, #tpu.memory_space<vmem>>, vector<32x32xf32>
    %cst_38 = arith.constant dense<0.000000e+00> : vector<2x32xf32>
    %196 = tpu.matmul %171, %195, %cst_38 {dimension_numbers = #tpu.dot_dimension_numbers<[1], [0], [0], [1], [0, 0, 1, 1], [], []>} : vector<2x32xf32>, vector<32x32xf32>, vector<2x32xf32> -> vector<2x32xf32>
    %197 = vector.shape_cast %194 : vector<8x32xf32> to vector<2x4x32xf32>
    %198 = vector.shape_cast %196 : vector<2x32xf32> to vector<2x1x32xf32>
    %199 = vector.broadcast %198 : vector<2x1x32xf32> to vector<2x4x32xf32>
    %200 = arith.addf %197, %199 : vector<2x4x32xf32>
    %201 = math.tanh %200 : vector<2x4x32xf32>
    %c0_39 = arith.constant 0 : index
    %c0_40 = arith.constant 0 : index
    %202 = vector.load %arg9[%c0_39, %c0_40] : memref<1x32xf32, #tpu.memory_space<vmem>>, vector<1x32xf32>
    %203 = vector.shape_cast %202 : vector<1x32xf32> to vector<1x1x32xf32>
    %204 = vector.broadcast %203 : vector<1x1x32xf32> to vector<2x4x32xf32>
    %205 = arith.mulf %201, %204 : vector<2x4x32xf32>
    %cst_41 = arith.constant dense<0.000000e+00> : vector<2x4xf32>
    %206 = vector.multi_reduction <add>, %205, %cst_41 [2] : vector<2x4x32xf32> to vector<2x4xf32>
    %207 = vector.shape_cast %206 : vector<2x4xf32> to vector<2x4x1xf32>
    %cst_42 = arith.constant dense<0xFF800000> : vector<2x1xf32>
    %208 = vector.multi_reduction <maximumf>, %207, %cst_42 [1] : vector<2x4x1xf32> to vector<2x1xf32>
    %209 = vector.shape_cast %208 : vector<2x1xf32> to vector<2x1x1xf32>
    %210 = vector.broadcast %209 : vector<2x1x1xf32> to vector<2x4x1xf32>
    %211 = arith.subf %207, %210 : vector<2x4x1xf32>
    %212 = math.exp %211 : vector<2x4x1xf32>
    %cst_43 = arith.constant dense<0.000000e+00> : vector<2x1xf32>
    %213 = vector.multi_reduction <add>, %212, %cst_43 [1] : vector<2x4x1xf32> to vector<2x1xf32>
    %214 = vector.shape_cast %213 : vector<2x1xf32> to vector<2x1x1xf32>
    %215 = tpu.reciprocal %214 {approx = true} : vector<2x1x1xf32> -> vector<2x1x1xf32>
    %216 = vector.broadcast %215 : vector<2x1x1xf32> to vector<2x4x1xf32>
    %217 = arith.mulf %212, %216 : vector<2x4x1xf32>
    %218 = vector.shape_cast %189 : vector<8x2048xf32> to vector<2x4x2048xf32>
    %219 = vector.broadcast %217 : vector<2x4x1xf32> to vector<2x4x2048xf32>
    %220 = arith.mulf %219, %218 : vector<2x4x2048xf32>
    %cst_44 = arith.constant dense<0.000000e+00> : vector<2x2048xf32>
    %221 = vector.multi_reduction <add>, %220, %cst_44 [1] : vector<2x4x2048xf32> to vector<2x2048xf32>
    %222 = arith.truncf %221 : vector<2x2048xf32> to vector<2x2048xbf16>
    %c2_i32_45 = arith.constant 2 : i32
    %223 = tpu.memref_slice %arg20[%c2_i32_45] : memref<3x!tpu.dma_semaphore, #tpu.memory_space<semaphore_mem>> -> memref<1x!tpu.dma_semaphore, #tpu.memory_space<semaphore_mem>>
    %224 = tpu.memref_squeeze %223 : memref<1x!tpu.dma_semaphore, #tpu.memory_space<semaphore_mem>> -> memref<!tpu.dma_semaphore, #tpu.memory_space<semaphore_mem>>
    tpu.wait_dma2 semaphore(%224 : memref<!tpu.dma_semaphore, #tpu.memory_space<semaphore_mem>>) src(%arg10 : memref<2048x64xbf16, #tpu.memory_space<any>>) dst(%arg19 : memref<2048x64xbf16, #tpu.memory_space<vmem>>)
    %c0_46 = arith.constant 0 : index
    %c0_47 = arith.constant 0 : index
    %225 = vector.load %arg19[%c0_46, %c0_47] : memref<2048x64xbf16, #tpu.memory_space<vmem>>, vector<2048x64xbf16>
    %cst_48 = arith.constant dense<0.000000e+00> : vector<2x64xf32>
    %226 = tpu.matmul %222, %225, %cst_48 {dimension_numbers = #tpu.dot_dimension_numbers<[1], [0], [0], [1], [0, 0, 1, 1], [], []>} : vector<2x2048xbf16>, vector<2048x64xbf16>, vector<2x64xf32> -> vector<2x64xf32>
    %c0_49 = arith.constant 0 : index
    %c0_50 = arith.constant 0 : index
    %227 = vector.load %arg11[%c0_49, %c0_50] : memref<1x64xf32, #tpu.memory_space<vmem>>, vector<1x64xf32>
    %228 = vector.broadcast %227 : vector<1x64xf32> to vector<2x64xf32>
    %229 = arith.addf %226, %228 : vector<2x64xf32>
    %230 = math.tanh %229 : vector<2x64xf32>
    %231 = vector.extract_strided_slice %230 {offsets = [0, 0], sizes = [2, 32], strides = [1, 1]} : vector<2x64xf32> to vector<2x32xf32>
    %232 = vector.extract_strided_slice %230 {offsets = [0, 32], sizes = [2, 32], strides = [1, 1]} : vector<2x64xf32> to vector<2x32xf32>
    %cst_51 = arith.constant 0.000000e+00 : f32
    %233 = vector.broadcast %cst_51 : f32 to vector<2x32xf32>
    %234 = vector.extract_strided_slice %12 {offsets = [0, 0, 0], sizes = [1, 2, 128], strides = [1, 1, 1]} : vector<8x2x128xf32> to vector<1x2x128xf32>
    %235 = vector.shape_cast %234 : vector<1x2x128xf32> to vector<2x128xf32>
    %236 = arith.truncf %231 : vector<2x32xf32> to vector<2x32xbf16>
    %cst_52 = arith.constant dense<0.000000e+00> : vector<2x128xf32>
    %237 = tpu.matmul %236, %13, %cst_52 {dimension_numbers = #tpu.dot_dimension_numbers<[1], [0], [0], [1], [0, 0, 1, 1], [], []>} : vector<2x32xbf16>, vector<32x128xbf16>, vector<2x128xf32> -> vector<2x128xf32>
    %238 = arith.addf %235, %237 : vector<2x128xf32>
    %239 = arith.mulf %238, %22 : vector<2x128xf32>
    %240 = math.tanh %239 : vector<2x128xf32>
    %241 = arith.mulf %240, %22 : vector<2x128xf32>
    %242 = arith.addf %241, %25 : vector<2x128xf32>
    %243 = vector.extract_strided_slice %242 {offsets = [0, 0], sizes = [2, 32], strides = [1, 1]} : vector<2x128xf32> to vector<2x32xf32>
    %244 = vector.extract_strided_slice %242 {offsets = [0, 32], sizes = [2, 32], strides = [1, 1]} : vector<2x128xf32> to vector<2x32xf32>
    %245 = vector.extract_strided_slice %242 {offsets = [0, 64], sizes = [2, 32], strides = [1, 1]} : vector<2x128xf32> to vector<2x32xf32>
    %246 = vector.extract_strided_slice %242 {offsets = [0, 96], sizes = [2, 32], strides = [1, 1]} : vector<2x128xf32> to vector<2x32xf32>
    %247 = arith.mulf %244, %233 : vector<2x32xf32>
    %248 = arith.mulf %243, %245 : vector<2x32xf32>
    %249 = arith.addf %247, %248 : vector<2x32xf32>
    %250 = math.tanh %249 : vector<2x32xf32>
    %251 = arith.mulf %246, %250 : vector<2x32xf32>
    %252 = vector.extract_strided_slice %12 {offsets = [1, 0, 0], sizes = [1, 2, 128], strides = [1, 1, 1]} : vector<8x2x128xf32> to vector<1x2x128xf32>
    %253 = vector.shape_cast %252 : vector<1x2x128xf32> to vector<2x128xf32>
    %254 = arith.truncf %251 : vector<2x32xf32> to vector<2x32xbf16>
    %cst_53 = arith.constant dense<0.000000e+00> : vector<2x128xf32>
    %255 = tpu.matmul %254, %13, %cst_53 {dimension_numbers = #tpu.dot_dimension_numbers<[1], [0], [0], [1], [0, 0, 1, 1], [], []>} : vector<2x32xbf16>, vector<32x128xbf16>, vector<2x128xf32> -> vector<2x128xf32>
    %256 = arith.addf %253, %255 : vector<2x128xf32>
    %257 = arith.mulf %256, %22 : vector<2x128xf32>
    %258 = math.tanh %257 : vector<2x128xf32>
    %259 = arith.mulf %258, %22 : vector<2x128xf32>
    %260 = arith.addf %259, %25 : vector<2x128xf32>
    %261 = vector.extract_strided_slice %260 {offsets = [0, 0], sizes = [2, 32], strides = [1, 1]} : vector<2x128xf32> to vector<2x32xf32>
    %262 = vector.extract_strided_slice %260 {offsets = [0, 32], sizes = [2, 32], strides = [1, 1]} : vector<2x128xf32> to vector<2x32xf32>
    %263 = vector.extract_strided_slice %260 {offsets = [0, 64], sizes = [2, 32], strides = [1, 1]} : vector<2x128xf32> to vector<2x32xf32>
    %264 = vector.extract_strided_slice %260 {offsets = [0, 96], sizes = [2, 32], strides = [1, 1]} : vector<2x128xf32> to vector<2x32xf32>
    %265 = arith.mulf %262, %249 : vector<2x32xf32>
    %266 = arith.mulf %261, %263 : vector<2x32xf32>
    %267 = arith.addf %265, %266 : vector<2x32xf32>
    %268 = math.tanh %267 : vector<2x32xf32>
    %269 = arith.mulf %264, %268 : vector<2x32xf32>
    %270 = vector.extract_strided_slice %12 {offsets = [2, 0, 0], sizes = [1, 2, 128], strides = [1, 1, 1]} : vector<8x2x128xf32> to vector<1x2x128xf32>
    %271 = vector.shape_cast %270 : vector<1x2x128xf32> to vector<2x128xf32>
    %272 = arith.truncf %269 : vector<2x32xf32> to vector<2x32xbf16>
    %cst_54 = arith.constant dense<0.000000e+00> : vector<2x128xf32>
    %273 = tpu.matmul %272, %13, %cst_54 {dimension_numbers = #tpu.dot_dimension_numbers<[1], [0], [0], [1], [0, 0, 1, 1], [], []>} : vector<2x32xbf16>, vector<32x128xbf16>, vector<2x128xf32> -> vector<2x128xf32>
    %274 = arith.addf %271, %273 : vector<2x128xf32>
    %275 = arith.mulf %274, %22 : vector<2x128xf32>
    %276 = math.tanh %275 : vector<2x128xf32>
    %277 = arith.mulf %276, %22 : vector<2x128xf32>
    %278 = arith.addf %277, %25 : vector<2x128xf32>
    %279 = vector.extract_strided_slice %278 {offsets = [0, 0], sizes = [2, 32], strides = [1, 1]} : vector<2x128xf32> to vector<2x32xf32>
    %280 = vector.extract_strided_slice %278 {offsets = [0, 32], sizes = [2, 32], strides = [1, 1]} : vector<2x128xf32> to vector<2x32xf32>
    %281 = vector.extract_strided_slice %278 {offsets = [0, 64], sizes = [2, 32], strides = [1, 1]} : vector<2x128xf32> to vector<2x32xf32>
    %282 = vector.extract_strided_slice %278 {offsets = [0, 96], sizes = [2, 32], strides = [1, 1]} : vector<2x128xf32> to vector<2x32xf32>
    %283 = arith.mulf %280, %267 : vector<2x32xf32>
    %284 = arith.mulf %279, %281 : vector<2x32xf32>
    %285 = arith.addf %283, %284 : vector<2x32xf32>
    %286 = math.tanh %285 : vector<2x32xf32>
    %287 = arith.mulf %282, %286 : vector<2x32xf32>
    %288 = vector.extract_strided_slice %12 {offsets = [3, 0, 0], sizes = [1, 2, 128], strides = [1, 1, 1]} : vector<8x2x128xf32> to vector<1x2x128xf32>
    %289 = vector.shape_cast %288 : vector<1x2x128xf32> to vector<2x128xf32>
    %290 = arith.truncf %287 : vector<2x32xf32> to vector<2x32xbf16>
    %cst_55 = arith.constant dense<0.000000e+00> : vector<2x128xf32>
    %291 = tpu.matmul %290, %13, %cst_55 {dimension_numbers = #tpu.dot_dimension_numbers<[1], [0], [0], [1], [0, 0, 1, 1], [], []>} : vector<2x32xbf16>, vector<32x128xbf16>, vector<2x128xf32> -> vector<2x128xf32>
    %292 = arith.addf %289, %291 : vector<2x128xf32>
    %293 = arith.mulf %292, %22 : vector<2x128xf32>
    %294 = math.tanh %293 : vector<2x128xf32>
    %295 = arith.mulf %294, %22 : vector<2x128xf32>
    %296 = arith.addf %295, %25 : vector<2x128xf32>
    %297 = vector.extract_strided_slice %296 {offsets = [0, 0], sizes = [2, 32], strides = [1, 1]} : vector<2x128xf32> to vector<2x32xf32>
    %298 = vector.extract_strided_slice %296 {offsets = [0, 32], sizes = [2, 32], strides = [1, 1]} : vector<2x128xf32> to vector<2x32xf32>
    %299 = vector.extract_strided_slice %296 {offsets = [0, 64], sizes = [2, 32], strides = [1, 1]} : vector<2x128xf32> to vector<2x32xf32>
    %300 = vector.extract_strided_slice %296 {offsets = [0, 96], sizes = [2, 32], strides = [1, 1]} : vector<2x128xf32> to vector<2x32xf32>
    %301 = arith.mulf %298, %285 : vector<2x32xf32>
    %302 = arith.mulf %297, %299 : vector<2x32xf32>
    %303 = arith.addf %301, %302 : vector<2x32xf32>
    %304 = math.tanh %303 : vector<2x32xf32>
    %305 = arith.mulf %300, %304 : vector<2x32xf32>
    %306 = vector.extract_strided_slice %12 {offsets = [4, 0, 0], sizes = [1, 2, 128], strides = [1, 1, 1]} : vector<8x2x128xf32> to vector<1x2x128xf32>
    %307 = vector.shape_cast %306 : vector<1x2x128xf32> to vector<2x128xf32>
    %308 = arith.truncf %305 : vector<2x32xf32> to vector<2x32xbf16>
    %cst_56 = arith.constant dense<0.000000e+00> : vector<2x128xf32>
    %309 = tpu.matmul %308, %13, %cst_56 {dimension_numbers = #tpu.dot_dimension_numbers<[1], [0], [0], [1], [0, 0, 1, 1], [], []>} : vector<2x32xbf16>, vector<32x128xbf16>, vector<2x128xf32> -> vector<2x128xf32>
    %310 = arith.addf %307, %309 : vector<2x128xf32>
    %311 = arith.mulf %310, %22 : vector<2x128xf32>
    %312 = math.tanh %311 : vector<2x128xf32>
    %313 = arith.mulf %312, %22 : vector<2x128xf32>
    %314 = arith.addf %313, %25 : vector<2x128xf32>
    %315 = vector.extract_strided_slice %314 {offsets = [0, 0], sizes = [2, 32], strides = [1, 1]} : vector<2x128xf32> to vector<2x32xf32>
    %316 = vector.extract_strided_slice %314 {offsets = [0, 32], sizes = [2, 32], strides = [1, 1]} : vector<2x128xf32> to vector<2x32xf32>
    %317 = vector.extract_strided_slice %314 {offsets = [0, 64], sizes = [2, 32], strides = [1, 1]} : vector<2x128xf32> to vector<2x32xf32>
    %318 = vector.extract_strided_slice %314 {offsets = [0, 96], sizes = [2, 32], strides = [1, 1]} : vector<2x128xf32> to vector<2x32xf32>
    %319 = arith.mulf %316, %303 : vector<2x32xf32>
    %320 = arith.mulf %315, %317 : vector<2x32xf32>
    %321 = arith.addf %319, %320 : vector<2x32xf32>
    %322 = math.tanh %321 : vector<2x32xf32>
    %323 = arith.mulf %318, %322 : vector<2x32xf32>
    %324 = vector.extract_strided_slice %12 {offsets = [5, 0, 0], sizes = [1, 2, 128], strides = [1, 1, 1]} : vector<8x2x128xf32> to vector<1x2x128xf32>
    %325 = vector.shape_cast %324 : vector<1x2x128xf32> to vector<2x128xf32>
    %326 = arith.truncf %323 : vector<2x32xf32> to vector<2x32xbf16>
    %cst_57 = arith.constant dense<0.000000e+00> : vector<2x128xf32>
    %327 = tpu.matmul %326, %13, %cst_57 {dimension_numbers = #tpu.dot_dimension_numbers<[1], [0], [0], [1], [0, 0, 1, 1], [], []>} : vector<2x32xbf16>, vector<32x128xbf16>, vector<2x128xf32> -> vector<2x128xf32>
    %328 = arith.addf %325, %327 : vector<2x128xf32>
    %329 = arith.mulf %328, %22 : vector<2x128xf32>
    %330 = math.tanh %329 : vector<2x128xf32>
    %331 = arith.mulf %330, %22 : vector<2x128xf32>
    %332 = arith.addf %331, %25 : vector<2x128xf32>
    %333 = vector.extract_strided_slice %332 {offsets = [0, 0], sizes = [2, 32], strides = [1, 1]} : vector<2x128xf32> to vector<2x32xf32>
    %334 = vector.extract_strided_slice %332 {offsets = [0, 32], sizes = [2, 32], strides = [1, 1]} : vector<2x128xf32> to vector<2x32xf32>
    %335 = vector.extract_strided_slice %332 {offsets = [0, 64], sizes = [2, 32], strides = [1, 1]} : vector<2x128xf32> to vector<2x32xf32>
    %336 = vector.extract_strided_slice %332 {offsets = [0, 96], sizes = [2, 32], strides = [1, 1]} : vector<2x128xf32> to vector<2x32xf32>
    %337 = arith.mulf %334, %321 : vector<2x32xf32>
    %338 = arith.mulf %333, %335 : vector<2x32xf32>
    %339 = arith.addf %337, %338 : vector<2x32xf32>
    %340 = math.tanh %339 : vector<2x32xf32>
    %341 = arith.mulf %336, %340 : vector<2x32xf32>
    %342 = vector.extract_strided_slice %12 {offsets = [6, 0, 0], sizes = [1, 2, 128], strides = [1, 1, 1]} : vector<8x2x128xf32> to vector<1x2x128xf32>
    %343 = vector.shape_cast %342 : vector<1x2x128xf32> to vector<2x128xf32>
    %344 = arith.truncf %341 : vector<2x32xf32> to vector<2x32xbf16>
    %cst_58 = arith.constant dense<0.000000e+00> : vector<2x128xf32>
    %345 = tpu.matmul %344, %13, %cst_58 {dimension_numbers = #tpu.dot_dimension_numbers<[1], [0], [0], [1], [0, 0, 1, 1], [], []>} : vector<2x32xbf16>, vector<32x128xbf16>, vector<2x128xf32> -> vector<2x128xf32>
    %346 = arith.addf %343, %345 : vector<2x128xf32>
    %347 = arith.mulf %346, %22 : vector<2x128xf32>
    %348 = math.tanh %347 : vector<2x128xf32>
    %349 = arith.mulf %348, %22 : vector<2x128xf32>
    %350 = arith.addf %349, %25 : vector<2x128xf32>
    %351 = vector.extract_strided_slice %350 {offsets = [0, 0], sizes = [2, 32], strides = [1, 1]} : vector<2x128xf32> to vector<2x32xf32>
    %352 = vector.extract_strided_slice %350 {offsets = [0, 32], sizes = [2, 32], strides = [1, 1]} : vector<2x128xf32> to vector<2x32xf32>
    %353 = vector.extract_strided_slice %350 {offsets = [0, 64], sizes = [2, 32], strides = [1, 1]} : vector<2x128xf32> to vector<2x32xf32>
    %354 = vector.extract_strided_slice %350 {offsets = [0, 96], sizes = [2, 32], strides = [1, 1]} : vector<2x128xf32> to vector<2x32xf32>
    %355 = arith.mulf %352, %339 : vector<2x32xf32>
    %356 = arith.mulf %351, %353 : vector<2x32xf32>
    %357 = arith.addf %355, %356 : vector<2x32xf32>
    %358 = math.tanh %357 : vector<2x32xf32>
    %359 = arith.mulf %354, %358 : vector<2x32xf32>
    %360 = vector.extract_strided_slice %12 {offsets = [7, 0, 0], sizes = [1, 2, 128], strides = [1, 1, 1]} : vector<8x2x128xf32> to vector<1x2x128xf32>
    %361 = vector.shape_cast %360 : vector<1x2x128xf32> to vector<2x128xf32>
    %362 = arith.truncf %359 : vector<2x32xf32> to vector<2x32xbf16>
    %cst_59 = arith.constant dense<0.000000e+00> : vector<2x128xf32>
    %363 = tpu.matmul %362, %13, %cst_59 {dimension_numbers = #tpu.dot_dimension_numbers<[1], [0], [0], [1], [0, 0, 1, 1], [], []>} : vector<2x32xbf16>, vector<32x128xbf16>, vector<2x128xf32> -> vector<2x128xf32>
    %364 = arith.addf %361, %363 : vector<2x128xf32>
    %365 = arith.mulf %364, %22 : vector<2x128xf32>
    %366 = math.tanh %365 : vector<2x128xf32>
    %367 = arith.mulf %366, %22 : vector<2x128xf32>
    %368 = arith.addf %367, %25 : vector<2x128xf32>
    %369 = vector.extract_strided_slice %368 {offsets = [0, 0], sizes = [2, 32], strides = [1, 1]} : vector<2x128xf32> to vector<2x32xf32>
    %370 = vector.extract_strided_slice %368 {offsets = [0, 32], sizes = [2, 32], strides = [1, 1]} : vector<2x128xf32> to vector<2x32xf32>
    %371 = vector.extract_strided_slice %368 {offsets = [0, 64], sizes = [2, 32], strides = [1, 1]} : vector<2x128xf32> to vector<2x32xf32>
    %372 = vector.extract_strided_slice %368 {offsets = [0, 96], sizes = [2, 32], strides = [1, 1]} : vector<2x128xf32> to vector<2x32xf32>
    %373 = arith.mulf %370, %357 : vector<2x32xf32>
    %374 = arith.mulf %369, %371 : vector<2x32xf32>
    %375 = arith.addf %373, %374 : vector<2x32xf32>
    %376 = math.tanh %375 : vector<2x32xf32>
    %377 = arith.mulf %372, %376 : vector<2x32xf32>
    %c0_60 = arith.constant 0 : index
    %c0_61 = arith.constant 0 : index
    %378 = vector.load %arg12[%c0_60, %c0_61] : memref<32x32xf32, #tpu.memory_space<vmem>>, vector<32x32xf32>
    %cst_62 = arith.constant dense<0.000000e+00> : vector<2x32xf32>
    %379 = tpu.matmul %377, %378, %cst_62 {dimension_numbers = #tpu.dot_dimension_numbers<[1], [0], [0], [1], [0, 0, 1, 1], [], []>} : vector<2x32xf32>, vector<32x32xf32>, vector<2x32xf32> -> vector<2x32xf32>
    %c0_63 = arith.constant 0 : index
    %c0_64 = arith.constant 0 : index
    %380 = vector.load %arg13[%c0_63, %c0_64] : memref<1x32xf32, #tpu.memory_space<vmem>>, vector<1x32xf32>
    %381 = vector.broadcast %380 : vector<1x32xf32> to vector<2x32xf32>
    %382 = arith.addf %379, %381 : vector<2x32xf32>
    %383 = math.tanh %382 : vector<2x32xf32>
    %384 = arith.mulf %383, %232 : vector<2x32xf32>
    %c0_65 = arith.constant 0 : index
    %c0_66 = arith.constant 0 : index
    %385 = vector.load %arg14[%c0_65, %c0_66] : memref<32x10xf32, #tpu.memory_space<vmem>>, vector<32x10xf32>
    %cst_67 = arith.constant dense<0.000000e+00> : vector<2x10xf32>
    %386 = tpu.matmul %384, %385, %cst_67 {dimension_numbers = #tpu.dot_dimension_numbers<[1], [0], [0], [1], [0, 0, 1, 1], [], []>} : vector<2x32xf32>, vector<32x10xf32>, vector<2x10xf32> -> vector<2x10xf32>
    %c0_68 = arith.constant 0 : index
    %c0_69 = arith.constant 0 : index
    %387 = vector.load %arg15[%c0_68, %c0_69] : memref<1x10xf32, #tpu.memory_space<vmem>>, vector<1x10xf32>
    %388 = vector.broadcast %387 : vector<1x10xf32> to vector<2x10xf32>
    %389 = arith.addf %386, %388 : vector<2x10xf32>
    %cst_70 = arith.constant dense<0xFF800000> : vector<2xf32>
    %390 = vector.multi_reduction <maximumf>, %389, %cst_70 [1] : vector<2x10xf32> to vector<2xf32>
    %391 = vector.shape_cast %390 : vector<2xf32> to vector<2x1xf32>
    %392 = vector.broadcast %391 : vector<2x1xf32> to vector<2x10xf32>
    %393 = arith.subf %389, %392 : vector<2x10xf32>
    %394 = math.exp %393 : vector<2x10xf32>
    %cst_71 = arith.constant dense<0.000000e+00> : vector<2xf32>
    %395 = vector.multi_reduction <add>, %394, %cst_71 [1] : vector<2x10xf32> to vector<2xf32>
    %396 = vector.shape_cast %395 : vector<2xf32> to vector<2x1xf32>
    %397 = math.log %396 : vector<2x1xf32>
    %398 = vector.broadcast %391 : vector<2x1xf32> to vector<2x10xf32>
    %399 = arith.subf %389, %398 : vector<2x10xf32>
    %400 = vector.broadcast %397 : vector<2x1xf32> to vector<2x10xf32>
    %401 = arith.subf %399, %400 : vector<2x10xf32>
    %c0_72 = arith.constant 0 : index
    %c0_73 = arith.constant 0 : index
    %402 = vector.load %arg16[%c0_72, %c0_73] : memref<2x10xf32, #tpu.memory_space<vmem>>, vector<2x10xf32>
    tpu.vector_store %arg16[%c0_72, %c0_73], %401 {strides = array<i32>} : memref<2x10xf32, #tpu.memory_space<vmem>>, vector<2x10xf32>,
    return
  }
}

</mosaic_0001>

<llo_original>
// kernel: net_forward.1
$region0: #{net_forward.1}
  #allocation0 [shape = 'u32[]', space=smem, size = 0x4, offset = 0x4, fixed_abs, tag = 'smem constant byte address 0x4 - core index']
  #allocation1 [shape = 'u32[144,128]{1,0:T(1,128)}', space=vmem, size = 0x12000, scoped, tag = 'internal scratch']
  #allocation2 [shape = 'bf16[192,2048]{1,0:T(16,128)(2,1)}', space=vmem, size = 0xc0000, scoped, tag = 'scratch operand']
  #allocation3 [shape = 'bf16[2048,32]{1,0:T(16,128)(2,1)}', space=vmem, size = 0x80000, scoped, tag = 'scratch operand']
  #allocation4 [shape = 'bf16[2048,64]{1,0:T(16,128)(2,1)}', space=vmem, size = 0x80000, scoped, tag = 'scratch operand']
  #allocation5 [shape = 's32[3]{0}', space=sflag, size = 0xc, scoped, tag = 'scratch operand']
  #allocation8 [shape = 's32[]', space=sflag, size = 0x4, offset = 0, fixed_abs, tag = 'sflag constant byte address 0x0 - dummy sync flag']
  #allocation9 [shape = 's32[]', space=sflag, size = 0x4, offset = 0, fixed_abs, tag = 'sflag constant byte address 0x0 - dummy sync flag']
  #allocation10 [shape = 's32[]', space=sflag, size = 0x4, offset = 0, fixed_abs, tag = 'sflag constant byte address 0x0 - dummy sync flag']
  %s0 = inlined_call_operand.vmem [shape: bf16[16,32], index: 0, kind: input, shape index: {}]
  %s1 = inlined_call_operand.vmem [shape: bf16[8,192], index: 1, kind: input, shape index: {}]
  %s2 = inlined_call_operand.vmem [shape: bf16[32,128], index: 2, kind: input, shape index: {}]
  %s3 = inlined_call_operand.vmem [shape: bf16[32,128], index: 3, kind: input, shape index: {}]
  %s4 = inlined_call_operand.vmem [shape: f32[1,128], index: 4, kind: input, shape index: {}]
  %s5 = inlined_call_operand.vmem [shape: bf16[192,2048], index: 5, kind: input, shape index: {}]
  %s6 = inlined_call_operand.vmem [shape: f32[1,2048], index: 6, kind: input, shape index: {}]
  %s7 = inlined_call_operand.vmem [shape: bf16[2048,32], index: 7, kind: input, shape index: {}]
  %s8 = inlined_call_operand.vmem [shape: f32[32,32], index: 8, kind: input, shape index: {}]
  %s9 = inlined_call_operand.vmem [shape: f32[1,32], index: 9, kind: input, shape index: {}]
  %s10 = inlined_call_operand.vmem [shape: bf16[2048,64], index: 10, kind: input, shape index: {}]
  %s11 = inlined_call_operand.vmem [shape: f32[1,64], index: 11, kind: input, shape index: {}]
  %s12 = inlined_call_operand.vmem [shape: f32[32,32], index: 12, kind: input, shape index: {}]
  %s13 = inlined_call_operand.vmem [shape: f32[1,32], index: 13, kind: input, shape index: {}]
  %s14 = inlined_call_operand.vmem [shape: f32[32,10], index: 14, kind: input, shape index: {}]
  %s15 = inlined_call_operand.vmem [shape: f32[1,10], index: 15, kind: input, shape index: {}]
  %s16 = inlined_call_operand.hbm [shape: f32[2,10], index: 16, kind: output, shape index: {}]
  %s17 = sld [smem:[#allocation0]]
  $region167: #{net_forward.1} parent=0
    _
  %s19 = ssub.s32 1, %s17
  %s20 = scalar_select 0, %s19, %s17
  $region1: #{net_forward.1} parent=0
    #allocation6 [shape = 'u8[1024]{0}', space=vmem, size = 0x400, scoped, tag = 'output window, operand 0, single buffered']
    #allocation7 [shape = 's32[1]{0}', space=sflag, size = 0x4, scoped, tag = 'scoped memory for net_forward.1']
    %21 = vsyncpa [#allocation7], 0
    // Predicated region
    $region2: #{net_forward.1} parent=1 // pred_check
      _
    $region3: #{net_forward.1} parent=1 // pred_check_branch
      %23 = sbr.rel (0) target = $region5
    $region4: #{net_forward.1} parent=1 // pred_region
      _
    $region5: #{net_forward.1} parent=1 // pred_fallthru
      _
    // Predicated region
    $region6: #{net_forward.1} parent=1 // pred_check
      _
    $region7: #{net_forward.1} parent=1 // pred_check_branch
      %25 = sbr.rel (0) target = $region9
    $region8: #{net_forward.1} parent=1 // pred_region
      _
    $region9: #{net_forward.1} parent=1 // pred_fallthru
      _
    // Predicated region
    $region10: #{net_forward.1} parent=1 // pred_check
      _
    $region11: #{net_forward.1} parent=1 // pred_check_branch
      %27 = sbr.rel (0) target = $region13
    $region12: #{net_forward.1} parent=1 // pred_region
      _
    $region13: #{net_forward.1} parent=1 // pred_fallthru
      _
    // Predicated region
    $region14: #{net_forward.1} parent=1 // pred_check
      _
    $region15: #{net_forward.1} parent=1 // pred_check_branch
      %29 = sbr.rel (0) target = $region17
    $region16: #{net_forward.1} parent=1 // pred_region
      _
    $region17: #{net_forward.1} parent=1 // pred_fallthru
      _
    // Predicated region
    $region18: #{net_forward.1} parent=1 // pred_check
      _
    $region19: #{net_forward.1} parent=1 // pred_check_branch
      %31 = sbr.rel (0) target = $region21
    $region20: #{net_forward.1} parent=1 // pred_region
      _
    $region21: #{net_forward.1} parent=1 // pred_fallthru
      _
    // Predicated region
    $region22: #{net_forward.1} parent=1 // pred_check
      _
    $region23: #{net_forward.1} parent=1 // pred_check_branch
      %33 = sbr.rel (0) target = $region25
    $region24: #{net_forward.1} parent=1 // pred_region
      _
    $region25: #{net_forward.1} parent=1 // pred_fallthru
      _
    // Predicated region
    $region26: #{net_forward.1} parent=1 // pred_check
      _
    $region27: #{net_forward.1} parent=1 // pred_check_branch
      %35 = sbr.rel (0) target = $region29
    $region28: #{net_forward.1} parent=1 // pred_region
      _
    $region29: #{net_forward.1} parent=1 // pred_fallthru
      _
    // Predicated region
    $region30: #{net_forward.1} parent=1 // pred_check
      _
    $region31: #{net_forward.1} parent=1 // pred_check_branch
      %37 = sbr.rel (0) target = $region33
    $region32: #{net_forward.1} parent=1 // pred_region
      _
    $region33: #{net_forward.1} parent=1 // pred_fallthru
      _
    // Predicated region
    $region34: #{net_forward.1} parent=1 // pred_check
      _
    $region35: #{net_forward.1} parent=1 // pred_check_branch
      %39 = sbr.rel (0) target = $region37
    $region36: #{net_forward.1} parent=1 // pred_region
      _
    $region37: #{net_forward.1} parent=1 // pred_fallthru
      _
    // Predicated region
    $region38: #{net_forward.1} parent=1 // pred_check
      _
    $region39: #{net_forward.1} parent=1 // pred_check_branch
      %41 = sbr.rel (0) target = $region41
    $region40: #{net_forward.1} parent=1 // pred_region
      _
    $region41: #{net_forward.1} parent=1 // pred_fallthru
      _
    // Predicated region
    $region42: #{net_forward.1} parent=1 // pred_check
      _
    $region43: #{net_forward.1} parent=1 // pred_check_branch
      %43 = sbr.rel (0) target = $region45
    $region44: #{net_forward.1} parent=1 // pred_region
      _
    $region45: #{net_forward.1} parent=1 // pred_fallthru
      _
    // Predicated region
    $region46: #{net_forward.1} parent=1 // pred_check
      _
    $region47: #{net_forward.1} parent=1 // pred_check_branch
      %45 = sbr.rel (0) target = $region49
    $region48: #{net_forward.1} parent=1 // pred_region
      _
    $region49: #{net_forward.1} parent=1 // pred_fallthru
      _
    // Predicated region
    $region50: #{net_forward.1} parent=1 // pred_check
      _
    $region51: #{net_forward.1} parent=1 // pred_check_branch
      %47 = sbr.rel (0) target = $region53
    $region52: #{net_forward.1} parent=1 // pred_region
      _
    $region53: #{net_forward.1} parent=1 // pred_fallthru
      _
    %p50 = scmp.lt.u32.totalorder 4, 8
    %p51 = pneg %p50
    // Predicated region
    $region54: #{net_forward.1} parent=1 // pred_check
      _
    $region55: #{net_forward.1} parent=1 // pred_check_branch
      %53 = sbr.rel (%p50) target = $region57
    $region56: #{net_forward.1} parent=1 // pred_region
      %s834 = sand.u32 4, 7
      %p835 = scmp.eq.s32.totalorder %s834, 0
      %p836 = pneg %p835
      // Predicated region
      $region69: #{net_forward.1} parent=56 // pred_check
        _
      $region70: #{net_forward.1} parent=56 // pred_check_branch
        %838 = sbr.rel (%p835) target = $region72
      $region71: #{net_forward.1} parent=56 // pred_region
        %s839 = sand.u32 4, 7
        %s840 = ssub.s32 4, %s839
        %s841 = scalar_lea.vmem %s5, %s840
        %s842 = ssub.s32 4, %s839
        %s843 = scalar_lea.vmem [#allocation2], %s842
        loop: start=0, step=1, limit=1
        $region73: #{net_forward.1} parent=71 // loop_pre_header
          _
        $region74: #{net_forward.1} parent=71 // loop_header
          %s845 = sphi 0, %s849
          %p846 = scmp.ge.s32.totalorder %s845, 1
          %s850 = sphi %s5, %s5
          %s851 = sphi [#allocation2], [#allocation2]
        $region75: #{net_forward.1} parent=71 // loop_header_branch
          %848 = sbr.rel (%p846) target = $region79
        $region76: #{net_forward.1} parent=71 // loop_body
          _
        $region77: #{net_forward.1} parent=71 // loop_footer
          %s849 = sadd.s32 1, %s845
        $region78: #{net_forward.1} parent=71 // loop_footer_branch
          %844 = sbr.rel target = $region74
        $region79: #{net_forward.1} parent=71 // loop_exit
          _
        %s852 = sshllo.u32 0, %s839
        loop: start=0, step=1, limit=1
        $region80: #{net_forward.1} parent=71 // loop_pre_header
          _
        $region81: #{net_forward.1} parent=71 // loop_header
          %s854 = sphi 0, %s858
          %p855 = scmp.ge.s32.totalorder %s854, 1
          %s859 = sphi %s841, %s841
          %s860 = sphi %s843, %s843
        $region82: #{net_forward.1} parent=71 // loop_header_branch
          %857 = sbr.rel (%p855) target = $region86
        $region83: #{net_forward.1} parent=71 // loop_body
          %v861 = vld [vmem:[%s859] sm:%s852]
          %862 = vst [vmem:[%s860] sm:%s852] %v861
          %v863 = vld [vmem:[%s859 + $0x40] sm:%s852]
          %864 = vst [vmem:[%s860 + $0x4] sm:%s852] %v863
          %v865 = vld [vmem:[%s859 + $0x4] sm:%s852]
          %866 = vst [vmem:[%s860 + $0x8] sm:%s852] %v865
          %v867 = vld [vmem:[%s859 + $0x44] sm:%s852]
          %868 = vst [vmem:[%s860 + $0xc] sm:%s852] %v867
          %v869 = vld [vmem:[%s859 + $0x8] sm:%s852]
          %870 = vst [vmem:[%s860 + $0x10] sm:%s852] %v869
          %v871 = vld [vmem:[%s859 + $0x48] sm:%s852]
          %872 = vst [vmem:[%s860 + $0x14] sm:%s852] %v871
          %v873 = vld [vmem:[%s859 + $0xc] sm:%s852]
          %874 = vst [vmem:[%s860 + $0x18] sm:%s852] %v873
          %v875 = vld [vmem:[%s859 + $0x4c] sm:%s852]
          %876 = vst [vmem:[%s860 + $0x1c] sm:%s852] %v875
          %v877 = vld [vmem:[%s859 + $0x10] sm:%s852]
          %878 = vst [vmem:[%s860 + $0x20] sm:%s852] %v877
          %v879 = vld [vmem:[%s859 + $0x50] sm:%s852]
          %880 = vst [vmem:[%s860 + $0x24] sm:%s852] %v879
          %v881 = vld [vmem:[%s859 + $0x14] sm:%s852]
          %882 = vst [vmem:[%s860 + $0x28] sm:%s852] %v881
          %v883 = vld [vmem:[%s859 + $0x54] sm:%s852]
          %884 = vst [vmem:[%s860 + $0x2c] sm:%s852] %v883
          %v885 = vld [vmem:[%s859 + $0x18] sm:%s852]
          %886 = vst [vmem:[%s860 + $0x30] sm:%s852] %v885
          %v887 = vld [vmem:[%s859 + $0x58] sm:%s852]
          %888 = vst [vmem:[%s860 + $0x34] sm:%s852] %v887
          %v889 = vld [vmem:[%s859 + $0x1c] sm:%s852]
          %890 = vst [vmem:[%s860 + $0x38] sm:%s852] %v889
          %v891 = vld [vmem:[%s859 + $0x5c] sm:%s852]
          %892 = vst [vmem:[%s860 + $0x3c] sm:%s852] %v891
          %v893 = vld [vmem:[%s859 + $0x20] sm:%s852]
          %894 = vst [vmem:[%s860 + $0x40] sm:%s852] %v893
          %v895 = vld [vmem:[%s859 + $0x60] sm:%s852]
          %896 = vst [vmem:[%s860 + $0x44] sm:%s852] %v895
          %v897 = vld [vmem:[%s859 + $0x24] sm:%s852]
          %898 = vst [vmem:[%s860 + $0x48] sm:%s852] %v897
          %v899 = vld [vmem:[%s859 + $0x64] sm:%s852]
          %900 = vst [vmem:[%s860 + $0x4c] sm:%s852] %v899
          %v901 = vld [vmem:[%s859 + $0x28] sm:%s852]
          %902 = vst [vmem:[%s860 + $0x50] sm:%s852] %v901
          %v903 = vld [vmem:[%s859 + $0x68] sm:%s852]
          %904 = vst [vmem:[%s860 + $0x54] sm:%s852] %v903
          %v905 = vld [vmem:[%s859 + $0x2c] sm:%s852]
          %906 = vst [vmem:[%s860 + $0x58] sm:%s852] %v905
          %v907 = vld [vmem:[%s859 + $0x6c] sm:%s852]
          %908 = vst [vmem:[%s860 + $0x5c] sm:%s852] %v907
          %v909 = vld [vmem:[%s859 + $0x30] sm:%s852]
          %910 = vst [vmem:[%s860 + $0x60] sm:%s852] %v909
          %v911 = vld [vmem:[%s859 + $0x70] sm:%s852]
          %912 = vst [vmem:[%s860 + $0x64] sm:%s852] %v911
          %v913 = vld [vmem:[%s859 + $0x34] sm:%s852]
          %914 = vst [vmem:[%s860 + $0x68] sm:%s852] %v913
          %v915 = vld [vmem:[%s859 + $0x74] sm:%s852]
          %916 = vst [vmem:[%s860 + $0x6c] sm:%s852] %v915
          %v917 = vld [vmem:[%s859 + $0x38] sm:%s852]
          %918 = vst [vmem:[%s860 + $0x70] sm:%s852] %v917
          %v919 = vld [vmem:[%s859 + $0x78] sm:%s852]
          %920 = vst [vmem:[%s860 + $0x74] sm:%s852] %v919
          %v921 = vld [vmem:[%s859 + $0x3c] sm:%s852]
          %922 = vst [vmem:[%s860 + $0x78] sm:%s852] %v921
          %v923 = vld [vmem:[%s859 + $0x7c] sm:%s852]
          %924 = vst [vmem:[%s860 + $0x7c] sm:%s852] %v923
          %v925 = vld [vmem:[%s859 + $0x80] sm:%s852]
          %926 = vst [vmem:[%s860 + $0x80] sm:%s852] %v925
          %v927 = vld [vmem:[%s859 + $0xc0] sm:%s852]
          %928 = vst [vmem:[%s860 + $0x84] sm:%s852] %v927
          %v929 = vld [vmem:[%s859 + $0x84] sm:%s852]
          %930 = vst [vmem:[%s860 + $0x88] sm:%s852] %v929
          %v931 = vld [vmem:[%s859 + $0xc4] sm:%s852]
          %932 = vst [vmem:[%s860 + $0x8c] sm:%s852] %v931
          %v933 = vld [vmem:[%s859 + $0x88] sm:%s852]
          %934 = vst [vmem:[%s860 + $0x90] sm:%s852] %v933
          %v935 = vld [vmem:[%s859 + $0xc8] sm:%s852]
          %936 = vst [vmem:[%s860 + $0x94] sm:%s852] %v935
          %v937 = vld [vmem:[%s859 + $0x8c] sm:%s852]
          %938 = vst [vmem:[%s860 + $0x98] sm:%s852] %v937
          %v939 = vld [vmem:[%s859 + $0xcc] sm:%s852]
          %940 = vst [vmem:[%s860 + $0x9c] sm:%s852] %v939
          %v941 = vld [vmem:[%s859 + $0x90] sm:%s852]
          %942 = vst [vmem:[%s860 + $0xa0] sm:%s852] %v941
          %v943 = vld [vmem:[%s859 + $0xd0] sm:%s852]
          %944 = vst [vmem:[%s860 + $0xa4] sm:%s852] %v943
          %v945 = vld [vmem:[%s859 + $0x94] sm:%s852]
          %946 = vst [vmem:[%s860 + $0xa8] sm:%s852] %v945
          %v947 = vld [vmem:[%s859 + $0xd4] sm:%s852]
          %948 = vst [vmem:[%s860 + $0xac] sm:%s852] %v947
          %v949 = vld [vmem:[%s859 + $0x98] sm:%s852]
          %950 = vst [vmem:[%s860 + $0xb0] sm:%s852] %v949
          %v951 = vld [vmem:[%s859 + $0xd8] sm:%s852]
          %952 = vst [vmem:[%s860 + $0xb4] sm:%s852] %v951
          %v953 = vld [vmem:[%s859 + $0x9c] sm:%s852]
          %954 = vst [vmem:[%s860 + $0xb8] sm:%s852] %v953
          %v955 = vld [vmem:[%s859 + $0xdc] sm:%s852]
          %956 = vst [vmem:[%s860 + $0xbc] sm:%s852] %v955
          %v957 = vld [vmem:[%s859 + $0xa0] sm:%s852]
          %958 = vst [vmem:[%s860 + $0xc0] sm:%s852] %v957
          %v959 = vld [vmem:[%s859 + $0xe0] sm:%s852]
          %960 = vst [vmem:[%s860 + $0xc4] sm:%s852] %v959
          %v961 = vld [vmem:[%s859 + $0xa4] sm:%s852]
          %962 = vst [vmem:[%s860 + $0xc8] sm:%s852] %v961
          %v963 = vld [vmem:[%s859 + $0xe4] sm:%s852]
          %964 = vst [vmem:[%s860 + $0xcc] sm:%s852] %v963
          %v965 = vld [vmem:[%s859 + $0xa8] sm:%s852]
          %966 = vst [vmem:[%s860 + $0xd0] sm:%s852] %v965
          %v967 = vld [vmem:[%s859 + $0xe8] sm:%s852]
          %968 = vst [vmem:[%s860 + $0xd4] sm:%s852] %v967
          %v969 = vld [vmem:[%s859 + $0xac] sm:%s852]
          %970 = vst [vmem:[%s860 + $0xd8] sm:%s852] %v969
          %v971 = vld [vmem:[%s859 + $0xec] sm:%s852]
          %972 = vst [vmem:[%s860 + $0xdc] sm:%s852] %v971
          %v973 = vld [vmem:[%s859 + $0xb0] sm:%s852]
          %974 = vst [vmem:[%s860 + $0xe0] sm:%s852] %v973
          %v975 = vld [vmem:[%s859 + $0xf0] sm:%s852]
          %976 = vst [vmem:[%s860 + $0xe4] sm:%s852] %v975
          %v977 = vld [vmem:[%s859 + $0xb4] sm:%s852]
          %978 = vst [vmem:[%s860 + $0xe8] sm:%s852] %v977
          %v979 = vld [vmem:[%s859 + $0xf4] sm:%s852]
          %980 = vst [vmem:[%s860 + $0xec] sm:%s852] %v979
          %v981 = vld [vmem:[%s859 + $0xb8] sm:%s852]
          %982 = vst [vmem:[%s860 + $0xf0] sm:%s852] %v981
          %v983 = vld [vmem:[%s859 + $0xf8] sm:%s852]
          %984 = vst [vmem:[%s860 + $0xf4] sm:%s852] %v983
          %v985 = vld [vmem:[%s859 + $0xbc] sm:%s852]
          %986 = vst [vmem:[%s860 + $0xf8] sm:%s852] %v985
          %v987 = vld [vmem:[%s859 + $0xfc] sm:%s852]
          %988 = vst [vmem:[%s860 + $0xfc] sm:%s852] %v987
          %v989 = vld [vmem:[%s859 + $0x100] sm:%s852]
          %990 = vst [vmem:[%s860 + $0x100] sm:%s852] %v989
          %v991 = vld [vmem:[%s859 + $0x140] sm:%s852]
          %992 = vst [vmem:[%s860 + $0x104] sm:%s852] %v991
          %v993 = vld [vmem:[%s859 + $0x104] sm:%s852]
          %994 = vst [vmem:[%s860 + $0x108] sm:%s852] %v993
          %v995 = vld [vmem:[%s859 + $0x144] sm:%s852]
          %996 = vst [vmem:[%s860 + $0x10c] sm:%s852] %v995
          %v997 = vld [vmem:[%s859 + $0x108] sm:%s852]
          %998 = vst [vmem:[%s860 + $0x110] sm:%s852] %v997
          %v999 = vld [vmem:[%s859 + $0x148] sm:%s852]
          %1000 = vst [vmem:[%s860 + $0x114] sm:%s852] %v999
          %v1001 = vld [vmem:[%s859 + $0x10c] sm:%s852]
          %1002 = vst [vmem:[%s860 + $0x118] sm:%s852] %v1001
          %v1003 = vld [vmem:[%s859 + $0x14c] sm:%s852]
          %1004 = vst [vmem:[%s860 + $0x11c] sm:%s852] %v1003
          %v1005 = vld [vmem:[%s859 + $0x110] sm:%s852]
          %1006 = vst [vmem:[%s860 + $0x120] sm:%s852] %v1005
          %v1007 = vld [vmem:[%s859 + $0x150] sm:%s852]
          %1008 = vst [vmem:[%s860 + $0x124] sm:%s852] %v1007
          %v1009 = vld [vmem:[%s859 + $0x114] sm:%s852]
          %1010 = vst [vmem:[%s860 + $0x128] sm:%s852] %v1009
          %v1011 = vld [vmem:[%s859 + $0x154] sm:%s852]
          %1012 = vst [vmem:[%s860 + $0x12c] sm:%s852] %v1011
          %v1013 = vld [vmem:[%s859 + $0x118] sm:%s852]
          %1014 = vst [vmem:[%s860 + $0x130] sm:%s852] %v1013
          %v1015 = vld [vmem:[%s859 + $0x158] sm:%s852]
          %1016 = vst [vmem:[%s860 + $0x134] sm:%s852] %v1015
          %v1017 = vld [vmem:[%s859 + $0x11c] sm:%s852]
          %1018 = vst [vmem:[%s860 + $0x138] sm:%s852] %v1017
          %v1019 = vld [vmem:[%s859 + $0x15c] sm:%s852]
          %1020 = vst [vmem:[%s860 + $0x13c] sm:%s852] %v1019
          %v1021 = vld [vmem:[%s859 + $0x120] sm:%s852]
          %1022 = vst [vmem:[%s860 + $0x140] sm:%s852] %v1021
          %v1023 = vld [vmem:[%s859 + $0x160] sm:%s852]
          %1024 = vst [vmem:[%s860 + $0x144] sm:%s852] %v1023
          %v1025 = vld [vmem:[%s859 + $0x124] sm:%s852]
          %1026 = vst [vmem:[%s860 + $0x148] sm:%s852] %v1025
          %v1027 = vld [vmem:[%s859 + $0x164] sm:%s852]
          %1028 = vst [vmem:[%s860 + $0x14c] sm:%s852] %v1027
          %v1029 = vld [vmem:[%s859 + $0x128] sm:%s852]
          %1030 = vst [vmem:[%s860 + $0x150] sm:%s852] %v1029
          %v1031 = vld [vmem:[%s859 + $0x168] sm:%s852]
          %1032 = vst [vmem:[%s860 + $0x154] sm:%s852] %v1031
          %v1033 = vld [vmem:[%s859 + $0x12c] sm:%s852]
          %1034 = vst [vmem:[%s860 + $0x158] sm:%s852] %v1033
          %v1035 = vld [vmem:[%s859 + $0x16c] sm:%s852]
          %1036 = vst [vmem:[%s860 + $0x15c] sm:%s852] %v1035
          %v1037 = vld [vmem:[%s859 + $0x130] sm:%s852]
          %1038 = vst [vmem:[%s860 + $0x160] sm:%s852] %v1037
          %v1039 = vld [vmem:[%s859 + $0x170] sm:%s852]
          %1040 = vst [vmem:[%s860 + $0x164] sm:%s852] %v1039
          %v1041 = vld [vmem:[%s859 + $0x134] sm:%s852]
          %1042 = vst [vmem:[%s860 + $0x168] sm:%s852] %v1041
          %v1043 = vld [vmem:[%s859 + $0x174] sm:%s852]
          %1044 = vst [vmem:[%s860 + $0x16c] sm:%s852] %v1043
          %v1045 = vld [vmem:[%s859 + $0x138] sm:%s852]
          %1046 = vst [vmem:[%s860 + $0x170] sm:%s852] %v1045
          %v1047 = vld [vmem:[%s859 + $0x178] sm:%s852]
          %1048 = vst [vmem:[%s860 + $0x174] sm:%s852] %v1047
          %v1049 = vld [vmem:[%s859 + $0x13c] sm:%s852]
          %1050 = vst [vmem:[%s860 + $0x178] sm:%s852] %v1049
          %v1051 = vld [vmem:[%s859 + $0x17c] sm:%s852]
          %1052 = vst [vmem:[%s860 + $0x17c] sm:%s852] %v1051
          %v1053 = vld [vmem:[%s859 + $0x180] sm:%s852]
          %1054 = vst [vmem:[%s860 + $0x180] sm:%s852] %v1053
          %v1055 = vld [vmem:[%s859 + $0x1c0] sm:%s852]
          %1056 = vst [vmem:[%s860 + $0x184] sm:%s852] %v1055
          %v1057 = vld [vmem:[%s859 + $0x184] sm:%s852]
          %1058 = vst [vmem:[%s860 + $0x188] sm:%s852] %v1057
          %v1059 = vld [vmem:[%s859 + $0x1c4] sm:%s852]
          %1060 = vst [vmem:[%s860 + $0x18c] sm:%s852] %v1059
          %v1061 = vld [vmem:[%s859 + $0x188] sm:%s852]
          %1062 = vst [vmem:[%s860 + $0x190] sm:%s852] %v1061
          %v1063 = vld [vmem:[%s859 + $0x1c8] sm:%s852]
          %1064 = vst [vmem:[%s860 + $0x194] sm:%s852] %v1063
          %v1065 = vld [vmem:[%s859 + $0x18c] sm:%s852]
          %1066 = vst [vmem:[%s860 + $0x198] sm:%s852] %v1065
          %v1067 = vld [vmem:[%s859 + $0x1cc] sm:%s852]
          %1068 = vst [vmem:[%s860 + $0x19c] sm:%s852] %v1067
          %v1069 = vld [vmem:[%s859 + $0x190] sm:%s852]
          %1070 = vst [vmem:[%s860 + $0x1a0] sm:%s852] %v1069
          %v1071 = vld [vmem:[%s859 + $0x1d0] sm:%s852]
          %1072 = vst [vmem:[%s860 + $0x1a4] sm:%s852] %v1071
          %v1073 = vld [vmem:[%s859 + $0x194] sm:%s852]
          %1074 = vst [vmem:[%s860 + $0x1a8] sm:%s852] %v1073
          %v1075 = vld [vmem:[%s859 + $0x1d4] sm:%s852]
          %1076 = vst [vmem:[%s860 + $0x1ac] sm:%s852] %v1075
          %v1077 = vld [vmem:[%s859 + $0x198] sm:%s852]
          %1078 = vst [vmem:[%s860 + $0x1b0] sm:%s852] %v1077
          %v1079 = vld [vmem:[%s859 + $0x1d8] sm:%s852]
          %1080 = vst [vmem:[%s860 + $0x1b4] sm:%s852] %v1079
          %v1081 = vld [vmem:[%s859 + $0x19c] sm:%s852]
          %1082 = vst [vmem:[%s860 + $0x1b8] sm:%s852] %v1081
          %v1083 = vld [vmem:[%s859 + $0x1dc] sm:%s852]
          %1084 = vst [vmem:[%s860 + $0x1bc] sm:%s852] %v1083
          %v1085 = vld [vmem:[%s859 + $0x1a0] sm:%s852]
          %1086 = vst [vmem:[%s860 + $0x1c0] sm:%s852] %v1085
          %v1087 = vld [vmem:[%s859 + $0x1e0] sm:%s852]
          %1088 = vst [vmem:[%s860 + $0x1c4] sm:%s852] %v1087
          %v1089 = vld [vmem:[%s859 + $0x1a4] sm:%s852]
          %1090 = vst [vmem:[%s860 + $0x1c8] sm:%s852] %v1089
          %v1091 = vld [vmem:[%s859 + $0x1e4] sm:%s852]
          %1092 = vst [vmem:[%s860 + $0x1cc] sm:%s852] %v1091
          %v1093 = vld [vmem:[%s859 + $0x1a8] sm:%s852]
          %1094 = vst [vmem:[%s860 + $0x1d0] sm:%s852] %v1093
          %v1095 = vld [vmem:[%s859 + $0x1e8] sm:%s852]
          %1096 = vst [vmem:[%s860 + $0x1d4] sm:%s852] %v1095
          %v1097 = vld [vmem:[%s859 + $0x1ac] sm:%s852]
          %1098 = vst [vmem:[%s860 + $0x1d8] sm:%s852] %v1097
          %v1099 = vld [vmem:[%s859 + $0x1ec] sm:%s852]
          %1100 = vst [vmem:[%s860 + $0x1dc] sm:%s852] %v1099
          %v1101 = vld [vmem:[%s859 + $0x1b0] sm:%s852]
          %1102 = vst [vmem:[%s860 + $0x1e0] sm:%s852] %v1101
          %v1103 = vld [vmem:[%s859 + $0x1f0] sm:%s852]
          %1104 = vst [vmem:[%s860 + $0x1e4] sm:%s852] %v1103
          %v1105 = vld [vmem:[%s859 + $0x1b4] sm:%s852]
          %1106 = vst [vmem:[%s860 + $0x1e8] sm:%s852] %v1105
          %v1107 = vld [vmem:[%s859 + $0x1f4] sm:%s852]
          %1108 = vst [vmem:[%s860 + $0x1ec] sm:%s852] %v1107
          %v1109 = vld [vmem:[%s859 + $0x1b8] sm:%s852]
          %1110 = vst [vmem:[%s860 + $0x1f0] sm:%s852] %v1109
          %v1111 = vld [vmem:[%s859 + $0x1f8] sm:%s852]
          %1112 = vst [vmem:[%s860 + $0x1f4] sm:%s852] %v1111
          %v1113 = vld [vmem:[%s859 + $0x1bc] sm:%s852]
          %1114 = vst [vmem:[%s860 + $0x1f8] sm:%s852] %v1113
          %v1115 = vld [vmem:[%s859 + $0x1fc] sm:%s852]
          %1116 = vst [vmem:[%s860 + $0x1fc] sm:%s852] %v1115
          %v1117 = vld [vmem:[%s859 + $0x200] sm:%s852]
          %1118 = vst [vmem:[%s860 + $0x200] sm:%s852] %v1117
          %v1119 = vld [vmem:[%s859 + $0x240] sm:%s852]
          %1120 = vst [vmem:[%s860 + $0x204] sm:%s852] %v1119
          %v1121 = vld [vmem:[%s859 + $0x204] sm:%s852]
          %1122 = vst [vmem:[%s860 + $0x208] sm:%s852] %v1121
          %v1123 = vld [vmem:[%s859 + $0x244] sm:%s852]
          %1124 = vst [vmem:[%s860 + $0x20c] sm:%s852] %v1123
          %v1125 = vld [vmem:[%s859 + $0x208] sm:%s852]
          %1126 = vst [vmem:[%s860 + $0x210] sm:%s852] %v1125
          %v1127 = vld [vmem:[%s859 + $0x248] sm:%s852]
          %1128 = vst [vmem:[%s860 + $0x214] sm:%s852] %v1127
          %v1129 = vld [vmem:[%s859 + $0x20c] sm:%s852]
          %1130 = vst [vmem:[%s860 + $0x218] sm:%s852] %v1129
          %v1131 = vld [vmem:[%s859 + $0x24c] sm:%s852]
          %1132 = vst [vmem:[%s860 + $0x21c] sm:%s852] %v1131
          %v1133 = vld [vmem:[%s859 + $0x210] sm:%s852]
          %1134 = vst [vmem:[%s860 + $0x220] sm:%s852] %v1133
          %v1135 = vld [vmem:[%s859 + $0x250] sm:%s852]
          %1136 = vst [vmem:[%s860 + $0x224] sm:%s852] %v1135
          %v1137 = vld [vmem:[%s859 + $0x214] sm:%s852]
          %1138 = vst [vmem:[%s860 + $0x228] sm:%s852] %v1137
          %v1139 = vld [vmem:[%s859 + $0x254] sm:%s852]
          %1140 = vst [vmem:[%s860 + $0x22c] sm:%s852] %v1139
          %v1141 = vld [vmem:[%s859 + $0x218] sm:%s852]
          %1142 = vst [vmem:[%s860 + $0x230] sm:%s852] %v1141
          %v1143 = vld [vmem:[%s859 + $0x258] sm:%s852]
          %1144 = vst [vmem:[%s860 + $0x234] sm:%s852] %v1143
          %v1145 = vld [vmem:[%s859 + $0x21c] sm:%s852]
          %1146 = vst [vmem:[%s860 + $0x238] sm:%s852] %v1145
          %v1147 = vld [vmem:[%s859 + $0x25c] sm:%s852]
          %1148 = vst [vmem:[%s860 + $0x23c] sm:%s852] %v1147
          %v1149 = vld [vmem:[%s859 + $0x220] sm:%s852]
          %1150 = vst [vmem:[%s860 + $0x240] sm:%s852] %v1149
          %v1151 = vld [vmem:[%s859 + $0x260] sm:%s852]
          %1152 = vst [vmem:[%s860 + $0x244] sm:%s852] %v1151
          %v1153 = vld [vmem:[%s859 + $0x224] sm:%s852]
          %1154 = vst [vmem:[%s860 + $0x248] sm:%s852] %v1153
          %v1155 = vld [vmem:[%s859 + $0x264] sm:%s852]
          %1156 = vst [vmem:[%s860 + $0x24c] sm:%s852] %v1155
          %v1157 = vld [vmem:[%s859 + $0x228] sm:%s852]
          %1158 = vst [vmem:[%s860 + $0x250] sm:%s852] %v1157
          %v1159 = vld [vmem:[%s859 + $0x268] sm:%s852]
          %1160 = vst [vmem:[%s860 + $0x254] sm:%s852] %v1159
          %v1161 = vld [vmem:[%s859 + $0x22c] sm:%s852]
          %1162 = vst [vmem:[%s860 + $0x258] sm:%s852] %v1161
          %v1163 = vld [vmem:[%s859 + $0x26c] sm:%s852]
          %1164 = vst [vmem:[%s860 + $0x25c] sm:%s852] %v1163
          %v1165 = vld [vmem:[%s859 + $0x230] sm:%s852]
          %1166 = vst [vmem:[%s860 + $0x260] sm:%s852] %v1165
          %v1167 = vld [vmem:[%s859 + $0x270] sm:%s852]
          %1168 = vst [vmem:[%s860 + $0x264] sm:%s852] %v1167
          %v1169 = vld [vmem:[%s859 + $0x234] sm:%s852]
          %1170 = vst [vmem:[%s860 + $0x268] sm:%s852] %v1169
          %v1171 = vld [vmem:[%s859 + $0x274] sm:%s852]
          %1172 = vst [vmem:[%s860 + $0x26c] sm:%s852] %v1171
          %v1173 = vld [vmem:[%s859 + $0x238] sm:%s852]
          %1174 = vst [vmem:[%s860 + $0x270] sm:%s852] %v1173
          %v1175 = vld [vmem:[%s859 + $0x278] sm:%s852]
          %1176 = vst [vmem:[%s860 + $0x274] sm:%s852] %v1175
          %v1177 = vld [vmem:[%s859 + $0x23c] sm:%s852]
          %1178 = vst [vmem:[%s860 + $0x278] sm:%s852] %v1177
          %v1179 = vld [vmem:[%s859 + $0x27c] sm:%s852]
          %1180 = vst [vmem:[%s860 + $0x27c] sm:%s852] %v1179
          %v1181 = vld [vmem:[%s859 + $0x280] sm:%s852]
          %1182 = vst [vmem:[%s860 + $0x280] sm:%s852] %v1181
          %v1183 = vld [vmem:[%s859 + $0x2c0] sm:%s852]
          %1184 = vst [vmem:[%s860 + $0x284] sm:%s852] %v1183
          %v1185 = vld [vmem:[%s859 + $0x284] sm:%s852]
          %1186 = vst [vmem:[%s860 + $0x288] sm:%s852] %v1185
          %v1187 = vld [vmem:[%s859 + $0x2c4] sm:%s852]
          %1188 = vst [vmem:[%s860 + $0x28c] sm:%s852] %v1187
          %v1189 = vld [vmem:[%s859 + $0x288] sm:%s852]
          %1190 = vst [vmem:[%s860 + $0x290] sm:%s852] %v1189
          %v1191 = vld [vmem:[%s859 + $0x2c8] sm:%s852]
          %1192 = vst [vmem:[%s860 + $0x294] sm:%s852] %v1191
          %v1193 = vld [vmem:[%s859 + $0x28c] sm:%s852]
          %1194 = vst [vmem:[%s860 + $0x298] sm:%s852] %v1193
          %v1195 = vld [vmem:[%s859 + $0x2cc] sm:%s852]
          %1196 = vst [vmem:[%s860 + $0x29c] sm:%s852] %v1195
          %v1197 = vld [vmem:[%s859 + $0x290] sm:%s852]
          %1198 = vst [vmem:[%s860 + $0x2a0] sm:%s852] %v1197
          %v1199 = vld [vmem:[%s859 + $0x2d0] sm:%s852]
          %1200 = vst [vmem:[%s860 + $0x2a4] sm:%s852] %v1199
          %v1201 = vld [vmem:[%s859 + $0x294] sm:%s852]
          %1202 = vst [vmem:[%s860 + $0x2a8] sm:%s852] %v1201
          %v1203 = vld [vmem:[%s859 + $0x2d4] sm:%s852]
          %1204 = vst [vmem:[%s860 + $0x2ac] sm:%s852] %v1203
          %v1205 = vld [vmem:[%s859 + $0x298] sm:%s852]
          %1206 = vst [vmem:[%s860 + $0x2b0] sm:%s852] %v1205
          %v1207 = vld [vmem:[%s859 + $0x2d8] sm:%s852]
          %1208 = vst [vmem:[%s860 + $0x2b4] sm:%s852] %v1207
          %v1209 = vld [vmem:[%s859 + $0x29c] sm:%s852]
          %1210 = vst [vmem:[%s860 + $0x2b8] sm:%s852] %v1209
          %v1211 = vld [vmem:[%s859 + $0x2dc] sm:%s852]
          %1212 = vst [vmem:[%s860 + $0x2bc] sm:%s852] %v1211
          %v1213 = vld [vmem:[%s859 + $0x2a0] sm:%s852]
          %1214 = vst [vmem:[%s860 + $0x2c0] sm:%s852] %v1213
          %v1215 = vld [vmem:[%s859 + $0x2e0] sm:%s852]
          %1216 = vst [vmem:[%s860 + $0x2c4] sm:%s852] %v1215
          %v1217 = vld [vmem:[%s859 + $0x2a4] sm:%s852]
          %1218 = vst [vmem:[%s860 + $0x2c8] sm:%s852] %v1217
          %v1219 = vld [vmem:[%s859 + $0x2e4] sm:%s852]
          %1220 = vst [vmem:[%s860 + $0x2cc] sm:%s852] %v1219
          %v1221 = vld [vmem:[%s859 + $0x2a8] sm:%s852]
          %1222 = vst [vmem:[%s860 + $0x2d0] sm:%s852] %v1221
          %v1223 = vld [vmem:[%s859 + $0x2e8] sm:%s852]
          %1224 = vst [vmem:[%s860 + $0x2d4] sm:%s852] %v1223
          %v1225 = vld [vmem:[%s859 + $0x2ac] sm:%s852]
          %1226 = vst [vmem:[%s860 + $0x2d8] sm:%s852] %v1225
          %v1227 = vld [vmem:[%s859 + $0x2ec] sm:%s852]
          %1228 = vst [vmem:[%s860 + $0x2dc] sm:%s852] %v1227
          %v1229 = vld [vmem:[%s859 + $0x2b0] sm:%s852]
          %1230 = vst [vmem:[%s860 + $0x2e0] sm:%s852] %v1229
          %v1231 = vld [vmem:[%s859 + $0x2f0] sm:%s852]
          %1232 = vst [vmem:[%s860 + $0x2e4] sm:%s852] %v1231
          %v1233 = vld [vmem:[%s859 + $0x2b4] sm:%s852]
          %1234 = vst [vmem:[%s860 + $0x2e8] sm:%s852] %v1233
          %v1235 = vld [vmem:[%s859 + $0x2f4] sm:%s852]
          %1236 = vst [vmem:[%s860 + $0x2ec] sm:%s852] %v1235
          %v1237 = vld [vmem:[%s859 + $0x2b8] sm:%s852]
          %1238 = vst [vmem:[%s860 + $0x2f0] sm:%s852] %v1237
          %v1239 = vld [vmem:[%s859 + $0x2f8] sm:%s852]
          %1240 = vst [vmem:[%s860 + $0x2f4] sm:%s852] %v1239
          %v1241 = vld [vmem:[%s859 + $0x2bc] sm:%s852]
          %1242 = vst [vmem:[%s860 + $0x2f8] sm:%s852] %v1241
          %v1243 = vld [vmem:[%s859 + $0x2fc] sm:%s852]
          %1244 = vst [vmem:[%s860 + $0x2fc] sm:%s852] %v1243
          %v1245 = vld [vmem:[%s859 + $0x300] sm:%s852]
          %1246 = vst [vmem:[%s860 + $0x300] sm:%s852] %v1245
          %v1247 = vld [vmem:[%s859 + $0x340] sm:%s852]
          %1248 = vst [vmem:[%s860 + $0x304] sm:%s852] %v1247
          %v1249 = vld [vmem:[%s859 + $0x304] sm:%s852]
          %1250 = vst [vmem:[%s860 + $0x308] sm:%s852] %v1249
          %v1251 = vld [vmem:[%s859 + $0x344] sm:%s852]
          %1252 = vst [vmem:[%s860 + $0x30c] sm:%s852] %v1251
          %v1253 = vld [vmem:[%s859 + $0x308] sm:%s852]
          %1254 = vst [vmem:[%s860 + $0x310] sm:%s852] %v1253
          %v1255 = vld [vmem:[%s859 + $0x348] sm:%s852]
          %1256 = vst [vmem:[%s860 + $0x314] sm:%s852] %v1255
          %v1257 = vld [vmem:[%s859 + $0x30c] sm:%s852]
          %1258 = vst [vmem:[%s860 + $0x318] sm:%s852] %v1257
          %v1259 = vld [vmem:[%s859 + $0x34c] sm:%s852]
          %1260 = vst [vmem:[%s860 + $0x31c] sm:%s852] %v1259
          %v1261 = vld [vmem:[%s859 + $0x310] sm:%s852]
          %1262 = vst [vmem:[%s860 + $0x320] sm:%s852] %v1261
          %v1263 = vld [vmem:[%s859 + $0x350] sm:%s852]
          %1264 = vst [vmem:[%s860 + $0x324] sm:%s852] %v1263
          %v1265 = vld [vmem:[%s859 + $0x314] sm:%s852]
          %1266 = vst [vmem:[%s860 + $0x328] sm:%s852] %v1265
          %v1267 = vld [vmem:[%s859 + $0x354] sm:%s852]
          %1268 = vst [vmem:[%s860 + $0x32c] sm:%s852] %v1267
          %v1269 = vld [vmem:[%s859 + $0x318] sm:%s852]
          %1270 = vst [vmem:[%s860 + $0x330] sm:%s852] %v1269
          %v1271 = vld [vmem:[%s859 + $0x358] sm:%s852]
          %1272 = vst [vmem:[%s860 + $0x334] sm:%s852] %v1271
          %v1273 = vld [vmem:[%s859 + $0x31c] sm:%s852]
          %1274 = vst [vmem:[%s860 + $0x338] sm:%s852] %v1273
          %v1275 = vld [vmem:[%s859 + $0x35c] sm:%s852]
          %1276 = vst [vmem:[%s860 + $0x33c] sm:%s852] %v1275
          %v1277 = vld [vmem:[%s859 + $0x320] sm:%s852]
          %1278 = vst [vmem:[%s860 + $0x340] sm:%s852] %v1277
          %v1279 = vld [vmem:[%s859 + $0x360] sm:%s852]
          %1280 = vst [vmem:[%s860 + $0x344] sm:%s852] %v1279
          %v1281 = vld [vmem:[%s859 + $0x324] sm:%s852]
          %1282 = vst [vmem:[%s860 + $0x348] sm:%s852] %v1281
          %v1283 = vld [vmem:[%s859 + $0x364] sm:%s852]
          %1284 = vst [vmem:[%s860 + $0x34c] sm:%s852] %v1283
          %v1285 = vld [vmem:[%s859 + $0x328] sm:%s852]
          %1286 = vst [vmem:[%s860 + $0x350] sm:%s852] %v1285
          %v1287 = vld [vmem:[%s859 + $0x368] sm:%s852]
          %1288 = vst [vmem:[%s860 + $0x354] sm:%s852] %v1287
          %v1289 = vld [vmem:[%s859 + $0x32c] sm:%s852]
          %1290 = vst [vmem:[%s860 + $0x358] sm:%s852] %v1289
          %v1291 = vld [vmem:[%s859 + $0x36c] sm:%s852]
          %1292 = vst [vmem:[%s860 + $0x35c] sm:%s852] %v1291
          %v1293 = vld [vmem:[%s859 + $0x330] sm:%s852]
          %1294 = vst [vmem:[%s860 + $0x360] sm:%s852] %v1293
          %v1295 = vld [vmem:[%s859 + $0x370] sm:%s852]
          %1296 = vst [vmem:[%s860 + $0x364] sm:%s852] %v1295
          %v1297 = vld [vmem:[%s859 + $0x334] sm:%s852]
          %1298 = vst [vmem:[%s860 + $0x368] sm:%s852] %v1297
          %v1299 = vld [vmem:[%s859 + $0x374] sm:%s852]
          %1300 = vst [vmem:[%s860 + $0x36c] sm:%s852] %v1299
          %v1301 = vld [vmem:[%s859 + $0x338] sm:%s852]
          %1302 = vst [vmem:[%s860 + $0x370] sm:%s852] %v1301
          %v1303 = vld [vmem:[%s859 + $0x378] sm:%s852]
          %1304 = vst [vmem:[%s860 + $0x374] sm:%s852] %v1303
          %v1305 = vld [vmem:[%s859 + $0x33c] sm:%s852]
          %1306 = vst [vmem:[%s860 + $0x378] sm:%s852] %v1305
          %v1307 = vld [vmem:[%s859 + $0x37c] sm:%s852]
          %1308 = vst [vmem:[%s860 + $0x37c] sm:%s852] %v1307
          %v1309 = vld [vmem:[%s859 + $0x380] sm:%s852]
          %1310 = vst [vmem:[%s860 + $0x380] sm:%s852] %v1309
          %v1311 = vld [vmem:[%s859 + $0x3c0] sm:%s852]
          %1312 = vst [vmem:[%s860 + $0x384] sm:%s852] %v1311
          %v1313 = vld [vmem:[%s859 + $0x384] sm:%s852]
          %1314 = vst [vmem:[%s860 + $0x388] sm:%s852] %v1313
          %v1315 = vld [vmem:[%s859 + $0x3c4] sm:%s852]
          %1316 = vst [vmem:[%s860 + $0x38c] sm:%s852] %v1315
          %v1317 = vld [vmem:[%s859 + $0x388] sm:%s852]
          %1318 = vst [vmem:[%s860 + $0x390] sm:%s852] %v1317
          %v1319 = vld [vmem:[%s859 + $0x3c8] sm:%s852]
          %1320 = vst [vmem:[%s860 + $0x394] sm:%s852] %v1319
          %v1321 = vld [vmem:[%s859 + $0x38c] sm:%s852]
          %1322 = vst [vmem:[%s860 + $0x398] sm:%s852] %v1321
          %v1323 = vld [vmem:[%s859 + $0x3cc] sm:%s852]
          %1324 = vst [vmem:[%s860 + $0x39c] sm:%s852] %v1323
          %v1325 = vld [vmem:[%s859 + $0x390] sm:%s852]
          %1326 = vst [vmem:[%s860 + $0x3a0] sm:%s852] %v1325
          %v1327 = vld [vmem:[%s859 + $0x3d0] sm:%s852]
          %1328 = vst [vmem:[%s860 + $0x3a4] sm:%s852] %v1327
          %v1329 = vld [vmem:[%s859 + $0x394] sm:%s852]
          %1330 = vst [vmem:[%s860 + $0x3a8] sm:%s852] %v1329
          %v1331 = vld [vmem:[%s859 + $0x3d4] sm:%s852]
          %1332 = vst [vmem:[%s860 + $0x3ac] sm:%s852] %v1331
          %v1333 = vld [vmem:[%s859 + $0x398] sm:%s852]
          %1334 = vst [vmem:[%s860 + $0x3b0] sm:%s852] %v1333
          %v1335 = vld [vmem:[%s859 + $0x3d8] sm:%s852]
          %1336 = vst [vmem:[%s860 + $0x3b4] sm:%s852] %v1335
          %v1337 = vld [vmem:[%s859 + $0x39c] sm:%s852]
          %1338 = vst [vmem:[%s860 + $0x3b8] sm:%s852] %v1337
          %v1339 = vld [vmem:[%s859 + $0x3dc] sm:%s852]
          %1340 = vst [vmem:[%s860 + $0x3bc] sm:%s852] %v1339
          %v1341 = vld [vmem:[%s859 + $0x3a0] sm:%s852]
          %1342 = vst [vmem:[%s860 + $0x3c0] sm:%s852] %v1341
          %v1343 = vld [vmem:[%s859 + $0x3e0] sm:%s852]
          %1344 = vst [vmem:[%s860 + $0x3c4] sm:%s852] %v1343
          %v1345 = vld [vmem:[%s859 + $0x3a4] sm:%s852]
          %1346 = vst [vmem:[%s860 + $0x3c8] sm:%s852] %v1345
          %v1347 = vld [vmem:[%s859 + $0x3e4] sm:%s852]
          %1348 = vst [vmem:[%s860 + $0x3cc] sm:%s852] %v1347
          %v1349 = vld [vmem:[%s859 + $0x3a8] sm:%s852]
          %1350 = vst [vmem:[%s860 + $0x3d0] sm:%s852] %v1349
          %v1351 = vld [vmem:[%s859 + $0x3e8] sm:%s852]
          %1352 = vst [vmem:[%s860 + $0x3d4] sm:%s852] %v1351
          %v1353 = vld [vmem:[%s859 + $0x3ac] sm:%s852]
          %1354 = vst [vmem:[%s860 + $0x3d8] sm:%s852] %v1353
          %v1355 = vld [vmem:[%s859 + $0x3ec] sm:%s852]
          %1356 = vst [vmem:[%s860 + $0x3dc] sm:%s852] %v1355
          %v1357 = vld [vmem:[%s859 + $0x3b0] sm:%s852]
          %1358 = vst [vmem:[%s860 + $0x3e0] sm:%s852] %v1357
          %v1359 = vld [vmem:[%s859 + $0x3f0] sm:%s852]
          %1360 = vst [vmem:[%s860 + $0x3e4] sm:%s852] %v1359
          %v1361 = vld [vmem:[%s859 + $0x3b4] sm:%s852]
          %1362 = vst [vmem:[%s860 + $0x3e8] sm:%s852] %v1361
          %v1363 = vld [vmem:[%s859 + $0x3f4] sm:%s852]
          %1364 = vst [vmem:[%s860 + $0x3ec] sm:%s852] %v1363
          %v1365 = vld [vmem:[%s859 + $0x3b8] sm:%s852]
          %1366 = vst [vmem:[%s860 + $0x3f0] sm:%s852] %v1365
          %v1367 = vld [vmem:[%s859 + $0x3f8] sm:%s852]
          %1368 = vst [vmem:[%s860 + $0x3f4] sm:%s852] %v1367
          %v1369 = vld [vmem:[%s859 + $0x3bc] sm:%s852]
          %1370 = vst [vmem:[%s860 + $0x3f8] sm:%s852] %v1369
          %v1371 = vld [vmem:[%s859 + $0x3fc] sm:%s852]
          %1372 = vst [vmem:[%s860 + $0x3fc] sm:%s852] %v1371
          %v1373 = vld [vmem:[%s859 + $0x400] sm:%s852]
          %1374 = vst [vmem:[%s860 + $0x400] sm:%s852] %v1373
          %v1375 = vld [vmem:[%s859 + $0x440] sm:%s852]
          %1376 = vst [vmem:[%s860 + $0x404] sm:%s852] %v1375
          %v1377 = vld [vmem:[%s859 + $0x404] sm:%s852]
          %1378 = vst [vmem:[%s860 + $0x408] sm:%s852] %v1377
          %v1379 = vld [vmem:[%s859 + $0x444] sm:%s852]
          %1380 = vst [vmem:[%s860 + $0x40c] sm:%s852] %v1379
          %v1381 = vld [vmem:[%s859 + $0x408] sm:%s852]
          %1382 = vst [vmem:[%s860 + $0x410] sm:%s852] %v1381
          %v1383 = vld [vmem:[%s859 + $0x448] sm:%s852]
          %1384 = vst [vmem:[%s860 + $0x414] sm:%s852] %v1383
          %v1385 = vld [vmem:[%s859 + $0x40c] sm:%s852]
          %1386 = vst [vmem:[%s860 + $0x418] sm:%s852] %v1385
          %v1387 = vld [vmem:[%s859 + $0x44c] sm:%s852]
          %1388 = vst [vmem:[%s860 + $0x41c] sm:%s852] %v1387
          %v1389 = vld [vmem:[%s859 + $0x410] sm:%s852]
          %1390 = vst [vmem:[%s860 + $0x420] sm:%s852] %v1389
          %v1391 = vld [vmem:[%s859 + $0x450] sm:%s852]
          %1392 = vst [vmem:[%s860 + $0x424] sm:%s852] %v1391
          %v1393 = vld [vmem:[%s859 + $0x414] sm:%s852]
          %1394 = vst [vmem:[%s860 + $0x428] sm:%s852] %v1393
          %v1395 = vld [vmem:[%s859 + $0x454] sm:%s852]
          %1396 = vst [vmem:[%s860 + $0x42c] sm:%s852] %v1395
          %v1397 = vld [vmem:[%s859 + $0x418] sm:%s852]
          %1398 = vst [vmem:[%s860 + $0x430] sm:%s852] %v1397
          %v1399 = vld [vmem:[%s859 + $0x458] sm:%s852]
          %1400 = vst [vmem:[%s860 + $0x434] sm:%s852] %v1399
          %v1401 = vld [vmem:[%s859 + $0x41c] sm:%s852]
          %1402 = vst [vmem:[%s860 + $0x438] sm:%s852] %v1401
          %v1403 = vld [vmem:[%s859 + $0x45c] sm:%s852]
          %1404 = vst [vmem:[%s860 + $0x43c] sm:%s852] %v1403
          %v1405 = vld [vmem:[%s859 + $0x420] sm:%s852]
          %1406 = vst [vmem:[%s860 + $0x440] sm:%s852] %v1405
          %v1407 = vld [vmem:[%s859 + $0x460] sm:%s852]
          %1408 = vst [vmem:[%s860 + $0x444] sm:%s852] %v1407
          %v1409 = vld [vmem:[%s859 + $0x424] sm:%s852]
          %1410 = vst [vmem:[%s860 + $0x448] sm:%s852] %v1409
          %v1411 = vld [vmem:[%s859 + $0x464] sm:%s852]
          %1412 = vst [vmem:[%s860 + $0x44c] sm:%s852] %v1411
          %v1413 = vld [vmem:[%s859 + $0x428] sm:%s852]
          %1414 = vst [vmem:[%s860 + $0x450] sm:%s852] %v1413
          %v1415 = vld [vmem:[%s859 + $0x468] sm:%s852]
          %1416 = vst [vmem:[%s860 + $0x454] sm:%s852] %v1415
          %v1417 = vld [vmem:[%s859 + $0x42c] sm:%s852]
          %1418 = vst [vmem:[%s860 + $0x458] sm:%s852] %v1417
          %v1419 = vld [vmem:[%s859 + $0x46c] sm:%s852]
          %1420 = vst [vmem:[%s860 + $0x45c] sm:%s852] %v1419
          %v1421 = vld [vmem:[%s859 + $0x430] sm:%s852]
          %1422 = vst [vmem:[%s860 + $0x460] sm:%s852] %v1421
          %v1423 = vld [vmem:[%s859 + $0x470] sm:%s852]
          %1424 = vst [vmem:[%s860 + $0x464] sm:%s852] %v1423
          %v1425 = vld [vmem:[%s859 + $0x434] sm:%s852]
          %1426 = vst [vmem:[%s860 + $0x468] sm:%s852] %v1425
          %v1427 = vld [vmem:[%s859 + $0x474] sm:%s852]
          %1428 = vst [vmem:[%s860 + $0x46c] sm:%s852] %v1427
          %v1429 = vld [vmem:[%s859 + $0x438] sm:%s852]
          %1430 = vst [vmem:[%s860 + $0x470] sm:%s852] %v1429
          %v1431 = vld [vmem:[%s859 + $0x478] sm:%s852]
          %1432 = vst [vmem:[%s860 + $0x474] sm:%s852] %v1431
          %v1433 = vld [vmem:[%s859 + $0x43c] sm:%s852]
          %1434 = vst [vmem:[%s860 + $0x478] sm:%s852] %v1433
          %v1435 = vld [vmem:[%s859 + $0x47c] sm:%s852]
          %1436 = vst [vmem:[%s860 + $0x47c] sm:%s852] %v1435
          %v1437 = vld [vmem:[%s859 + $0x480] sm:%s852]
          %1438 = vst [vmem:[%s860 + $0x480] sm:%s852] %v1437
          %v1439 = vld [vmem:[%s859 + $0x4c0] sm:%s852]
          %1440 = vst [vmem:[%s860 + $0x484] sm:%s852] %v1439
          %v1441 = vld [vmem:[%s859 + $0x484] sm:%s852]
          %1442 = vst [vmem:[%s860 + $0x488] sm:%s852] %v1441
          %v1443 = vld [vmem:[%s859 + $0x4c4] sm:%s852]
          %1444 = vst [vmem:[%s860 + $0x48c] sm:%s852] %v1443
          %v1445 = vld [vmem:[%s859 + $0x488] sm:%s852]
          %1446 = vst [vmem:[%s860 + $0x490] sm:%s852] %v1445
          %v1447 = vld [vmem:[%s859 + $0x4c8] sm:%s852]
          %1448 = vst [vmem:[%s860 + $0x494] sm:%s852] %v1447
          %v1449 = vld [vmem:[%s859 + $0x48c] sm:%s852]
          %1450 = vst [vmem:[%s860 + $0x498] sm:%s852] %v1449
          %v1451 = vld [vmem:[%s859 + $0x4cc] sm:%s852]
          %1452 = vst [vmem:[%s860 + $0x49c] sm:%s852] %v1451
          %v1453 = vld [vmem:[%s859 + $0x490] sm:%s852]
          %1454 = vst [vmem:[%s860 + $0x4a0] sm:%s852] %v1453
          %v1455 = vld [vmem:[%s859 + $0x4d0] sm:%s852]
          %1456 = vst [vmem:[%s860 + $0x4a4] sm:%s852] %v1455
          %v1457 = vld [vmem:[%s859 + $0x494] sm:%s852]
          %1458 = vst [vmem:[%s860 + $0x4a8] sm:%s852] %v1457
          %v1459 = vld [vmem:[%s859 + $0x4d4] sm:%s852]
          %1460 = vst [vmem:[%s860 + $0x4ac] sm:%s852] %v1459
          %v1461 = vld [vmem:[%s859 + $0x498] sm:%s852]
          %1462 = vst [vmem:[%s860 + $0x4b0] sm:%s852] %v1461
          %v1463 = vld [vmem:[%s859 + $0x4d8] sm:%s852]
          %1464 = vst [vmem:[%s860 + $0x4b4] sm:%s852] %v1463
          %v1465 = vld [vmem:[%s859 + $0x49c] sm:%s852]
          %1466 = vst [vmem:[%s860 + $0x4b8] sm:%s852] %v1465
          %v1467 = vld [vmem:[%s859 + $0x4dc] sm:%s852]
          %1468 = vst [vmem:[%s860 + $0x4bc] sm:%s852] %v1467
          %v1469 = vld [vmem:[%s859 + $0x4a0] sm:%s852]
          %1470 = vst [vmem:[%s860 + $0x4c0] sm:%s852] %v1469
          %v1471 = vld [vmem:[%s859 + $0x4e0] sm:%s852]
          %1472 = vst [vmem:[%s860 + $0x4c4] sm:%s852] %v1471
          %v1473 = vld [vmem:[%s859 + $0x4a4] sm:%s852]
          %1474 = vst [vmem:[%s860 + $0x4c8] sm:%s852] %v1473
          %v1475 = vld [vmem:[%s859 + $0x4e4] sm:%s852]
          %1476 = vst [vmem:[%s860 + $0x4cc] sm:%s852] %v1475
          %v1477 = vld [vmem:[%s859 + $0x4a8] sm:%s852]
          %1478 = vst [vmem:[%s860 + $0x4d0] sm:%s852] %v1477
          %v1479 = vld [vmem:[%s859 + $0x4e8] sm:%s852]
          %1480 = vst [vmem:[%s860 + $0x4d4] sm:%s852] %v1479
          %v1481 = vld [vmem:[%s859 + $0x4ac] sm:%s852]
          %1482 = vst [vmem:[%s860 + $0x4d8] sm:%s852] %v1481
          %v1483 = vld [vmem:[%s859 + $0x4ec] sm:%s852]
          %1484 = vst [vmem:[%s860 + $0x4dc] sm:%s852] %v1483
          %v1485 = vld [vmem:[%s859 + $0x4b0] sm:%s852]
          %1486 = vst [vmem:[%s860 + $0x4e0] sm:%s852] %v1485
          %v1487 = vld [vmem:[%s859 + $0x4f0] sm:%s852]
          %1488 = vst [vmem:[%s860 + $0x4e4] sm:%s852] %v1487
          %v1489 = vld [vmem:[%s859 + $0x4b4] sm:%s852]
          %1490 = vst [vmem:[%s860 + $0x4e8] sm:%s852] %v1489
          %v1491 = vld [vmem:[%s859 + $0x4f4] sm:%s852]
          %1492 = vst [vmem:[%s860 + $0x4ec] sm:%s852] %v1491
          %v1493 = vld [vmem:[%s859 + $0x4b8] sm:%s852]
          %1494 = vst [vmem:[%s860 + $0x4f0] sm:%s852] %v1493
          %v1495 = vld [vmem:[%s859 + $0x4f8] sm:%s852]
          %1496 = vst [vmem:[%s860 + $0x4f4] sm:%s852] %v1495
          %v1497 = vld [vmem:[%s859 + $0x4bc] sm:%s852]
          %1498 = vst [vmem:[%s860 + $0x4f8] sm:%s852] %v1497
          %v1499 = vld [vmem:[%s859 + $0x4fc] sm:%s852]
          %1500 = vst [vmem:[%s860 + $0x4fc] sm:%s852] %v1499
          %v1501 = vld [vmem:[%s859 + $0x500] sm:%s852]
          %1502 = vst [vmem:[%s860 + $0x500] sm:%s852] %v1501
          %v1503 = vld [vmem:[%s859 + $0x540] sm:%s852]
          %1504 = vst [vmem:[%s860 + $0x504] sm:%s852] %v1503
          %v1505 = vld [vmem:[%s859 + $0x504] sm:%s852]
          %1506 = vst [vmem:[%s860 + $0x508] sm:%s852] %v1505
          %v1507 = vld [vmem:[%s859 + $0x544] sm:%s852]
          %1508 = vst [vmem:[%s860 + $0x50c] sm:%s852] %v1507
          %v1509 = vld [vmem:[%s859 + $0x508] sm:%s852]
          %1510 = vst [vmem:[%s860 + $0x510] sm:%s852] %v1509
          %v1511 = vld [vmem:[%s859 + $0x548] sm:%s852]
          %1512 = vst [vmem:[%s860 + $0x514] sm:%s852] %v1511
          %v1513 = vld [vmem:[%s859 + $0x50c] sm:%s852]
          %1514 = vst [vmem:[%s860 + $0x518] sm:%s852] %v1513
          %v1515 = vld [vmem:[%s859 + $0x54c] sm:%s852]
          %1516 = vst [vmem:[%s860 + $0x51c] sm:%s852] %v1515
          %v1517 = vld [vmem:[%s859 + $0x510] sm:%s852]
          %1518 = vst [vmem:[%s860 + $0x520] sm:%s852] %v1517
          %v1519 = vld [vmem:[%s859 + $0x550] sm:%s852]
          %1520 = vst [vmem:[%s860 + $0x524] sm:%s852] %v1519
          %v1521 = vld [vmem:[%s859 + $0x514] sm:%s852]
          %1522 = vst [vmem:[%s860 + $0x528] sm:%s852] %v1521
          %v1523 = vld [vmem:[%s859 + $0x554] sm:%s852]
          %1524 = vst [vmem:[%s860 + $0x52c] sm:%s852] %v1523
          %v1525 = vld [vmem:[%s859 + $0x518] sm:%s852]
          %1526 = vst [vmem:[%s860 + $0x530] sm:%s852] %v1525
          %v1527 = vld [vmem:[%s859 + $0x558] sm:%s852]
          %1528 = vst [vmem:[%s860 + $0x534] sm:%s852] %v1527
          %v1529 = vld [vmem:[%s859 + $0x51c] sm:%s852]
          %1530 = vst [vmem:[%s860 + $0x538] sm:%s852] %v1529
          %v1531 = vld [vmem:[%s859 + $0x55c] sm:%s852]
          %1532 = vst [vmem:[%s860 + $0x53c] sm:%s852] %v1531
          %v1533 = vld [vmem:[%s859 + $0x520] sm:%s852]
          %1534 = vst [vmem:[%s860 + $0x540] sm:%s852] %v1533
          %v1535 = vld [vmem:[%s859 + $0x560] sm:%s852]
          %1536 = vst [vmem:[%s860 + $0x544] sm:%s852] %v1535
          %v1537 = vld [vmem:[%s859 + $0x524] sm:%s852]
          %1538 = vst [vmem:[%s860 + $0x548] sm:%s852] %v1537
          %v1539 = vld [vmem:[%s859 + $0x564] sm:%s852]
          %1540 = vst [vmem:[%s860 + $0x54c] sm:%s852] %v1539
          %v1541 = vld [vmem:[%s859 + $0x528] sm:%s852]
          %1542 = vst [vmem:[%s860 + $0x550] sm:%s852] %v1541
          %v1543 = vld [vmem:[%s859 + $0x568] sm:%s852]
          %1544 = vst [vmem:[%s860 + $0x554] sm:%s852] %v1543
          %v1545 = vld [vmem:[%s859 + $0x52c] sm:%s852]
          %1546 = vst [vmem:[%s860 + $0x558] sm:%s852] %v1545
          %v1547 = vld [vmem:[%s859 + $0x56c] sm:%s852]
          %1548 = vst [vmem:[%s860 + $0x55c] sm:%s852] %v1547
          %v1549 = vld [vmem:[%s859 + $0x530] sm:%s852]
          %1550 = vst [vmem:[%s860 + $0x560] sm:%s852] %v1549
          %v1551 = vld [vmem:[%s859 + $0x570] sm:%s852]
          %1552 = vst [vmem:[%s860 + $0x564] sm:%s852] %v1551
          %v1553 = vld [vmem:[%s859 + $0x534] sm:%s852]
          %1554 = vst [vmem:[%s860 + $0x568] sm:%s852] %v1553
          %v1555 = vld [vmem:[%s859 + $0x574] sm:%s852]
          %1556 = vst [vmem:[%s860 + $0x56c] sm:%s852] %v1555
          %v1557 = vld [vmem:[%s859 + $0x538] sm:%s852]
          %1558 = vst [vmem:[%s860 + $0x570] sm:%s852] %v1557
          %v1559 = vld [vmem:[%s859 + $0x578] sm:%s852]
          %1560 = vst [vmem:[%s860 + $0x574] sm:%s852] %v1559
          %v1561 = vld [vmem:[%s859 + $0x53c] sm:%s852]
          %1562 = vst [vmem:[%s860 + $0x578] sm:%s852] %v1561
          %v1563 = vld [vmem:[%s859 + $0x57c] sm:%s852]
          %1564 = vst [vmem:[%s860 + $0x57c] sm:%s852] %v1563
          %v1565 = vld [vmem:[%s859 + $0x580] sm:%s852]
          %1566 = vst [vmem:[%s860 + $0x580] sm:%s852] %v1565
          %v1567 = vld [vmem:[%s859 + $0x5c0] sm:%s852]
          %1568 = vst [vmem:[%s860 + $0x584] sm:%s852] %v1567
          %v1569 = vld [vmem:[%s859 + $0x584] sm:%s852]
          %1570 = vst [vmem:[%s860 + $0x588] sm:%s852] %v1569
          %v1571 = vld [vmem:[%s859 + $0x5c4] sm:%s852]
          %1572 = vst [vmem:[%s860 + $0x58c] sm:%s852] %v1571
          %v1573 = vld [vmem:[%s859 + $0x588] sm:%s852]
          %1574 = vst [vmem:[%s860 + $0x590] sm:%s852] %v1573
          %v1575 = vld [vmem:[%s859 + $0x5c8] sm:%s852]
          %1576 = vst [vmem:[%s860 + $0x594] sm:%s852] %v1575
          %v1577 = vld [vmem:[%s859 + $0x58c] sm:%s852]
          %1578 = vst [vmem:[%s860 + $0x598] sm:%s852] %v1577
          %v1579 = vld [vmem:[%s859 + $0x5cc] sm:%s852]
          %1580 = vst [vmem:[%s860 + $0x59c] sm:%s852] %v1579
          %v1581 = vld [vmem:[%s859 + $0x590] sm:%s852]
          %1582 = vst [vmem:[%s860 + $0x5a0] sm:%s852] %v1581
          %v1583 = vld [vmem:[%s859 + $0x5d0] sm:%s852]
          %1584 = vst [vmem:[%s860 + $0x5a4] sm:%s852] %v1583
          %v1585 = vld [vmem:[%s859 + $0x594] sm:%s852]
          %1586 = vst [vmem:[%s860 + $0x5a8] sm:%s852] %v1585
          %v1587 = vld [vmem:[%s859 + $0x5d4] sm:%s852]
          %1588 = vst [vmem:[%s860 + $0x5ac] sm:%s852] %v1587
          %v1589 = vld [vmem:[%s859 + $0x598] sm:%s852]
          %1590 = vst [vmem:[%s860 + $0x5b0] sm:%s852] %v1589
          %v1591 = vld [vmem:[%s859 + $0x5d8] sm:%s852]
          %1592 = vst [vmem:[%s860 + $0x5b4] sm:%s852] %v1591
          %v1593 = vld [vmem:[%s859 + $0x59c] sm:%s852]
          %1594 = vst [vmem:[%s860 + $0x5b8] sm:%s852] %v1593
          %v1595 = vld [vmem:[%s859 + $0x5dc] sm:%s852]
          %1596 = vst [vmem:[%s860 + $0x5bc] sm:%s852] %v1595
          %v1597 = vld [vmem:[%s859 + $0x5a0] sm:%s852]
          %1598 = vst [vmem:[%s860 + $0x5c0] sm:%s852] %v1597
          %v1599 = vld [vmem:[%s859 + $0x5e0] sm:%s852]
          %1600 = vst [vmem:[%s860 + $0x5c4] sm:%s852] %v1599
          %v1601 = vld [vmem:[%s859 + $0x5a4] sm:%s852]
          %1602 = vst [vmem:[%s860 + $0x5c8] sm:%s852] %v1601
          %v1603 = vld [vmem:[%s859 + $0x5e4] sm:%s852]
          %1604 = vst [vmem:[%s860 + $0x5cc] sm:%s852] %v1603
          %v1605 = vld [vmem:[%s859 + $0x5a8] sm:%s852]
          %1606 = vst [vmem:[%s860 + $0x5d0] sm:%s852] %v1605
          %v1607 = vld [vmem:[%s859 + $0x5e8] sm:%s852]
          %1608 = vst [vmem:[%s860 + $0x5d4] sm:%s852] %v1607
          %v1609 = vld [vmem:[%s859 + $0x5ac] sm:%s852]
          %1610 = vst [vmem:[%s860 + $0x5d8] sm:%s852] %v1609
          %v1611 = vld [vmem:[%s859 + $0x5ec] sm:%s852]
          %1612 = vst [vmem:[%s860 + $0x5dc] sm:%s852] %v1611
          %v1613 = vld [vmem:[%s859 + $0x5b0] sm:%s852]
          %1614 = vst [vmem:[%s860 + $0x5e0] sm:%s852] %v1613
          %v1615 = vld [vmem:[%s859 + $0x5f0] sm:%s852]
          %1616 = vst [vmem:[%s860 + $0x5e4] sm:%s852] %v1615
          %v1617 = vld [vmem:[%s859 + $0x5b4] sm:%s852]
          %1618 = vst [vmem:[%s860 + $0x5e8] sm:%s852] %v1617
          %v1619 = vld [vmem:[%s859 + $0x5f4] sm:%s852]
          %1620 = vst [vmem:[%s860 + $0x5ec] sm:%s852] %v1619
          %v1621 = vld [vmem:[%s859 + $0x5b8] sm:%s852]
          %1622 = vst [vmem:[%s860 + $0x5f0] sm:%s852] %v1621
          %v1623 = vld [vmem:[%s859 + $0x5f8] sm:%s852]
          %1624 = vst [vmem:[%s860 + $0x5f4] sm:%s852] %v1623
          %v1625 = vld [vmem:[%s859 + $0x5bc] sm:%s852]
          %1626 = vst [vmem:[%s860 + $0x5f8] sm:%s852] %v1625
          %v1627 = vld [vmem:[%s859 + $0x5fc] sm:%s852]
          %1628 = vst [vmem:[%s860 + $0x5fc] sm:%s852] %v1627
        $region84: #{net_forward.1} parent=71 // loop_footer
          %s858 = sadd.s32 1, %s854
        $region85: #{net_forward.1} parent=71 // loop_footer_branch
          %853 = sbr.rel target = $region81
        $region86: #{net_forward.1} parent=71 // loop_exit
          _
      $region72: #{net_forward.1} parent=56 // pred_fallthru
        _
    $region57: #{net_forward.1} parent=1 // pred_fallthru
      _
    // Predicated region
    $region58: #{net_forward.1} parent=1 // pred_check
      %p54 = pneg %p50
    $region59: #{net_forward.1} parent=1 // pred_check_branch
      %56 = sbr.rel (%p54) target = $region61
    $region60: #{net_forward.1} parent=1 // pred_region
      %s57 = sshllo.u32 0, 4
      loop: start=0, step=1, limit=1
      $region62: #{net_forward.1} parent=60 // loop_pre_header
        _
      $region63: #{net_forward.1} parent=60 // loop_header
        %s59 = sphi 0, %s63
        %p60 = scmp.ge.s32.totalorder %s59, 1
        %s64 = sphi %s5, %s5
        %s65 = sphi [#allocation2], [#allocation2]
      $region64: #{net_forward.1} parent=60 // loop_header_branch
        %62 = sbr.rel (%p60) target = $region68
      $region65: #{net_forward.1} parent=60 // loop_body
        %v66 = vld [vmem:[%s64] sm:%s57]
        %67 = vst [vmem:[%s65] sm:%s57] %v66
        %v68 = vld [vmem:[%s64 + $0x40] sm:%s57]
        %69 = vst [vmem:[%s65 + $0x4] sm:%s57] %v68
        %v70 = vld [vmem:[%s64 + $0x4] sm:%s57]
        %71 = vst [vmem:[%s65 + $0x8] sm:%s57] %v70
        %v72 = vld [vmem:[%s64 + $0x44] sm:%s57]
        %73 = vst [vmem:[%s65 + $0xc] sm:%s57] %v72
        %v74 = vld [vmem:[%s64 + $0x8] sm:%s57]
        %75 = vst [vmem:[%s65 + $0x10] sm:%s57] %v74
        %v76 = vld [vmem:[%s64 + $0x48] sm:%s57]
        %77 = vst [vmem:[%s65 + $0x14] sm:%s57] %v76
        %v78 = vld [vmem:[%s64 + $0xc] sm:%s57]
        %79 = vst [vmem:[%s65 + $0x18] sm:%s57] %v78
        %v80 = vld [vmem:[%s64 + $0x4c] sm:%s57]
        %81 = vst [vmem:[%s65 + $0x1c] sm:%s57] %v80
        %v82 = vld [vmem:[%s64 + $0x10] sm:%s57]
        %83 = vst [vmem:[%s65 + $0x20] sm:%s57] %v82
        %v84 = vld [vmem:[%s64 + $0x50] sm:%s57]
        %85 = vst [vmem:[%s65 + $0x24] sm:%s57] %v84
        %v86 = vld [vmem:[%s64 + $0x14] sm:%s57]
        %87 = vst [vmem:[%s65 + $0x28] sm:%s57] %v86
        %v88 = vld [vmem:[%s64 + $0x54] sm:%s57]
        %89 = vst [vmem:[%s65 + $0x2c] sm:%s57] %v88
        %v90 = vld [vmem:[%s64 + $0x18] sm:%s57]
        %91 = vst [vmem:[%s65 + $0x30] sm:%s57] %v90
        %v92 = vld [vmem:[%s64 + $0x58] sm:%s57]
        %93 = vst [vmem:[%s65 + $0x34] sm:%s57] %v92
        %v94 = vld [vmem:[%s64 + $0x1c] sm:%s57]
        %95 = vst [vmem:[%s65 + $0x38] sm:%s57] %v94
        %v96 = vld [vmem:[%s64 + $0x5c] sm:%s57]
        %97 = vst [vmem:[%s65 + $0x3c] sm:%s57] %v96
        %v98 = vld [vmem:[%s64 + $0x20] sm:%s57]
        %99 = vst [vmem:[%s65 + $0x40] sm:%s57] %v98
        %v100 = vld [vmem:[%s64 + $0x60] sm:%s57]
        %101 = vst [vmem:[%s65 + $0x44] sm:%s57] %v100
        %v102 = vld [vmem:[%s64 + $0x24] sm:%s57]
        %103 = vst [vmem:[%s65 + $0x48] sm:%s57] %v102
        %v104 = vld [vmem:[%s64 + $0x64] sm:%s57]
        %105 = vst [vmem:[%s65 + $0x4c] sm:%s57] %v104
        %v106 = vld [vmem:[%s64 + $0x28] sm:%s57]
        %107 = vst [vmem:[%s65 + $0x50] sm:%s57] %v106
        %v108 = vld [vmem:[%s64 + $0x68] sm:%s57]
        %109 = vst [vmem:[%s65 + $0x54] sm:%s57] %v108
        %v110 = vld [vmem:[%s64 + $0x2c] sm:%s57]
        %111 = vst [vmem:[%s65 + $0x58] sm:%s57] %v110
        %v112 = vld [vmem:[%s64 + $0x6c] sm:%s57]
        %113 = vst [vmem:[%s65 + $0x5c] sm:%s57] %v112
        %v114 = vld [vmem:[%s64 + $0x30] sm:%s57]
        %115 = vst [vmem:[%s65 + $0x60] sm:%s57] %v114
        %v116 = vld [vmem:[%s64 + $0x70] sm:%s57]
        %117 = vst [vmem:[%s65 + $0x64] sm:%s57] %v116
        %v118 = vld [vmem:[%s64 + $0x34] sm:%s57]
        %119 = vst [vmem:[%s65 + $0x68] sm:%s57] %v118
        %v120 = vld [vmem:[%s64 + $0x74] sm:%s57]
        %121 = vst [vmem:[%s65 + $0x6c] sm:%s57] %v120
        %v122 = vld [vmem:[%s64 + $0x38] sm:%s57]
        %123 = vst [vmem:[%s65 + $0x70] sm:%s57] %v122
        %v124 = vld [vmem:[%s64 + $0x78] sm:%s57]
        %125 = vst [vmem:[%s65 + $0x74] sm:%s57] %v124
        %v126 = vld [vmem:[%s64 + $0x3c] sm:%s57]
        %127 = vst [vmem:[%s65 + $0x78] sm:%s57] %v126
        %v128 = vld [vmem:[%s64 + $0x7c] sm:%s57]
        %129 = vst [vmem:[%s65 + $0x7c] sm:%s57] %v128
        %v130 = vld [vmem:[%s64 + $0x80] sm:%s57]
        %131 = vst [vmem:[%s65 + $0x80] sm:%s57] %v130
        %v132 = vld [vmem:[%s64 + $0xc0] sm:%s57]
        %133 = vst [vmem:[%s65 + $0x84] sm:%s57] %v132
        %v134 = vld [vmem:[%s64 + $0x84] sm:%s57]
        %135 = vst [vmem:[%s65 + $0x88] sm:%s57] %v134
        %v136 = vld [vmem:[%s64 + $0xc4] sm:%s57]
        %137 = vst [vmem:[%s65 + $0x8c] sm:%s57] %v136
        %v138 = vld [vmem:[%s64 + $0x88] sm:%s57]
        %139 = vst [vmem:[%s65 + $0x90] sm:%s57] %v138
        %v140 = vld [vmem:[%s64 + $0xc8] sm:%s57]
        %141 = vst [vmem:[%s65 + $0x94] sm:%s57] %v140
        %v142 = vld [vmem:[%s64 + $0x8c] sm:%s57]
        %143 = vst [vmem:[%s65 + $0x98] sm:%s57] %v142
        %v144 = vld [vmem:[%s64 + $0xcc] sm:%s57]
        %145 = vst [vmem:[%s65 + $0x9c] sm:%s57] %v144
        %v146 = vld [vmem:[%s64 + $0x90] sm:%s57]
        %147 = vst [vmem:[%s65 + $0xa0] sm:%s57] %v146
        %v148 = vld [vmem:[%s64 + $0xd0] sm:%s57]
        %149 = vst [vmem:[%s65 + $0xa4] sm:%s57] %v148
        %v150 = vld [vmem:[%s64 + $0x94] sm:%s57]
        %151 = vst [vmem:[%s65 + $0xa8] sm:%s57] %v150
        %v152 = vld [vmem:[%s64 + $0xd4] sm:%s57]
        %153 = vst [vmem:[%s65 + $0xac] sm:%s57] %v152
        %v154 = vld [vmem:[%s64 + $0x98] sm:%s57]
        %155 = vst [vmem:[%s65 + $0xb0] sm:%s57] %v154
        %v156 = vld [vmem:[%s64 + $0xd8] sm:%s57]
        %157 = vst [vmem:[%s65 + $0xb4] sm:%s57] %v156
        %v158 = vld [vmem:[%s64 + $0x9c] sm:%s57]
        %159 = vst [vmem:[%s65 + $0xb8] sm:%s57] %v158
        %v160 = vld [vmem:[%s64 + $0xdc] sm:%s57]
        %161 = vst [vmem:[%s65 + $0xbc] sm:%s57] %v160
        %v162 = vld [vmem:[%s64 + $0xa0] sm:%s57]
        %163 = vst [vmem:[%s65 + $0xc0] sm:%s57] %v162
        %v164 = vld [vmem:[%s64 + $0xe0] sm:%s57]
        %165 = vst [vmem:[%s65 + $0xc4] sm:%s57] %v164
        %v166 = vld [vmem:[%s64 + $0xa4] sm:%s57]
        %167 = vst [vmem:[%s65 + $0xc8] sm:%s57] %v166
        %v168 = vld [vmem:[%s64 + $0xe4] sm:%s57]
        %169 = vst [vmem:[%s65 + $0xcc] sm:%s57] %v168
        %v170 = vld [vmem:[%s64 + $0xa8] sm:%s57]
        %171 = vst [vmem:[%s65 + $0xd0] sm:%s57] %v170
        %v172 = vld [vmem:[%s64 + $0xe8] sm:%s57]
        %173 = vst [vmem:[%s65 + $0xd4] sm:%s57] %v172
        %v174 = vld [vmem:[%s64 + $0xac] sm:%s57]
        %175 = vst [vmem:[%s65 + $0xd8] sm:%s57] %v174
        %v176 = vld [vmem:[%s64 + $0xec] sm:%s57]
        %177 = vst [vmem:[%s65 + $0xdc] sm:%s57] %v176
        %v178 = vld [vmem:[%s64 + $0xb0] sm:%s57]
        %179 = vst [vmem:[%s65 + $0xe0] sm:%s57] %v178
        %v180 = vld [vmem:[%s64 + $0xf0] sm:%s57]
        %181 = vst [vmem:[%s65 + $0xe4] sm:%s57] %v180
        %v182 = vld [vmem:[%s64 + $0xb4] sm:%s57]
        %183 = vst [vmem:[%s65 + $0xe8] sm:%s57] %v182
        %v184 = vld [vmem:[%s64 + $0xf4] sm:%s57]
        %185 = vst [vmem:[%s65 + $0xec] sm:%s57] %v184
        %v186 = vld [vmem:[%s64 + $0xb8] sm:%s57]
        %187 = vst [vmem:[%s65 + $0xf0] sm:%s57] %v186
        %v188 = vld [vmem:[%s64 + $0xf8] sm:%s57]
        %189 = vst [vmem:[%s65 + $0xf4] sm:%s57] %v188
        %v190 = vld [vmem:[%s64 + $0xbc] sm:%s57]
        %191 = vst [vmem:[%s65 + $0xf8] sm:%s57] %v190
        %v192 = vld [vmem:[%s64 + $0xfc] sm:%s57]
        %193 = vst [vmem:[%s65 + $0xfc] sm:%s57] %v192
        %v194 = vld [vmem:[%s64 + $0x100] sm:%s57]
        %195 = vst [vmem:[%s65 + $0x100] sm:%s57] %v194
        %v196 = vld [vmem:[%s64 + $0x140] sm:%s57]
        %197 = vst [vmem:[%s65 + $0x104] sm:%s57] %v196
        %v198 = vld [vmem:[%s64 + $0x104] sm:%s57]
        %199 = vst [vmem:[%s65 + $0x108] sm:%s57] %v198
        %v200 = vld [vmem:[%s64 + $0x144] sm:%s57]
        %201 = vst [vmem:[%s65 + $0x10c] sm:%s57] %v200
        %v202 = vld [vmem:[%s64 + $0x108] sm:%s57]
        %203 = vst [vmem:[%s65 + $0x110] sm:%s57] %v202
        %v204 = vld [vmem:[%s64 + $0x148] sm:%s57]
        %205 = vst [vmem:[%s65 + $0x114] sm:%s57] %v204
        %v206 = vld [vmem:[%s64 + $0x10c] sm:%s57]
        %207 = vst [vmem:[%s65 + $0x118] sm:%s57] %v206
        %v208 = vld [vmem:[%s64 + $0x14c] sm:%s57]
        %209 = vst [vmem:[%s65 + $0x11c] sm:%s57] %v208
        %v210 = vld [vmem:[%s64 + $0x110] sm:%s57]
        %211 = vst [vmem:[%s65 + $0x120] sm:%s57] %v210
        %v212 = vld [vmem:[%s64 + $0x150] sm:%s57]
        %213 = vst [vmem:[%s65 + $0x124] sm:%s57] %v212
        %v214 = vld [vmem:[%s64 + $0x114] sm:%s57]
        %215 = vst [vmem:[%s65 + $0x128] sm:%s57] %v214
        %v216 = vld [vmem:[%s64 + $0x154] sm:%s57]
        %217 = vst [vmem:[%s65 + $0x12c] sm:%s57] %v216
        %v218 = vld [vmem:[%s64 + $0x118] sm:%s57]
        %219 = vst [vmem:[%s65 + $0x130] sm:%s57] %v218
        %v220 = vld [vmem:[%s64 + $0x158] sm:%s57]
        %221 = vst [vmem:[%s65 + $0x134] sm:%s57] %v220
        %v222 = vld [vmem:[%s64 + $0x11c] sm:%s57]
        %223 = vst [vmem:[%s65 + $0x138] sm:%s57] %v222
        %v224 = vld [vmem:[%s64 + $0x15c] sm:%s57]
        %225 = vst [vmem:[%s65 + $0x13c] sm:%s57] %v224
        %v226 = vld [vmem:[%s64 + $0x120] sm:%s57]
        %227 = vst [vmem:[%s65 + $0x140] sm:%s57] %v226
        %v228 = vld [vmem:[%s64 + $0x160] sm:%s57]
        %229 = vst [vmem:[%s65 + $0x144] sm:%s57] %v228
        %v230 = vld [vmem:[%s64 + $0x124] sm:%s57]
        %231 = vst [vmem:[%s65 + $0x148] sm:%s57] %v230
        %v232 = vld [vmem:[%s64 + $0x164] sm:%s57]
        %233 = vst [vmem:[%s65 + $0x14c] sm:%s57] %v232
        %v234 = vld [vmem:[%s64 + $0x128] sm:%s57]
        %235 = vst [vmem:[%s65 + $0x150] sm:%s57] %v234
        %v236 = vld [vmem:[%s64 + $0x168] sm:%s57]
        %237 = vst [vmem:[%s65 + $0x154] sm:%s57] %v236
        %v238 = vld [vmem:[%s64 + $0x12c] sm:%s57]
        %239 = vst [vmem:[%s65 + $0x158] sm:%s57] %v238
        %v240 = vld [vmem:[%s64 + $0x16c] sm:%s57]
        %241 = vst [vmem:[%s65 + $0x15c] sm:%s57] %v240
        %v242 = vld [vmem:[%s64 + $0x130] sm:%s57]
        %243 = vst [vmem:[%s65 + $0x160] sm:%s57] %v242
        %v244 = vld [vmem:[%s64 + $0x170] sm:%s57]
        %245 = vst [vmem:[%s65 + $0x164] sm:%s57] %v244
        %v246 = vld [vmem:[%s64 + $0x134] sm:%s57]
        %247 = vst [vmem:[%s65 + $0x168] sm:%s57] %v246
        %v248 = vld [vmem:[%s64 + $0x174] sm:%s57]
        %249 = vst [vmem:[%s65 + $0x16c] sm:%s57] %v248
        %v250 = vld [vmem:[%s64 + $0x138] sm:%s57]
        %251 = vst [vmem:[%s65 + $0x170] sm:%s57] %v250
        %v252 = vld [vmem:[%s64 + $0x178] sm:%s57]
        %253 = vst [vmem:[%s65 + $0x174] sm:%s57] %v252
        %v254 = vld [vmem:[%s64 + $0x13c] sm:%s57]
        %255 = vst [vmem:[%s65 + $0x178] sm:%s57] %v254
        %v256 = vld [vmem:[%s64 + $0x17c] sm:%s57]
        %257 = vst [vmem:[%s65 + $0x17c] sm:%s57] %v256
        %v258 = vld [vmem:[%s64 + $0x180] sm:%s57]
        %259 = vst [vmem:[%s65 + $0x180] sm:%s57] %v258
        %v260 = vld [vmem:[%s64 + $0x1c0] sm:%s57]
        %261 = vst [vmem:[%s65 + $0x184] sm:%s57] %v260
        %v262 = vld [vmem:[%s64 + $0x184] sm:%s57]
        %263 = vst [vmem:[%s65 + $0x188] sm:%s57] %v262
        %v264 = vld [vmem:[%s64 + $0x1c4] sm:%s57]
        %265 = vst [vmem:[%s65 + $0x18c] sm:%s57] %v264
        %v266 = vld [vmem:[%s64 + $0x188] sm:%s57]
        %267 = vst [vmem:[%s65 + $0x190] sm:%s57] %v266
        %v268 = vld [vmem:[%s64 + $0x1c8] sm:%s57]
        %269 = vst [vmem:[%s65 + $0x194] sm:%s57] %v268
        %v270 = vld [vmem:[%s64 + $0x18c] sm:%s57]
        %271 = vst [vmem:[%s65 + $0x198] sm:%s57] %v270
        %v272 = vld [vmem:[%s64 + $0x1cc] sm:%s57]
        %273 = vst [vmem:[%s65 + $0x19c] sm:%s57] %v272
        %v274 = vld [vmem:[%s64 + $0x190] sm:%s57]
        %275 = vst [vmem:[%s65 + $0x1a0] sm:%s57] %v274
        %v276 = vld [vmem:[%s64 + $0x1d0] sm:%s57]
        %277 = vst [vmem:[%s65 + $0x1a4] sm:%s57] %v276
        %v278 = vld [vmem:[%s64 + $0x194] sm:%s57]
        %279 = vst [vmem:[%s65 + $0x1a8] sm:%s57] %v278
        %v280 = vld [vmem:[%s64 + $0x1d4] sm:%s57]
        %281 = vst [vmem:[%s65 + $0x1ac] sm:%s57] %v280
        %v282 = vld [vmem:[%s64 + $0x198] sm:%s57]
        %283 = vst [vmem:[%s65 + $0x1b0] sm:%s57] %v282
        %v284 = vld [vmem:[%s64 + $0x1d8] sm:%s57]
        %285 = vst [vmem:[%s65 + $0x1b4] sm:%s57] %v284
        %v286 = vld [vmem:[%s64 + $0x19c] sm:%s57]
        %287 = vst [vmem:[%s65 + $0x1b8] sm:%s57] %v286
        %v288 = vld [vmem:[%s64 + $0x1dc] sm:%s57]
        %289 = vst [vmem:[%s65 + $0x1bc] sm:%s57] %v288
        %v290 = vld [vmem:[%s64 + $0x1a0] sm:%s57]
        %291 = vst [vmem:[%s65 + $0x1c0] sm:%s57] %v290
        %v292 = vld [vmem:[%s64 + $0x1e0] sm:%s57]
        %293 = vst [vmem:[%s65 + $0x1c4] sm:%s57] %v292
        %v294 = vld [vmem:[%s64 + $0x1a4] sm:%s57]
        %295 = vst [vmem:[%s65 + $0x1c8] sm:%s57] %v294
        %v296 = vld [vmem:[%s64 + $0x1e4] sm:%s57]
        %297 = vst [vmem:[%s65 + $0x1cc] sm:%s57] %v296
        %v298 = vld [vmem:[%s64 + $0x1a8] sm:%s57]
        %299 = vst [vmem:[%s65 + $0x1d0] sm:%s57] %v298
        %v300 = vld [vmem:[%s64 + $0x1e8] sm:%s57]
        %301 = vst [vmem:[%s65 + $0x1d4] sm:%s57] %v300
        %v302 = vld [vmem:[%s64 + $0x1ac] sm:%s57]
        %303 = vst [vmem:[%s65 + $0x1d8] sm:%s57] %v302
        %v304 = vld [vmem:[%s64 + $0x1ec] sm:%s57]
        %305 = vst [vmem:[%s65 + $0x1dc] sm:%s57] %v304
        %v306 = vld [vmem:[%s64 + $0x1b0] sm:%s57]
        %307 = vst [vmem:[%s65 + $0x1e0] sm:%s57] %v306
        %v308 = vld [vmem:[%s64 + $0x1f0] sm:%s57]
        %309 = vst [vmem:[%s65 + $0x1e4] sm:%s57] %v308
        %v310 = vld [vmem:[%s64 + $0x1b4] sm:%s57]
        %311 = vst [vmem:[%s65 + $0x1e8] sm:%s57] %v310
        %v312 = vld [vmem:[%s64 + $0x1f4] sm:%s57]
        %313 = vst [vmem:[%s65 + $0x1ec] sm:%s57] %v312
        %v314 = vld [vmem:[%s64 + $0x1b8] sm:%s57]
        %315 = vst [vmem:[%s65 + $0x1f0] sm:%s57] %v314
        %v316 = vld [vmem:[%s64 + $0x1f8] sm:%s57]
        %317 = vst [vmem:[%s65 + $0x1f4] sm:%s57] %v316
        %v318 = vld [vmem:[%s64 + $0x1bc] sm:%s57]
        %319 = vst [vmem:[%s65 + $0x1f8] sm:%s57] %v318
        %v320 = vld [vmem:[%s64 + $0x1fc] sm:%s57]
        %321 = vst [vmem:[%s65 + $0x1fc] sm:%s57] %v320
        %v322 = vld [vmem:[%s64 + $0x200] sm:%s57]
        %323 = vst [vmem:[%s65 + $0x200] sm:%s57] %v322
        %v324 = vld [vmem:[%s64 + $0x240] sm:%s57]
        %325 = vst [vmem:[%s65 + $0x204] sm:%s57] %v324
        %v326 = vld [vmem:[%s64 + $0x204] sm:%s57]
        %327 = vst [vmem:[%s65 + $0x208] sm:%s57] %v326
        %v328 = vld [vmem:[%s64 + $0x244] sm:%s57]
        %329 = vst [vmem:[%s65 + $0x20c] sm:%s57] %v328
        %v330 = vld [vmem:[%s64 + $0x208] sm:%s57]
        %331 = vst [vmem:[%s65 + $0x210] sm:%s57] %v330
        %v332 = vld [vmem:[%s64 + $0x248] sm:%s57]
        %333 = vst [vmem:[%s65 + $0x214] sm:%s57] %v332
        %v334 = vld [vmem:[%s64 + $0x20c] sm:%s57]
        %335 = vst [vmem:[%s65 + $0x218] sm:%s57] %v334
        %v336 = vld [vmem:[%s64 + $0x24c] sm:%s57]
        %337 = vst [vmem:[%s65 + $0x21c] sm:%s57] %v336
        %v338 = vld [vmem:[%s64 + $0x210] sm:%s57]
        %339 = vst [vmem:[%s65 + $0x220] sm:%s57] %v338
        %v340 = vld [vmem:[%s64 + $0x250] sm:%s57]
        %341 = vst [vmem:[%s65 + $0x224] sm:%s57] %v340
        %v342 = vld [vmem:[%s64 + $0x214] sm:%s57]
        %343 = vst [vmem:[%s65 + $0x228] sm:%s57] %v342
        %v344 = vld [vmem:[%s64 + $0x254] sm:%s57]
        %345 = vst [vmem:[%s65 + $0x22c] sm:%s57] %v344
        %v346 = vld [vmem:[%s64 + $0x218] sm:%s57]
        %347 = vst [vmem:[%s65 + $0x230] sm:%s57] %v346
        %v348 = vld [vmem:[%s64 + $0x258] sm:%s57]
        %349 = vst [vmem:[%s65 + $0x234] sm:%s57] %v348
        %v350 = vld [vmem:[%s64 + $0x21c] sm:%s57]
        %351 = vst [vmem:[%s65 + $0x238] sm:%s57] %v350
        %v352 = vld [vmem:[%s64 + $0x25c] sm:%s57]
        %353 = vst [vmem:[%s65 + $0x23c] sm:%s57] %v352
        %v354 = vld [vmem:[%s64 + $0x220] sm:%s57]
        %355 = vst [vmem:[%s65 + $0x240] sm:%s57] %v354
        %v356 = vld [vmem:[%s64 + $0x260] sm:%s57]
        %357 = vst [vmem:[%s65 + $0x244] sm:%s57] %v356
        %v358 = vld [vmem:[%s64 + $0x224] sm:%s57]
        %359 = vst [vmem:[%s65 + $0x248] sm:%s57] %v358
        %v360 = vld [vmem:[%s64 + $0x264] sm:%s57]
        %361 = vst [vmem:[%s65 + $0x24c] sm:%s57] %v360
        %v362 = vld [vmem:[%s64 + $0x228] sm:%s57]
        %363 = vst [vmem:[%s65 + $0x250] sm:%s57] %v362
        %v364 = vld [vmem:[%s64 + $0x268] sm:%s57]
        %365 = vst [vmem:[%s65 + $0x254] sm:%s57] %v364
        %v366 = vld [vmem:[%s64 + $0x22c] sm:%s57]
        %367 = vst [vmem:[%s65 + $0x258] sm:%s57] %v366
        %v368 = vld [vmem:[%s64 + $0x26c] sm:%s57]
        %369 = vst [vmem:[%s65 + $0x25c] sm:%s57] %v368
        %v370 = vld [vmem:[%s64 + $0x230] sm:%s57]
        %371 = vst [vmem:[%s65 + $0x260] sm:%s57] %v370
        %v372 = vld [vmem:[%s64 + $0x270] sm:%s57]
        %373 = vst [vmem:[%s65 + $0x264] sm:%s57] %v372
        %v374 = vld [vmem:[%s64 + $0x234] sm:%s57]
        %375 = vst [vmem:[%s65 + $0x268] sm:%s57] %v374
        %v376 = vld [vmem:[%s64 + $0x274] sm:%s57]
        %377 = vst [vmem:[%s65 + $0x26c] sm:%s57] %v376
        %v378 = vld [vmem:[%s64 + $0x238] sm:%s57]
        %379 = vst [vmem:[%s65 + $0x270] sm:%s57] %v378
        %v380 = vld [vmem:[%s64 + $0x278] sm:%s57]
        %381 = vst [vmem:[%s65 + $0x274] sm:%s57] %v380
        %v382 = vld [vmem:[%s64 + $0x23c] sm:%s57]
        %383 = vst [vmem:[%s65 + $0x278] sm:%s57] %v382
        %v384 = vld [vmem:[%s64 + $0x27c] sm:%s57]
        %385 = vst [vmem:[%s65 + $0x27c] sm:%s57] %v384
        %v386 = vld [vmem:[%s64 + $0x280] sm:%s57]
        %387 = vst [vmem:[%s65 + $0x280] sm:%s57] %v386
        %v388 = vld [vmem:[%s64 + $0x2c0] sm:%s57]
        %389 = vst [vmem:[%s65 + $0x284] sm:%s57] %v388
        %v390 = vld [vmem:[%s64 + $0x284] sm:%s57]
        %391 = vst [vmem:[%s65 + $0x288] sm:%s57] %v390
        %v392 = vld [vmem:[%s64 + $0x2c4] sm:%s57]
        %393 = vst [vmem:[%s65 + $0x28c] sm:%s57] %v392
        %v394 = vld [vmem:[%s64 + $0x288] sm:%s57]
        %395 = vst [vmem:[%s65 + $0x290] sm:%s57] %v394
        %v396 = vld [vmem:[%s64 + $0x2c8] sm:%s57]
        %397 = vst [vmem:[%s65 + $0x294] sm:%s57] %v396
        %v398 = vld [vmem:[%s64 + $0x28c] sm:%s57]
        %399 = vst [vmem:[%s65 + $0x298] sm:%s57] %v398
        %v400 = vld [vmem:[%s64 + $0x2cc] sm:%s57]
        %401 = vst [vmem:[%s65 + $0x29c] sm:%s57] %v400
        %v402 = vld [vmem:[%s64 + $0x290] sm:%s57]
        %403 = vst [vmem:[%s65 + $0x2a0] sm:%s57] %v402
        %v404 = vld [vmem:[%s64 + $0x2d0] sm:%s57]
        %405 = vst [vmem:[%s65 + $0x2a4] sm:%s57] %v404
        %v406 = vld [vmem:[%s64 + $0x294] sm:%s57]
        %407 = vst [vmem:[%s65 + $0x2a8] sm:%s57] %v406
        %v408 = vld [vmem:[%s64 + $0x2d4] sm:%s57]
        %409 = vst [vmem:[%s65 + $0x2ac] sm:%s57] %v408
        %v410 = vld [vmem:[%s64 + $0x298] sm:%s57]
        %411 = vst [vmem:[%s65 + $0x2b0] sm:%s57] %v410
        %v412 = vld [vmem:[%s64 + $0x2d8] sm:%s57]
        %413 = vst [vmem:[%s65 + $0x2b4] sm:%s57] %v412
        %v414 = vld [vmem:[%s64 + $0x29c] sm:%s57]
        %415 = vst [vmem:[%s65 + $0x2b8] sm:%s57] %v414
        %v416 = vld [vmem:[%s64 + $0x2dc] sm:%s57]
        %417 = vst [vmem:[%s65 + $0x2bc] sm:%s57] %v416
        %v418 = vld [vmem:[%s64 + $0x2a0] sm:%s57]
        %419 = vst [vmem:[%s65 + $0x2c0] sm:%s57] %v418
        %v420 = vld [vmem:[%s64 + $0x2e0] sm:%s57]
        %421 = vst [vmem:[%s65 + $0x2c4] sm:%s57] %v420
        %v422 = vld [vmem:[%s64 + $0x2a4] sm:%s57]
        %423 = vst [vmem:[%s65 + $0x2c8] sm:%s57] %v422
        %v424 = vld [vmem:[%s64 + $0x2e4] sm:%s57]
        %425 = vst [vmem:[%s65 + $0x2cc] sm:%s57] %v424
        %v426 = vld [vmem:[%s64 + $0x2a8] sm:%s57]
        %427 = vst [vmem:[%s65 + $0x2d0] sm:%s57] %v426
        %v428 = vld [vmem:[%s64 + $0x2e8] sm:%s57]
        %429 = vst [vmem:[%s65 + $0x2d4] sm:%s57] %v428
        %v430 = vld [vmem:[%s64 + $0x2ac] sm:%s57]
        %431 = vst [vmem:[%s65 + $0x2d8] sm:%s57] %v430
        %v432 = vld [vmem:[%s64 + $0x2ec] sm:%s57]
        %433 = vst [vmem:[%s65 + $0x2dc] sm:%s57] %v432
        %v434 = vld [vmem:[%s64 + $0x2b0] sm:%s57]
        %435 = vst [vmem:[%s65 + $0x2e0] sm:%s57] %v434
        %v436 = vld [vmem:[%s64 + $0x2f0] sm:%s57]
        %437 = vst [vmem:[%s65 + $0x2e4] sm:%s57] %v436
        %v438 = vld [vmem:[%s64 + $0x2b4] sm:%s57]
        %439 = vst [vmem:[%s65 + $0x2e8] sm:%s57] %v438
        %v440 = vld [vmem:[%s64 + $0x2f4] sm:%s57]
        %441 = vst [vmem:[%s65 + $0x2ec] sm:%s57] %v440
        %v442 = vld [vmem:[%s64 + $0x2b8] sm:%s57]
        %443 = vst [vmem:[%s65 + $0x2f0] sm:%s57] %v442
        %v444 = vld [vmem:[%s64 + $0x2f8] sm:%s57]
        %445 = vst [vmem:[%s65 + $0x2f4] sm:%s57] %v444
        %v446 = vld [vmem:[%s64 + $0x2bc] sm:%s57]
        %447 = vst [vmem:[%s65 + $0x2f8] sm:%s57] %v446
        %v448 = vld [vmem:[%s64 + $0x2fc] sm:%s57]
        %449 = vst [vmem:[%s65 + $0x2fc] sm:%s57] %v448
        %v450 = vld [vmem:[%s64 + $0x300] sm:%s57]
        %451 = vst [vmem:[%s65 + $0x300] sm:%s57] %v450
        %v452 = vld [vmem:[%s64 + $0x340] sm:%s57]
        %453 = vst [vmem:[%s65 + $0x304] sm:%s57] %v452
        %v454 = vld [vmem:[%s64 + $0x304] sm:%s57]
        %455 = vst [vmem:[%s65 + $0x308] sm:%s57] %v454
        %v456 = vld [vmem:[%s64 + $0x344] sm:%s57]
        %457 = vst [vmem:[%s65 + $0x30c] sm:%s57] %v456
        %v458 = vld [vmem:[%s64 + $0x308] sm:%s57]
        %459 = vst [vmem:[%s65 + $0x310] sm:%s57] %v458
        %v460 = vld [vmem:[%s64 + $0x348] sm:%s57]
        %461 = vst [vmem:[%s65 + $0x314] sm:%s57] %v460
        %v462 = vld [vmem:[%s64 + $0x30c] sm:%s57]
        %463 = vst [vmem:[%s65 + $0x318] sm:%s57] %v462
        %v464 = vld [vmem:[%s64 + $0x34c] sm:%s57]
        %465 = vst [vmem:[%s65 + $0x31c] sm:%s57] %v464
        %v466 = vld [vmem:[%s64 + $0x310] sm:%s57]
        %467 = vst [vmem:[%s65 + $0x320] sm:%s57] %v466
        %v468 = vld [vmem:[%s64 + $0x350] sm:%s57]
        %469 = vst [vmem:[%s65 + $0x324] sm:%s57] %v468
        %v470 = vld [vmem:[%s64 + $0x314] sm:%s57]
        %471 = vst [vmem:[%s65 + $0x328] sm:%s57] %v470
        %v472 = vld [vmem:[%s64 + $0x354] sm:%s57]
        %473 = vst [vmem:[%s65 + $0x32c] sm:%s57] %v472
        %v474 = vld [vmem:[%s64 + $0x318] sm:%s57]
        %475 = vst [vmem:[%s65 + $0x330] sm:%s57] %v474
        %v476 = vld [vmem:[%s64 + $0x358] sm:%s57]
        %477 = vst [vmem:[%s65 + $0x334] sm:%s57] %v476
        %v478 = vld [vmem:[%s64 + $0x31c] sm:%s57]
        %479 = vst [vmem:[%s65 + $0x338] sm:%s57] %v478
        %v480 = vld [vmem:[%s64 + $0x35c] sm:%s57]
        %481 = vst [vmem:[%s65 + $0x33c] sm:%s57] %v480
        %v482 = vld [vmem:[%s64 + $0x320] sm:%s57]
        %483 = vst [vmem:[%s65 + $0x340] sm:%s57] %v482
        %v484 = vld [vmem:[%s64 + $0x360] sm:%s57]
        %485 = vst [vmem:[%s65 + $0x344] sm:%s57] %v484
        %v486 = vld [vmem:[%s64 + $0x324] sm:%s57]
        %487 = vst [vmem:[%s65 + $0x348] sm:%s57] %v486
        %v488 = vld [vmem:[%s64 + $0x364] sm:%s57]
        %489 = vst [vmem:[%s65 + $0x34c] sm:%s57] %v488
        %v490 = vld [vmem:[%s64 + $0x328] sm:%s57]
        %491 = vst [vmem:[%s65 + $0x350] sm:%s57] %v490
        %v492 = vld [vmem:[%s64 + $0x368] sm:%s57]
        %493 = vst [vmem:[%s65 + $0x354] sm:%s57] %v492
        %v494 = vld [vmem:[%s64 + $0x32c] sm:%s57]
        %495 = vst [vmem:[%s65 + $0x358] sm:%s57] %v494
        %v496 = vld [vmem:[%s64 + $0x36c] sm:%s57]
        %497 = vst [vmem:[%s65 + $0x35c] sm:%s57] %v496
        %v498 = vld [vmem:[%s64 + $0x330] sm:%s57]
        %499 = vst [vmem:[%s65 + $0x360] sm:%s57] %v498
        %v500 = vld [vmem:[%s64 + $0x370] sm:%s57]
        %501 = vst [vmem:[%s65 + $0x364] sm:%s57] %v500
        %v502 = vld [vmem:[%s64 + $0x334] sm:%s57]
        %503 = vst [vmem:[%s65 + $0x368] sm:%s57] %v502
        %v504 = vld [vmem:[%s64 + $0x374] sm:%s57]
        %505 = vst [vmem:[%s65 + $0x36c] sm:%s57] %v504
        %v506 = vld [vmem:[%s64 + $0x338] sm:%s57]
        %507 = vst [vmem:[%s65 + $0x370] sm:%s57] %v506
        %v508 = vld [vmem:[%s64 + $0x378] sm:%s57]
        %509 = vst [vmem:[%s65 + $0x374] sm:%s57] %v508
        %v510 = vld [vmem:[%s64 + $0x33c] sm:%s57]
        %511 = vst [vmem:[%s65 + $0x378] sm:%s57] %v510
        %v512 = vld [vmem:[%s64 + $0x37c] sm:%s57]
        %513 = vst [vmem:[%s65 + $0x37c] sm:%s57] %v512
        %v514 = vld [vmem:[%s64 + $0x380] sm:%s57]
        %515 = vst [vmem:[%s65 + $0x380] sm:%s57] %v514
        %v516 = vld [vmem:[%s64 + $0x3c0] sm:%s57]
        %517 = vst [vmem:[%s65 + $0x384] sm:%s57] %v516
        %v518 = vld [vmem:[%s64 + $0x384] sm:%s57]
        %519 = vst [vmem:[%s65 + $0x388] sm:%s57] %v518
        %v520 = vld [vmem:[%s64 + $0x3c4] sm:%s57]
        %521 = vst [vmem:[%s65 + $0x38c] sm:%s57] %v520
        %v522 = vld [vmem:[%s64 + $0x388] sm:%s57]
        %523 = vst [vmem:[%s65 + $0x390] sm:%s57] %v522
        %v524 = vld [vmem:[%s64 + $0x3c8] sm:%s57]
        %525 = vst [vmem:[%s65 + $0x394] sm:%s57] %v524
        %v526 = vld [vmem:[%s64 + $0x38c] sm:%s57]
        %527 = vst [vmem:[%s65 + $0x398] sm:%s57] %v526
        %v528 = vld [vmem:[%s64 + $0x3cc] sm:%s57]
        %529 = vst [vmem:[%s65 + $0x39c] sm:%s57] %v528
        %v530 = vld [vmem:[%s64 + $0x390] sm:%s57]
        %531 = vst [vmem:[%s65 + $0x3a0] sm:%s57] %v530
        %v532 = vld [vmem:[%s64 + $0x3d0] sm:%s57]
        %533 = vst [vmem:[%s65 + $0x3a4] sm:%s57] %v532
        %v534 = vld [vmem:[%s64 + $0x394] sm:%s57]
        %535 = vst [vmem:[%s65 + $0x3a8] sm:%s57] %v534
        %v536 = vld [vmem:[%s64 + $0x3d4] sm:%s57]
        %537 = vst [vmem:[%s65 + $0x3ac] sm:%s57] %v536
        %v538 = vld [vmem:[%s64 + $0x398] sm:%s57]
        %539 = vst [vmem:[%s65 + $0x3b0] sm:%s57] %v538
        %v540 = vld [vmem:[%s64 + $0x3d8] sm:%s57]
        %541 = vst [vmem:[%s65 + $0x3b4] sm:%s57] %v540
        %v542 = vld [vmem:[%s64 + $0x39c] sm:%s57]
        %543 = vst [vmem:[%s65 + $0x3b8] sm:%s57] %v542
        %v544 = vld [vmem:[%s64 + $0x3dc] sm:%s57]
        %545 = vst [vmem:[%s65 + $0x3bc] sm:%s57] %v544
        %v546 = vld [vmem:[%s64 + $0x3a0] sm:%s57]
        %547 = vst [vmem:[%s65 + $0x3c0] sm:%s57] %v546
        %v548 = vld [vmem:[%s64 + $0x3e0] sm:%s57]
        %549 = vst [vmem:[%s65 + $0x3c4] sm:%s57] %v548
        %v550 = vld [vmem:[%s64 + $0x3a4] sm:%s57]
        %551 = vst [vmem:[%s65 + $0x3c8] sm:%s57] %v550
        %v552 = vld [vmem:[%s64 + $0x3e4] sm:%s57]
        %553 = vst [vmem:[%s65 + $0x3cc] sm:%s57] %v552
        %v554 = vld [vmem:[%s64 + $0x3a8] sm:%s57]
        %555 = vst [vmem:[%s65 + $0x3d0] sm:%s57] %v554
        %v556 = vld [vmem:[%s64 + $0x3e8] sm:%s57]
        %557 = vst [vmem:[%s65 + $0x3d4] sm:%s57] %v556
        %v558 = vld [vmem:[%s64 + $0x3ac] sm:%s57]
        %559 = vst [vmem:[%s65 + $0x3d8] sm:%s57] %v558
        %v560 = vld [vmem:[%s64 + $0x3ec] sm:%s57]
        %561 = vst [vmem:[%s65 + $0x3dc] sm:%s57] %v560
        %v562 = vld [vmem:[%s64 + $0x3b0] sm:%s57]
        %563 = vst [vmem:[%s65 + $0x3e0] sm:%s57] %v562
        %v564 = vld [vmem:[%s64 + $0x3f0] sm:%s57]
        %565 = vst [vmem:[%s65 + $0x3e4] sm:%s57] %v564
        %v566 = vld [vmem:[%s64 + $0x3b4] sm:%s57]
        %567 = vst [vmem:[%s65 + $0x3e8] sm:%s57] %v566
        %v568 = vld [vmem:[%s64 + $0x3f4] sm:%s57]
        %569 = vst [vmem:[%s65 + $0x3ec] sm:%s57] %v568
        %v570 = vld [vmem:[%s64 + $0x3b8] sm:%s57]
        %571 = vst [vmem:[%s65 + $0x3f0] sm:%s57] %v570
        %v572 = vld [vmem:[%s64 + $0x3f8] sm:%s57]
        %573 = vst [vmem:[%s65 + $0x3f4] sm:%s57] %v572
        %v574 = vld [vmem:[%s64 + $0x3bc] sm:%s57]
        %575 = vst [vmem:[%s65 + $0x3f8] sm:%s57] %v574
        %v576 = vld [vmem:[%s64 + $0x3fc] sm:%s57]
        %577 = vst [vmem:[%s65 + $0x3fc] sm:%s57] %v576
        %v578 = vld [vmem:[%s64 + $0x400] sm:%s57]
        %579 = vst [vmem:[%s65 + $0x400] sm:%s57] %v578
        %v580 = vld [vmem:[%s64 + $0x440] sm:%s57]
        %581 = vst [vmem:[%s65 + $0x404] sm:%s57] %v580
        %v582 = vld [vmem:[%s64 + $0x404] sm:%s57]
        %583 = vst [vmem:[%s65 + $0x408] sm:%s57] %v582
        %v584 = vld [vmem:[%s64 + $0x444] sm:%s57]
        %585 = vst [vmem:[%s65 + $0x40c] sm:%s57] %v584
        %v586 = vld [vmem:[%s64 + $0x408] sm:%s57]
        %587 = vst [vmem:[%s65 + $0x410] sm:%s57] %v586
        %v588 = vld [vmem:[%s64 + $0x448] sm:%s57]
        %589 = vst [vmem:[%s65 + $0x414] sm:%s57] %v588
        %v590 = vld [vmem:[%s64 + $0x40c] sm:%s57]
        %591 = vst [vmem:[%s65 + $0x418] sm:%s57] %v590
        %v592 = vld [vmem:[%s64 + $0x44c] sm:%s57]
        %593 = vst [vmem:[%s65 + $0x41c] sm:%s57] %v592
        %v594 = vld [vmem:[%s64 + $0x410] sm:%s57]
        %595 = vst [vmem:[%s65 + $0x420] sm:%s57] %v594
        %v596 = vld [vmem:[%s64 + $0x450] sm:%s57]
        %597 = vst [vmem:[%s65 + $0x424] sm:%s57] %v596
        %v598 = vld [vmem:[%s64 + $0x414] sm:%s57]
        %599 = vst [vmem:[%s65 + $0x428] sm:%s57] %v598
        %v600 = vld [vmem:[%s64 + $0x454] sm:%s57]
        %601 = vst [vmem:[%s65 + $0x42c] sm:%s57] %v600
        %v602 = vld [vmem:[%s64 + $0x418] sm:%s57]
        %603 = vst [vmem:[%s65 + $0x430] sm:%s57] %v602
        %v604 = vld [vmem:[%s64 + $0x458] sm:%s57]
        %605 = vst [vmem:[%s65 + $0x434] sm:%s57] %v604
        %v606 = vld [vmem:[%s64 + $0x41c] sm:%s57]
        %607 = vst [vmem:[%s65 + $0x438] sm:%s57] %v606
        %v608 = vld [vmem:[%s64 + $0x45c] sm:%s57]
        %609 = vst [vmem:[%s65 + $0x43c] sm:%s57] %v608
        %v610 = vld [vmem:[%s64 + $0x420] sm:%s57]
        %611 = vst [vmem:[%s65 + $0x440] sm:%s57] %v610
        %v612 = vld [vmem:[%s64 + $0x460] sm:%s57]
        %613 = vst [vmem:[%s65 + $0x444] sm:%s57] %v612
        %v614 = vld [vmem:[%s64 + $0x424] sm:%s57]
        %615 = vst [vmem:[%s65 + $0x448] sm:%s57] %v614
        %v616 = vld [vmem:[%s64 + $0x464] sm:%s57]
        %617 = vst [vmem:[%s65 + $0x44c] sm:%s57] %v616
        %v618 = vld [vmem:[%s64 + $0x428] sm:%s57]
        %619 = vst [vmem:[%s65 + $0x450] sm:%s57] %v618
        %v620 = vld [vmem:[%s64 + $0x468] sm:%s57]
        %621 = vst [vmem:[%s65 + $0x454] sm:%s57] %v620
        %v622 = vld [vmem:[%s64 + $0x42c] sm:%s57]
        %623 = vst [vmem:[%s65 + $0x458] sm:%s57] %v622
        %v624 = vld [vmem:[%s64 + $0x46c] sm:%s57]
        %625 = vst [vmem:[%s65 + $0x45c] sm:%s57] %v624
        %v626 = vld [vmem:[%s64 + $0x430] sm:%s57]
        %627 = vst [vmem:[%s65 + $0x460] sm:%s57] %v626
        %v628 = vld [vmem:[%s64 + $0x470] sm:%s57]
        %629 = vst [vmem:[%s65 + $0x464] sm:%s57] %v628
        %v630 = vld [vmem:[%s64 + $0x434] sm:%s57]
        %631 = vst [vmem:[%s65 + $0x468] sm:%s57] %v630
        %v632 = vld [vmem:[%s64 + $0x474] sm:%s57]
        %633 = vst [vmem:[%s65 + $0x46c] sm:%s57] %v632
        %v634 = vld [vmem:[%s64 + $0x438] sm:%s57]
        %635 = vst [vmem:[%s65 + $0x470] sm:%s57] %v634
        %v636 = vld [vmem:[%s64 + $0x478] sm:%s57]
        %637 = vst [vmem:[%s65 + $0x474] sm:%s57] %v636
        %v638 = vld [vmem:[%s64 + $0x43c] sm:%s57]
        %639 = vst [vmem:[%s65 + $0x478] sm:%s57] %v638
        %v640 = vld [vmem:[%s64 + $0x47c] sm:%s57]
        %641 = vst [vmem:[%s65 + $0x47c] sm:%s57] %v640
        %v642 = vld [vmem:[%s64 + $0x480] sm:%s57]
        %643 = vst [vmem:[%s65 + $0x480] sm:%s57] %v642
        %v644 = vld [vmem:[%s64 + $0x4c0] sm:%s57]
        %645 = vst [vmem:[%s65 + $0x484] sm:%s57] %v644
        %v646 = vld [vmem:[%s64 + $0x484] sm:%s57]
        %647 = vst [vmem:[%s65 + $0x488] sm:%s57] %v646
        %v648 = vld [vmem:[%s64 + $0x4c4] sm:%s57]
        %649 = vst [vmem:[%s65 + $0x48c] sm:%s57] %v648
        %v650 = vld [vmem:[%s64 + $0x488] sm:%s57]
        %651 = vst [vmem:[%s65 + $0x490] sm:%s57] %v650
        %v652 = vld [vmem:[%s64 + $0x4c8] sm:%s57]
        %653 = vst [vmem:[%s65 + $0x494] sm:%s57] %v652
        %v654 = vld [vmem:[%s64 + $0x48c] sm:%s57]
        %655 = vst [vmem:[%s65 + $0x498] sm:%s57] %v654
        %v656 = vld [vmem:[%s64 + $0x4cc] sm:%s57]
        %657 = vst [vmem:[%s65 + $0x49c] sm:%s57] %v656
        %v658 = vld [vmem:[%s64 + $0x490] sm:%s57]
        %659 = vst [vmem:[%s65 + $0x4a0] sm:%s57] %v658
        %v660 = vld [vmem:[%s64 + $0x4d0] sm:%s57]
        %661 = vst [vmem:[%s65 + $0x4a4] sm:%s57] %v660
        %v662 = vld [vmem:[%s64 + $0x494] sm:%s57]
        %663 = vst [vmem:[%s65 + $0x4a8] sm:%s57] %v662
        %v664 = vld [vmem:[%s64 + $0x4d4] sm:%s57]
        %665 = vst [vmem:[%s65 + $0x4ac] sm:%s57] %v664
        %v666 = vld [vmem:[%s64 + $0x498] sm:%s57]
        %667 = vst [vmem:[%s65 + $0x4b0] sm:%s57] %v666
        %v668 = vld [vmem:[%s64 + $0x4d8] sm:%s57]
        %669 = vst [vmem:[%s65 + $0x4b4] sm:%s57] %v668
        %v670 = vld [vmem:[%s64 + $0x49c] sm:%s57]
        %671 = vst [vmem:[%s65 + $0x4b8] sm:%s57] %v670
        %v672 = vld [vmem:[%s64 + $0x4dc] sm:%s57]
        %673 = vst [vmem:[%s65 + $0x4bc] sm:%s57] %v672
        %v674 = vld [vmem:[%s64 + $0x4a0] sm:%s57]
        %675 = vst [vmem:[%s65 + $0x4c0] sm:%s57] %v674
        %v676 = vld [vmem:[%s64 + $0x4e0] sm:%s57]
        %677 = vst [vmem:[%s65 + $0x4c4] sm:%s57] %v676
        %v678 = vld [vmem:[%s64 + $0x4a4] sm:%s57]
        %679 = vst [vmem:[%s65 + $0x4c8] sm:%s57] %v678
        %v680 = vld [vmem:[%s64 + $0x4e4] sm:%s57]
        %681 = vst [vmem:[%s65 + $0x4cc] sm:%s57] %v680
        %v682 = vld [vmem:[%s64 + $0x4a8] sm:%s57]
        %683 = vst [vmem:[%s65 + $0x4d0] sm:%s57] %v682
        %v684 = vld [vmem:[%s64 + $0x4e8] sm:%s57]
        %685 = vst [vmem:[%s65 + $0x4d4] sm:%s57] %v684
        %v686 = vld [vmem:[%s64 + $0x4ac] sm:%s57]
        %687 = vst [vmem:[%s65 + $0x4d8] sm:%s57] %v686
        %v688 = vld [vmem:[%s64 + $0x4ec] sm:%s57]
        %689 = vst [vmem:[%s65 + $0x4dc] sm:%s57] %v688
        %v690 = vld [vmem:[%s64 + $0x4b0] sm:%s57]
        %691 = vst [vmem:[%s65 + $0x4e0] sm:%s57] %v690
        %v692 = vld [vmem:[%s64 + $0x4f0] sm:%s57]
        %693 = vst [vmem:[%s65 + $0x4e4] sm:%s57] %v692
        %v694 = vld [vmem:[%s64 + $0x4b4] sm:%s57]
        %695 = vst [vmem:[%s65 + $0x4e8] sm:%s57] %v694
        %v696 = vld [vmem:[%s64 + $0x4f4] sm:%s57]
        %697 = vst [vmem:[%s65 + $0x4ec] sm:%s57] %v696
        %v698 = vld [vmem:[%s64 + $0x4b8] sm:%s57]
        %699 = vst [vmem:[%s65 + $0x4f0] sm:%s57] %v698
        %v700 = vld [vmem:[%s64 + $0x4f8] sm:%s57]
        %701 = vst [vmem:[%s65 + $0x4f4] sm:%s57] %v700
        %v702 = vld [vmem:[%s64 + $0x4bc] sm:%s57]
        %703 = vst [vmem:[%s65 + $0x4f8] sm:%s57] %v702
        %v704 = vld [vmem:[%s64 + $0x4fc] sm:%s57]
        %705 = vst [vmem:[%s65 + $0x4fc] sm:%s57] %v704
        %v706 = vld [vmem:[%s64 + $0x500] sm:%s57]
        %707 = vst [vmem:[%s65 + $0x500] sm:%s57] %v706
        %v708 = vld [vmem:[%s64 + $0x540] sm:%s57]
        %709 = vst [vmem:[%s65 + $0x504] sm:%s57] %v708
        %v710 = vld [vmem:[%s64 + $0x504] sm:%s57]
        %711 = vst [vmem:[%s65 + $0x508] sm:%s57] %v710
        %v712 = vld [vmem:[%s64 + $0x544] sm:%s57]
        %713 = vst [vmem:[%s65 + $0x50c] sm:%s57] %v712
        %v714 = vld [vmem:[%s64 + $0x508] sm:%s57]
        %715 = vst [vmem:[%s65 + $0x510] sm:%s57] %v714
        %v716 = vld [vmem:[%s64 + $0x548] sm:%s57]
        %717 = vst [vmem:[%s65 + $0x514] sm:%s57] %v716
        %v718 = vld [vmem:[%s64 + $0x50c] sm:%s57]
        %719 = vst [vmem:[%s65 + $0x518] sm:%s57] %v718
        %v720 = vld [vmem:[%s64 + $0x54c] sm:%s57]
        %721 = vst [vmem:[%s65 + $0x51c] sm:%s57] %v720
        %v722 = vld [vmem:[%s64 + $0x510] sm:%s57]
        %723 = vst [vmem:[%s65 + $0x520] sm:%s57] %v722
        %v724 = vld [vmem:[%s64 + $0x550] sm:%s57]
        %725 = vst [vmem:[%s65 + $0x524] sm:%s57] %v724
        %v726 = vld [vmem:[%s64 + $0x514] sm:%s57]
        %727 = vst [vmem:[%s65 + $0x528] sm:%s57] %v726
        %v728 = vld [vmem:[%s64 + $0x554] sm:%s57]
        %729 = vst [vmem:[%s65 + $0x52c] sm:%s57] %v728
        %v730 = vld [vmem:[%s64 + $0x518] sm:%s57]
        %731 = vst [vmem:[%s65 + $0x530] sm:%s57] %v730
        %v732 = vld [vmem:[%s64 + $0x558] sm:%s57]
        %733 = vst [vmem:[%s65 + $0x534] sm:%s57] %v732
        %v734 = vld [vmem:[%s64 + $0x51c] sm:%s57]
        %735 = vst [vmem:[%s65 + $0x538] sm:%s57] %v734
        %v736 = vld [vmem:[%s64 + $0x55c] sm:%s57]
        %737 = vst [vmem:[%s65 + $0x53c] sm:%s57] %v736
        %v738 = vld [vmem:[%s64 + $0x520] sm:%s57]
        %739 = vst [vmem:[%s65 + $0x540] sm:%s57] %v738
        %v740 = vld [vmem:[%s64 + $0x560] sm:%s57]
        %741 = vst [vmem:[%s65 + $0x544] sm:%s57] %v740
        %v742 = vld [vmem:[%s64 + $0x524] sm:%s57]
        %743 = vst [vmem:[%s65 + $0x548] sm:%s57] %v742
        %v744 = vld [vmem:[%s64 + $0x564] sm:%s57]
        %745 = vst [vmem:[%s65 + $0x54c] sm:%s57] %v744
        %v746 = vld [vmem:[%s64 + $0x528] sm:%s57]
        %747 = vst [vmem:[%s65 + $0x550] sm:%s57] %v746
        %v748 = vld [vmem:[%s64 + $0x568] sm:%s57]
        %749 = vst [vmem:[%s65 + $0x554] sm:%s57] %v748
        %v750 = vld [vmem:[%s64 + $0x52c] sm:%s57]
        %751 = vst [vmem:[%s65 + $0x558] sm:%s57] %v750
        %v752 = vld [vmem:[%s64 + $0x56c] sm:%s57]
        %753 = vst [vmem:[%s65 + $0x55c] sm:%s57] %v752
        %v754 = vld [vmem:[%s64 + $0x530] sm:%s57]
        %755 = vst [vmem:[%s65 + $0x560] sm:%s57] %v754
        %v756 = vld [vmem:[%s64 + $0x570] sm:%s57]
        %757 = vst [vmem:[%s65 + $0x564] sm:%s57] %v756
        %v758 = vld [vmem:[%s64 + $0x534] sm:%s57]
        %759 = vst [vmem:[%s65 + $0x568] sm:%s57] %v758
        %v760 = vld [vmem:[%s64 + $0x574] sm:%s57]
        %761 = vst [vmem:[%s65 + $0x56c] sm:%s57] %v760
        %v762 = vld [vmem:[%s64 + $0x538] sm:%s57]
        %763 = vst [vmem:[%s65 + $0x570] sm:%s57] %v762
        %v764 = vld [vmem:[%s64 + $0x578] sm:%s57]
        %765 = vst [vmem:[%s65 + $0x574] sm:%s57] %v764
        %v766 = vld [vmem:[%s64 + $0x53c] sm:%s57]
        %767 = vst [vmem:[%s65 + $0x578] sm:%s57] %v766
        %v768 = vld [vmem:[%s64 + $0x57c] sm:%s57]
        %769 = vst [vmem:[%s65 + $0x57c] sm:%s57] %v768
        %v770 = vld [vmem:[%s64 + $0x580] sm:%s57]
        %771 = vst [vmem:[%s65 + $0x580] sm:%s57] %v770
        %v772 = vld [vmem:[%s64 + $0x5c0] sm:%s57]
        %773 = vst [vmem:[%s65 + $0x584] sm:%s57] %v772
        %v774 = vld [vmem:[%s64 + $0x584] sm:%s57]
        %775 = vst [vmem:[%s65 + $0x588] sm:%s57] %v774
        %v776 = vld [vmem:[%s64 + $0x5c4] sm:%s57]
        %777 = vst [vmem:[%s65 + $0x58c] sm:%s57] %v776
        %v778 = vld [vmem:[%s64 + $0x588] sm:%s57]
        %779 = vst [vmem:[%s65 + $0x590] sm:%s57] %v778
        %v780 = vld [vmem:[%s64 + $0x5c8] sm:%s57]
        %781 = vst [vmem:[%s65 + $0x594] sm:%s57] %v780
        %v782 = vld [vmem:[%s64 + $0x58c] sm:%s57]
        %783 = vst [vmem:[%s65 + $0x598] sm:%s57] %v782
        %v784 = vld [vmem:[%s64 + $0x5cc] sm:%s57]
        %785 = vst [vmem:[%s65 + $0x59c] sm:%s57] %v784
        %v786 = vld [vmem:[%s64 + $0x590] sm:%s57]
        %787 = vst [vmem:[%s65 + $0x5a0] sm:%s57] %v786
        %v788 = vld [vmem:[%s64 + $0x5d0] sm:%s57]
        %789 = vst [vmem:[%s65 + $0x5a4] sm:%s57] %v788
        %v790 = vld [vmem:[%s64 + $0x594] sm:%s57]
        %791 = vst [vmem:[%s65 + $0x5a8] sm:%s57] %v790
        %v792 = vld [vmem:[%s64 + $0x5d4] sm:%s57]
        %793 = vst [vmem:[%s65 + $0x5ac] sm:%s57] %v792
        %v794 = vld [vmem:[%s64 + $0x598] sm:%s57]
        %795 = vst [vmem:[%s65 + $0x5b0] sm:%s57] %v794
        %v796 = vld [vmem:[%s64 + $0x5d8] sm:%s57]
        %797 = vst [vmem:[%s65 + $0x5b4] sm:%s57] %v796
        %v798 = vld [vmem:[%s64 + $0x59c] sm:%s57]
        %799 = vst [vmem:[%s65 + $0x5b8] sm:%s57] %v798
        %v800 = vld [vmem:[%s64 + $0x5dc] sm:%s57]
        %801 = vst [vmem:[%s65 + $0x5bc] sm:%s57] %v800
        %v802 = vld [vmem:[%s64 + $0x5a0] sm:%s57]
        %803 = vst [vmem:[%s65 + $0x5c0] sm:%s57] %v802
        %v804 = vld [vmem:[%s64 + $0x5e0] sm:%s57]
        %805 = vst [vmem:[%s65 + $0x5c4] sm:%s57] %v804
        %v806 = vld [vmem:[%s64 + $0x5a4] sm:%s57]
        %807 = vst [vmem:[%s65 + $0x5c8] sm:%s57] %v806
        %v808 = vld [vmem:[%s64 + $0x5e4] sm:%s57]
        %809 = vst [vmem:[%s65 + $0x5cc] sm:%s57] %v808
        %v810 = vld [vmem:[%s64 + $0x5a8] sm:%s57]
        %811 = vst [vmem:[%s65 + $0x5d0] sm:%s57] %v810
        %v812 = vld [vmem:[%s64 + $0x5e8] sm:%s57]
        %813 = vst [vmem:[%s65 + $0x5d4] sm:%s57] %v812
        %v814 = vld [vmem:[%s64 + $0x5ac] sm:%s57]
        %815 = vst [vmem:[%s65 + $0x5d8] sm:%s57] %v814
        %v816 = vld [vmem:[%s64 + $0x5ec] sm:%s57]
        %817 = vst [vmem:[%s65 + $0x5dc] sm:%s57] %v816
        %v818 = vld [vmem:[%s64 + $0x5b0] sm:%s57]
        %819 = vst [vmem:[%s65 + $0x5e0] sm:%s57] %v818
        %v820 = vld [vmem:[%s64 + $0x5f0] sm:%s57]
        %821 = vst [vmem:[%s65 + $0x5e4] sm:%s57] %v820
        %v822 = vld [vmem:[%s64 + $0x5b4] sm:%s57]
        %823 = vst [vmem:[%s65 + $0x5e8] sm:%s57] %v822
        %v824 = vld [vmem:[%s64 + $0x5f4] sm:%s57]
        %825 = vst [vmem:[%s65 + $0x5ec] sm:%s57] %v824
        %v826 = vld [vmem:[%s64 + $0x5b8] sm:%s57]
        %827 = vst [vmem:[%s65 + $0x5f0] sm:%s57] %v826
        %v828 = vld [vmem:[%s64 + $0x5f8] sm:%s57]
        %829 = vst [vmem:[%s65 + $0x5f4] sm:%s57] %v828
        %v830 = vld [vmem:[%s64 + $0x5bc] sm:%s57]
        %831 = vst [vmem:[%s65 + $0x5f8] sm:%s57] %v830
        %v832 = vld [vmem:[%s64 + $0x5fc] sm:%s57]
        %833 = vst [vmem:[%s65 + $0x5fc] sm:%s57] %v832
      $region66: #{net_forward.1} parent=60 // loop_footer
        %s63 = sadd.s32 1, %s59
      $region67: #{net_forward.1} parent=60 // loop_footer_branch
        %58 = sbr.rel target = $region63
      $region68: #{net_forward.1} parent=60 // loop_exit
        _
    $region61: #{net_forward.1} parent=1 // pred_fallthru
      _
    // Predicated region
    $region87: #{net_forward.1} parent=1 // pred_check
      _
    $region88: #{net_forward.1} parent=1 // pred_check_branch
      %1631 = sbr.rel (0) target = $region90
    $region89: #{net_forward.1} parent=1 // pred_region
      %1632 = vsyncadd [#allocation5], 24576
    $region90: #{net_forward.1} parent=1 // pred_fallthru
      _
    %s1633 = scalar_lea.sflag [#allocation5], 1
    %p1635 = scmp.lt.u32.totalorder 1024, 8
    %p1636 = pneg %p1635
    // Predicated region
    $region91: #{net_forward.1} parent=1 // pred_check
      _
    $region92: #{net_forward.1} parent=1 // pred_check_branch
      %1638 = sbr.rel (%p1635) target = $region94
    $region93: #{net_forward.1} parent=1 // pred_region
      %s1653 = sand.u32 1024, 7
      %p1654 = scmp.eq.s32.totalorder %s1653, 0
      // Predicated region
      $region106: #{net_forward.1} parent=93 // pred_check
        %p1655 = pneg %p1654
      $region107: #{net_forward.1} parent=93 // pred_check_branch
        %1657 = sbr.rel (%p1655) target = $region109
      $region108: #{net_forward.1} parent=93 // pred_region
        loop: start=0, step=1, limit=1
        $region110: #{net_forward.1} parent=108 // loop_pre_header
          _
        $region111: #{net_forward.1} parent=108 // loop_header
          %s1659 = sphi 0, %s1663
          %p1660 = scmp.ge.s32.totalorder %s1659, 1
          %s1664 = sphi %s7, %s7
          %s1665 = sphi [#allocation3], [#allocation3]
        $region112: #{net_forward.1} parent=108 // loop_header_branch
          %1662 = sbr.rel (%p1660) target = $region116
        $region113: #{net_forward.1} parent=108 // loop_body
          %v1666 = vld [vmem:[%s1664] sm:$0xff]
          %1667 = vst [vmem:[%s1665] sm:$0xff] %v1666
          %v1668 = vld [vmem:[%s1664 + $0x8] sm:$0xff]
          %1669 = vst [vmem:[%s1665 + $0x8] sm:$0xff] %v1668
          %v1670 = vld [vmem:[%s1664 + $0x10] sm:$0xff]
          %1671 = vst [vmem:[%s1665 + $0x10] sm:$0xff] %v1670
          %v1672 = vld [vmem:[%s1664 + $0x18] sm:$0xff]
          %1673 = vst [vmem:[%s1665 + $0x18] sm:$0xff] %v1672
          %v1674 = vld [vmem:[%s1664 + $0x20] sm:$0xff]
          %1675 = vst [vmem:[%s1665 + $0x20] sm:$0xff] %v1674
          %v1676 = vld [vmem:[%s1664 + $0x28] sm:$0xff]
          %1677 = vst [vmem:[%s1665 + $0x28] sm:$0xff] %v1676
          %v1678 = vld [vmem:[%s1664 + $0x30] sm:$0xff]
          %1679 = vst [vmem:[%s1665 + $0x30] sm:$0xff] %v1678
          %v1680 = vld [vmem:[%s1664 + $0x38] sm:$0xff]
          %1681 = vst [vmem:[%s1665 + $0x38] sm:$0xff] %v1680
          %v1682 = vld [vmem:[%s1664 + $0x40] sm:$0xff]
          %1683 = vst [vmem:[%s1665 + $0x40] sm:$0xff] %v1682
          %v1684 = vld [vmem:[%s1664 + $0x48] sm:$0xff]
          %1685 = vst [vmem:[%s1665 + $0x48] sm:$0xff] %v1684
          %v1686 = vld [vmem:[%s1664 + $0x50] sm:$0xff]
          %1687 = vst [vmem:[%s1665 + $0x50] sm:$0xff] %v1686
          %v1688 = vld [vmem:[%s1664 + $0x58] sm:$0xff]
          %1689 = vst [vmem:[%s1665 + $0x58] sm:$0xff] %v1688
          %v1690 = vld [vmem:[%s1664 + $0x60] sm:$0xff]
          %1691 = vst [vmem:[%s1665 + $0x60] sm:$0xff] %v1690
          %v1692 = vld [vmem:[%s1664 + $0x68] sm:$0xff]
          %1693 = vst [vmem:[%s1665 + $0x68] sm:$0xff] %v1692
          %v1694 = vld [vmem:[%s1664 + $0x70] sm:$0xff]
          %1695 = vst [vmem:[%s1665 + $0x70] sm:$0xff] %v1694
          %v1696 = vld [vmem:[%s1664 + $0x78] sm:$0xff]
          %1697 = vst [vmem:[%s1665 + $0x78] sm:$0xff] %v1696
          %v1698 = vld [vmem:[%s1664 + $0x80] sm:$0xff]
          %1699 = vst [vmem:[%s1665 + $0x80] sm:$0xff] %v1698
          %v1700 = vld [vmem:[%s1664 + $0x88] sm:$0xff]
          %1701 = vst [vmem:[%s1665 + $0x88] sm:$0xff] %v1700
          %v1702 = vld [vmem:[%s1664 + $0x90] sm:$0xff]
          %1703 = vst [vmem:[%s1665 + $0x90] sm:$0xff] %v1702
          %v1704 = vld [vmem:[%s1664 + $0x98] sm:$0xff]
          %1705 = vst [vmem:[%s1665 + $0x98] sm:$0xff] %v1704
          %v1706 = vld [vmem:[%s1664 + $0xa0] sm:$0xff]
          %1707 = vst [vmem:[%s1665 + $0xa0] sm:$0xff] %v1706
          %v1708 = vld [vmem:[%s1664 + $0xa8] sm:$0xff]
          %1709 = vst [vmem:[%s1665 + $0xa8] sm:$0xff] %v1708
          %v1710 = vld [vmem:[%s1664 + $0xb0] sm:$0xff]
          %1711 = vst [vmem:[%s1665 + $0xb0] sm:$0xff] %v1710
          %v1712 = vld [vmem:[%s1664 + $0xb8] sm:$0xff]
          %1713 = vst [vmem:[%s1665 + $0xb8] sm:$0xff] %v1712
          %v1714 = vld [vmem:[%s1664 + $0xc0] sm:$0xff]
          %1715 = vst [vmem:[%s1665 + $0xc0] sm:$0xff] %v1714
          %v1716 = vld [vmem:[%s1664 + $0xc8] sm:$0xff]
          %1717 = vst [vmem:[%s1665 + $0xc8] sm:$0xff] %v1716
          %v1718 = vld [vmem:[%s1664 + $0xd0] sm:$0xff]
          %1719 = vst [vmem:[%s1665 + $0xd0] sm:$0xff] %v1718
          %v1720 = vld [vmem:[%s1664 + $0xd8] sm:$0xff]
          %1721 = vst [vmem:[%s1665 + $0xd8] sm:$0xff] %v1720
          %v1722 = vld [vmem:[%s1664 + $0xe0] sm:$0xff]
          %1723 = vst [vmem:[%s1665 + $0xe0] sm:$0xff] %v1722
          %v1724 = vld [vmem:[%s1664 + $0xe8] sm:$0xff]
          %1725 = vst [vmem:[%s1665 + $0xe8] sm:$0xff] %v1724
          %v1726 = vld [vmem:[%s1664 + $0xf0] sm:$0xff]
          %1727 = vst [vmem:[%s1665 + $0xf0] sm:$0xff] %v1726
          %v1728 = vld [vmem:[%s1664 + $0xf8] sm:$0xff]
          %1729 = vst [vmem:[%s1665 + $0xf8] sm:$0xff] %v1728
          %v1730 = vld [vmem:[%s1664 + $0x100] sm:$0xff]
          %1731 = vst [vmem:[%s1665 + $0x100] sm:$0xff] %v1730
          %v1732 = vld [vmem:[%s1664 + $0x108] sm:$0xff]
          %1733 = vst [vmem:[%s1665 + $0x108] sm:$0xff] %v1732
          %v1734 = vld [vmem:[%s1664 + $0x110] sm:$0xff]
          %1735 = vst [vmem:[%s1665 + $0x110] sm:$0xff] %v1734
          %v1736 = vld [vmem:[%s1664 + $0x118] sm:$0xff]
          %1737 = vst [vmem:[%s1665 + $0x118] sm:$0xff] %v1736
          %v1738 = vld [vmem:[%s1664 + $0x120] sm:$0xff]
          %1739 = vst [vmem:[%s1665 + $0x120] sm:$0xff] %v1738
          %v1740 = vld [vmem:[%s1664 + $0x128] sm:$0xff]
          %1741 = vst [vmem:[%s1665 + $0x128] sm:$0xff] %v1740
          %v1742 = vld [vmem:[%s1664 + $0x130] sm:$0xff]
          %1743 = vst [vmem:[%s1665 + $0x130] sm:$0xff] %v1742
          %v1744 = vld [vmem:[%s1664 + $0x138] sm:$0xff]
          %1745 = vst [vmem:[%s1665 + $0x138] sm:$0xff] %v1744
          %v1746 = vld [vmem:[%s1664 + $0x140] sm:$0xff]
          %1747 = vst [vmem:[%s1665 + $0x140] sm:$0xff] %v1746
          %v1748 = vld [vmem:[%s1664 + $0x148] sm:$0xff]
          %1749 = vst [vmem:[%s1665 + $0x148] sm:$0xff] %v1748
          %v1750 = vld [vmem:[%s1664 + $0x150] sm:$0xff]
          %1751 = vst [vmem:[%s1665 + $0x150] sm:$0xff] %v1750
          %v1752 = vld [vmem:[%s1664 + $0x158] sm:$0xff]
          %1753 = vst [vmem:[%s1665 + $0x158] sm:$0xff] %v1752
          %v1754 = vld [vmem:[%s1664 + $0x160] sm:$0xff]
          %1755 = vst [vmem:[%s1665 + $0x160] sm:$0xff] %v1754
          %v1756 = vld [vmem:[%s1664 + $0x168] sm:$0xff]
          %1757 = vst [vmem:[%s1665 + $0x168] sm:$0xff] %v1756
          %v1758 = vld [vmem:[%s1664 + $0x170] sm:$0xff]
          %1759 = vst [vmem:[%s1665 + $0x170] sm:$0xff] %v1758
          %v1760 = vld [vmem:[%s1664 + $0x178] sm:$0xff]
          %1761 = vst [vmem:[%s1665 + $0x178] sm:$0xff] %v1760
          %v1762 = vld [vmem:[%s1664 + $0x180] sm:$0xff]
          %1763 = vst [vmem:[%s1665 + $0x180] sm:$0xff] %v1762
          %v1764 = vld [vmem:[%s1664 + $0x188] sm:$0xff]
          %1765 = vst [vmem:[%s1665 + $0x188] sm:$0xff] %v1764
          %v1766 = vld [vmem:[%s1664 + $0x190] sm:$0xff]
          %1767 = vst [vmem:[%s1665 + $0x190] sm:$0xff] %v1766
          %v1768 = vld [vmem:[%s1664 + $0x198] sm:$0xff]
          %1769 = vst [vmem:[%s1665 + $0x198] sm:$0xff] %v1768
          %v1770 = vld [vmem:[%s1664 + $0x1a0] sm:$0xff]
          %1771 = vst [vmem:[%s1665 + $0x1a0] sm:$0xff] %v1770
          %v1772 = vld [vmem:[%s1664 + $0x1a8] sm:$0xff]
          %1773 = vst [vmem:[%s1665 + $0x1a8] sm:$0xff] %v1772
          %v1774 = vld [vmem:[%s1664 + $0x1b0] sm:$0xff]
          %1775 = vst [vmem:[%s1665 + $0x1b0] sm:$0xff] %v1774
          %v1776 = vld [vmem:[%s1664 + $0x1b8] sm:$0xff]
          %1777 = vst [vmem:[%s1665 + $0x1b8] sm:$0xff] %v1776
          %v1778 = vld [vmem:[%s1664 + $0x1c0] sm:$0xff]
          %1779 = vst [vmem:[%s1665 + $0x1c0] sm:$0xff] %v1778
          %v1780 = vld [vmem:[%s1664 + $0x1c8] sm:$0xff]
          %1781 = vst [vmem:[%s1665 + $0x1c8] sm:$0xff] %v1780
          %v1782 = vld [vmem:[%s1664 + $0x1d0] sm:$0xff]
          %1783 = vst [vmem:[%s1665 + $0x1d0] sm:$0xff] %v1782
          %v1784 = vld [vmem:[%s1664 + $0x1d8] sm:$0xff]
          %1785 = vst [vmem:[%s1665 + $0x1d8] sm:$0xff] %v1784
          %v1786 = vld [vmem:[%s1664 + $0x1e0] sm:$0xff]
          %1787 = vst [vmem:[%s1665 + $0x1e0] sm:$0xff] %v1786
          %v1788 = vld [vmem:[%s1664 + $0x1e8] sm:$0xff]
          %1789 = vst [vmem:[%s1665 + $0x1e8] sm:$0xff] %v1788
          %v1790 = vld [vmem:[%s1664 + $0x1f0] sm:$0xff]
          %1791 = vst [vmem:[%s1665 + $0x1f0] sm:$0xff] %v1790
          %v1792 = vld [vmem:[%s1664 + $0x1f8] sm:$0xff]
          %1793 = vst [vmem:[%s1665 + $0x1f8] sm:$0xff] %v1792
          %v1794 = vld [vmem:[%s1664 + $0x200] sm:$0xff]
          %1795 = vst [vmem:[%s1665 + $0x200] sm:$0xff] %v1794
          %v1796 = vld [vmem:[%s1664 + $0x208] sm:$0xff]
          %1797 = vst [vmem:[%s1665 + $0x208] sm:$0xff] %v1796
          %v1798 = vld [vmem:[%s1664 + $0x210] sm:$0xff]
          %1799 = vst [vmem:[%s1665 + $0x210] sm:$0xff] %v1798
          %v1800 = vld [vmem:[%s1664 + $0x218] sm:$0xff]
          %1801 = vst [vmem:[%s1665 + $0x218] sm:$0xff] %v1800
          %v1802 = vld [vmem:[%s1664 + $0x220] sm:$0xff]
          %1803 = vst [vmem:[%s1665 + $0x220] sm:$0xff] %v1802
          %v1804 = vld [vmem:[%s1664 + $0x228] sm:$0xff]
          %1805 = vst [vmem:[%s1665 + $0x228] sm:$0xff] %v1804
          %v1806 = vld [vmem:[%s1664 + $0x230] sm:$0xff]
          %1807 = vst [vmem:[%s1665 + $0x230] sm:$0xff] %v1806
          %v1808 = vld [vmem:[%s1664 + $0x238] sm:$0xff]
          %1809 = vst [vmem:[%s1665 + $0x238] sm:$0xff] %v1808
          %v1810 = vld [vmem:[%s1664 + $0x240] sm:$0xff]
          %1811 = vst [vmem:[%s1665 + $0x240] sm:$0xff] %v1810
          %v1812 = vld [vmem:[%s1664 + $0x248] sm:$0xff]
          %1813 = vst [vmem:[%s1665 + $0x248] sm:$0xff] %v1812
          %v1814 = vld [vmem:[%s1664 + $0x250] sm:$0xff]
          %1815 = vst [vmem:[%s1665 + $0x250] sm:$0xff] %v1814
          %v1816 = vld [vmem:[%s1664 + $0x258] sm:$0xff]
          %1817 = vst [vmem:[%s1665 + $0x258] sm:$0xff] %v1816
          %v1818 = vld [vmem:[%s1664 + $0x260] sm:$0xff]
          %1819 = vst [vmem:[%s1665 + $0x260] sm:$0xff] %v1818
          %v1820 = vld [vmem:[%s1664 + $0x268] sm:$0xff]
          %1821 = vst [vmem:[%s1665 + $0x268] sm:$0xff] %v1820
          %v1822 = vld [vmem:[%s1664 + $0x270] sm:$0xff]
          %1823 = vst [vmem:[%s1665 + $0x270] sm:$0xff] %v1822
          %v1824 = vld [vmem:[%s1664 + $0x278] sm:$0xff]
          %1825 = vst [vmem:[%s1665 + $0x278] sm:$0xff] %v1824
          %v1826 = vld [vmem:[%s1664 + $0x280] sm:$0xff]
          %1827 = vst [vmem:[%s1665 + $0x280] sm:$0xff] %v1826
          %v1828 = vld [vmem:[%s1664 + $0x288] sm:$0xff]
          %1829 = vst [vmem:[%s1665 + $0x288] sm:$0xff] %v1828
          %v1830 = vld [vmem:[%s1664 + $0x290] sm:$0xff]
          %1831 = vst [vmem:[%s1665 + $0x290] sm:$0xff] %v1830
          %v1832 = vld [vmem:[%s1664 + $0x298] sm:$0xff]
          %1833 = vst [vmem:[%s1665 + $0x298] sm:$0xff] %v1832
          %v1834 = vld [vmem:[%s1664 + $0x2a0] sm:$0xff]
          %1835 = vst [vmem:[%s1665 + $0x2a0] sm:$0xff] %v1834
          %v1836 = vld [vmem:[%s1664 + $0x2a8] sm:$0xff]
          %1837 = vst [vmem:[%s1665 + $0x2a8] sm:$0xff] %v1836
          %v1838 = vld [vmem:[%s1664 + $0x2b0] sm:$0xff]
          %1839 = vst [vmem:[%s1665 + $0x2b0] sm:$0xff] %v1838
          %v1840 = vld [vmem:[%s1664 + $0x2b8] sm:$0xff]
          %1841 = vst [vmem:[%s1665 + $0x2b8] sm:$0xff] %v1840
          %v1842 = vld [vmem:[%s1664 + $0x2c0] sm:$0xff]
          %1843 = vst [vmem:[%s1665 + $0x2c0] sm:$0xff] %v1842
          %v1844 = vld [vmem:[%s1664 + $0x2c8] sm:$0xff]
          %1845 = vst [vmem:[%s1665 + $0x2c8] sm:$0xff] %v1844
          %v1846 = vld [vmem:[%s1664 + $0x2d0] sm:$0xff]
          %1847 = vst [vmem:[%s1665 + $0x2d0] sm:$0xff] %v1846
          %v1848 = vld [vmem:[%s1664 + $0x2d8] sm:$0xff]
          %1849 = vst [vmem:[%s1665 + $0x2d8] sm:$0xff] %v1848
          %v1850 = vld [vmem:[%s1664 + $0x2e0] sm:$0xff]
          %1851 = vst [vmem:[%s1665 + $0x2e0] sm:$0xff] %v1850
          %v1852 = vld [vmem:[%s1664 + $0x2e8] sm:$0xff]
          %1853 = vst [vmem:[%s1665 + $0x2e8] sm:$0xff] %v1852
          %v1854 = vld [vmem:[%s1664 + $0x2f0] sm:$0xff]
          %1855 = vst [vmem:[%s1665 + $0x2f0] sm:$0xff] %v1854
          %v1856 = vld [vmem:[%s1664 + $0x2f8] sm:$0xff]
          %1857 = vst [vmem:[%s1665 + $0x2f8] sm:$0xff] %v1856
          %v1858 = vld [vmem:[%s1664 + $0x300] sm:$0xff]
          %1859 = vst [vmem:[%s1665 + $0x300] sm:$0xff] %v1858
          %v1860 = vld [vmem:[%s1664 + $0x308] sm:$0xff]
          %1861 = vst [vmem:[%s1665 + $0x308] sm:$0xff] %v1860
          %v1862 = vld [vmem:[%s1664 + $0x310] sm:$0xff]
          %1863 = vst [vmem:[%s1665 + $0x310] sm:$0xff] %v1862
          %v1864 = vld [vmem:[%s1664 + $0x318] sm:$0xff]
          %1865 = vst [vmem:[%s1665 + $0x318] sm:$0xff] %v1864
          %v1866 = vld [vmem:[%s1664 + $0x320] sm:$0xff]
          %1867 = vst [vmem:[%s1665 + $0x320] sm:$0xff] %v1866
          %v1868 = vld [vmem:[%s1664 + $0x328] sm:$0xff]
          %1869 = vst [vmem:[%s1665 + $0x328] sm:$0xff] %v1868
          %v1870 = vld [vmem:[%s1664 + $0x330] sm:$0xff]
          %1871 = vst [vmem:[%s1665 + $0x330] sm:$0xff] %v1870
          %v1872 = vld [vmem:[%s1664 + $0x338] sm:$0xff]
          %1873 = vst [vmem:[%s1665 + $0x338] sm:$0xff] %v1872
          %v1874 = vld [vmem:[%s1664 + $0x340] sm:$0xff]
          %1875 = vst [vmem:[%s1665 + $0x340] sm:$0xff] %v1874
          %v1876 = vld [vmem:[%s1664 + $0x348] sm:$0xff]
          %1877 = vst [vmem:[%s1665 + $0x348] sm:$0xff] %v1876
          %v1878 = vld [vmem:[%s1664 + $0x350] sm:$0xff]
          %1879 = vst [vmem:[%s1665 + $0x350] sm:$0xff] %v1878
          %v1880 = vld [vmem:[%s1664 + $0x358] sm:$0xff]
          %1881 = vst [vmem:[%s1665 + $0x358] sm:$0xff] %v1880
          %v1882 = vld [vmem:[%s1664 + $0x360] sm:$0xff]
          %1883 = vst [vmem:[%s1665 + $0x360] sm:$0xff] %v1882
          %v1884 = vld [vmem:[%s1664 + $0x368] sm:$0xff]
          %1885 = vst [vmem:[%s1665 + $0x368] sm:$0xff] %v1884
          %v1886 = vld [vmem:[%s1664 + $0x370] sm:$0xff]
          %1887 = vst [vmem:[%s1665 + $0x370] sm:$0xff] %v1886
          %v1888 = vld [vmem:[%s1664 + $0x378] sm:$0xff]
          %1889 = vst [vmem:[%s1665 + $0x378] sm:$0xff] %v1888
          %v1890 = vld [vmem:[%s1664 + $0x380] sm:$0xff]
          %1891 = vst [vmem:[%s1665 + $0x380] sm:$0xff] %v1890
          %v1892 = vld [vmem:[%s1664 + $0x388] sm:$0xff]
          %1893 = vst [vmem:[%s1665 + $0x388] sm:$0xff] %v1892
          %v1894 = vld [vmem:[%s1664 + $0x390] sm:$0xff]
          %1895 = vst [vmem:[%s1665 + $0x390] sm:$0xff] %v1894
          %v1896 = vld [vmem:[%s1664 + $0x398] sm:$0xff]
          %1897 = vst [vmem:[%s1665 + $0x398] sm:$0xff] %v1896
          %v1898 = vld [vmem:[%s1664 + $0x3a0] sm:$0xff]
          %1899 = vst [vmem:[%s1665 + $0x3a0] sm:$0xff] %v1898
          %v1900 = vld [vmem:[%s1664 + $0x3a8] sm:$0xff]
          %1901 = vst [vmem:[%s1665 + $0x3a8] sm:$0xff] %v1900
          %v1902 = vld [vmem:[%s1664 + $0x3b0] sm:$0xff]
          %1903 = vst [vmem:[%s1665 + $0x3b0] sm:$0xff] %v1902
          %v1904 = vld [vmem:[%s1664 + $0x3b8] sm:$0xff]
          %1905 = vst [vmem:[%s1665 + $0x3b8] sm:$0xff] %v1904
          %v1906 = vld [vmem:[%s1664 + $0x3c0] sm:$0xff]
          %1907 = vst [vmem:[%s1665 + $0x3c0] sm:$0xff] %v1906
          %v1908 = vld [vmem:[%s1664 + $0x3c8] sm:$0xff]
          %1909 = vst [vmem:[%s1665 + $0x3c8] sm:$0xff] %v1908
          %v1910 = vld [vmem:[%s1664 + $0x3d0] sm:$0xff]
          %1911 = vst [vmem:[%s1665 + $0x3d0] sm:$0xff] %v1910
          %v1912 = vld [vmem:[%s1664 + $0x3d8] sm:$0xff]
          %1913 = vst [vmem:[%s1665 + $0x3d8] sm:$0xff] %v1912
          %v1914 = vld [vmem:[%s1664 + $0x3e0] sm:$0xff]
          %1915 = vst [vmem:[%s1665 + $0x3e0] sm:$0xff] %v1914
          %v1916 = vld [vmem:[%s1664 + $0x3e8] sm:$0xff]
          %1917 = vst [vmem:[%s1665 + $0x3e8] sm:$0xff] %v1916
          %v1918 = vld [vmem:[%s1664 + $0x3f0] sm:$0xff]
          %1919 = vst [vmem:[%s1665 + $0x3f0] sm:$0xff] %v1918
          %v1920 = vld [vmem:[%s1664 + $0x3f8] sm:$0xff]
          %1921 = vst [vmem:[%s1665 + $0x3f8] sm:$0xff] %v1920
        $region114: #{net_forward.1} parent=108 // loop_footer
          %s1663 = sadd.s32 1, %s1659
        $region115: #{net_forward.1} parent=108 // loop_footer_branch
          %1658 = sbr.rel target = $region111
        $region116: #{net_forward.1} parent=108 // loop_exit
          _
      $region109: #{net_forward.1} parent=93 // pred_fallthru
        _
      %p1922 = pneg %p1654
      // Predicated region
      $region117: #{net_forward.1} parent=93 // pred_check
        _
      $region118: #{net_forward.1} parent=93 // pred_check_branch
        %1924 = sbr.rel (%p1654) target = $region120
      $region119: #{net_forward.1} parent=93 // pred_region
        %s1925 = sand.u32 1024, 7
      $region120: #{net_forward.1} parent=93 // pred_fallthru
        _
    $region94: #{net_forward.1} parent=1 // pred_fallthru
      _
    // Predicated region
    $region95: #{net_forward.1} parent=1 // pred_check
      %p1639 = pneg %p1635
    $region96: #{net_forward.1} parent=1 // pred_check_branch
      %1641 = sbr.rel (%p1639) target = $region98
    $region97: #{net_forward.1} parent=1 // pred_region
      %s1642 = sshllo.u32 0, 1024
      loop: start=0, step=1, limit=1
      $region99: #{net_forward.1} parent=97 // loop_pre_header
        _
      $region100: #{net_forward.1} parent=97 // loop_header
        %s1644 = sphi 0, %s1648
        %p1645 = scmp.ge.s32.totalorder %s1644, 1
        %s1649 = sphi %s7, %s7
        %s1650 = sphi [#allocation3], [#allocation3]
      $region101: #{net_forward.1} parent=97 // loop_header_branch
        %1647 = sbr.rel (%p1645) target = $region105
      $region102: #{net_forward.1} parent=97 // loop_body
        %v1651 = vld [vmem:[%s1649] sm:%s1642]
        %1652 = vst [vmem:[%s1650] sm:%s1642] %v1651
      $region103: #{net_forward.1} parent=97 // loop_footer
        %s1648 = sadd.s32 1, %s1644
      $region104: #{net_forward.1} parent=97 // loop_footer_branch
        %1643 = sbr.rel target = $region100
      $region105: #{net_forward.1} parent=97 // loop_exit
        _
    $region98: #{net_forward.1} parent=1 // pred_fallthru
      _
    // Predicated region
    $region121: #{net_forward.1} parent=1 // pred_check
      _
    $region122: #{net_forward.1} parent=1 // pred_check_branch
      %1928 = sbr.rel (0) target = $region124
    $region123: #{net_forward.1} parent=1 // pred_region
      %1929 = vsyncadd %s1633, 16384
    $region124: #{net_forward.1} parent=1 // pred_fallthru
      _
    %s1930 = scalar_lea.sflag [#allocation5], 2
    %p1932 = scmp.lt.u32.totalorder 1024, 8
    %p1933 = pneg %p1932
    // Predicated region
    $region125: #{net_forward.1} parent=1 // pred_check
      _
    $region126: #{net_forward.1} parent=1 // pred_check_branch
      %1935 = sbr.rel (%p1932) target = $region128
    $region127: #{net_forward.1} parent=1 // pred_region
      %s1950 = sand.u32 1024, 7
      %p1951 = scmp.eq.s32.totalorder %s1950, 0
      // Predicated region
      $region140: #{net_forward.1} parent=127 // pred_check
        %p1952 = pneg %p1951
      $region141: #{net_forward.1} parent=127 // pred_check_branch
        %1954 = sbr.rel (%p1952) target = $region143
      $region142: #{net_forward.1} parent=127 // pred_region
        loop: start=0, step=1, limit=1
        $region144: #{net_forward.1} parent=142 // loop_pre_header
          _
        $region145: #{net_forward.1} parent=142 // loop_header
          %s1956 = sphi 0, %s1960
          %p1957 = scmp.ge.s32.totalorder %s1956, 1
          %s1961 = sphi %s10, %s10
          %s1962 = sphi [#allocation4], [#allocation4]
        $region146: #{net_forward.1} parent=142 // loop_header_branch
          %1959 = sbr.rel (%p1957) target = $region150
        $region147: #{net_forward.1} parent=142 // loop_body
          %v1963 = vld [vmem:[%s1961] sm:$0xff]
          %1964 = vst [vmem:[%s1962] sm:$0xff] %v1963
          %v1965 = vld [vmem:[%s1961 + $0x8] sm:$0xff]
          %1966 = vst [vmem:[%s1962 + $0x8] sm:$0xff] %v1965
          %v1967 = vld [vmem:[%s1961 + $0x10] sm:$0xff]
          %1968 = vst [vmem:[%s1962 + $0x10] sm:$0xff] %v1967
          %v1969 = vld [vmem:[%s1961 + $0x18] sm:$0xff]
          %1970 = vst [vmem:[%s1962 + $0x18] sm:$0xff] %v1969
          %v1971 = vld [vmem:[%s1961 + $0x20] sm:$0xff]
          %1972 = vst [vmem:[%s1962 + $0x20] sm:$0xff] %v1971
          %v1973 = vld [vmem:[%s1961 + $0x28] sm:$0xff]
          %1974 = vst [vmem:[%s1962 + $0x28] sm:$0xff] %v1973
          %v1975 = vld [vmem:[%s1961 + $0x30] sm:$0xff]
          %1976 = vst [vmem:[%s1962 + $0x30] sm:$0xff] %v1975
          %v1977 = vld [vmem:[%s1961 + $0x38] sm:$0xff]
          %1978 = vst [vmem:[%s1962 + $0x38] sm:$0xff] %v1977
          %v1979 = vld [vmem:[%s1961 + $0x40] sm:$0xff]
          %1980 = vst [vmem:[%s1962 + $0x40] sm:$0xff] %v1979
          %v1981 = vld [vmem:[%s1961 + $0x48] sm:$0xff]
          %1982 = vst [vmem:[%s1962 + $0x48] sm:$0xff] %v1981
          %v1983 = vld [vmem:[%s1961 + $0x50] sm:$0xff]
          %1984 = vst [vmem:[%s1962 + $0x50] sm:$0xff] %v1983
          %v1985 = vld [vmem:[%s1961 + $0x58] sm:$0xff]
          %1986 = vst [vmem:[%s1962 + $0x58] sm:$0xff] %v1985
          %v1987 = vld [vmem:[%s1961 + $0x60] sm:$0xff]
          %1988 = vst [vmem:[%s1962 + $0x60] sm:$0xff] %v1987
          %v1989 = vld [vmem:[%s1961 + $0x68] sm:$0xff]
          %1990 = vst [vmem:[%s1962 + $0x68] sm:$0xff] %v1989
          %v1991 = vld [vmem:[%s1961 + $0x70] sm:$0xff]
          %1992 = vst [vmem:[%s1962 + $0x70] sm:$0xff] %v1991
          %v1993 = vld [vmem:[%s1961 + $0x78] sm:$0xff]
          %1994 = vst [vmem:[%s1962 + $0x78] sm:$0xff] %v1993
          %v1995 = vld [vmem:[%s1961 + $0x80] sm:$0xff]
          %1996 = vst [vmem:[%s1962 + $0x80] sm:$0xff] %v1995
          %v1997 = vld [vmem:[%s1961 + $0x88] sm:$0xff]
          %1998 = vst [vmem:[%s1962 + $0x88] sm:$0xff] %v1997
          %v1999 = vld [vmem:[%s1961 + $0x90] sm:$0xff]
          %2000 = vst [vmem:[%s1962 + $0x90] sm:$0xff] %v1999
          %v2001 = vld [vmem:[%s1961 + $0x98] sm:$0xff]
          %2002 = vst [vmem:[%s1962 + $0x98] sm:$0xff] %v2001
          %v2003 = vld [vmem:[%s1961 + $0xa0] sm:$0xff]
          %2004 = vst [vmem:[%s1962 + $0xa0] sm:$0xff] %v2003
          %v2005 = vld [vmem:[%s1961 + $0xa8] sm:$0xff]
          %2006 = vst [vmem:[%s1962 + $0xa8] sm:$0xff] %v2005
          %v2007 = vld [vmem:[%s1961 + $0xb0] sm:$0xff]
          %2008 = vst [vmem:[%s1962 + $0xb0] sm:$0xff] %v2007
          %v2009 = vld [vmem:[%s1961 + $0xb8] sm:$0xff]
          %2010 = vst [vmem:[%s1962 + $0xb8] sm:$0xff] %v2009
          %v2011 = vld [vmem:[%s1961 + $0xc0] sm:$0xff]
          %2012 = vst [vmem:[%s1962 + $0xc0] sm:$0xff] %v2011
          %v2013 = vld [vmem:[%s1961 + $0xc8] sm:$0xff]
          %2014 = vst [vmem:[%s1962 + $0xc8] sm:$0xff] %v2013
          %v2015 = vld [vmem:[%s1961 + $0xd0] sm:$0xff]
          %2016 = vst [vmem:[%s1962 + $0xd0] sm:$0xff] %v2015
          %v2017 = vld [vmem:[%s1961 + $0xd8] sm:$0xff]
          %2018 = vst [vmem:[%s1962 + $0xd8] sm:$0xff] %v2017
          %v2019 = vld [vmem:[%s1961 + $0xe0] sm:$0xff]
          %2020 = vst [vmem:[%s1962 + $0xe0] sm:$0xff] %v2019
          %v2021 = vld [vmem:[%s1961 + $0xe8] sm:$0xff]
          %2022 = vst [vmem:[%s1962 + $0xe8] sm:$0xff] %v2021
          %v2023 = vld [vmem:[%s1961 + $0xf0] sm:$0xff]
          %2024 = vst [vmem:[%s1962 + $0xf0] sm:$0xff] %v2023
          %v2025 = vld [vmem:[%s1961 + $0xf8] sm:$0xff]
          %2026 = vst [vmem:[%s1962 + $0xf8] sm:$0xff] %v2025
          %v2027 = vld [vmem:[%s1961 + $0x100] sm:$0xff]
          %2028 = vst [vmem:[%s1962 + $0x100] sm:$0xff] %v2027
          %v2029 = vld [vmem:[%s1961 + $0x108] sm:$0xff]
          %2030 = vst [vmem:[%s1962 + $0x108] sm:$0xff] %v2029
          %v2031 = vld [vmem:[%s1961 + $0x110] sm:$0xff]
          %2032 = vst [vmem:[%s1962 + $0x110] sm:$0xff] %v2031
          %v2033 = vld [vmem:[%s1961 + $0x118] sm:$0xff]
          %2034 = vst [vmem:[%s1962 + $0x118] sm:$0xff] %v2033
          %v2035 = vld [vmem:[%s1961 + $0x120] sm:$0xff]
          %2036 = vst [vmem:[%s1962 + $0x120] sm:$0xff] %v2035
          %v2037 = vld [vmem:[%s1961 + $0x128] sm:$0xff]
          %2038 = vst [vmem:[%s1962 + $0x128] sm:$0xff] %v2037
          %v2039 = vld [vmem:[%s1961 + $0x130] sm:$0xff]
          %2040 = vst [vmem:[%s1962 + $0x130] sm:$0xff] %v2039
          %v2041 = vld [vmem:[%s1961 + $0x138] sm:$0xff]
          %2042 = vst [vmem:[%s1962 + $0x138] sm:$0xff] %v2041
          %v2043 = vld [vmem:[%s1961 + $0x140] sm:$0xff]
          %2044 = vst [vmem:[%s1962 + $0x140] sm:$0xff] %v2043
          %v2045 = vld [vmem:[%s1961 + $0x148] sm:$0xff]
          %2046 = vst [vmem:[%s1962 + $0x148] sm:$0xff] %v2045
          %v2047 = vld [vmem:[%s1961 + $0x150] sm:$0xff]
          %2048 = vst [vmem:[%s1962 + $0x150] sm:$0xff] %v2047
          %v2049 = vld [vmem:[%s1961 + $0x158] sm:$0xff]
          %2050 = vst [vmem:[%s1962 + $0x158] sm:$0xff] %v2049
          %v2051 = vld [vmem:[%s1961 + $0x160] sm:$0xff]
          %2052 = vst [vmem:[%s1962 + $0x160] sm:$0xff] %v2051
          %v2053 = vld [vmem:[%s1961 + $0x168] sm:$0xff]
          %2054 = vst [vmem:[%s1962 + $0x168] sm:$0xff] %v2053
          %v2055 = vld [vmem:[%s1961 + $0x170] sm:$0xff]
          %2056 = vst [vmem:[%s1962 + $0x170] sm:$0xff] %v2055
          %v2057 = vld [vmem:[%s1961 + $0x178] sm:$0xff]
          %2058 = vst [vmem:[%s1962 + $0x178] sm:$0xff] %v2057
          %v2059 = vld [vmem:[%s1961 + $0x180] sm:$0xff]
          %2060 = vst [vmem:[%s1962 + $0x180] sm:$0xff] %v2059
          %v2061 = vld [vmem:[%s1961 + $0x188] sm:$0xff]
          %2062 = vst [vmem:[%s1962 + $0x188] sm:$0xff] %v2061
          %v2063 = vld [vmem:[%s1961 + $0x190] sm:$0xff]
          %2064 = vst [vmem:[%s1962 + $0x190] sm:$0xff] %v2063
          %v2065 = vld [vmem:[%s1961 + $0x198] sm:$0xff]
          %2066 = vst [vmem:[%s1962 + $0x198] sm:$0xff] %v2065
          %v2067 = vld [vmem:[%s1961 + $0x1a0] sm:$0xff]
          %2068 = vst [vmem:[%s1962 + $0x1a0] sm:$0xff] %v2067
          %v2069 = vld [vmem:[%s1961 + $0x1a8] sm:$0xff]
          %2070 = vst [vmem:[%s1962 + $0x1a8] sm:$0xff] %v2069
          %v2071 = vld [vmem:[%s1961 + $0x1b0] sm:$0xff]
          %2072 = vst [vmem:[%s1962 + $0x1b0] sm:$0xff] %v2071
          %v2073 = vld [vmem:[%s1961 + $0x1b8] sm:$0xff]
          %2074 = vst [vmem:[%s1962 + $0x1b8] sm:$0xff] %v2073
          %v2075 = vld [vmem:[%s1961 + $0x1c0] sm:$0xff]
          %2076 = vst [vmem:[%s1962 + $0x1c0] sm:$0xff] %v2075
          %v2077 = vld [vmem:[%s1961 + $0x1c8] sm:$0xff]
          %2078 = vst [vmem:[%s1962 + $0x1c8] sm:$0xff] %v2077
          %v2079 = vld [vmem:[%s1961 + $0x1d0] sm:$0xff]
          %2080 = vst [vmem:[%s1962 + $0x1d0] sm:$0xff] %v2079
          %v2081 = vld [vmem:[%s1961 + $0x1d8] sm:$0xff]
          %2082 = vst [vmem:[%s1962 + $0x1d8] sm:$0xff] %v2081
          %v2083 = vld [vmem:[%s1961 + $0x1e0] sm:$0xff]
          %2084 = vst [vmem:[%s1962 + $0x1e0] sm:$0xff] %v2083
          %v2085 = vld [vmem:[%s1961 + $0x1e8] sm:$0xff]
          %2086 = vst [vmem:[%s1962 + $0x1e8] sm:$0xff] %v2085
          %v2087 = vld [vmem:[%s1961 + $0x1f0] sm:$0xff]
          %2088 = vst [vmem:[%s1962 + $0x1f0] sm:$0xff] %v2087
          %v2089 = vld [vmem:[%s1961 + $0x1f8] sm:$0xff]
          %2090 = vst [vmem:[%s1962 + $0x1f8] sm:$0xff] %v2089
          %v2091 = vld [vmem:[%s1961 + $0x200] sm:$0xff]
          %2092 = vst [vmem:[%s1962 + $0x200] sm:$0xff] %v2091
          %v2093 = vld [vmem:[%s1961 + $0x208] sm:$0xff]
          %2094 = vst [vmem:[%s1962 + $0x208] sm:$0xff] %v2093
          %v2095 = vld [vmem:[%s1961 + $0x210] sm:$0xff]
          %2096 = vst [vmem:[%s1962 + $0x210] sm:$0xff] %v2095
          %v2097 = vld [vmem:[%s1961 + $0x218] sm:$0xff]
          %2098 = vst [vmem:[%s1962 + $0x218] sm:$0xff] %v2097
          %v2099 = vld [vmem:[%s1961 + $0x220] sm:$0xff]
          %2100 = vst [vmem:[%s1962 + $0x220] sm:$0xff] %v2099
          %v2101 = vld [vmem:[%s1961 + $0x228] sm:$0xff]
          %2102 = vst [vmem:[%s1962 + $0x228] sm:$0xff] %v2101
          %v2103 = vld [vmem:[%s1961 + $0x230] sm:$0xff]
          %2104 = vst [vmem:[%s1962 + $0x230] sm:$0xff] %v2103
          %v2105 = vld [vmem:[%s1961 + $0x238] sm:$0xff]
          %2106 = vst [vmem:[%s1962 + $0x238] sm:$0xff] %v2105
          %v2107 = vld [vmem:[%s1961 + $0x240] sm:$0xff]
          %2108 = vst [vmem:[%s1962 + $0x240] sm:$0xff] %v2107
          %v2109 = vld [vmem:[%s1961 + $0x248] sm:$0xff]
          %2110 = vst [vmem:[%s1962 + $0x248] sm:$0xff] %v2109
          %v2111 = vld [vmem:[%s1961 + $0x250] sm:$0xff]
          %2112 = vst [vmem:[%s1962 + $0x250] sm:$0xff] %v2111
          %v2113 = vld [vmem:[%s1961 + $0x258] sm:$0xff]
          %2114 = vst [vmem:[%s1962 + $0x258] sm:$0xff] %v2113
          %v2115 = vld [vmem:[%s1961 + $0x260] sm:$0xff]
          %2116 = vst [vmem:[%s1962 + $0x260] sm:$0xff] %v2115
          %v2117 = vld [vmem:[%s1961 + $0x268] sm:$0xff]
          %2118 = vst [vmem:[%s1962 + $0x268] sm:$0xff] %v2117
          %v2119 = vld [vmem:[%s1961 + $0x270] sm:$0xff]
          %2120 = vst [vmem:[%s1962 + $0x270] sm:$0xff] %v2119
          %v2121 = vld [vmem:[%s1961 + $0x278] sm:$0xff]
          %2122 = vst [vmem:[%s1962 + $0x278] sm:$0xff] %v2121
          %v2123 = vld [vmem:[%s1961 + $0x280] sm:$0xff]
          %2124 = vst [vmem:[%s1962 + $0x280] sm:$0xff] %v2123
          %v2125 = vld [vmem:[%s1961 + $0x288] sm:$0xff]
          %2126 = vst [vmem:[%s1962 + $0x288] sm:$0xff] %v2125
          %v2127 = vld [vmem:[%s1961 + $0x290] sm:$0xff]
          %2128 = vst [vmem:[%s1962 + $0x290] sm:$0xff] %v2127
          %v2129 = vld [vmem:[%s1961 + $0x298] sm:$0xff]
          %2130 = vst [vmem:[%s1962 + $0x298] sm:$0xff] %v2129
          %v2131 = vld [vmem:[%s1961 + $0x2a0] sm:$0xff]
          %2132 = vst [vmem:[%s1962 + $0x2a0] sm:$0xff] %v2131
          %v2133 = vld [vmem:[%s1961 + $0x2a8] sm:$0xff]
          %2134 = vst [vmem:[%s1962 + $0x2a8] sm:$0xff] %v2133
          %v2135 = vld [vmem:[%s1961 + $0x2b0] sm:$0xff]
          %2136 = vst [vmem:[%s1962 + $0x2b0] sm:$0xff] %v2135
          %v2137 = vld [vmem:[%s1961 + $0x2b8] sm:$0xff]
          %2138 = vst [vmem:[%s1962 + $0x2b8] sm:$0xff] %v2137
          %v2139 = vld [vmem:[%s1961 + $0x2c0] sm:$0xff]
          %2140 = vst [vmem:[%s1962 + $0x2c0] sm:$0xff] %v2139
          %v2141 = vld [vmem:[%s1961 + $0x2c8] sm:$0xff]
          %2142 = vst [vmem:[%s1962 + $0x2c8] sm:$0xff] %v2141
          %v2143 = vld [vmem:[%s1961 + $0x2d0] sm:$0xff]
          %2144 = vst [vmem:[%s1962 + $0x2d0] sm:$0xff] %v2143
          %v2145 = vld [vmem:[%s1961 + $0x2d8] sm:$0xff]
          %2146 = vst [vmem:[%s1962 + $0x2d8] sm:$0xff] %v2145
          %v2147 = vld [vmem:[%s1961 + $0x2e0] sm:$0xff]
          %2148 = vst [vmem:[%s1962 + $0x2e0] sm:$0xff] %v2147
          %v2149 = vld [vmem:[%s1961 + $0x2e8] sm:$0xff]
          %2150 = vst [vmem:[%s1962 + $0x2e8] sm:$0xff] %v2149
          %v2151 = vld [vmem:[%s1961 + $0x2f0] sm:$0xff]
          %2152 = vst [vmem:[%s1962 + $0x2f0] sm:$0xff] %v2151
          %v2153 = vld [vmem:[%s1961 + $0x2f8] sm:$0xff]
          %2154 = vst [vmem:[%s1962 + $0x2f8] sm:$0xff] %v2153
          %v2155 = vld [vmem:[%s1961 + $0x300] sm:$0xff]
          %2156 = vst [vmem:[%s1962 + $0x300] sm:$0xff] %v2155
          %v2157 = vld [vmem:[%s1961 + $0x308] sm:$0xff]
          %2158 = vst [vmem:[%s1962 + $0x308] sm:$0xff] %v2157
          %v2159 = vld [vmem:[%s1961 + $0x310] sm:$0xff]
          %2160 = vst [vmem:[%s1962 + $0x310] sm:$0xff] %v2159
          %v2161 = vld [vmem:[%s1961 + $0x318] sm:$0xff]
          %2162 = vst [vmem:[%s1962 + $0x318] sm:$0xff] %v2161
          %v2163 = vld [vmem:[%s1961 + $0x320] sm:$0xff]
          %2164 = vst [vmem:[%s1962 + $0x320] sm:$0xff] %v2163
          %v2165 = vld [vmem:[%s1961 + $0x328] sm:$0xff]
          %2166 = vst [vmem:[%s1962 + $0x328] sm:$0xff] %v2165
          %v2167 = vld [vmem:[%s1961 + $0x330] sm:$0xff]
          %2168 = vst [vmem:[%s1962 + $0x330] sm:$0xff] %v2167
          %v2169 = vld [vmem:[%s1961 + $0x338] sm:$0xff]
          %2170 = vst [vmem:[%s1962 + $0x338] sm:$0xff] %v2169
          %v2171 = vld [vmem:[%s1961 + $0x340] sm:$0xff]
          %2172 = vst [vmem:[%s1962 + $0x340] sm:$0xff] %v2171
          %v2173 = vld [vmem:[%s1961 + $0x348] sm:$0xff]
          %2174 = vst [vmem:[%s1962 + $0x348] sm:$0xff] %v2173
          %v2175 = vld [vmem:[%s1961 + $0x350] sm:$0xff]
          %2176 = vst [vmem:[%s1962 + $0x350] sm:$0xff] %v2175
          %v2177 = vld [vmem:[%s1961 + $0x358] sm:$0xff]
          %2178 = vst [vmem:[%s1962 + $0x358] sm:$0xff] %v2177
          %v2179 = vld [vmem:[%s1961 + $0x360] sm:$0xff]
          %2180 = vst [vmem:[%s1962 + $0x360] sm:$0xff] %v2179
          %v2181 = vld [vmem:[%s1961 + $0x368] sm:$0xff]
          %2182 = vst [vmem:[%s1962 + $0x368] sm:$0xff] %v2181
          %v2183 = vld [vmem:[%s1961 + $0x370] sm:$0xff]
          %2184 = vst [vmem:[%s1962 + $0x370] sm:$0xff] %v2183
          %v2185 = vld [vmem:[%s1961 + $0x378] sm:$0xff]
          %2186 = vst [vmem:[%s1962 + $0x378] sm:$0xff] %v2185
          %v2187 = vld [vmem:[%s1961 + $0x380] sm:$0xff]
          %2188 = vst [vmem:[%s1962 + $0x380] sm:$0xff] %v2187
          %v2189 = vld [vmem:[%s1961 + $0x388] sm:$0xff]
          %2190 = vst [vmem:[%s1962 + $0x388] sm:$0xff] %v2189
          %v2191 = vld [vmem:[%s1961 + $0x390] sm:$0xff]
          %2192 = vst [vmem:[%s1962 + $0x390] sm:$0xff] %v2191
          %v2193 = vld [vmem:[%s1961 + $0x398] sm:$0xff]
          %2194 = vst [vmem:[%s1962 + $0x398] sm:$0xff] %v2193
          %v2195 = vld [vmem:[%s1961 + $0x3a0] sm:$0xff]
          %2196 = vst [vmem:[%s1962 + $0x3a0] sm:$0xff] %v2195
          %v2197 = vld [vmem:[%s1961 + $0x3a8] sm:$0xff]
          %2198 = vst [vmem:[%s1962 + $0x3a8] sm:$0xff] %v2197
          %v2199 = vld [vmem:[%s1961 + $0x3b0] sm:$0xff]
          %2200 = vst [vmem:[%s1962 + $0x3b0] sm:$0xff] %v2199
          %v2201 = vld [vmem:[%s1961 + $0x3b8] sm:$0xff]
          %2202 = vst [vmem:[%s1962 + $0x3b8] sm:$0xff] %v2201
          %v2203 = vld [vmem:[%s1961 + $0x3c0] sm:$0xff]
          %2204 = vst [vmem:[%s1962 + $0x3c0] sm:$0xff] %v2203
          %v2205 = vld [vmem:[%s1961 + $0x3c8] sm:$0xff]
          %2206 = vst [vmem:[%s1962 + $0x3c8] sm:$0xff] %v2205
          %v2207 = vld [vmem:[%s1961 + $0x3d0] sm:$0xff]
          %2208 = vst [vmem:[%s1962 + $0x3d0] sm:$0xff] %v2207
          %v2209 = vld [vmem:[%s1961 + $0x3d8] sm:$0xff]
          %2210 = vst [vmem:[%s1962 + $0x3d8] sm:$0xff] %v2209
          %v2211 = vld [vmem:[%s1961 + $0x3e0] sm:$0xff]
          %2212 = vst [vmem:[%s1962 + $0x3e0] sm:$0xff] %v2211
          %v2213 = vld [vmem:[%s1961 + $0x3e8] sm:$0xff]
          %2214 = vst [vmem:[%s1962 + $0x3e8] sm:$0xff] %v2213
          %v2215 = vld [vmem:[%s1961 + $0x3f0] sm:$0xff]
          %2216 = vst [vmem:[%s1962 + $0x3f0] sm:$0xff] %v2215
          %v2217 = vld [vmem:[%s1961 + $0x3f8] sm:$0xff]
          %2218 = vst [vmem:[%s1962 + $0x3f8] sm:$0xff] %v2217
        $region148: #{net_forward.1} parent=142 // loop_footer
          %s1960 = sadd.s32 1, %s1956
        $region149: #{net_forward.1} parent=142 // loop_footer_branch
          %1955 = sbr.rel target = $region145
        $region150: #{net_forward.1} parent=142 // loop_exit
          _
      $region143: #{net_forward.1} parent=127 // pred_fallthru
        _
      %p2219 = pneg %p1951
      // Predicated region
      $region151: #{net_forward.1} parent=127 // pred_check
        _
      $region152: #{net_forward.1} parent=127 // pred_check_branch
        %2221 = sbr.rel (%p1951) target = $region154
      $region153: #{net_forward.1} parent=127 // pred_region
        %s2222 = sand.u32 1024, 7
      $region154: #{net_forward.1} parent=127 // pred_fallthru
        _
    $region128: #{net_forward.1} parent=1 // pred_fallthru
      _
    // Predicated region
    $region129: #{net_forward.1} parent=1 // pred_check
      %p1936 = pneg %p1932
    $region130: #{net_forward.1} parent=1 // pred_check_branch
      %1938 = sbr.rel (%p1936) target = $region132
    $region131: #{net_forward.1} parent=1 // pred_region
      %s1939 = sshllo.u32 0, 1024
      loop: start=0, step=1, limit=1
      $region133: #{net_forward.1} parent=131 // loop_pre_header
        _
      $region134: #{net_forward.1} parent=131 // loop_header
        %s1941 = sphi 0, %s1945
        %p1942 = scmp.ge.s32.totalorder %s1941, 1
        %s1946 = sphi %s10, %s10
        %s1947 = sphi [#allocation4], [#allocation4]
      $region135: #{net_forward.1} parent=131 // loop_header_branch
        %1944 = sbr.rel (%p1942) target = $region139
      $region136: #{net_forward.1} parent=131 // loop_body
        %v1948 = vld [vmem:[%s1946] sm:%s1939]
        %1949 = vst [vmem:[%s1947] sm:%s1939] %v1948
      $region137: #{net_forward.1} parent=131 // loop_footer
        %s1945 = sadd.s32 1, %s1941
      $region138: #{net_forward.1} parent=131 // loop_footer_branch
        %1940 = sbr.rel target = $region134
      $region139: #{net_forward.1} parent=131 // loop_exit
        _
    $region132: #{net_forward.1} parent=1 // pred_fallthru
      _
    // Predicated region
    $region155: #{net_forward.1} parent=1 // pred_check
      _
    $region156: #{net_forward.1} parent=1 // pred_check_branch
      %2225 = sbr.rel (0) target = $region158
    $region157: #{net_forward.1} parent=1 // pred_region
      %2226 = vsyncadd %s1930, 16384
    $region158: #{net_forward.1} parent=1 // pred_fallthru
      _
    %v2227 = vld [vmem:[%s0] sm:$0xf]
    %v2228 = vld [vmem:[%s0 + $0x4] sm:$0xf]
    %v2229 = vld [vmem:[%s2] sm:$0xf]
    %v2230 = vld [vmem:[%s2 + $0x4] sm:$0xf]
    %v2231 = vld [vmem:[%s2 + $0x8] sm:$0xf]
    %v2232 = vld [vmem:[%s2 + $0xc] sm:$0xf]
    %v2233 = vld [vmem:[%s4] sm:$0x1]
    %v2235 = vlaneseq
    %v2236 = vshrl.u32 %v2235, 7
    %v2237 = vsub.s32 0, %v2236
    %v2238 = vrot.slane %v2233, %v2237
    %v2242 = vunpack.c.l.b16 %v2227
    %v2243 = vunpack.c.l.b16 %v2228
    %v2244 = vpack.c.b16 %v2243, %v2242
    %v2249 = vunpack.c.l.b16 %v2229
    %v2250 = vunpack.c.l.b16 %v2230
    %v2251 = vunpack.c.l.b16 %v2231
    %v2252 = vunpack.c.l.b16 %v2232
    %v2253 = vpack.c.b16 %v2250, %v2249
    %v2254 = vpack.c.b16 %v2252, %v2251
    %vm2257 = vcmask 261120
    %v2259 = vsel %vm2257, %v2244, 0
    %2261 = vmatprep.subr.bf16.mxu0 0
    %2262 = vmatpush1.bf16.msra.mxu0 %v2253
    %2263 = vmatprep.subr.bf16.mxu0 0
    %2264 = vmatpush1.bf16.msra.mxu0 %v2254
    %2265 = vmatprep.subr.bf16.mxu0 0
    %2266 = vmatpush1.bf16.msra.mxu0 0
    %2267 = vmatprep.subr.bf16.mxu0 0
    %2268 = vmatpush1.bf16.msra.mxu0 0
    %2269 = vmatprep.subr.bf16.mxu0 0
    %2270 = vmatpush1.bf16.msra.mxu0 0
    %2271 = vmatprep.subr.bf16.mxu0 0
    %2272 = vmatpush1.bf16.msra.mxu0 0
    %2273 = vmatprep.subr.bf16.mxu0 0
    %2274 = vmatpush1.bf16.msra.mxu0 0
    %2275 = vmatprep.subr.bf16.mxu0 0
    %2276 = vmatpush1.bf16.msra.mxu0 0
    %2277 = vmatprep.subr.bf16.mxu0 0
    %2278 = vmatpush1.bf16.msra.mxu0 0
    %2279 = vmatprep.subr.bf16.mxu0 0
    %2280 = vmatpush1.bf16.msra.mxu0 0
    %2281 = vmatprep.subr.bf16.mxu0 0
    %2282 = vmatpush1.bf16.msra.mxu0 0
    %2283 = vmatprep.subr.bf16.mxu0 0
    %2284 = vmatpush1.bf16.msra.mxu0 0
    %2285 = vmatprep.subr.bf16.mxu0 0
    %2286 = vmatpush1.bf16.msra.mxu0 0
    %2287 = vmatprep.subr.bf16.mxu0 0
    %2288 = vmatpush1.bf16.msra.mxu0 0
    %2289 = vmatprep.subr.bf16.mxu0 0
    %2290 = vmatpush1.bf16.msra.mxu0 0
    %2291 = vmatprep.subr.bf16.mxu0 0
    %2292 = vmatpush1.bf16.msra.mxu0 0
    %2293 = vmatprep.mubr.bf16.mxu0 0
    %2294 = vmatmul.mubr.bf16.gmra.mrb[0].mxu0 %v2259
    %v2295 = vpop.f32.mrb[0].mxu0
    %v2296 = vadd.f32 %v2238, %v2295
    %v2297 = vpop.f32.mrb[0].mxu0
    %v2298 = vpop.f32.mrb[0].mxu0
    %v2299 = vadd.f32 %v2238, %v2298
    %v2300 = vpop.f32.mrb[0].mxu0
    %2301 = vdwg.mxu0
    %v2304 = vcombine.high %v2296, %v2296
    %v2306 = vunpack.c.l.s4 1983009808
    %v2307 = vunpack.c.0.s8 %v2306
    %v2308 = vlaneseq
    %v2309 = vshrl.u32 %v2308, 7
    %v2310 = vsub.s32 %v2307, %v2309
    %v2311 = vrot.slane %v2296, %v2310
    %v2313 = vunpack.c.l.s4 1983009808
    %v2314 = vunpack.c.0.s8 %v2313
    %v2315 = vlaneseq
    %v2316 = vshrl.u32 %v2315, 7
    %v2317 = vsub.s32 %v2314, %v2316
    %v2318 = vrot.slane %v2304, %v2317
    %v2319 = vcombine.high %v2311, %v2311
    %v2320 = vcombine.high %v2318, %v2318
    %v2321 = vcombine.high %v2299, %v2299
    %v2323 = vunpack.c.l.s4 1983009808
    %v2324 = vunpack.c.0.s8 %v2323
    %v2325 = vlaneseq
    %v2326 = vshrl.u32 %v2325, 7
    %v2327 = vsub.s32 %v2324, %v2326
    %v2328 = vrot.slane %v2299, %v2327
    %v2330 = vunpack.c.l.s4 1983009808
    %v2331 = vunpack.c.0.s8 %v2330
    %v2332 = vlaneseq
    %v2333 = vshrl.u32 %v2332, 7
    %v2334 = vsub.s32 %v2331, %v2333
    %v2335 = vrot.slane %v2321, %v2334
    %v2336 = vcombine.high %v2328, %v2328
    %v2337 = vcombine.high %v2335, %v2335
    %v2346 = vld [vmem:[%s3] sm:$0xf]
    %v2347 = vld [vmem:[%s3 + $0x4] sm:$0xf]
    %v2348 = vld [vmem:[%s3 + $0x8] sm:$0xf]
    %v2349 = vld [vmem:[%s3 + $0xc] sm:$0xf]
    %v2350 = vlaneseq
    %v2351 = vand.u32 %v2350, 127
    %vm2352 = vcmp.ge.s32.totalorder %v2351, 64
    %vm2353 = vcmp.lt.s32.totalorder %v2351, 96
    %vm2354 = vmand %vm2352, %vm2353
    %v2355 = vsel %vm2354, 1.0, 0.5
    %v2356 = vsel %vm2354, 0.0, 0.5
    %v2361 = vunpack.c.l.b16 %v2346
    %v2362 = vunpack.c.l.b16 %v2347
    %v2363 = vunpack.c.l.b16 %v2348
    %v2364 = vunpack.c.l.b16 %v2349
    %v2365 = vpack.c.b16 %v2362, %v2361
    %v2366 = vpack.c.b16 %v2364, %v2363
    %v2370 = vsel %vm2257, 0, 0
    %2372 = vmatprep.subr.bf16.mxu0 0
    %2373 = vmatpush1.bf16.msra.mxu0 %v2365
    %2374 = vmatprep.subr.bf16.mxu0 0
    %2375 = vmatpush1.bf16.msra.mxu0 %v2366
    %2376 = vmatprep.subr.bf16.mxu0 0
    %2377 = vmatpush1.bf16.msra.mxu0 0
    %2378 = vmatprep.subr.bf16.mxu0 0
    %2379 = vmatpush1.bf16.msra.mxu0 0
    %2380 = vmatprep.subr.bf16.mxu0 0
    %2381 = vmatpush1.bf16.msra.mxu0 0
    %2382 = vmatprep.subr.bf16.mxu0 0
    %2383 = vmatpush1.bf16.msra.mxu0 0
    %2384 = vmatprep.subr.bf16.mxu0 0
    %2385 = vmatpush1.bf16.msra.mxu0 0
    %2386 = vmatprep.subr.bf16.mxu0 0
    %2387 = vmatpush1.bf16.msra.mxu0 0
    %2388 = vmatprep.subr.bf16.mxu0 0
    %2389 = vmatpush1.bf16.msra.mxu0 0
    %2390 = vmatprep.subr.bf16.mxu0 0
    %2391 = vmatpush1.bf16.msra.mxu0 0
    %2392 = vmatprep.subr.bf16.mxu0 0
    %2393 = vmatpush1.bf16.msra.mxu0 0
    %2394 = vmatprep.subr.bf16.mxu0 0
    %2395 = vmatpush1.bf16.msra.mxu0 0
    %2396 = vmatprep.subr.bf16.mxu0 0
    %2397 = vmatpush1.bf16.msra.mxu0 0
    %2398 = vmatprep.subr.bf16.mxu0 0
    %2399 = vmatpush1.bf16.msra.mxu0 0
    %2400 = vmatprep.subr.bf16.mxu0 0
    %2401 = vmatpush1.bf16.msra.mxu0 0
    %2402 = vmatprep.subr.bf16.mxu0 0
    %2403 = vmatpush1.bf16.msra.mxu0 0
    %2404 = vmatprep.mubr.bf16.mxu0 0
    %2405 = vmatmul.mubr.bf16.gmra.mrb[0].mxu0 %v2370
    %v2406 = vpop.f32.mrb[0].mxu0
    %v2407 = vadd.f32 0.0, %v2406
    %v2408 = vpop.f32.mrb[0].mxu0
    %v2409 = vpop.f32.mrb[0].mxu0
    %v2410 = vpop.f32.mrb[0].mxu0
    %2411 = vdwg.mxu0
    %v2412 = vadd.f32 %v2311, %v2407
    %v2413 = vmul.f32 %v2412, %v2355
    %v2414 = vtanh.pop %v2413
    %v2415 = vmul.f32 %v2414, %v2355
    %v2416 = vadd.f32 %v2415, %v2356
    %v2417 = vmul.f32 %v2416, 0.0
    %2419 = vrot.lane.b32.xlu0 %v2416, 64
    %v2420 = vpop.permute.xlu0 %2419
    %v2422 = vmul.f32 %v2416, %v2420
    %2424 = vrot.lane.b32.xlu0 %v2422, 32
    %v2425 = vpop.permute.xlu0 %2424
    %v2427 = vadd.f32 %v2417, %v2425
    %v2428 = vtanh.pop %v2427
    %2430 = vrot.lane.b32.xlu0 %v2428, 64
    %v2431 = vpop.permute.xlu0 %2430
    %v2433 = vmul.f32 %v2416, %v2431
    %v2434 = vpack.c.bf16 %v2433, %v2433
    %2436 = vrot.lane.b32.xlu0 %v2434, 32
    %v2437 = vpop.permute.xlu0 %2436
    %v2439 = vsel %vm2257, %v2437, 0
    %2441 = vmatprep.subr.bf16.mxu0 0
    %2442 = vmatpush1.bf16.msra.mxu0 %v2365
    %2443 = vmatprep.subr.bf16.mxu0 0
    %2444 = vmatpush1.bf16.msra.mxu0 %v2366
    %2445 = vmatprep.subr.bf16.mxu0 0
    %2446 = vmatpush1.bf16.msra.mxu0 0
    %2447 = vmatprep.subr.bf16.mxu0 0
    %2448 = vmatpush1.bf16.msra.mxu0 0
    %2449 = vmatprep.subr.bf16.mxu0 0
    %2450 = vmatpush1.bf16.msra.mxu0 0
    %2451 = vmatprep.subr.bf16.mxu0 0
    %2452 = vmatpush1.bf16.msra.mxu0 0
    %2453 = vmatprep.subr.bf16.mxu0 0
    %2454 = vmatpush1.bf16.msra.mxu0 0
    %2455 = vmatprep.subr.bf16.mxu0 0
    %2456 = vmatpush1.bf16.msra.mxu0 0
    %2457 = vmatprep.subr.bf16.mxu0 0
    %2458 = vmatpush1.bf16.msra.mxu0 0
    %2459 = vmatprep.subr.bf16.mxu0 0
    %2460 = vmatpush1.bf16.msra.mxu0 0
    %2461 = vmatprep.subr.bf16.mxu0 0
    %2462 = vmatpush1.bf16.msra.mxu0 0
    %2463 = vmatprep.subr.bf16.mxu0 0
    %2464 = vmatpush1.bf16.msra.mxu0 0
    %2465 = vmatprep.subr.bf16.mxu0 0
    %2466 = vmatpush1.bf16.msra.mxu0 0
    %2467 = vmatprep.subr.bf16.mxu0 0
    %2468 = vmatpush1.bf16.msra.mxu0 0
    %2469 = vmatprep.subr.bf16.mxu0 0
    %2470 = vmatpush1.bf16.msra.mxu0 0
    %2471 = vmatprep.subr.bf16.mxu0 0
    %2472 = vmatpush1.bf16.msra.mxu0 0
    %2473 = vmatprep.mubr.bf16.mxu0 0
    %2474 = vmatmul.mubr.bf16.gmra.mrb[0].mxu0 %v2439
    %v2475 = vpop.f32.mrb[0].mxu0
    %v2476 = vadd.f32 0.0, %v2475
    %v2477 = vpop.f32.mrb[0].mxu0
    %v2478 = vpop.f32.mrb[0].mxu0
    %v2479 = vpop.f32.mrb[0].mxu0
    %2480 = vdwg.mxu0
    %v2481 = vadd.f32 %v2319, %v2476
    %v2482 = vmul.f32 %v2481, %v2355
    %v2483 = vtanh.pop %v2482
    %v2484 = vmul.f32 %v2483, %v2355
    %v2485 = vadd.f32 %v2484, %v2356
    %v2486 = vmul.f32 %v2485, %v2427
    %2488 = vrot.lane.b32.xlu0 %v2485, 64
    %v2489 = vpop.permute.xlu0 %2488
    %v2491 = vmul.f32 %v2485, %v2489
    %2493 = vrot.lane.b32.xlu0 %v2491, 32
    %v2494 = vpop.permute.xlu0 %2493
    %v2496 = vadd.f32 %v2486, %v2494
    %v2497 = vtanh.pop %v2496
    %2499 = vrot.lane.b32.xlu0 %v2497, 64
    %v2500 = vpop.permute.xlu0 %2499
    %v2502 = vmul.f32 %v2485, %v2500
    %v2503 = vpack.c.bf16 %v2502, %v2502
    %2505 = vrot.lane.b32.xlu0 %v2503, 32
    %v2506 = vpop.permute.xlu0 %2505
    %v2508 = vsel %vm2257, %v2506, 0
    %2510 = vmatprep.subr.bf16.mxu0 0
    %2511 = vmatpush1.bf16.msra.mxu0 %v2365
    %2512 = vmatprep.subr.bf16.mxu0 0
    %2513 = vmatpush1.bf16.msra.mxu0 %v2366
    %2514 = vmatprep.subr.bf16.mxu0 0
    %2515 = vmatpush1.bf16.msra.mxu0 0
    %2516 = vmatprep.subr.bf16.mxu0 0
    %2517 = vmatpush1.bf16.msra.mxu0 0
    %2518 = vmatprep.subr.bf16.mxu0 0
    %2519 = vmatpush1.bf16.msra.mxu0 0
    %2520 = vmatprep.subr.bf16.mxu0 0
    %2521 = vmatpush1.bf16.msra.mxu0 0
    %2522 = vmatprep.subr.bf16.mxu0 0
    %2523 = vmatpush1.bf16.msra.mxu0 0
    %2524 = vmatprep.subr.bf16.mxu0 0
    %2525 = vmatpush1.bf16.msra.mxu0 0
    %2526 = vmatprep.subr.bf16.mxu0 0
    %2527 = vmatpush1.bf16.msra.mxu0 0
    %2528 = vmatprep.subr.bf16.mxu0 0
    %2529 = vmatpush1.bf16.msra.mxu0 0
    %2530 = vmatprep.subr.bf16.mxu0 0
    %2531 = vmatpush1.bf16.msra.mxu0 0
    %2532 = vmatprep.subr.bf16.mxu0 0
    %2533 = vmatpush1.bf16.msra.mxu0 0
    %2534 = vmatprep.subr.bf16.mxu0 0
    %2535 = vmatpush1.bf16.msra.mxu0 0
    %2536 = vmatprep.subr.bf16.mxu0 0
    %2537 = vmatpush1.bf16.msra.mxu0 0
    %2538 = vmatprep.subr.bf16.mxu0 0
    %2539 = vmatpush1.bf16.msra.mxu0 0
    %2540 = vmatprep.subr.bf16.mxu0 0
    %2541 = vmatpush1.bf16.msra.mxu0 0
    %2542 = vmatprep.mubr.bf16.mxu0 0
    %2543 = vmatmul.mubr.bf16.gmra.mrb[0].mxu0 %v2508
    %v2544 = vpop.f32.mrb[0].mxu0
    %v2545 = vadd.f32 0.0, %v2544
    %v2546 = vpop.f32.mrb[0].mxu0
    %v2547 = vpop.f32.mrb[0].mxu0
    %v2548 = vpop.f32.mrb[0].mxu0
    %2549 = vdwg.mxu0
    %v2550 = vadd.f32 %v2318, %v2545
    %v2551 = vmul.f32 %v2550, %v2355
    %v2552 = vtanh.pop %v2551
    %v2553 = vmul.f32 %v2552, %v2355
    %v2554 = vadd.f32 %v2553, %v2356
    %v2555 = vmul.f32 %v2554, %v2496
    %2557 = vrot.lane.b32.xlu0 %v2554, 64
    %v2558 = vpop.permute.xlu0 %2557
    %v2560 = vmul.f32 %v2554, %v2558
    %2562 = vrot.lane.b32.xlu0 %v2560, 32
    %v2563 = vpop.permute.xlu0 %2562
    %v2565 = vadd.f32 %v2555, %v2563
    %v2566 = vtanh.pop %v2565
    %2568 = vrot.lane.b32.xlu0 %v2566, 64
    %v2569 = vpop.permute.xlu0 %2568
    %v2571 = vmul.f32 %v2554, %v2569
    %v2572 = vpack.c.bf16 %v2571, %v2571
    %2574 = vrot.lane.b32.xlu0 %v2572, 32
    %v2575 = vpop.permute.xlu0 %2574
    %v2577 = vsel %vm2257, %v2575, 0
    %2579 = vmatprep.subr.bf16.mxu0 0
    %2580 = vmatpush1.bf16.msra.mxu0 %v2365
    %2581 = vmatprep.subr.bf16.mxu0 0
    %2582 = vmatpush1.bf16.msra.mxu0 %v2366
    %2583 = vmatprep.subr.bf16.mxu0 0
    %2584 = vmatpush1.bf16.msra.mxu0 0
    %2585 = vmatprep.subr.bf16.mxu0 0
    %2586 = vmatpush1.bf16.msra.mxu0 0
    %2587 = vmatprep.subr.bf16.mxu0 0
    %2588 = vmatpush1.bf16.msra.mxu0 0
    %2589 = vmatprep.subr.bf16.mxu0 0
    %2590 = vmatpush1.bf16.msra.mxu0 0
    %2591 = vmatprep.subr.bf16.mxu0 0
    %2592 = vmatpush1.bf16.msra.mxu0 0
    %2593 = vmatprep.subr.bf16.mxu0 0
    %2594 = vmatpush1.bf16.msra.mxu0 0
    %2595 = vmatprep.subr.bf16.mxu0 0
    %2596 = vmatpush1.bf16.msra.mxu0 0
    %2597 = vmatprep.subr.bf16.mxu0 0
    %2598 = vmatpush1.bf16.msra.mxu0 0
    %2599 = vmatprep.subr.bf16.mxu0 0
    %2600 = vmatpush1.bf16.msra.mxu0 0
    %2601 = vmatprep.subr.bf16.mxu0 0
    %2602 = vmatpush1.bf16.msra.mxu0 0
    %2603 = vmatprep.subr.bf16.mxu0 0
    %2604 = vmatpush1.bf16.msra.mxu0 0
    %2605 = vmatprep.subr.bf16.mxu0 0
    %2606 = vmatpush1.bf16.msra.mxu0 0
    %2607 = vmatprep.subr.bf16.mxu0 0
    %2608 = vmatpush1.bf16.msra.mxu0 0
    %2609 = vmatprep.subr.bf16.mxu0 0
    %2610 = vmatpush1.bf16.msra.mxu0 0
    %2611 = vmatprep.mubr.bf16.mxu0 0
    %2612 = vmatmul.mubr.bf16.gmra.mrb[0].mxu0 %v2577
    %v2613 = vpop.f32.mrb[0].mxu0
    %v2614 = vadd.f32 0.0, %v2613
    %v2615 = vpop.f32.mrb[0].mxu0
    %v2616 = vpop.f32.mrb[0].mxu0
    %v2617 = vpop.f32.mrb[0].mxu0
    %2618 = vdwg.mxu0
    %v2619 = vadd.f32 %v2320, %v2614
    %v2620 = vmul.f32 %v2619, %v2355
    %v2621 = vtanh.pop %v2620
    %v2622 = vmul.f32 %v2621, %v2355
    %v2623 = vadd.f32 %v2622, %v2356
    %v2624 = vmul.f32 %v2623, %v2565
    %2626 = vrot.lane.b32.xlu0 %v2623, 64
    %v2627 = vpop.permute.xlu0 %2626
    %v2629 = vmul.f32 %v2623, %v2627
    %2631 = vrot.lane.b32.xlu0 %v2629, 32
    %v2632 = vpop.permute.xlu0 %2631
    %v2634 = vadd.f32 %v2624, %v2632
    %v2635 = vtanh.pop %v2634
    %2637 = vrot.lane.b32.xlu0 %v2635, 64
    %v2638 = vpop.permute.xlu0 %2637
    %v2640 = vmul.f32 %v2623, %v2638
    %v2641 = vpack.c.bf16 %v2640, %v2640
    %2643 = vrot.lane.b32.xlu0 %v2641, 32
    %v2644 = vpop.permute.xlu0 %2643
    %v2646 = vsel %vm2257, %v2644, 0
    %2648 = vmatprep.subr.bf16.mxu0 0
    %2649 = vmatpush1.bf16.msra.mxu0 %v2365
    %2650 = vmatprep.subr.bf16.mxu0 0
    %2651 = vmatpush1.bf16.msra.mxu0 %v2366
    %2652 = vmatprep.subr.bf16.mxu0 0
    %2653 = vmatpush1.bf16.msra.mxu0 0
    %2654 = vmatprep.subr.bf16.mxu0 0
    %2655 = vmatpush1.bf16.msra.mxu0 0
    %2656 = vmatprep.subr.bf16.mxu0 0
    %2657 = vmatpush1.bf16.msra.mxu0 0
    %2658 = vmatprep.subr.bf16.mxu0 0
    %2659 = vmatpush1.bf16.msra.mxu0 0
    %2660 = vmatprep.subr.bf16.mxu0 0
    %2661 = vmatpush1.bf16.msra.mxu0 0
    %2662 = vmatprep.subr.bf16.mxu0 0
    %2663 = vmatpush1.bf16.msra.mxu0 0
    %2664 = vmatprep.subr.bf16.mxu0 0
    %2665 = vmatpush1.bf16.msra.mxu0 0
    %2666 = vmatprep.subr.bf16.mxu0 0
    %2667 = vmatpush1.bf16.msra.mxu0 0
    %2668 = vmatprep.subr.bf16.mxu0 0
    %2669 = vmatpush1.bf16.msra.mxu0 0
    %2670 = vmatprep.subr.bf16.mxu0 0
    %2671 = vmatpush1.bf16.msra.mxu0 0
    %2672 = vmatprep.subr.bf16.mxu0 0
    %2673 = vmatpush1.bf16.msra.mxu0 0
    %2674 = vmatprep.subr.bf16.mxu0 0
    %2675 = vmatpush1.bf16.msra.mxu0 0
    %2676 = vmatprep.subr.bf16.mxu0 0
    %2677 = vmatpush1.bf16.msra.mxu0 0
    %2678 = vmatprep.subr.bf16.mxu0 0
    %2679 = vmatpush1.bf16.msra.mxu0 0
    %2680 = vmatprep.mubr.bf16.mxu0 0
    %2681 = vmatmul.mubr.bf16.gmra.mrb[0].mxu0 %v2646
    %v2682 = vpop.f32.mrb[0].mxu0
    %v2683 = vadd.f32 0.0, %v2682
    %v2684 = vpop.f32.mrb[0].mxu0
    %v2685 = vpop.f32.mrb[0].mxu0
    %v2686 = vpop.f32.mrb[0].mxu0
    %2687 = vdwg.mxu0
    %v2688 = vadd.f32 %v2328, %v2683
    %v2689 = vmul.f32 %v2688, %v2355
    %v2690 = vtanh.pop %v2689
    %v2691 = vmul.f32 %v2690, %v2355
    %v2692 = vadd.f32 %v2691, %v2356
    %v2693 = vmul.f32 %v2692, %v2634
    %2695 = vrot.lane.b32.xlu0 %v2692, 64
    %v2696 = vpop.permute.xlu0 %2695
    %v2698 = vmul.f32 %v2692, %v2696
    %2700 = vrot.lane.b32.xlu0 %v2698, 32
    %v2701 = vpop.permute.xlu0 %2700
    %v2703 = vadd.f32 %v2693, %v2701
    %v2704 = vtanh.pop %v2703
    %2706 = vrot.lane.b32.xlu0 %v2704, 64
    %v2707 = vpop.permute.xlu0 %2706
    %v2709 = vmul.f32 %v2692, %v2707
    %v2710 = vpack.c.bf16 %v2709, %v2709
    %2712 = vrot.lane.b32.xlu0 %v2710, 32
    %v2713 = vpop.permute.xlu0 %2712
    %v2715 = vsel %vm2257, %v2713, 0
    %2717 = vmatprep.subr.bf16.mxu0 0
    %2718 = vmatpush1.bf16.msra.mxu0 %v2365
    %2719 = vmatprep.subr.bf16.mxu0 0
    %2720 = vmatpush1.bf16.msra.mxu0 %v2366
    %2721 = vmatprep.subr.bf16.mxu0 0
    %2722 = vmatpush1.bf16.msra.mxu0 0
    %2723 = vmatprep.subr.bf16.mxu0 0
    %2724 = vmatpush1.bf16.msra.mxu0 0
    %2725 = vmatprep.subr.bf16.mxu0 0
    %2726 = vmatpush1.bf16.msra.mxu0 0
    %2727 = vmatprep.subr.bf16.mxu0 0
    %2728 = vmatpush1.bf16.msra.mxu0 0
    %2729 = vmatprep.subr.bf16.mxu0 0
    %2730 = vmatpush1.bf16.msra.mxu0 0
    %2731 = vmatprep.subr.bf16.mxu0 0
    %2732 = vmatpush1.bf16.msra.mxu0 0
    %2733 = vmatprep.subr.bf16.mxu0 0
    %2734 = vmatpush1.bf16.msra.mxu0 0
    %2735 = vmatprep.subr.bf16.mxu0 0
    %2736 = vmatpush1.bf16.msra.mxu0 0
    %2737 = vmatprep.subr.bf16.mxu0 0
    %2738 = vmatpush1.bf16.msra.mxu0 0
    %2739 = vmatprep.subr.bf16.mxu0 0
    %2740 = vmatpush1.bf16.msra.mxu0 0
    %2741 = vmatprep.subr.bf16.mxu0 0
    %2742 = vmatpush1.bf16.msra.mxu0 0
    %2743 = vmatprep.subr.bf16.mxu0 0
    %2744 = vmatpush1.bf16.msra.mxu0 0
    %2745 = vmatprep.subr.bf16.mxu0 0
    %2746 = vmatpush1.bf16.msra.mxu0 0
    %2747 = vmatprep.subr.bf16.mxu0 0
    %2748 = vmatpush1.bf16.msra.mxu0 0
    %2749 = vmatprep.mubr.bf16.mxu0 0
    %2750 = vmatmul.mubr.bf16.gmra.mrb[0].mxu0 %v2715
    %v2751 = vpop.f32.mrb[0].mxu0
    %v2752 = vadd.f32 0.0, %v2751
    %v2753 = vpop.f32.mrb[0].mxu0
    %v2754 = vpop.f32.mrb[0].mxu0
    %v2755 = vpop.f32.mrb[0].mxu0
    %2756 = vdwg.mxu0
    %v2757 = vadd.f32 %v2336, %v2752
    %v2758 = vmul.f32 %v2757, %v2355
    %v2759 = vtanh.pop %v2758
    %v2760 = vmul.f32 %v2759, %v2355
    %v2761 = vadd.f32 %v2760, %v2356
    %v2762 = vmul.f32 %v2761, %v2703
    %2764 = vrot.lane.b32.xlu0 %v2761, 64
    %v2765 = vpop.permute.xlu0 %2764
    %v2767 = vmul.f32 %v2761, %v2765
    %2769 = vrot.lane.b32.xlu0 %v2767, 32
    %v2770 = vpop.permute.xlu0 %2769
    %v2772 = vadd.f32 %v2762, %v2770
    %v2773 = vtanh.pop %v2772
    %2775 = vrot.lane.b32.xlu0 %v2773, 64
    %v2776 = vpop.permute.xlu0 %2775
    %v2778 = vmul.f32 %v2761, %v2776
    %v2779 = vpack.c.bf16 %v2778, %v2778
    %2781 = vrot.lane.b32.xlu0 %v2779, 32
    %v2782 = vpop.permute.xlu0 %2781
    %v2784 = vsel %vm2257, %v2782, 0
    %2786 = vmatprep.subr.bf16.mxu0 0
    %2787 = vmatpush1.bf16.msra.mxu0 %v2365
    %2788 = vmatprep.subr.bf16.mxu0 0
    %2789 = vmatpush1.bf16.msra.mxu0 %v2366
    %2790 = vmatprep.subr.bf16.mxu0 0
    %2791 = vmatpush1.bf16.msra.mxu0 0
    %2792 = vmatprep.subr.bf16.mxu0 0
    %2793 = vmatpush1.bf16.msra.mxu0 0
    %2794 = vmatprep.subr.bf16.mxu0 0
    %2795 = vmatpush1.bf16.msra.mxu0 0
    %2796 = vmatprep.subr.bf16.mxu0 0
    %2797 = vmatpush1.bf16.msra.mxu0 0
    %2798 = vmatprep.subr.bf16.mxu0 0
    %2799 = vmatpush1.bf16.msra.mxu0 0
    %2800 = vmatprep.subr.bf16.mxu0 0
    %2801 = vmatpush1.bf16.msra.mxu0 0
    %2802 = vmatprep.subr.bf16.mxu0 0
    %2803 = vmatpush1.bf16.msra.mxu0 0
    %2804 = vmatprep.subr.bf16.mxu0 0
    %2805 = vmatpush1.bf16.msra.mxu0 0
    %2806 = vmatprep.subr.bf16.mxu0 0
    %2807 = vmatpush1.bf16.msra.mxu0 0
    %2808 = vmatprep.subr.bf16.mxu0 0
    %2809 = vmatpush1.bf16.msra.mxu0 0
    %2810 = vmatprep.subr.bf16.mxu0 0
    %2811 = vmatpush1.bf16.msra.mxu0 0
    %2812 = vmatprep.subr.bf16.mxu0 0
    %2813 = vmatpush1.bf16.msra.mxu0 0
    %2814 = vmatprep.subr.bf16.mxu0 0
    %2815 = vmatpush1.bf16.msra.mxu0 0
    %2816 = vmatprep.subr.bf16.mxu0 0
    %2817 = vmatpush1.bf16.msra.mxu0 0
    %2818 = vmatprep.mubr.bf16.mxu0 0
    %2819 = vmatmul.mubr.bf16.gmra.mrb[0].mxu0 %v2784
    %v2820 = vpop.f32.mrb[0].mxu0
    %v2821 = vadd.f32 0.0, %v2820
    %v2822 = vpop.f32.mrb[0].mxu0
    %v2823 = vpop.f32.mrb[0].mxu0
    %v2824 = vpop.f32.mrb[0].mxu0
    %2825 = vdwg.mxu0
    %v2826 = vadd.f32 %v2335, %v2821
    %v2827 = vmul.f32 %v2826, %v2355
    %v2828 = vtanh.pop %v2827
    %v2829 = vmul.f32 %v2828, %v2355
    %v2830 = vadd.f32 %v2829, %v2356
    %v2831 = vmul.f32 %v2830, %v2772
    %2833 = vrot.lane.b32.xlu0 %v2830, 64
    %v2834 = vpop.permute.xlu0 %2833
    %v2836 = vmul.f32 %v2830, %v2834
    %2838 = vrot.lane.b32.xlu0 %v2836, 32
    %v2839 = vpop.permute.xlu0 %2838
    %v2841 = vadd.f32 %v2831, %v2839
    %v2842 = vtanh.pop %v2841
    %2844 = vrot.lane.b32.xlu0 %v2842, 64
    %v2845 = vpop.permute.xlu0 %2844
    %v2847 = vmul.f32 %v2830, %v2845
    %v2848 = vpack.c.bf16 %v2847, %v2847
    %2850 = vrot.lane.b32.xlu0 %v2848, 32
    %v2851 = vpop.permute.xlu0 %2850
    %v2853 = vsel %vm2257, %v2851, 0
    %2855 = vmatprep.subr.bf16.mxu0 0
    %2856 = vmatpush1.bf16.msra.mxu0 %v2365
    %2857 = vmatprep.subr.bf16.mxu0 0
    %2858 = vmatpush1.bf16.msra.mxu0 %v2366
    %2859 = vmatprep.subr.bf16.mxu0 0
    %2860 = vmatpush1.bf16.msra.mxu0 0
    %2861 = vmatprep.subr.bf16.mxu0 0
    %2862 = vmatpush1.bf16.msra.mxu0 0
    %2863 = vmatprep.subr.bf16.mxu0 0
    %2864 = vmatpush1.bf16.msra.mxu0 0
    %2865 = vmatprep.subr.bf16.mxu0 0
    %2866 = vmatpush1.bf16.msra.mxu0 0
    %2867 = vmatprep.subr.bf16.mxu0 0
    %2868 = vmatpush1.bf16.msra.mxu0 0
    %2869 = vmatprep.subr.bf16.mxu0 0
    %2870 = vmatpush1.bf16.msra.mxu0 0
    %2871 = vmatprep.subr.bf16.mxu0 0
    %2872 = vmatpush1.bf16.msra.mxu0 0
    %2873 = vmatprep.subr.bf16.mxu0 0
    %2874 = vmatpush1.bf16.msra.mxu0 0
    %2875 = vmatprep.subr.bf16.mxu0 0
    %2876 = vmatpush1.bf16.msra.mxu0 0
    %2877 = vmatprep.subr.bf16.mxu0 0
    %2878 = vmatpush1.bf16.msra.mxu0 0
    %2879 = vmatprep.subr.bf16.mxu0 0
    %2880 = vmatpush1.bf16.msra.mxu0 0
    %2881 = vmatprep.subr.bf16.mxu0 0
    %2882 = vmatpush1.bf16.msra.mxu0 0
    %2883 = vmatprep.subr.bf16.mxu0 0
    %2884 = vmatpush1.bf16.msra.mxu0 0
    %2885 = vmatprep.subr.bf16.mxu0 0
    %2886 = vmatpush1.bf16.msra.mxu0 0
    %2887 = vmatprep.mubr.bf16.mxu0 0
    %2888 = vmatmul.mubr.bf16.gmra.mrb[0].mxu0 %v2853
    %v2889 = vpop.f32.mrb[0].mxu0
    %v2890 = vadd.f32 0.0, %v2889
    %v2891 = vpop.f32.mrb[0].mxu0
    %v2892 = vpop.f32.mrb[0].mxu0
    %v2893 = vpop.f32.mrb[0].mxu0
    %2894 = vdwg.mxu0
    %v2895 = vadd.f32 %v2337, %v2890
    %v2896 = vmul.f32 %v2895, %v2355
    %v2897 = vtanh.pop %v2896
    %v2898 = vmul.f32 %v2897, %v2355
    %v2899 = vadd.f32 %v2898, %v2356
    %v2900 = vmul.f32 %v2899, %v2841
    %2902 = vrot.lane.b32.xlu0 %v2899, 64
    %v2903 = vpop.permute.xlu0 %2902
    %v2905 = vmul.f32 %v2899, %v2903
    %2907 = vrot.lane.b32.xlu0 %v2905, 32
    %v2908 = vpop.permute.xlu0 %2907
    %v2910 = vadd.f32 %v2900, %v2908
    %v2911 = vtanh.pop %v2910
    %2913 = vrot.lane.b32.xlu0 %v2911, 64
    %v2914 = vpop.permute.xlu0 %2913
    %v2916 = vmul.f32 %v2899, %v2914
    %s2917 = smul.u32 4, 24
    %s2918 = smul.u32 %s2917, 16
    %s2919 = sshll.u32 %s2918, 4
    %2920 = dma.done [#allocation5], %s2919
    %v2921 = vld [vmem:[%s1] sm:$0xff]
    %v2922 = vld [vmem:[#allocation2] sm:$0xff]
    %v2923 = vld [vmem:[#allocation2 + $0x8] sm:$0xff]
    %v2924 = vld [vmem:[#allocation2 + $0x10] sm:$0xff]
    %v2925 = vld [vmem:[#allocation2 + $0x18] sm:$0xff]
    %v2926 = vld [vmem:[#allocation2 + $0x20] sm:$0xff]
    %v2927 = vld [vmem:[#allocation2 + $0x28] sm:$0xff]
    %v2928 = vld [vmem:[#allocation2 + $0x30] sm:$0xff]
    %v2929 = vld [vmem:[#allocation2 + $0x38] sm:$0xff]
    %v2930 = vld [vmem:[#allocation2 + $0x40] sm:$0xff]
    %v2931 = vld [vmem:[#allocation2 + $0x48] sm:$0xff]
    %v2932 = vld [vmem:[#allocation2 + $0x50] sm:$0xff]
    %v2933 = vld [vmem:[#allocation2 + $0x58] sm:$0xff]
    %v2934 = vld [vmem:[#allocation2 + $0x60] sm:$0xff]
    %v2935 = vld [vmem:[#allocation2 + $0x68] sm:$0xff]
    %v2936 = vld [vmem:[#allocation2 + $0x70] sm:$0xff]
    %v2937 = vld [vmem:[#allocation2 + $0x78] sm:$0xff]
    %v2938 = vld [vmem:[#allocation2 + $0x80] sm:$0xff]
    %v2939 = vld [vmem:[#allocation2 + $0x88] sm:$0xff]
    %v2940 = vld [vmem:[#allocation2 + $0x90] sm:$0xff]
    %v2941 = vld [vmem:[#allocation2 + $0x98] sm:$0xff]
    %v2942 = vld [vmem:[#allocation2 + $0xa0] sm:$0xff]
    %v2943 = vld [vmem:[#allocation2 + $0xa8] sm:$0xff]
    %v2944 = vld [vmem:[#allocation2 + $0xb0] sm:$0xff]
    %v2945 = vld [vmem:[#allocation2 + $0xb8] sm:$0xff]
    %v2946 = vld [vmem:[#allocation2 + $0xc0] sm:$0xff]
    %v2947 = vld [vmem:[#allocation2 + $0xc8] sm:$0xff]
    %v2948 = vld [vmem:[#allocation2 + $0xd0] sm:$0xff]
    %v2949 = vld [vmem:[#allocation2 + $0xd8] sm:$0xff]
    %v2950 = vld [vmem:[#allocation2 + $0xe0] sm:$0xff]
    %v2951 = vld [vmem:[#allocation2 + $0xe8] sm:$0xff]
    %v2952 = vld [vmem:[#allocation2 + $0xf0] sm:$0xff]
    %v2953 = vld [vmem:[#allocation2 + $0xf8] sm:$0xff]
    %v2954 = vld [vmem:[#allocation2 + $0x100] sm:$0xff]
    %v2955 = vld [vmem:[#allocation2 + $0x108] sm:$0xff]
    %v2956 = vld [vmem:[#allocation2 + $0x110] sm:$0xff]
    %v2957 = vld [vmem:[#allocation2 + $0x118] sm:$0xff]
    %v2958 = vld [vmem:[#allocation2 + $0x120] sm:$0xff]
    %v2959 = vld [vmem:[#allocation2 + $0x128] sm:$0xff]
    %v2960 = vld [vmem:[#allocation2 + $0x130] sm:$0xff]
    %v2961 = vld [vmem:[#allocation2 + $0x138] sm:$0xff]
    %v2962 = vld [vmem:[#allocation2 + $0x140] sm:$0xff]
    %v2963 = vld [vmem:[#allocation2 + $0x148] sm:$0xff]
    %v2964 = vld [vmem:[#allocation2 + $0x150] sm:$0xff]
    %v2965 = vld [vmem:[#allocation2 + $0x158] sm:$0xff]
    %v2966 = vld [vmem:[#allocation2 + $0x160] sm:$0xff]
    %v2967 = vld [vmem:[#allocation2 + $0x168] sm:$0xff]
    %v2968 = vld [vmem:[#allocation2 + $0x170] sm:$0xff]
    %v2969 = vld [vmem:[#allocation2 + $0x178] sm:$0xff]
    %v2970 = vld [vmem:[#allocation2 + $0x180] sm:$0xff]
    %v2971 = vld [vmem:[#allocation2 + $0x188] sm:$0xff]
    %v2972 = vld [vmem:[#allocation2 + $0x190] sm:$0xff]
    %v2973 = vld [vmem:[#allocation2 + $0x198] sm:$0xff]
    %v2974 = vld [vmem:[#allocation2 + $0x1a0] sm:$0xff]
    %v2975 = vld [vmem:[#allocation2 + $0x1a8] sm:$0xff]
    %v2976 = vld [vmem:[#allocation2 + $0x1b0] sm:$0xff]
    %v2977 = vld [vmem:[#allocation2 + $0x1b8] sm:$0xff]
    %v2978 = vld [vmem:[#allocation2 + $0x1c0] sm:$0xff]
    %v2979 = vld [vmem:[#allocation2 + $0x1c8] sm:$0xff]
    %v2980 = vld [vmem:[#allocation2 + $0x1d0] sm:$0xff]
    %v2981 = vld [vmem:[#allocation2 + $0x1d8] sm:$0xff]
    %v2982 = vld [vmem:[#allocation2 + $0x1e0] sm:$0xff]
    %v2983 = vld [vmem:[#allocation2 + $0x1e8] sm:$0xff]
    %v2984 = vld [vmem:[#allocation2 + $0x1f0] sm:$0xff]
    %v2985 = vld [vmem:[#allocation2 + $0x1f8] sm:$0xff]
    %v2986 = vld [vmem:[#allocation2 + $0x200] sm:$0xff]
    %v2987 = vld [vmem:[#allocation2 + $0x208] sm:$0xff]
    %v2988 = vld [vmem:[#allocation2 + $0x210] sm:$0xff]
    %v2989 = vld [vmem:[#allocation2 + $0x218] sm:$0xff]
    %v2990 = vld [vmem:[#allocation2 + $0x220] sm:$0xff]
    %v2991 = vld [vmem:[#allocation2 + $0x228] sm:$0xff]
    %v2992 = vld [vmem:[#allocation2 + $0x230] sm:$0xff]
    %v2993 = vld [vmem:[#allocation2 + $0x238] sm:$0xff]
    %v2994 = vld [vmem:[#allocation2 + $0x240] sm:$0xff]
    %v2995 = vld [vmem:[#allocation2 + $0x248] sm:$0xff]
    %v2996 = vld [vmem:[#allocation2 + $0x250] sm:$0xff]
    %v2997 = vld [vmem:[#allocation2 + $0x258] sm:$0xff]
    %v2998 = vld [vmem:[#allocation2 + $0x260] sm:$0xff]
    %v2999 = vld [vmem:[#allocation2 + $0x268] sm:$0xff]
    %v3000 = vld [vmem:[#allocation2 + $0x270] sm:$0xff]
    %v3001 = vld [vmem:[#allocation2 + $0x278] sm:$0xff]
    %v3002 = vld [vmem:[#allocation2 + $0x280] sm:$0xff]
    %v3003 = vld [vmem:[#allocation2 + $0x288] sm:$0xff]
    %v3004 = vld [vmem:[#allocation2 + $0x290] sm:$0xff]
    %v3005 = vld [vmem:[#allocation2 + $0x298] sm:$0xff]
    %v3006 = vld [vmem:[#allocation2 + $0x2a0] sm:$0xff]
    %v3007 = vld [vmem:[#allocation2 + $0x2a8] sm:$0xff]
    %v3008 = vld [vmem:[#allocation2 + $0x2b0] sm:$0xff]
    %v3009 = vld [vmem:[#allocation2 + $0x2b8] sm:$0xff]
    %v3010 = vld [vmem:[#allocation2 + $0x2c0] sm:$0xff]
    %v3011 = vld [vmem:[#allocation2 + $0x2c8] sm:$0xff]
    %v3012 = vld [vmem:[#allocation2 + $0x2d0] sm:$0xff]
    %v3013 = vld [vmem:[#allocation2 + $0x2d8] sm:$0xff]
    %v3014 = vld [vmem:[#allocation2 + $0x2e0] sm:$0xff]
    %v3015 = vld [vmem:[#allocation2 + $0x2e8] sm:$0xff]
    %v3016 = vld [vmem:[#allocation2 + $0x2f0] sm:$0xff]
    %v3017 = vld [vmem:[#allocation2 + $0x2f8] sm:$0xff]
    %v3018 = vld [vmem:[#allocation2 + $0x300] sm:$0xff]
    %v3019 = vld [vmem:[#allocation2 + $0x308] sm:$0xff]
    %v3020 = vld [vmem:[#allocation2 + $0x310] sm:$0xff]
    %v3021 = vld [vmem:[#allocation2 + $0x318] sm:$0xff]
    %v3022 = vld [vmem:[#allocation2 + $0x320] sm:$0xff]
    %v3023 = vld [vmem:[#allocation2 + $0x328] sm:$0xff]
    %v3024 = vld [vmem:[#allocation2 + $0x330] sm:$0xff]
    %v3025 = vld [vmem:[#allocation2 + $0x338] sm:$0xff]
    %v3026 = vld [vmem:[#allocation2 + $0x340] sm:$0xff]
    %v3027 = vld [vmem:[#allocation2 + $0x348] sm:$0xff]
    %v3028 = vld [vmem:[#allocation2 + $0x350] sm:$0xff]
    %v3029 = vld [vmem:[#allocation2 + $0x358] sm:$0xff]
    %v3030 = vld [vmem:[#allocation2 + $0x360] sm:$0xff]
    %v3031 = vld [vmem:[#allocation2 + $0x368] sm:$0xff]
    %v3032 = vld [vmem:[#allocation2 + $0x370] sm:$0xff]
    %v3033 = vld [vmem:[#allocation2 + $0x378] sm:$0xff]
    %v3034 = vld [vmem:[#allocation2 + $0x380] sm:$0xff]
    %v3035 = vld [vmem:[#allocation2 + $0x388] sm:$0xff]
    %v3036 = vld [vmem:[#allocation2 + $0x390] sm:$0xff]
    %v3037 = vld [vmem:[#allocation2 + $0x398] sm:$0xff]
    %v3038 = vld [vmem:[#allocation2 + $0x3a0] sm:$0xff]
    %v3039 = vld [vmem:[#allocation2 + $0x3a8] sm:$0xff]
    %v3040 = vld [vmem:[#allocation2 + $0x3b0] sm:$0xff]
    %v3041 = vld [vmem:[#allocation2 + $0x3b8] sm:$0xff]
    %v3042 = vld [vmem:[#allocation2 + $0x3c0] sm:$0xff]
    %v3043 = vld [vmem:[#allocation2 + $0x3c8] sm:$0xff]
    %v3044 = vld [vmem:[#allocation2 + $0x3d0] sm:$0xff]
    %v3045 = vld [vmem:[#allocation2 + $0x3d8] sm:$0xff]
    %v3046 = vld [vmem:[#allocation2 + $0x3e0] sm:$0xff]
    %v3047 = vld [vmem:[#allocation2 + $0x3e8] sm:$0xff]
    %v3048 = vld [vmem:[#allocation2 + $0x3f0] sm:$0xff]
    %v3049 = vld [vmem:[#allocation2 + $0x3f8] sm:$0xff]
    %v3050 = vld [vmem:[#allocation2 + $0x400] sm:$0xff]
    %v3051 = vld [vmem:[#allocation2 + $0x408] sm:$0xff]
    %v3052 = vld [vmem:[#allocation2 + $0x410] sm:$0xff]
    %v3053 = vld [vmem:[#allocation2 + $0x418] sm:$0xff]
    %v3054 = vld [vmem:[#allocation2 + $0x420] sm:$0xff]
    %v3055 = vld [vmem:[#allocation2 + $0x428] sm:$0xff]
    %v3056 = vld [vmem:[#allocation2 + $0x430] sm:$0xff]
    %v3057 = vld [vmem:[#allocation2 + $0x438] sm:$0xff]
    %v3058 = vld [vmem:[#allocation2 + $0x440] sm:$0xff]
    %v3059 = vld [vmem:[#allocation2 + $0x448] sm:$0xff]
    %v3060 = vld [vmem:[#allocation2 + $0x450] sm:$0xff]
    %v3061 = vld [vmem:[#allocation2 + $0x458] sm:$0xff]
    %v3062 = vld [vmem:[#allocation2 + $0x460] sm:$0xff]
    %v3063 = vld [vmem:[#allocation2 + $0x468] sm:$0xff]
    %v3064 = vld [vmem:[#allocation2 + $0x470] sm:$0xff]
    %v3065 = vld [vmem:[#allocation2 + $0x478] sm:$0xff]
    %v3066 = vld [vmem:[#allocation2 + $0x480] sm:$0xff]
    %v3067 = vld [vmem:[#allocation2 + $0x488] sm:$0xff]
    %v3068 = vld [vmem:[#allocation2 + $0x490] sm:$0xff]
    %v3069 = vld [vmem:[#allocation2 + $0x498] sm:$0xff]
    %v3070 = vld [vmem:[#allocation2 + $0x4a0] sm:$0xff]
    %v3071 = vld [vmem:[#allocation2 + $0x4a8] sm:$0xff]
    %v3072 = vld [vmem:[#allocation2 + $0x4b0] sm:$0xff]
    %v3073 = vld [vmem:[#allocation2 + $0x4b8] sm:$0xff]
    %v3074 = vld [vmem:[#allocation2 + $0x4c0] sm:$0xff]
    %v3075 = vld [vmem:[#allocation2 + $0x4c8] sm:$0xff]
    %v3076 = vld [vmem:[#allocation2 + $0x4d0] sm:$0xff]
    %v3077 = vld [vmem:[#allocation2 + $0x4d8] sm:$0xff]
    %v3078 = vld [vmem:[#allocation2 + $0x4e0] sm:$0xff]
    %v3079 = vld [vmem:[#allocation2 + $0x4e8] sm:$0xff]
    %v3080 = vld [vmem:[#allocation2 + $0x4f0] sm:$0xff]
    %v3081 = vld [vmem:[#allocation2 + $0x4f8] sm:$0xff]
    %v3082 = vld [vmem:[#allocation2 + $0x500] sm:$0xff]
    %v3083 = vld [vmem:[#allocation2 + $0x508] sm:$0xff]
    %v3084 = vld [vmem:[#allocation2 + $0x510] sm:$0xff]
    %v3085 = vld [vmem:[#allocation2 + $0x518] sm:$0xff]
    %v3086 = vld [vmem:[#allocation2 + $0x520] sm:$0xff]
    %v3087 = vld [vmem:[#allocation2 + $0x528] sm:$0xff]
    %v3088 = vld [vmem:[#allocation2 + $0x530] sm:$0xff]
    %v3089 = vld [vmem:[#allocation2 + $0x538] sm:$0xff]
    %v3090 = vld [vmem:[#allocation2 + $0x540] sm:$0xff]
    %v3091 = vld [vmem:[#allocation2 + $0x548] sm:$0xff]
    %v3092 = vld [vmem:[#allocation2 + $0x550] sm:$0xff]
    %v3093 = vld [vmem:[#allocation2 + $0x558] sm:$0xff]
    %v3094 = vld [vmem:[#allocation2 + $0x560] sm:$0xff]
    %v3095 = vld [vmem:[#allocation2 + $0x568] sm:$0xff]
    %v3096 = vld [vmem:[#allocation2 + $0x570] sm:$0xff]
    %v3097 = vld [vmem:[#allocation2 + $0x578] sm:$0xff]
    %v3098 = vld [vmem:[#allocation2 + $0x580] sm:$0xff]
    %v3099 = vld [vmem:[#allocation2 + $0x588] sm:$0xff]
    %v3100 = vld [vmem:[#allocation2 + $0x590] sm:$0xff]
    %v3101 = vld [vmem:[#allocation2 + $0x598] sm:$0xff]
    %v3102 = vld [vmem:[#allocation2 + $0x5a0] sm:$0xff]
    %v3103 = vld [vmem:[#allocation2 + $0x5a8] sm:$0xff]
    %v3104 = vld [vmem:[#allocation2 + $0x5b0] sm:$0xff]
    %v3105 = vld [vmem:[#allocation2 + $0x5b8] sm:$0xff]
    %v3106 = vld [vmem:[#allocation2 + $0x5c0] sm:$0xff]
    %v3107 = vld [vmem:[#allocation2 + $0x5c8] sm:$0xff]
    %v3108 = vld [vmem:[#allocation2 + $0x5d0] sm:$0xff]
    %v3109 = vld [vmem:[#allocation2 + $0x5d8] sm:$0xff]
    %v3110 = vld [vmem:[#allocation2 + $0x5e0] sm:$0xff]
    %v3111 = vld [vmem:[#allocation2 + $0x5e8] sm:$0xff]
    %v3112 = vld [vmem:[#allocation2 + $0x5f0] sm:$0xff]
    %v3113 = vld [vmem:[#allocation2 + $0x5f8] sm:$0xff]
    %v3114 = vld [vmem:[%s6] sm:$0xff]
    %v3115 = vld [vmem:[%s6 + $0x8] sm:$0xff]
    %v3118 = vlaneseq
    %v3119 = vshrl.u32 %v3118, 7
    %v3120 = vsub.s32 0, %v3119
    %v3121 = vrot.slane %v3114, %v3120
    %v3122 = vlaneseq
    %v3123 = vshrl.u32 %v3122, 7
    %v3124 = vsub.s32 1, %v3123
    %v3125 = vrot.slane %v3114, %v3124
    %v3126 = vlaneseq
    %v3127 = vshrl.u32 %v3126, 7
    %v3128 = vsub.s32 2, %v3127
    %v3129 = vrot.slane %v3114, %v3128
    %v3130 = vlaneseq
    %v3131 = vshrl.u32 %v3130, 7
    %v3132 = vsub.s32 3, %v3131
    %v3133 = vrot.slane %v3114, %v3132
    %v3134 = vlaneseq
    %v3135 = vshrl.u32 %v3134, 7
    %v3136 = vsub.s32 4, %v3135
    %v3137 = vrot.slane %v3114, %v3136
    %v3138 = vlaneseq
    %v3139 = vshrl.u32 %v3138, 7
    %v3140 = vsub.s32 5, %v3139
    %v3141 = vrot.slane %v3114, %v3140
    %v3142 = vlaneseq
    %v3143 = vshrl.u32 %v3142, 7
    %v3144 = vsub.s32 6, %v3143
    %v3145 = vrot.slane %v3114, %v3144
    %v3146 = vlaneseq
    %v3147 = vshrl.u32 %v3146, 7
    %v3148 = vsub.s32 7, %v3147
    %v3149 = vrot.slane %v3114, %v3148
    %v3150 = vlaneseq
    %v3151 = vshrl.u32 %v3150, 7
    %v3152 = vsub.s32 0, %v3151
    %v3153 = vrot.slane %v3115, %v3152
    %v3154 = vlaneseq
    %v3155 = vshrl.u32 %v3154, 7
    %v3156 = vsub.s32 1, %v3155
    %v3157 = vrot.slane %v3115, %v3156
    %v3158 = vlaneseq
    %v3159 = vshrl.u32 %v3158, 7
    %v3160 = vsub.s32 2, %v3159
    %v3161 = vrot.slane %v3115, %v3160
    %v3162 = vlaneseq
    %v3163 = vshrl.u32 %v3162, 7
    %v3164 = vsub.s32 3, %v3163
    %v3165 = vrot.slane %v3115, %v3164
    %v3166 = vlaneseq
    %v3167 = vshrl.u32 %v3166, 7
    %v3168 = vsub.s32 4, %v3167
    %v3169 = vrot.slane %v3115, %v3168
    %v3170 = vlaneseq
    %v3171 = vshrl.u32 %v3170, 7
    %v3172 = vsub.s32 5, %v3171
    %v3173 = vrot.slane %v3115, %v3172
    %v3174 = vlaneseq
    %v3175 = vshrl.u32 %v3174, 7
    %v3176 = vsub.s32 6, %v3175
    %v3177 = vrot.slane %v3115, %v3176
    %v3178 = vlaneseq
    %v3179 = vshrl.u32 %v3178, 7
    %v3180 = vsub.s32 7, %v3179
    %v3181 = vrot.slane %v3115, %v3180
    %v3199 = vunpack.c.l.b16 %v2921
    %v3200 = vunpack.c.h.b16 %v2921
    %v3201 = vpack.c.b16 %v3199, %v3199
    %v3202 = vpack.c.b16 %v3200, %v3200
    %vm3204 = vcmask 523264
    %v3206 = vsel %vm3204, %v3202, 0
    %3208 = vmatprep.subr.bf16.mxu0 %v2923
    %3209 = vmatpush1.bf16.msra.mxu0 %v2922
    %3210 = vmatprep.subr.bf16.mxu0 %v2939
    %3211 = vmatpush1.bf16.msra.mxu0 %v2938
    %3212 = vmatprep.subr.bf16.mxu0 %v2955
    %3213 = vmatpush1.bf16.msra.mxu0 %v2954
    %3214 = vmatprep.subr.bf16.mxu0 %v2971
    %3215 = vmatpush1.bf16.msra.mxu0 %v2970
    %3216 = vmatprep.subr.bf16.mxu0 %v2987
    %3217 = vmatpush1.bf16.msra.mxu0 %v2986
    %3218 = vmatprep.subr.bf16.mxu0 %v3003
    %3219 = vmatpush1.bf16.msra.mxu0 %v3002
    %3220 = vmatprep.subr.bf16.mxu0 %v3019
    %3221 = vmatpush1.bf16.msra.mxu0 %v3018
    %3222 = vmatprep.subr.bf16.mxu0 %v3035
    %3223 = vmatpush1.bf16.msra.mxu0 %v3034
    %3224 = vmatprep.subr.bf16.mxu0 %v3051
    %3225 = vmatpush1.bf16.msra.mxu0 %v3050
    %3226 = vmatprep.subr.bf16.mxu0 %v3067
    %3227 = vmatpush1.bf16.msra.mxu0 %v3066
    %3228 = vmatprep.subr.bf16.mxu0 %v3083
    %3229 = vmatpush1.bf16.msra.mxu0 %v3082
    %3230 = vmatprep.subr.bf16.mxu0 %v3099
    %3231 = vmatpush1.bf16.msra.mxu0 %v3098
    %3232 = vmatprep.subr.bf16.mxu0 0
    %3233 = vmatpush1.bf16.msra.mxu0 0
    %3234 = vmatprep.subr.bf16.mxu0 0
    %3235 = vmatpush1.bf16.msra.mxu0 0
    %3236 = vmatprep.subr.bf16.mxu0 0
    %3237 = vmatpush1.bf16.msra.mxu0 0
    %3238 = vmatprep.subr.bf16.mxu0 0
    %3239 = vmatpush1.bf16.msra.mxu0 0
    %3240 = vmatprep.mubr.bf16.mxu0 %v3206
    %3241 = vmatmul.mubr.bf16.gmra.mrb[0].mxu0 %v3201
    %v3242 = vpop.f32.mrb[0].mxu0
    %v3243 = vadd.f32 %v3121, %v3242
    %v3244 = vpop.f32.mrb[0].mxu0
    %v3245 = vadd.f32 %v3125, %v3244
    %v3246 = vpop.f32.mrb[0].mxu0
    %v3247 = vpop.f32.mrb[0].mxu0
    %3248 = vdwg.mxu0
    %3249 = vmatprep.subr.bf16.mxu0 %v2925
    %3250 = vmatpush1.bf16.msra.mxu0 %v2924
    %3251 = vmatprep.subr.bf16.mxu0 %v2941
    %3252 = vmatpush1.bf16.msra.mxu0 %v2940
    %3253 = vmatprep.subr.bf16.mxu0 %v2957
    %3254 = vmatpush1.bf16.msra.mxu0 %v2956
    %3255 = vmatprep.subr.bf16.mxu0 %v2973
    %3256 = vmatpush1.bf16.msra.mxu0 %v2972
    %3257 = vmatprep.subr.bf16.mxu0 %v2989
    %3258 = vmatpush1.bf16.msra.mxu0 %v2988
    %3259 = vmatprep.subr.bf16.mxu0 %v3005
    %3260 = vmatpush1.bf16.msra.mxu0 %v3004
    %3261 = vmatprep.subr.bf16.mxu0 %v3021
    %3262 = vmatpush1.bf16.msra.mxu0 %v3020
    %3263 = vmatprep.subr.bf16.mxu0 %v3037
    %3264 = vmatpush1.bf16.msra.mxu0 %v3036
    %3265 = vmatprep.subr.bf16.mxu0 %v3053
    %3266 = vmatpush1.bf16.msra.mxu0 %v3052
    %3267 = vmatprep.subr.bf16.mxu0 %v3069
    %3268 = vmatpush1.bf16.msra.mxu0 %v3068
    %3269 = vmatprep.subr.bf16.mxu0 %v3085
    %3270 = vmatpush1.bf16.msra.mxu0 %v3084
    %3271 = vmatprep.subr.bf16.mxu0 %v3101
    %3272 = vmatpush1.bf16.msra.mxu0 %v3100
    %3273 = vmatprep.subr.bf16.mxu0 0
    %3274 = vmatpush1.bf16.msra.mxu0 0
    %3275 = vmatprep.subr.bf16.mxu0 0
    %3276 = vmatpush1.bf16.msra.mxu0 0
    %3277 = vmatprep.subr.bf16.mxu0 0
    %3278 = vmatpush1.bf16.msra.mxu0 0
    %3279 = vmatprep.subr.bf16.mxu0 0
    %3280 = vmatpush1.bf16.msra.mxu0 0
    %3281 = vmatprep.mubr.bf16.mxu0 %v3206
    %3282 = vmatmul.mubr.bf16.gmra.mrb[0].mxu0 %v3201
    %v3283 = vpop.f32.mrb[0].mxu0
    %v3284 = vadd.f32 %v3129, %v3283
    %v3285 = vpop.f32.mrb[0].mxu0
    %v3286 = vadd.f32 %v3133, %v3285
    %v3287 = vpop.f32.mrb[0].mxu0
    %v3288 = vpop.f32.mrb[0].mxu0
    %3289 = vdwg.mxu0
    %3290 = vmatprep.subr.bf16.mxu0 %v2927
    %3291 = vmatpush1.bf16.msra.mxu0 %v2926
    %3292 = vmatprep.subr.bf16.mxu0 %v2943
    %3293 = vmatpush1.bf16.msra.mxu0 %v2942
    %3294 = vmatprep.subr.bf16.mxu0 %v2959
    %3295 = vmatpush1.bf16.msra.mxu0 %v2958
    %3296 = vmatprep.subr.bf16.mxu0 %v2975
    %3297 = vmatpush1.bf16.msra.mxu0 %v2974
    %3298 = vmatprep.subr.bf16.mxu0 %v2991
    %3299 = vmatpush1.bf16.msra.mxu0 %v2990
    %3300 = vmatprep.subr.bf16.mxu0 %v3007
    %3301 = vmatpush1.bf16.msra.mxu0 %v3006
    %3302 = vmatprep.subr.bf16.mxu0 %v3023
    %3303 = vmatpush1.bf16.msra.mxu0 %v3022
    %3304 = vmatprep.subr.bf16.mxu0 %v3039
    %3305 = vmatpush1.bf16.msra.mxu0 %v3038
    %3306 = vmatprep.subr.bf16.mxu0 %v3055
    %3307 = vmatpush1.bf16.msra.mxu0 %v3054
    %3308 = vmatprep.subr.bf16.mxu0 %v3071
    %3309 = vmatpush1.bf16.msra.mxu0 %v3070
    %3310 = vmatprep.subr.bf16.mxu0 %v3087
    %3311 = vmatpush1.bf16.msra.mxu0 %v3086
    %3312 = vmatprep.subr.bf16.mxu0 %v3103
    %3313 = vmatpush1.bf16.msra.mxu0 %v3102
    %3314 = vmatprep.subr.bf16.mxu0 0
    %3315 = vmatpush1.bf16.msra.mxu0 0
    %3316 = vmatprep.subr.bf16.mxu0 0
    %3317 = vmatpush1.bf16.msra.mxu0 0
    %3318 = vmatprep.subr.bf16.mxu0 0
    %3319 = vmatpush1.bf16.msra.mxu0 0
    %3320 = vmatprep.subr.bf16.mxu0 0
    %3321 = vmatpush1.bf16.msra.mxu0 0
    %3322 = vmatprep.mubr.bf16.mxu0 %v3206
    %3323 = vmatmul.mubr.bf16.gmra.mrb[0].mxu0 %v3201
    %v3324 = vpop.f32.mrb[0].mxu0
    %v3325 = vadd.f32 %v3137, %v3324
    %v3326 = vpop.f32.mrb[0].mxu0
    %v3327 = vadd.f32 %v3141, %v3326
    %v3328 = vpop.f32.mrb[0].mxu0
    %v3329 = vpop.f32.mrb[0].mxu0
    %3330 = vdwg.mxu0
    %3331 = vmatprep.subr.bf16.mxu0 %v2929
    %3332 = vmatpush1.bf16.msra.mxu0 %v2928
    %3333 = vmatprep.subr.bf16.mxu0 %v2945
    %3334 = vmatpush1.bf16.msra.mxu0 %v2944
    %3335 = vmatprep.subr.bf16.mxu0 %v2961
    %3336 = vmatpush1.bf16.msra.mxu0 %v2960
    %3337 = vmatprep.subr.bf16.mxu0 %v2977
    %3338 = vmatpush1.bf16.msra.mxu0 %v2976
    %3339 = vmatprep.subr.bf16.mxu0 %v2993
    %3340 = vmatpush1.bf16.msra.mxu0 %v2992
    %3341 = vmatprep.subr.bf16.mxu0 %v3009
    %3342 = vmatpush1.bf16.msra.mxu0 %v3008
    %3343 = vmatprep.subr.bf16.mxu0 %v3025
    %3344 = vmatpush1.bf16.msra.mxu0 %v3024
    %3345 = vmatprep.subr.bf16.mxu0 %v3041
    %3346 = vmatpush1.bf16.msra.mxu0 %v3040
    %3347 = vmatprep.subr.bf16.mxu0 %v3057
    %3348 = vmatpush1.bf16.msra.mxu0 %v3056
    %3349 = vmatprep.subr.bf16.mxu0 %v3073
    %3350 = vmatpush1.bf16.msra.mxu0 %v3072
    %3351 = vmatprep.subr.bf16.mxu0 %v3089
    %3352 = vmatpush1.bf16.msra.mxu0 %v3088
    %3353 = vmatprep.subr.bf16.mxu0 %v3105
    %3354 = vmatpush1.bf16.msra.mxu0 %v3104
    %3355 = vmatprep.subr.bf16.mxu0 0
    %3356 = vmatpush1.bf16.msra.mxu0 0
    %3357 = vmatprep.subr.bf16.mxu0 0
    %3358 = vmatpush1.bf16.msra.mxu0 0
    %3359 = vmatprep.subr.bf16.mxu0 0
    %3360 = vmatpush1.bf16.msra.mxu0 0
    %3361 = vmatprep.subr.bf16.mxu0 0
    %3362 = vmatpush1.bf16.msra.mxu0 0
    %3363 = vmatprep.mubr.bf16.mxu0 %v3206
    %3364 = vmatmul.mubr.bf16.gmra.mrb[0].mxu0 %v3201
    %v3365 = vpop.f32.mrb[0].mxu0
    %v3366 = vadd.f32 %v3145, %v3365
    %v3367 = vpop.f32.mrb[0].mxu0
    %v3368 = vadd.f32 %v3149, %v3367
    %v3369 = vpop.f32.mrb[0].mxu0
    %v3370 = vpop.f32.mrb[0].mxu0
    %3371 = vdwg.mxu0
    %3372 = vmatprep.subr.bf16.mxu0 %v2931
    %3373 = vmatpush1.bf16.msra.mxu0 %v2930
    %3374 = vmatprep.subr.bf16.mxu0 %v2947
    %3375 = vmatpush1.bf16.msra.mxu0 %v2946
    %3376 = vmatprep.subr.bf16.mxu0 %v2963
    %3377 = vmatpush1.bf16.msra.mxu0 %v2962
    %3378 = vmatprep.subr.bf16.mxu0 %v2979
    %3379 = vmatpush1.bf16.msra.mxu0 %v2978
    %3380 = vmatprep.subr.bf16.mxu0 %v2995
    %3381 = vmatpush1.bf16.msra.mxu0 %v2994
    %3382 = vmatprep.subr.bf16.mxu0 %v3011
    %3383 = vmatpush1.bf16.msra.mxu0 %v3010
    %3384 = vmatprep.subr.bf16.mxu0 %v3027
    %3385 = vmatpush1.bf16.msra.mxu0 %v3026
    %3386 = vmatprep.subr.bf16.mxu0 %v3043
    %3387 = vmatpush1.bf16.msra.mxu0 %v3042
    %3388 = vmatprep.subr.bf16.mxu0 %v3059
    %3389 = vmatpush1.bf16.msra.mxu0 %v3058
    %3390 = vmatprep.subr.bf16.mxu0 %v3075
    %3391 = vmatpush1.bf16.msra.mxu0 %v3074
    %3392 = vmatprep.subr.bf16.mxu0 %v3091
    %3393 = vmatpush1.bf16.msra.mxu0 %v3090
    %3394 = vmatprep.subr.bf16.mxu0 %v3107
    %3395 = vmatpush1.bf16.msra.mxu0 %v3106
    %3396 = vmatprep.subr.bf16.mxu0 0
    %3397 = vmatpush1.bf16.msra.mxu0 0
    %3398 = vmatprep.subr.bf16.mxu0 0
    %3399 = vmatpush1.bf16.msra.mxu0 0
    %3400 = vmatprep.subr.bf16.mxu0 0
    %3401 = vmatpush1.bf16.msra.mxu0 0
    %3402 = vmatprep.subr.bf16.mxu0 0
    %3403 = vmatpush1.bf16.msra.mxu0 0
    %3404 = vmatprep.mubr.bf16.mxu0 %v3206
    %3405 = vmatmul.mubr.bf16.gmra.mrb[0].mxu0 %v3201
    %v3406 = vpop.f32.mrb[0].mxu0
    %v3407 = vadd.f32 %v3153, %v3406
    %v3408 = vpop.f32.mrb[0].mxu0
    %v3409 = vadd.f32 %v3157, %v3408
    %v3410 = vpop.f32.mrb[0].mxu0
    %v3411 = vpop.f32.mrb[0].mxu0
    %3412 = vdwg.mxu0
    %3413 = vmatprep.subr.bf16.mxu0 %v2933
    %3414 = vmatpush1.bf16.msra.mxu0 %v2932
    %3415 = vmatprep.subr.bf16.mxu0 %v2949
    %3416 = vmatpush1.bf16.msra.mxu0 %v2948
    %3417 = vmatprep.subr.bf16.mxu0 %v2965
    %3418 = vmatpush1.bf16.msra.mxu0 %v2964
    %3419 = vmatprep.subr.bf16.mxu0 %v2981
    %3420 = vmatpush1.bf16.msra.mxu0 %v2980
    %3421 = vmatprep.subr.bf16.mxu0 %v2997
    %3422 = vmatpush1.bf16.msra.mxu0 %v2996
    %3423 = vmatprep.subr.bf16.mxu0 %v3013
    %3424 = vmatpush1.bf16.msra.mxu0 %v3012
    %3425 = vmatprep.subr.bf16.mxu0 %v3029
    %3426 = vmatpush1.bf16.msra.mxu0 %v3028
    %3427 = vmatprep.subr.bf16.mxu0 %v3045
    %3428 = vmatpush1.bf16.msra.mxu0 %v3044
    %3429 = vmatprep.subr.bf16.mxu0 %v3061
    %3430 = vmatpush1.bf16.msra.mxu0 %v3060
    %3431 = vmatprep.subr.bf16.mxu0 %v3077
    %3432 = vmatpush1.bf16.msra.mxu0 %v3076
    %3433 = vmatprep.subr.bf16.mxu0 %v3093
    %3434 = vmatpush1.bf16.msra.mxu0 %v3092
    %3435 = vmatprep.subr.bf16.mxu0 %v3109
    %3436 = vmatpush1.bf16.msra.mxu0 %v3108
    %3437 = vmatprep.subr.bf16.mxu0 0
    %3438 = vmatpush1.bf16.msra.mxu0 0
    %3439 = vmatprep.subr.bf16.mxu0 0
    %3440 = vmatpush1.bf16.msra.mxu0 0
    %3441 = vmatprep.subr.bf16.mxu0 0
    %3442 = vmatpush1.bf16.msra.mxu0 0
    %3443 = vmatprep.subr.bf16.mxu0 0
    %3444 = vmatpush1.bf16.msra.mxu0 0
    %3445 = vmatprep.mubr.bf16.mxu0 %v3206
    %3446 = vmatmul.mubr.bf16.gmra.mrb[0].mxu0 %v3201
    %v3447 = vpop.f32.mrb[0].mxu0
    %v3448 = vadd.f32 %v3161, %v3447
    %v3449 = vpop.f32.mrb[0].mxu0
    %v3450 = vadd.f32 %v3165, %v3449
    %v3451 = vpop.f32.mrb[0].mxu0
    %v3452 = vpop.f32.mrb[0].mxu0
    %3453 = vdwg.mxu0
    %3454 = vmatprep.subr.bf16.mxu0 %v2935
    %3455 = vmatpush1.bf16.msra.mxu0 %v2934
    %3456 = vmatprep.subr.bf16.mxu0 %v2951
    %3457 = vmatpush1.bf16.msra.mxu0 %v2950
    %3458 = vmatprep.subr.bf16.mxu0 %v2967
    %3459 = vmatpush1.bf16.msra.mxu0 %v2966
    %3460 = vmatprep.subr.bf16.mxu0 %v2983
    %3461 = vmatpush1.bf16.msra.mxu0 %v2982
    %3462 = vmatprep.subr.bf16.mxu0 %v2999
    %3463 = vmatpush1.bf16.msra.mxu0 %v2998
    %3464 = vmatprep.subr.bf16.mxu0 %v3015
    %3465 = vmatpush1.bf16.msra.mxu0 %v3014
    %3466 = vmatprep.subr.bf16.mxu0 %v3031
    %3467 = vmatpush1.bf16.msra.mxu0 %v3030
    %3468 = vmatprep.subr.bf16.mxu0 %v3047
    %3469 = vmatpush1.bf16.msra.mxu0 %v3046
    %3470 = vmatprep.subr.bf16.mxu0 %v3063
    %3471 = vmatpush1.bf16.msra.mxu0 %v3062
    %3472 = vmatprep.subr.bf16.mxu0 %v3079
    %3473 = vmatpush1.bf16.msra.mxu0 %v3078
    %3474 = vmatprep.subr.bf16.mxu0 %v3095
    %3475 = vmatpush1.bf16.msra.mxu0 %v3094
    %3476 = vmatprep.subr.bf16.mxu0 %v3111
    %3477 = vmatpush1.bf16.msra.mxu0 %v3110
    %3478 = vmatprep.subr.bf16.mxu0 0
    %3479 = vmatpush1.bf16.msra.mxu0 0
    %3480 = vmatprep.subr.bf16.mxu0 0
    %3481 = vmatpush1.bf16.msra.mxu0 0
    %3482 = vmatprep.subr.bf16.mxu0 0
    %3483 = vmatpush1.bf16.msra.mxu0 0
    %3484 = vmatprep.subr.bf16.mxu0 0
    %3485 = vmatpush1.bf16.msra.mxu0 0
    %3486 = vmatprep.mubr.bf16.mxu0 %v3206
    %3487 = vmatmul.mubr.bf16.gmra.mrb[0].mxu0 %v3201
    %v3488 = vpop.f32.mrb[0].mxu0
    %v3489 = vadd.f32 %v3169, %v3488
    %v3490 = vpop.f32.mrb[0].mxu0
    %v3491 = vadd.f32 %v3173, %v3490
    %v3492 = vpop.f32.mrb[0].mxu0
    %v3493 = vpop.f32.mrb[0].mxu0
    %3494 = vdwg.mxu0
    %3495 = vmatprep.subr.bf16.mxu0 %v2937
    %3496 = vmatpush1.bf16.msra.mxu0 %v2936
    %3497 = vmatprep.subr.bf16.mxu0 %v2953
    %3498 = vmatpush1.bf16.msra.mxu0 %v2952
    %3499 = vmatprep.subr.bf16.mxu0 %v2969
    %3500 = vmatpush1.bf16.msra.mxu0 %v2968
    %3501 = vmatprep.subr.bf16.mxu0 %v2985
    %3502 = vmatpush1.bf16.msra.mxu0 %v2984
    %3503 = vmatprep.subr.bf16.mxu0 %v3001
    %3504 = vmatpush1.bf16.msra.mxu0 %v3000
    %3505 = vmatprep.subr.bf16.mxu0 %v3017
    %3506 = vmatpush1.bf16.msra.mxu0 %v3016
    %3507 = vmatprep.subr.bf16.mxu0 %v3033
    %3508 = vmatpush1.bf16.msra.mxu0 %v3032
    %3509 = vmatprep.subr.bf16.mxu0 %v3049
    %3510 = vmatpush1.bf16.msra.mxu0 %v3048
    %3511 = vmatprep.subr.bf16.mxu0 %v3065
    %3512 = vmatpush1.bf16.msra.mxu0 %v3064
    %3513 = vmatprep.subr.bf16.mxu0 %v3081
    %3514 = vmatpush1.bf16.msra.mxu0 %v3080
    %3515 = vmatprep.subr.bf16.mxu0 %v3097
    %3516 = vmatpush1.bf16.msra.mxu0 %v3096
    %3517 = vmatprep.subr.bf16.mxu0 %v3113
    %3518 = vmatpush1.bf16.msra.mxu0 %v3112
    %3519 = vmatprep.subr.bf16.mxu0 0
    %3520 = vmatpush1.bf16.msra.mxu0 0
    %3521 = vmatprep.subr.bf16.mxu0 0
    %3522 = vmatpush1.bf16.msra.mxu0 0
    %3523 = vmatprep.subr.bf16.mxu0 0
    %3524 = vmatpush1.bf16.msra.mxu0 0
    %3525 = vmatprep.subr.bf16.mxu0 0
    %3526 = vmatpush1.bf16.msra.mxu0 0
    %3527 = vmatprep.mubr.bf16.mxu0 %v3206
    %3528 = vmatmul.mubr.bf16.gmra.mrb[0].mxu0 %v3201
    %v3529 = vpop.f32.mrb[0].mxu0
    %v3530 = vadd.f32 %v3177, %v3529
    %v3531 = vpop.f32.mrb[0].mxu0
    %v3532 = vadd.f32 %v3181, %v3531
    %v3533 = vpop.f32.mrb[0].mxu0
    %v3534 = vpop.f32.mrb[0].mxu0
    %3535 = vdwg.mxu0
    %v3536 = vmax.f32 %v3243, 0.0
    %v3537 = vmax.f32 %v3245, 0.0
    %v3538 = vmax.f32 %v3284, 0.0
    %v3539 = vmax.f32 %v3286, 0.0
    %v3540 = vmax.f32 %v3325, 0.0
    %v3541 = vmax.f32 %v3327, 0.0
    %v3542 = vmax.f32 %v3366, 0.0
    %v3543 = vmax.f32 %v3368, 0.0
    %v3544 = vmax.f32 %v3407, 0.0
    %v3545 = vmax.f32 %v3409, 0.0
    %v3546 = vmax.f32 %v3448, 0.0
    %v3547 = vmax.f32 %v3450, 0.0
    %v3548 = vmax.f32 %v3489, 0.0
    %v3549 = vmax.f32 %v3491, 0.0
    %v3550 = vmax.f32 %v3530, 0.0
    %v3551 = vmax.f32 %v3532, 0.0
    %v3552 = vmul.f32 %v3536, %v3536
    %v3553 = vmul.f32 %v3537, %v3537
    %v3554 = vmul.f32 %v3538, %v3538
    %v3555 = vmul.f32 %v3539, %v3539
    %v3556 = vmul.f32 %v3540, %v3540
    %v3557 = vmul.f32 %v3541, %v3541
    %v3558 = vmul.f32 %v3542, %v3542
    %v3559 = vmul.f32 %v3543, %v3543
    %v3560 = vmul.f32 %v3544, %v3544
    %v3561 = vmul.f32 %v3545, %v3545
    %v3562 = vmul.f32 %v3546, %v3546
    %v3563 = vmul.f32 %v3547, %v3547
    %v3564 = vmul.f32 %v3548, %v3548
    %v3565 = vmul.f32 %v3549, %v3549
    %v3566 = vmul.f32 %v3550, %v3550
    %v3567 = vmul.f32 %v3551, %v3551
    %v3568 = vadd.f32 %v3552, %v3553
    %v3569 = vadd.f32 %v3568, %v3554
    %v3570 = vadd.f32 %v3569, %v3555
    %v3571 = vadd.f32 %v3570, %v3556
    %v3572 = vadd.f32 %v3571, %v3557
    %v3573 = vadd.f32 %v3572, %v3558
    %v3574 = vadd.f32 %v3573, %v3559
    %v3575 = vadd.f32 %v3574, %v3560
    %v3576 = vadd.f32 %v3575, %v3561
    %v3577 = vadd.f32 %v3576, %v3562
    %v3578 = vadd.f32 %v3577, %v3563
    %v3579 = vadd.f32 %v3578, %v3564
    %v3580 = vadd.f32 %v3579, %v3565
    %v3581 = vadd.f32 %v3580, %v3566
    %v3582 = vadd.f32 %v3581, %v3567
    %3583 = vadd.xlane.f32.xlu0 %v3582
    %v3584 = vpop.xlane.xlu0 %3583
    %v3585 = vadd.f32 %v3584, 1e-10
    %v3586 = vrsqrt.pop %v3585
    %v3587 = vmul.f32 %v3536, %v3586
    %v3588 = vmul.f32 %v3537, %v3586
    %v3589 = vmul.f32 %v3538, %v3586
    %v3590 = vmul.f32 %v3539, %v3586
    %v3591 = vmul.f32 %v3540, %v3586
    %v3592 = vmul.f32 %v3541, %v3586
    %v3593 = vmul.f32 %v3542, %v3586
    %v3594 = vmul.f32 %v3543, %v3586
    %v3595 = vmul.f32 %v3544, %v3586
    %v3596 = vmul.f32 %v3545, %v3586
    %v3597 = vmul.f32 %v3546, %v3586
    %v3598 = vmul.f32 %v3547, %v3586
    %v3599 = vmul.f32 %v3548, %v3586
    %v3600 = vmul.f32 %v3549, %v3586
    %v3601 = vmul.f32 %v3550, %v3586
    %v3602 = vmul.f32 %v3551, %v3586
    %s3603 = smul.u32 4, 256
    %s3604 = smul.u32 %s3603, 1
    %s3605 = sshll.u32 %s3604, 4
    %3606 = dma.done %s1633, %s3605
    %v3607 = vpack.c.bf16 %v3587, %v3587
    %v3608 = vpack.c.bf16 %v3588, %v3588
    %v3609 = vpack.c.bf16 %v3589, %v3589
    %v3610 = vpack.c.bf16 %v3590, %v3590
    %v3611 = vpack.c.bf16 %v3591, %v3591
    %v3612 = vpack.c.bf16 %v3592, %v3592
    %v3613 = vpack.c.bf16 %v3593, %v3593
    %v3614 = vpack.c.bf16 %v3594, %v3594
    %v3615 = vpack.c.bf16 %v3595, %v3595
    %v3616 = vpack.c.bf16 %v3596, %v3596
    %v3617 = vpack.c.bf16 %v3597, %v3597
    %v3618 = vpack.c.bf16 %v3598, %v3598
    %v3619 = vpack.c.bf16 %v3599, %v3599
    %v3620 = vpack.c.bf16 %v3600, %v3600
    %v3621 = vpack.c.bf16 %v3601, %v3601
    %v3622 = vpack.c.bf16 %v3602, %v3602
    %v3623 = vld [vmem:[#allocation3] sm:$0xff]
    %v3624 = vld [vmem:[#allocation3 + $0x8] sm:$0xff]
    %v3625 = vld [vmem:[#allocation3 + $0x10] sm:$0xff]
    %v3626 = vld [vmem:[#allocation3 + $0x18] sm:$0xff]
    %v3627 = vld [vmem:[#allocation3 + $0x20] sm:$0xff]
    %v3628 = vld [vmem:[#allocation3 + $0x28] sm:$0xff]
    %v3629 = vld [vmem:[#allocation3 + $0x30] sm:$0xff]
    %v3630 = vld [vmem:[#allocation3 + $0x38] sm:$0xff]
    %v3631 = vld [vmem:[#allocation3 + $0x40] sm:$0xff]
    %v3632 = vld [vmem:[#allocation3 + $0x48] sm:$0xff]
    %v3633 = vld [vmem:[#allocation3 + $0x50] sm:$0xff]
    %v3634 = vld [vmem:[#allocation3 + $0x58] sm:$0xff]
    %v3635 = vld [vmem:[#allocation3 + $0x60] sm:$0xff]
    %v3636 = vld [vmem:[#allocation3 + $0x68] sm:$0xff]
    %v3637 = vld [vmem:[#allocation3 + $0x70] sm:$0xff]
    %v3638 = vld [vmem:[#allocation3 + $0x78] sm:$0xff]
    %v3639 = vld [vmem:[#allocation3 + $0x80] sm:$0xff]
    %v3640 = vld [vmem:[#allocation3 + $0x88] sm:$0xff]
    %v3641 = vld [vmem:[#allocation3 + $0x90] sm:$0xff]
    %v3642 = vld [vmem:[#allocation3 + $0x98] sm:$0xff]
    %v3643 = vld [vmem:[#allocation3 + $0xa0] sm:$0xff]
    %v3644 = vld [vmem:[#allocation3 + $0xa8] sm:$0xff]
    %v3645 = vld [vmem:[#allocation3 + $0xb0] sm:$0xff]
    %v3646 = vld [vmem:[#allocation3 + $0xb8] sm:$0xff]
    %v3647 = vld [vmem:[#allocation3 + $0xc0] sm:$0xff]
    %v3648 = vld [vmem:[#allocation3 + $0xc8] sm:$0xff]
    %v3649 = vld [vmem:[#allocation3 + $0xd0] sm:$0xff]
    %v3650 = vld [vmem:[#allocation3 + $0xd8] sm:$0xff]
    %v3651 = vld [vmem:[#allocation3 + $0xe0] sm:$0xff]
    %v3652 = vld [vmem:[#allocation3 + $0xe8] sm:$0xff]
    %v3653 = vld [vmem:[#allocation3 + $0xf0] sm:$0xff]
    %v3654 = vld [vmem:[#allocation3 + $0xf8] sm:$0xff]
    %v3655 = vld [vmem:[#allocation3 + $0x100] sm:$0xff]
    %v3656 = vld [vmem:[#allocation3 + $0x108] sm:$0xff]
    %v3657 = vld [vmem:[#allocation3 + $0x110] sm:$0xff]
    %v3658 = vld [vmem:[#allocation3 + $0x118] sm:$0xff]
    %v3659 = vld [vmem:[#allocation3 + $0x120] sm:$0xff]
    %v3660 = vld [vmem:[#allocation3 + $0x128] sm:$0xff]
    %v3661 = vld [vmem:[#allocation3 + $0x130] sm:$0xff]
    %v3662 = vld [vmem:[#allocation3 + $0x138] sm:$0xff]
    %v3663 = vld [vmem:[#allocation3 + $0x140] sm:$0xff]
    %v3664 = vld [vmem:[#allocation3 + $0x148] sm:$0xff]
    %v3665 = vld [vmem:[#allocation3 + $0x150] sm:$0xff]
    %v3666 = vld [vmem:[#allocation3 + $0x158] sm:$0xff]
    %v3667 = vld [vmem:[#allocation3 + $0x160] sm:$0xff]
    %v3668 = vld [vmem:[#allocation3 + $0x168] sm:$0xff]
    %v3669 = vld [vmem:[#allocation3 + $0x170] sm:$0xff]
    %v3670 = vld [vmem:[#allocation3 + $0x178] sm:$0xff]
    %v3671 = vld [vmem:[#allocation3 + $0x180] sm:$0xff]
    %v3672 = vld [vmem:[#allocation3 + $0x188] sm:$0xff]
    %v3673 = vld [vmem:[#allocation3 + $0x190] sm:$0xff]
    %v3674 = vld [vmem:[#allocation3 + $0x198] sm:$0xff]
    %v3675 = vld [vmem:[#allocation3 + $0x1a0] sm:$0xff]
    %v3676 = vld [vmem:[#allocation3 + $0x1a8] sm:$0xff]
    %v3677 = vld [vmem:[#allocation3 + $0x1b0] sm:$0xff]
    %v3678 = vld [vmem:[#allocation3 + $0x1b8] sm:$0xff]
    %v3679 = vld [vmem:[#allocation3 + $0x1c0] sm:$0xff]
    %v3680 = vld [vmem:[#allocation3 + $0x1c8] sm:$0xff]
    %v3681 = vld [vmem:[#allocation3 + $0x1d0] sm:$0xff]
    %v3682 = vld [vmem:[#allocation3 + $0x1d8] sm:$0xff]
    %v3683 = vld [vmem:[#allocation3 + $0x1e0] sm:$0xff]
    %v3684 = vld [vmem:[#allocation3 + $0x1e8] sm:$0xff]
    %v3685 = vld [vmem:[#allocation3 + $0x1f0] sm:$0xff]
    %v3686 = vld [vmem:[#allocation3 + $0x1f8] sm:$0xff]
    %v3687 = vld [vmem:[#allocation3 + $0x200] sm:$0xff]
    %v3688 = vld [vmem:[#allocation3 + $0x208] sm:$0xff]
    %v3689 = vld [vmem:[#allocation3 + $0x210] sm:$0xff]
    %v3690 = vld [vmem:[#allocation3 + $0x218] sm:$0xff]
    %v3691 = vld [vmem:[#allocation3 + $0x220] sm:$0xff]
    %v3692 = vld [vmem:[#allocation3 + $0x228] sm:$0xff]
    %v3693 = vld [vmem:[#allocation3 + $0x230] sm:$0xff]
    %v3694 = vld [vmem:[#allocation3 + $0x238] sm:$0xff]
    %v3695 = vld [vmem:[#allocation3 + $0x240] sm:$0xff]
    %v3696 = vld [vmem:[#allocation3 + $0x248] sm:$0xff]
    %v3697 = vld [vmem:[#allocation3 + $0x250] sm:$0xff]
    %v3698 = vld [vmem:[#allocation3 + $0x258] sm:$0xff]
    %v3699 = vld [vmem:[#allocation3 + $0x260] sm:$0xff]
    %v3700 = vld [vmem:[#allocation3 + $0x268] sm:$0xff]
    %v3701 = vld [vmem:[#allocation3 + $0x270] sm:$0xff]
    %v3702 = vld [vmem:[#allocation3 + $0x278] sm:$0xff]
    %v3703 = vld [vmem:[#allocation3 + $0x280] sm:$0xff]
    %v3704 = vld [vmem:[#allocation3 + $0x288] sm:$0xff]
    %v3705 = vld [vmem:[#allocation3 + $0x290] sm:$0xff]
    %v3706 = vld [vmem:[#allocation3 + $0x298] sm:$0xff]
    %v3707 = vld [vmem:[#allocation3 + $0x2a0] sm:$0xff]
    %v3708 = vld [vmem:[#allocation3 + $0x2a8] sm:$0xff]
    %v3709 = vld [vmem:[#allocation3 + $0x2b0] sm:$0xff]
    %v3710 = vld [vmem:[#allocation3 + $0x2b8] sm:$0xff]
    %v3711 = vld [vmem:[#allocation3 + $0x2c0] sm:$0xff]
    %v3712 = vld [vmem:[#allocation3 + $0x2c8] sm:$0xff]
    %v3713 = vld [vmem:[#allocation3 + $0x2d0] sm:$0xff]
    %v3714 = vld [vmem:[#allocation3 + $0x2d8] sm:$0xff]
    %v3715 = vld [vmem:[#allocation3 + $0x2e0] sm:$0xff]
    %v3716 = vld [vmem:[#allocation3 + $0x2e8] sm:$0xff]
    %v3717 = vld [vmem:[#allocation3 + $0x2f0] sm:$0xff]
    %v3718 = vld [vmem:[#allocation3 + $0x2f8] sm:$0xff]
    %v3719 = vld [vmem:[#allocation3 + $0x300] sm:$0xff]
    %v3720 = vld [vmem:[#allocation3 + $0x308] sm:$0xff]
    %v3721 = vld [vmem:[#allocation3 + $0x310] sm:$0xff]
    %v3722 = vld [vmem:[#allocation3 + $0x318] sm:$0xff]
    %v3723 = vld [vmem:[#allocation3 + $0x320] sm:$0xff]
    %v3724 = vld [vmem:[#allocation3 + $0x328] sm:$0xff]
    %v3725 = vld [vmem:[#allocation3 + $0x330] sm:$0xff]
    %v3726 = vld [vmem:[#allocation3 + $0x338] sm:$0xff]
    %v3727 = vld [vmem:[#allocation3 + $0x340] sm:$0xff]
    %v3728 = vld [vmem:[#allocation3 + $0x348] sm:$0xff]
    %v3729 = vld [vmem:[#allocation3 + $0x350] sm:$0xff]
    %v3730 = vld [vmem:[#allocation3 + $0x358] sm:$0xff]
    %v3731 = vld [vmem:[#allocation3 + $0x360] sm:$0xff]
    %v3732 = vld [vmem:[#allocation3 + $0x368] sm:$0xff]
    %v3733 = vld [vmem:[#allocation3 + $0x370] sm:$0xff]
    %v3734 = vld [vmem:[#allocation3 + $0x378] sm:$0xff]
    %v3735 = vld [vmem:[#allocation3 + $0x380] sm:$0xff]
    %v3736 = vld [vmem:[#allocation3 + $0x388] sm:$0xff]
    %v3737 = vld [vmem:[#allocation3 + $0x390] sm:$0xff]
    %v3738 = vld [vmem:[#allocation3 + $0x398] sm:$0xff]
    %v3739 = vld [vmem:[#allocation3 + $0x3a0] sm:$0xff]
    %v3740 = vld [vmem:[#allocation3 + $0x3a8] sm:$0xff]
    %v3741 = vld [vmem:[#allocation3 + $0x3b0] sm:$0xff]
    %v3742 = vld [vmem:[#allocation3 + $0x3b8] sm:$0xff]
    %v3743 = vld [vmem:[#allocation3 + $0x3c0] sm:$0xff]
    %v3744 = vld [vmem:[#allocation3 + $0x3c8] sm:$0xff]
    %v3745 = vld [vmem:[#allocation3 + $0x3d0] sm:$0xff]
    %v3746 = vld [vmem:[#allocation3 + $0x3d8] sm:$0xff]
    %v3747 = vld [vmem:[#allocation3 + $0x3e0] sm:$0xff]
    %v3748 = vld [vmem:[#allocation3 + $0x3e8] sm:$0xff]
    %v3749 = vld [vmem:[#allocation3 + $0x3f0] sm:$0xff]
    %v3750 = vld [vmem:[#allocation3 + $0x3f8] sm:$0xff]
    %3751 = vmatprep.subr.bf16.mxu0 0
    %3752 = vmatpush1.bf16.msra.mxu0 %v3623
    %3753 = vmatprep.subr.bf16.mxu0 0
    %3754 = vmatpush1.bf16.msra.mxu0 %v3624
    %3755 = vmatprep.subr.bf16.mxu0 0
    %3756 = vmatpush1.bf16.msra.mxu0 %v3625
    %3757 = vmatprep.subr.bf16.mxu0 0
    %3758 = vmatpush1.bf16.msra.mxu0 %v3626
    %3759 = vmatprep.subr.bf16.mxu0 0
    %3760 = vmatpush1.bf16.msra.mxu0 %v3627
    %3761 = vmatprep.subr.bf16.mxu0 0
    %3762 = vmatpush1.bf16.msra.mxu0 %v3628
    %3763 = vmatprep.subr.bf16.mxu0 0
    %3764 = vmatpush1.bf16.msra.mxu0 %v3629
    %3765 = vmatprep.subr.bf16.mxu0 0
    %3766 = vmatpush1.bf16.msra.mxu0 %v3630
    %3767 = vmatprep.subr.bf16.mxu0 0
    %3768 = vmatpush1.bf16.msra.mxu0 %v3631
    %3769 = vmatprep.subr.bf16.mxu0 0
    %3770 = vmatpush1.bf16.msra.mxu0 %v3632
    %3771 = vmatprep.subr.bf16.mxu0 0
    %3772 = vmatpush1.bf16.msra.mxu0 %v3633
    %3773 = vmatprep.subr.bf16.mxu0 0
    %3774 = vmatpush1.bf16.msra.mxu0 %v3634
    %3775 = vmatprep.subr.bf16.mxu0 0
    %3776 = vmatpush1.bf16.msra.mxu0 %v3635
    %3777 = vmatprep.subr.bf16.mxu0 0
    %3778 = vmatpush1.bf16.msra.mxu0 %v3636
    %3779 = vmatprep.subr.bf16.mxu0 0
    %3780 = vmatpush1.bf16.msra.mxu0 %v3637
    %3781 = vmatprep.subr.bf16.mxu0 0
    %3782 = vmatpush1.bf16.msra.mxu0 %v3638
    %3783 = vmatprep.mubr.bf16.mxu0 %v3608
    %3784 = vmatmul.mubr.bf16.gmra.mrb[0].mxu0 %v3607
    %v3785 = vpop.f32.mrb[0].mxu0
    %v3786 = vadd.f32 0.0, %v3785
    %v3787 = vpop.f32.mrb[0].mxu0
    %v3788 = vpop.f32.mrb[0].mxu0
    %v3789 = vpop.f32.mrb[0].mxu0
    %3790 = vdwg.mxu0
    %3791 = vmatprep.subr.bf16.mxu0 0
    %3792 = vmatpush1.bf16.msra.mxu0 %v3639
    %3793 = vmatprep.subr.bf16.mxu0 0
    %3794 = vmatpush1.bf16.msra.mxu0 %v3640
    %3795 = vmatprep.subr.bf16.mxu0 0
    %3796 = vmatpush1.bf16.msra.mxu0 %v3641
    %3797 = vmatprep.subr.bf16.mxu0 0
    %3798 = vmatpush1.bf16.msra.mxu0 %v3642
    %3799 = vmatprep.subr.bf16.mxu0 0
    %3800 = vmatpush1.bf16.msra.mxu0 %v3643
    %3801 = vmatprep.subr.bf16.mxu0 0
    %3802 = vmatpush1.bf16.msra.mxu0 %v3644
    %3803 = vmatprep.subr.bf16.mxu0 0
    %3804 = vmatpush1.bf16.msra.mxu0 %v3645
    %3805 = vmatprep.subr.bf16.mxu0 0
    %3806 = vmatpush1.bf16.msra.mxu0 %v3646
    %3807 = vmatprep.subr.bf16.mxu0 0
    %3808 = vmatpush1.bf16.msra.mxu0 %v3647
    %3809 = vmatprep.subr.bf16.mxu0 0
    %3810 = vmatpush1.bf16.msra.mxu0 %v3648
    %3811 = vmatprep.subr.bf16.mxu0 0
    %3812 = vmatpush1.bf16.msra.mxu0 %v3649
    %3813 = vmatprep.subr.bf16.mxu0 0
    %3814 = vmatpush1.bf16.msra.mxu0 %v3650
    %3815 = vmatprep.subr.bf16.mxu0 0
    %3816 = vmatpush1.bf16.msra.mxu0 %v3651
    %3817 = vmatprep.subr.bf16.mxu0 0
    %3818 = vmatpush1.bf16.msra.mxu0 %v3652
    %3819 = vmatprep.subr.bf16.mxu0 0
    %3820 = vmatpush1.bf16.msra.mxu0 %v3653
    %3821 = vmatprep.subr.bf16.mxu0 0
    %3822 = vmatpush1.bf16.msra.mxu0 %v3654
    %3823 = vmatprep.mubr.bf16.mxu0 %v3610
    %3824 = vmatmul.mubr.bf16.gmra.mrb[0].mxu0 %v3609
    %v3825 = vpop.f32.mrb[0].mxu0
    %v3826 = vadd.f32 %v3786, %v3825
    %v3827 = vpop.f32.mrb[0].mxu0
    %v3828 = vpop.f32.mrb[0].mxu0
    %v3829 = vpop.f32.mrb[0].mxu0
    %3830 = vdwg.mxu0
    %3831 = vmatprep.subr.bf16.mxu0 0
    %3832 = vmatpush1.bf16.msra.mxu0 %v3655
    %3833 = vmatprep.subr.bf16.mxu0 0
    %3834 = vmatpush1.bf16.msra.mxu0 %v3656
    %3835 = vmatprep.subr.bf16.mxu0 0
    %3836 = vmatpush1.bf16.msra.mxu0 %v3657
    %3837 = vmatprep.subr.bf16.mxu0 0
    %3838 = vmatpush1.bf16.msra.mxu0 %v3658
    %3839 = vmatprep.subr.bf16.mxu0 0
    %3840 = vmatpush1.bf16.msra.mxu0 %v3659
    %3841 = vmatprep.subr.bf16.mxu0 0
    %3842 = vmatpush1.bf16.msra.mxu0 %v3660
    %3843 = vmatprep.subr.bf16.mxu0 0
    %3844 = vmatpush1.bf16.msra.mxu0 %v3661
    %3845 = vmatprep.subr.bf16.mxu0 0
    %3846 = vmatpush1.bf16.msra.mxu0 %v3662
    %3847 = vmatprep.subr.bf16.mxu0 0
    %3848 = vmatpush1.bf16.msra.mxu0 %v3663
    %3849 = vmatprep.subr.bf16.mxu0 0
    %3850 = vmatpush1.bf16.msra.mxu0 %v3664
    %3851 = vmatprep.subr.bf16.mxu0 0
    %3852 = vmatpush1.bf16.msra.mxu0 %v3665
    %3853 = vmatprep.subr.bf16.mxu0 0
    %3854 = vmatpush1.bf16.msra.mxu0 %v3666
    %3855 = vmatprep.subr.bf16.mxu0 0
    %3856 = vmatpush1.bf16.msra.mxu0 %v3667
    %3857 = vmatprep.subr.bf16.mxu0 0
    %3858 = vmatpush1.bf16.msra.mxu0 %v3668
    %3859 = vmatprep.subr.bf16.mxu0 0
    %3860 = vmatpush1.bf16.msra.mxu0 %v3669
    %3861 = vmatprep.subr.bf16.mxu0 0
    %3862 = vmatpush1.bf16.msra.mxu0 %v3670
    %3863 = vmatprep.mubr.bf16.mxu0 %v3612
    %3864 = vmatmul.mubr.bf16.gmra.mrb[0].mxu0 %v3611
    %v3865 = vpop.f32.mrb[0].mxu0
    %v3866 = vadd.f32 %v3826, %v3865
    %v3867 = vpop.f32.mrb[0].mxu0
    %v3868 = vpop.f32.mrb[0].mxu0
    %v3869 = vpop.f32.mrb[0].mxu0
    %3870 = vdwg.mxu0
    %3871 = vmatprep.subr.bf16.mxu0 0
    %3872 = vmatpush1.bf16.msra.mxu0 %v3671
    %3873 = vmatprep.subr.bf16.mxu0 0
    %3874 = vmatpush1.bf16.msra.mxu0 %v3672
    %3875 = vmatprep.subr.bf16.mxu0 0
    %3876 = vmatpush1.bf16.msra.mxu0 %v3673
    %3877 = vmatprep.subr.bf16.mxu0 0
    %3878 = vmatpush1.bf16.msra.mxu0 %v3674
    %3879 = vmatprep.subr.bf16.mxu0 0
    %3880 = vmatpush1.bf16.msra.mxu0 %v3675
    %3881 = vmatprep.subr.bf16.mxu0 0
    %3882 = vmatpush1.bf16.msra.mxu0 %v3676
    %3883 = vmatprep.subr.bf16.mxu0 0
    %3884 = vmatpush1.bf16.msra.mxu0 %v3677
    %3885 = vmatprep.subr.bf16.mxu0 0
    %3886 = vmatpush1.bf16.msra.mxu0 %v3678
    %3887 = vmatprep.subr.bf16.mxu0 0
    %3888 = vmatpush1.bf16.msra.mxu0 %v3679
    %3889 = vmatprep.subr.bf16.mxu0 0
    %3890 = vmatpush1.bf16.msra.mxu0 %v3680
    %3891 = vmatprep.subr.bf16.mxu0 0
    %3892 = vmatpush1.bf16.msra.mxu0 %v3681
    %3893 = vmatprep.subr.bf16.mxu0 0
    %3894 = vmatpush1.bf16.msra.mxu0 %v3682
    %3895 = vmatprep.subr.bf16.mxu0 0
    %3896 = vmatpush1.bf16.msra.mxu0 %v3683
    %3897 = vmatprep.subr.bf16.mxu0 0
    %3898 = vmatpush1.bf16.msra.mxu0 %v3684
    %3899 = vmatprep.subr.bf16.mxu0 0
    %3900 = vmatpush1.bf16.msra.mxu0 %v3685
    %3901 = vmatprep.subr.bf16.mxu0 0
    %3902 = vmatpush1.bf16.msra.mxu0 %v3686
    %3903 = vmatprep.mubr.bf16.mxu0 %v3614
    %3904 = vmatmul.mubr.bf16.gmra.mrb[0].mxu0 %v3613
    %v3905 = vpop.f32.mrb[0].mxu0
    %v3906 = vadd.f32 %v3866, %v3905
    %v3907 = vpop.f32.mrb[0].mxu0
    %v3908 = vpop.f32.mrb[0].mxu0
    %v3909 = vpop.f32.mrb[0].mxu0
    %3910 = vdwg.mxu0
    %3911 = vmatprep.subr.bf16.mxu0 0
    %3912 = vmatpush1.bf16.msra.mxu0 %v3687
    %3913 = vmatprep.subr.bf16.mxu0 0
    %3914 = vmatpush1.bf16.msra.mxu0 %v3688
    %3915 = vmatprep.subr.bf16.mxu0 0
    %3916 = vmatpush1.bf16.msra.mxu0 %v3689
    %3917 = vmatprep.subr.bf16.mxu0 0
    %3918 = vmatpush1.bf16.msra.mxu0 %v3690
    %3919 = vmatprep.subr.bf16.mxu0 0
    %3920 = vmatpush1.bf16.msra.mxu0 %v3691
    %3921 = vmatprep.subr.bf16.mxu0 0
    %3922 = vmatpush1.bf16.msra.mxu0 %v3692
    %3923 = vmatprep.subr.bf16.mxu0 0
    %3924 = vmatpush1.bf16.msra.mxu0 %v3693
    %3925 = vmatprep.subr.bf16.mxu0 0
    %3926 = vmatpush1.bf16.msra.mxu0 %v3694
    %3927 = vmatprep.subr.bf16.mxu0 0
    %3928 = vmatpush1.bf16.msra.mxu0 %v3695
    %3929 = vmatprep.subr.bf16.mxu0 0
    %3930 = vmatpush1.bf16.msra.mxu0 %v3696
    %3931 = vmatprep.subr.bf16.mxu0 0
    %3932 = vmatpush1.bf16.msra.mxu0 %v3697
    %3933 = vmatprep.subr.bf16.mxu0 0
    %3934 = vmatpush1.bf16.msra.mxu0 %v3698
    %3935 = vmatprep.subr.bf16.mxu0 0
    %3936 = vmatpush1.bf16.msra.mxu0 %v3699
    %3937 = vmatprep.subr.bf16.mxu0 0
    %3938 = vmatpush1.bf16.msra.mxu0 %v3700
    %3939 = vmatprep.subr.bf16.mxu0 0
    %3940 = vmatpush1.bf16.msra.mxu0 %v3701
    %3941 = vmatprep.subr.bf16.mxu0 0
    %3942 = vmatpush1.bf16.msra.mxu0 %v3702
    %3943 = vmatprep.mubr.bf16.mxu0 %v3616
    %3944 = vmatmul.mubr.bf16.gmra.mrb[0].mxu0 %v3615
    %v3945 = vpop.f32.mrb[0].mxu0
    %v3946 = vadd.f32 %v3906, %v3945
    %v3947 = vpop.f32.mrb[0].mxu0
    %v3948 = vpop.f32.mrb[0].mxu0
    %v3949 = vpop.f32.mrb[0].mxu0
    %3950 = vdwg.mxu0
    %3951 = vmatprep.subr.bf16.mxu0 0
    %3952 = vmatpush1.bf16.msra.mxu0 %v3703
    %3953 = vmatprep.subr.bf16.mxu0 0
    %3954 = vmatpush1.bf16.msra.mxu0 %v3704
    %3955 = vmatprep.subr.bf16.mxu0 0
    %3956 = vmatpush1.bf16.msra.mxu0 %v3705
    %3957 = vmatprep.subr.bf16.mxu0 0
    %3958 = vmatpush1.bf16.msra.mxu0 %v3706
    %3959 = vmatprep.subr.bf16.mxu0 0
    %3960 = vmatpush1.bf16.msra.mxu0 %v3707
    %3961 = vmatprep.subr.bf16.mxu0 0
    %3962 = vmatpush1.bf16.msra.mxu0 %v3708
    %3963 = vmatprep.subr.bf16.mxu0 0
    %3964 = vmatpush1.bf16.msra.mxu0 %v3709
    %3965 = vmatprep.subr.bf16.mxu0 0
    %3966 = vmatpush1.bf16.msra.mxu0 %v3710
    %3967 = vmatprep.subr.bf16.mxu0 0
    %3968 = vmatpush1.bf16.msra.mxu0 %v3711
    %3969 = vmatprep.subr.bf16.mxu0 0
    %3970 = vmatpush1.bf16.msra.mxu0 %v3712
    %3971 = vmatprep.subr.bf16.mxu0 0
    %3972 = vmatpush1.bf16.msra.mxu0 %v3713
    %3973 = vmatprep.subr.bf16.mxu0 0
    %3974 = vmatpush1.bf16.msra.mxu0 %v3714
    %3975 = vmatprep.subr.bf16.mxu0 0
    %3976 = vmatpush1.bf16.msra.mxu0 %v3715
    %3977 = vmatprep.subr.bf16.mxu0 0
    %3978 = vmatpush1.bf16.msra.mxu0 %v3716
    %3979 = vmatprep.subr.bf16.mxu0 0
    %3980 = vmatpush1.bf16.msra.mxu0 %v3717
    %3981 = vmatprep.subr.bf16.mxu0 0
    %3982 = vmatpush1.bf16.msra.mxu0 %v3718
    %3983 = vmatprep.mubr.bf16.mxu0 %v3618
    %3984 = vmatmul.mubr.bf16.gmra.mrb[0].mxu0 %v3617
    %v3985 = vpop.f32.mrb[0].mxu0
    %v3986 = vadd.f32 %v3946, %v3985
    %v3987 = vpop.f32.mrb[0].mxu0
    %v3988 = vpop.f32.mrb[0].mxu0
    %v3989 = vpop.f32.mrb[0].mxu0
    %3990 = vdwg.mxu0
    %3991 = vmatprep.subr.bf16.mxu0 0
    %3992 = vmatpush1.bf16.msra.mxu0 %v3719
    %3993 = vmatprep.subr.bf16.mxu0 0
    %3994 = vmatpush1.bf16.msra.mxu0 %v3720
    %3995 = vmatprep.subr.bf16.mxu0 0
    %3996 = vmatpush1.bf16.msra.mxu0 %v3721
    %3997 = vmatprep.subr.bf16.mxu0 0
    %3998 = vmatpush1.bf16.msra.mxu0 %v3722
    %3999 = vmatprep.subr.bf16.mxu0 0
    %4000 = vmatpush1.bf16.msra.mxu0 %v3723
    %4001 = vmatprep.subr.bf16.mxu0 0
    %4002 = vmatpush1.bf16.msra.mxu0 %v3724
    %4003 = vmatprep.subr.bf16.mxu0 0
    %4004 = vmatpush1.bf16.msra.mxu0 %v3725
    %4005 = vmatprep.subr.bf16.mxu0 0
    %4006 = vmatpush1.bf16.msra.mxu0 %v3726
    %4007 = vmatprep.subr.bf16.mxu0 0
    %4008 = vmatpush1.bf16.msra.mxu0 %v3727
    %4009 = vmatprep.subr.bf16.mxu0 0
    %4010 = vmatpush1.bf16.msra.mxu0 %v3728
    %4011 = vmatprep.subr.bf16.mxu0 0
    %4012 = vmatpush1.bf16.msra.mxu0 %v3729
    %4013 = vmatprep.subr.bf16.mxu0 0
    %4014 = vmatpush1.bf16.msra.mxu0 %v3730
    %4015 = vmatprep.subr.bf16.mxu0 0
    %4016 = vmatpush1.bf16.msra.mxu0 %v3731
    %4017 = vmatprep.subr.bf16.mxu0 0
    %4018 = vmatpush1.bf16.msra.mxu0 %v3732
    %4019 = vmatprep.subr.bf16.mxu0 0
    %4020 = vmatpush1.bf16.msra.mxu0 %v3733
    %4021 = vmatprep.subr.bf16.mxu0 0
    %4022 = vmatpush1.bf16.msra.mxu0 %v3734
    %4023 = vmatprep.mubr.bf16.mxu0 %v3620
    %4024 = vmatmul.mubr.bf16.gmra.mrb[0].mxu0 %v3619
    %v4025 = vpop.f32.mrb[0].mxu0
    %v4026 = vadd.f32 %v3986, %v4025
    %v4027 = vpop.f32.mrb[0].mxu0
    %v4028 = vpop.f32.mrb[0].mxu0
    %v4029 = vpop.f32.mrb[0].mxu0
    %4030 = vdwg.mxu0
    %4031 = vmatprep.subr.bf16.mxu0 0
    %4032 = vmatpush1.bf16.msra.mxu0 %v3735
    %4033 = vmatprep.subr.bf16.mxu0 0
    %4034 = vmatpush1.bf16.msra.mxu0 %v3736
    %4035 = vmatprep.subr.bf16.mxu0 0
    %4036 = vmatpush1.bf16.msra.mxu0 %v3737
    %4037 = vmatprep.subr.bf16.mxu0 0
    %4038 = vmatpush1.bf16.msra.mxu0 %v3738
    %4039 = vmatprep.subr.bf16.mxu0 0
    %4040 = vmatpush1.bf16.msra.mxu0 %v3739
    %4041 = vmatprep.subr.bf16.mxu0 0
    %4042 = vmatpush1.bf16.msra.mxu0 %v3740
    %4043 = vmatprep.subr.bf16.mxu0 0
    %4044 = vmatpush1.bf16.msra.mxu0 %v3741
    %4045 = vmatprep.subr.bf16.mxu0 0
    %4046 = vmatpush1.bf16.msra.mxu0 %v3742
    %4047 = vmatprep.subr.bf16.mxu0 0
    %4048 = vmatpush1.bf16.msra.mxu0 %v3743
    %4049 = vmatprep.subr.bf16.mxu0 0
    %4050 = vmatpush1.bf16.msra.mxu0 %v3744
    %4051 = vmatprep.subr.bf16.mxu0 0
    %4052 = vmatpush1.bf16.msra.mxu0 %v3745
    %4053 = vmatprep.subr.bf16.mxu0 0
    %4054 = vmatpush1.bf16.msra.mxu0 %v3746
    %4055 = vmatprep.subr.bf16.mxu0 0
    %4056 = vmatpush1.bf16.msra.mxu0 %v3747
    %4057 = vmatprep.subr.bf16.mxu0 0
    %4058 = vmatpush1.bf16.msra.mxu0 %v3748
    %4059 = vmatprep.subr.bf16.mxu0 0
    %4060 = vmatpush1.bf16.msra.mxu0 %v3749
    %4061 = vmatprep.subr.bf16.mxu0 0
    %4062 = vmatpush1.bf16.msra.mxu0 %v3750
    %4063 = vmatprep.mubr.bf16.mxu0 %v3622
    %4064 = vmatmul.mubr.bf16.gmra.mrb[0].mxu0 %v3621
    %v4065 = vpop.f32.mrb[0].mxu0
    %v4066 = vadd.f32 %v4026, %v4065
    %v4067 = vpop.f32.mrb[0].mxu0
    %v4068 = vpop.f32.mrb[0].mxu0
    %v4069 = vpop.f32.mrb[0].mxu0
    %4070 = vdwg.mxu0
    %v4071 = vld [vmem:[%s8] sm:$0xff]
    %v4072 = vld [vmem:[%s8 + $0x8] sm:$0xff]
    %v4073 = vld [vmem:[%s8 + $0x10] sm:$0xff]
    %v4074 = vld [vmem:[%s8 + $0x18] sm:$0xff]
    %v4077 = vunpack.c.l.s4 1983009808
    %v4078 = vunpack.c.0.s8 %v4077
    %v4079 = vlaneseq
    %v4080 = vshrl.u32 %v4079, 7
    %v4081 = vsub.s32 %v4078, %v4080
    %v4082 = vrot.slane %v2916, %v4081
    %4083 = vrot.lane.b32.xlu0 %v4082, 32
    %v4084 = vpop.permute.xlu0 %4083
    %v4085 = vsel %vm2257, %v4084, 0
    %4087 = vmatprep.subr.mxu0 0.0
    %4088 = vmatpush1.msra.mxu0 %v4071
    %4089 = vmatprep.subr.mxu0 0.0
    %4090 = vmatpush1.msra.mxu0 %v4072
    %4091 = vmatprep.subr.mxu0 0.0
    %4092 = vmatpush1.msra.mxu0 %v4073
    %4093 = vmatprep.subr.mxu0 0.0
    %4094 = vmatpush1.msra.mxu0 %v4074
    %4095 = vmatprep.subr.mxu0 0.0
    %4096 = vmatpush1.msra.mxu0 0.0
    %4097 = vmatprep.subr.mxu0 0.0
    %4098 = vmatpush1.msra.mxu0 0.0
    %4099 = vmatprep.subr.mxu0 0.0
    %4100 = vmatpush1.msra.mxu0 0.0
    %4101 = vmatprep.subr.mxu0 0.0
    %4102 = vmatpush1.msra.mxu0 0.0
    %4103 = vmatprep.subr.mxu0 0.0
    %4104 = vmatpush1.msra.mxu0 0.0
    %4105 = vmatprep.subr.mxu0 0.0
    %4106 = vmatpush1.msra.mxu0 0.0
    %4107 = vmatprep.subr.mxu0 0.0
    %4108 = vmatpush1.msra.mxu0 0.0
    %4109 = vmatprep.subr.mxu0 0.0
    %4110 = vmatpush1.msra.mxu0 0.0
    %4111 = vmatprep.subr.mxu0 0.0
    %4112 = vmatpush1.msra.mxu0 0.0
    %4113 = vmatprep.subr.mxu0 0.0
    %4114 = vmatpush1.msra.mxu0 0.0
    %4115 = vmatprep.subr.mxu0 0.0
    %4116 = vmatpush1.msra.mxu0 0.0
    %4117 = vmatprep.subr.mxu0 0.0
    %4118 = vmatpush1.msra.mxu0 0.0
    %4119 = vmatprep.subr.mxu0 0.0
    %4120 = vmatpush1.msra.mxu0 0.0
    %4121 = vmatprep.subr.mxu0 0.0
    %4122 = vmatpush1.msra.mxu0 0.0
    %4123 = vmatprep.subr.mxu0 0.0
    %4124 = vmatpush1.msra.mxu0 0.0
    %4125 = vmatprep.subr.mxu0 0.0
    %4126 = vmatpush1.msra.mxu0 0.0
    %4127 = vmatprep.subr.mxu0 0.0
    %4128 = vmatpush1.msra.mxu0 0.0
    %4129 = vmatprep.subr.mxu0 0.0
    %4130 = vmatpush1.msra.mxu0 0.0
    %4131 = vmatprep.subr.mxu0 0.0
    %4132 = vmatpush1.msra.mxu0 0.0
    %4133 = vmatprep.subr.mxu0 0.0
    %4134 = vmatpush1.msra.mxu0 0.0
    %4135 = vmatprep.subr.mxu0 0.0
    %4136 = vmatpush1.msra.mxu0 0.0
    %4137 = vmatprep.subr.mxu0 0.0
    %4138 = vmatpush1.msra.mxu0 0.0
    %4139 = vmatprep.subr.mxu0 0.0
    %4140 = vmatpush1.msra.mxu0 0.0
    %4141 = vmatprep.subr.mxu0 0.0
    %4142 = vmatpush1.msra.mxu0 0.0
    %4143 = vmatprep.subr.mxu0 0.0
    %4144 = vmatpush1.msra.mxu0 0.0
    %4145 = vmatprep.subr.mxu0 0.0
    %4146 = vmatpush1.msra.mxu0 0.0
    %4147 = vmatprep.subr.mxu0 0.0
    %4148 = vmatpush1.msra.mxu0 0.0
    %4149 = vmatprep.subr.mxu0 0.0
    %4150 = vmatpush1.msra.mxu0 0.0
    %4151 = vmatprep.mubr.f32.mxu0 0.0
    %4152 = vmatmul.mubr.f32.gmra.mrb[0].mxu0 %v4085
    %v4153 = vpop.f32.mrb[0].mxu0
    %v4154 = vadd.f32 0.0, %v4153
    %v4155 = vpop.f32.mrb[0].mxu0
    %4156 = vdwg.mxu0
    %v4158 = vcombine.high %v4066, %v4066
    %v4162 = vunpack.c.l.s4 1966171168
    %v4163 = vunpack.c.0.s8 %v4162
    %v4164 = vlaneseq
    %v4165 = vshrl.u32 %v4164, 7
    %v4166 = vsub.s32 %v4163, %v4165
    %v4167 = vrot.slane %v4154, %v4166
    %v4168 = vcombine.high %v4167, %v4167
    %v4170 = vunpack.c.l.s4 1966171168
    %v4171 = vunpack.c.0.s8 %v4170
    %v4172 = vlaneseq
    %v4173 = vshrl.u32 %v4172, 7
    %v4174 = vsub.s32 %v4171, %v4173
    %v4175 = vrot.slane %v4167, %v4174
    %v4177 = vunpack.c.l.s4 1966171168
    %v4178 = vunpack.c.0.s8 %v4177
    %v4179 = vlaneseq
    %v4180 = vshrl.u32 %v4179, 7
    %v4181 = vsub.s32 %v4178, %v4180
    %v4182 = vrot.slane %v4168, %v4181
    %v4183 = vlaneseq
    %v4184 = vshrl.u32 %v4183, 7
    %v4185 = vsub.s32 0, %v4184
    %v4186 = vrot.slane %v4175, %v4185
    %v4187 = vlaneseq
    %v4188 = vshrl.u32 %v4187, 7
    %v4189 = vsub.s32 0, %v4188
    %v4190 = vrot.slane %v4182, %v4189
    %v4193 = vadd.f32 %v4066, %v4186
    %v4194 = vadd.f32 %v4158, %v4190
    %v4195 = vtanh.pop %v4193
    %v4196 = vtanh.pop %v4194
    %v4197 = vld [vmem:[%s9] sm:$0x1]
    %v4199 = vlaneseq
    %v4200 = vshrl.u32 %v4199, 7
    %v4201 = vsub.s32 0, %v4200
    %v4202 = vrot.slane %v4197, %v4201
    %v4204 = vmul.f32 %v4195, %v4202
    %v4205 = vmul.f32 %v4196, %v4202
    %vm4206 = vcmask 257024
    %v4207 = vsel %vm4206, %v4204, 0.0
    %4208 = vadd.xlane.f32.xlu0 %v4207
    %v4209 = vpop.xlane.xlu0 %4208
    %v4210 = vsel %vm4206, %v4205, 0.0
    %4211 = vadd.xlane.f32.xlu0 %v4210
    %v4212 = vpop.xlane.xlu0 %4211
    %vm4213 = vcmask 1043456
    %v4214 = vsel %vm4213, %v4209, -inf
    %v4215 = vrot.slane %v4214, 4
    %v4216 = vmax.f32 %v4214, %v4215
    %v4217 = vrot.slane %v4216, 2
    %v4218 = vmax.f32 %v4216, %v4217
    %v4219 = vrot.slane %v4218, 1
    %v4220 = vmax.f32 %v4218, %v4219
    %v4221 = vsel %vm4213, %v4212, -inf
    %v4222 = vrot.slane %v4221, 4
    %v4223 = vmax.f32 %v4221, %v4222
    %v4224 = vrot.slane %v4223, 2
    %v4225 = vmax.f32 %v4223, %v4224
    %v4226 = vrot.slane %v4225, 1
    %v4227 = vmax.f32 %v4225, %v4226
    %v4228 = vsub.f32 %v4209, %v4220
    %v4229 = vsub.f32 %v4212, %v4227
    %v4230 = vmul.f32 %v4228, 1.442695
    %v4231 = vpow.pop %v4230
    %v4232 = vmul.f32 %v4229, 1.442695
    %v4233 = vpow.pop %v4232
    %v4234 = vsel %vm4213, %v4231, 0.0
    %v4235 = vrot.slane %v4234, 4
    %v4236 = vadd.f32 %v4234, %v4235
    %v4237 = vrot.slane %v4236, 2
    %v4238 = vadd.f32 %v4236, %v4237
    %v4239 = vrot.slane %v4238, 1
    %v4240 = vadd.f32 %v4238, %v4239
    %v4241 = vsel %vm4213, %v4233, 0.0
    %v4242 = vrot.slane %v4241, 4
    %v4243 = vadd.f32 %v4241, %v4242
    %v4244 = vrot.slane %v4243, 2
    %v4245 = vadd.f32 %v4243, %v4244
    %v4246 = vrot.slane %v4245, 1
    %v4247 = vadd.f32 %v4245, %v4246
    %v4248 = vrcp.pop %v4240
    %v4249 = vrcp.pop %v4247
    %v4250 = vmul.f32 %v4231, %v4248
    %v4251 = vmul.f32 %v4233, %v4249
    %v4268 = vcombine.low %v3587, %v3588
    %v4269 = vcombine.high %v3587, %v3588
    %v4270 = vcombine.low %v3589, %v3590
    %v4271 = vcombine.high %v3589, %v3590
    %v4272 = vcombine.low %v3591, %v3592
    %v4273 = vcombine.high %v3591, %v3592
    %v4274 = vcombine.low %v3593, %v3594
    %v4275 = vcombine.high %v3593, %v3594
    %v4276 = vcombine.low %v3595, %v3596
    %v4277 = vcombine.high %v3595, %v3596
    %v4278 = vcombine.low %v3597, %v3598
    %v4279 = vcombine.high %v3597, %v3598
    %v4280 = vcombine.low %v3599, %v3600
    %v4281 = vcombine.high %v3599, %v3600
    %v4282 = vcombine.low %v3601, %v3602
    %v4283 = vcombine.high %v3601, %v3602
    %v4300 = vcombine.high %v4268, %v4268
    %v4301 = vcombine.high %v4270, %v4270
    %v4302 = vcombine.high %v4272, %v4272
    %v4303 = vcombine.high %v4274, %v4274
    %v4304 = vcombine.high %v4276, %v4276
    %v4305 = vcombine.high %v4278, %v4278
    %v4306 = vcombine.high %v4280, %v4280
    %v4307 = vcombine.high %v4282, %v4282
    %v4308 = vcombine.high %v4269, %v4269
    %v4309 = vcombine.high %v4271, %v4271
    %v4310 = vcombine.high %v4273, %v4273
    %v4311 = vcombine.high %v4275, %v4275
    %v4312 = vcombine.high %v4277, %v4277
    %v4313 = vcombine.high %v4279, %v4279
    %v4314 = vcombine.high %v4281, %v4281
    %v4315 = vcombine.high %v4283, %v4283
    %v4332 = vmul.f32 %v4250, %v4268
    %v4333 = vmul.f32 %v4250, %v4300
    %v4334 = vmul.f32 %v4250, %v4270
    %v4335 = vmul.f32 %v4250, %v4301
    %v4336 = vmul.f32 %v4250, %v4272
    %v4337 = vmul.f32 %v4250, %v4302
    %v4338 = vmul.f32 %v4250, %v4274
    %v4339 = vmul.f32 %v4250, %v4303
    %v4340 = vmul.f32 %v4250, %v4276
    %v4341 = vmul.f32 %v4250, %v4304
    %v4342 = vmul.f32 %v4250, %v4278
    %v4343 = vmul.f32 %v4250, %v4305
    %v4344 = vmul.f32 %v4250, %v4280
    %v4345 = vmul.f32 %v4250, %v4306
    %v4346 = vmul.f32 %v4250, %v4282
    %v4347 = vmul.f32 %v4250, %v4307
    %v4348 = vmul.f32 %v4251, %v4269
    %v4349 = vmul.f32 %v4251, %v4308
    %v4350 = vmul.f32 %v4251, %v4271
    %v4351 = vmul.f32 %v4251, %v4309
    %v4352 = vmul.f32 %v4251, %v4273
    %v4353 = vmul.f32 %v4251, %v4310
    %v4354 = vmul.f32 %v4251, %v4275
    %v4355 = vmul.f32 %v4251, %v4311
    %v4356 = vmul.f32 %v4251, %v4277
    %v4357 = vmul.f32 %v4251, %v4312
    %v4358 = vmul.f32 %v4251, %v4279
    %v4359 = vmul.f32 %v4251, %v4313
    %v4360 = vmul.f32 %v4251, %v4281
    %v4361 = vmul.f32 %v4251, %v4314
    %v4362 = vmul.f32 %v4251, %v4283
    %v4363 = vmul.f32 %v4251, %v4315
    %v4364 = vsel %vm4213, %v4332, 0.0
    %v4365 = vrot.slane %v4364, 4
    %v4366 = vadd.f32 %v4364, %v4365
    %v4367 = vrot.slane %v4366, 2
    %v4368 = vadd.f32 %v4366, %v4367
    %v4369 = vrot.slane %v4368, 1
    %v4370 = vadd.f32 %v4368, %v4369
    %v4371 = vsel %vm4213, %v4333, 0.0
    %v4372 = vrot.slane %v4371, 4
    %v4373 = vadd.f32 %v4371, %v4372
    %v4374 = vrot.slane %v4373, 2
    %v4375 = vadd.f32 %v4373, %v4374
    %v4376 = vrot.slane %v4375, 1
    %v4377 = vadd.f32 %v4375, %v4376
    %v4378 = vsel %vm4213, %v4334, 0.0
    %v4379 = vrot.slane %v4378, 4
    %v4380 = vadd.f32 %v4378, %v4379
    %v4381 = vrot.slane %v4380, 2
    %v4382 = vadd.f32 %v4380, %v4381
    %v4383 = vrot.slane %v4382, 1
    %v4384 = vadd.f32 %v4382, %v4383
    %v4385 = vsel %vm4213, %v4335, 0.0
    %v4386 = vrot.slane %v4385, 4
    %v4387 = vadd.f32 %v4385, %v4386
    %v4388 = vrot.slane %v4387, 2
    %v4389 = vadd.f32 %v4387, %v4388
    %v4390 = vrot.slane %v4389, 1
    %v4391 = vadd.f32 %v4389, %v4390
    %v4392 = vsel %vm4213, %v4336, 0.0
    %v4393 = vrot.slane %v4392, 4
    %v4394 = vadd.f32 %v4392, %v4393
    %v4395 = vrot.slane %v4394, 2
    %v4396 = vadd.f32 %v4394, %v4395
    %v4397 = vrot.slane %v4396, 1
    %v4398 = vadd.f32 %v4396, %v4397
    %v4399 = vsel %vm4213, %v4337, 0.0
    %v4400 = vrot.slane %v4399, 4
    %v4401 = vadd.f32 %v4399, %v4400
    %v4402 = vrot.slane %v4401, 2
    %v4403 = vadd.f32 %v4401, %v4402
    %v4404 = vrot.slane %v4403, 1
    %v4405 = vadd.f32 %v4403, %v4404
    %v4406 = vsel %vm4213, %v4338, 0.0
    %v4407 = vrot.slane %v4406, 4
    %v4408 = vadd.f32 %v4406, %v4407
    %v4409 = vrot.slane %v4408, 2
    %v4410 = vadd.f32 %v4408, %v4409
    %v4411 = vrot.slane %v4410, 1
    %v4412 = vadd.f32 %v4410, %v4411
    %v4413 = vsel %vm4213, %v4339, 0.0
    %v4414 = vrot.slane %v4413, 4
    %v4415 = vadd.f32 %v4413, %v4414
    %v4416 = vrot.slane %v4415, 2
    %v4417 = vadd.f32 %v4415, %v4416
    %v4418 = vrot.slane %v4417, 1
    %v4419 = vadd.f32 %v4417, %v4418
    %v4420 = vsel %vm4213, %v4340, 0.0
    %v4421 = vrot.slane %v4420, 4
    %v4422 = vadd.f32 %v4420, %v4421
    %v4423 = vrot.slane %v4422, 2
    %v4424 = vadd.f32 %v4422, %v4423
    %v4425 = vrot.slane %v4424, 1
    %v4426 = vadd.f32 %v4424, %v4425
    %v4427 = vsel %vm4213, %v4341, 0.0
    %v4428 = vrot.slane %v4427, 4
    %v4429 = vadd.f32 %v4427, %v4428
    %v4430 = vrot.slane %v4429, 2
    %v4431 = vadd.f32 %v4429, %v4430
    %v4432 = vrot.slane %v4431, 1
    %v4433 = vadd.f32 %v4431, %v4432
    %v4434 = vsel %vm4213, %v4342, 0.0
    %v4435 = vrot.slane %v4434, 4
    %v4436 = vadd.f32 %v4434, %v4435
    %v4437 = vrot.slane %v4436, 2
    %v4438 = vadd.f32 %v4436, %v4437
    %v4439 = vrot.slane %v4438, 1
    %v4440 = vadd.f32 %v4438, %v4439
    %v4441 = vsel %vm4213, %v4343, 0.0
    %v4442 = vrot.slane %v4441, 4
    %v4443 = vadd.f32 %v4441, %v4442
    %v4444 = vrot.slane %v4443, 2
    %v4445 = vadd.f32 %v4443, %v4444
    %v4446 = vrot.slane %v4445, 1
    %v4447 = vadd.f32 %v4445, %v4446
    %v4448 = vsel %vm4213, %v4344, 0.0
    %v4449 = vrot.slane %v4448, 4
    %v4450 = vadd.f32 %v4448, %v4449
    %v4451 = vrot.slane %v4450, 2
    %v4452 = vadd.f32 %v4450, %v4451
    %v4453 = vrot.slane %v4452, 1
    %v4454 = vadd.f32 %v4452, %v4453
    %v4455 = vsel %vm4213, %v4345, 0.0
    %v4456 = vrot.slane %v4455, 4
    %v4457 = vadd.f32 %v4455, %v4456
    %v4458 = vrot.slane %v4457, 2
    %v4459 = vadd.f32 %v4457, %v4458
    %v4460 = vrot.slane %v4459, 1
    %v4461 = vadd.f32 %v4459, %v4460
    %v4462 = vsel %vm4213, %v4346, 0.0
    %v4463 = vrot.slane %v4462, 4
    %v4464 = vadd.f32 %v4462, %v4463
    %v4465 = vrot.slane %v4464, 2
    %v4466 = vadd.f32 %v4464, %v4465
    %v4467 = vrot.slane %v4466, 1
    %v4468 = vadd.f32 %v4466, %v4467
    %v4469 = vsel %vm4213, %v4347, 0.0
    %v4470 = vrot.slane %v4469, 4
    %v4471 = vadd.f32 %v4469, %v4470
    %v4472 = vrot.slane %v4471, 2
    %v4473 = vadd.f32 %v4471, %v4472
    %v4474 = vrot.slane %v4473, 1
    %v4475 = vadd.f32 %v4473, %v4474
    %v4476 = vsel %vm4213, %v4348, 0.0
    %v4477 = vrot.slane %v4476, 4
    %v4478 = vadd.f32 %v4476, %v4477
    %v4479 = vrot.slane %v4478, 2
    %v4480 = vadd.f32 %v4478, %v4479
    %v4481 = vrot.slane %v4480, 1
    %v4482 = vadd.f32 %v4480, %v4481
    %v4483 = vsel %vm4213, %v4349, 0.0
    %v4484 = vrot.slane %v4483, 4
    %v4485 = vadd.f32 %v4483, %v4484
    %v4486 = vrot.slane %v4485, 2
    %v4487 = vadd.f32 %v4485, %v4486
    %v4488 = vrot.slane %v4487, 1
    %v4489 = vadd.f32 %v4487, %v4488
    %v4490 = vsel %vm4213, %v4350, 0.0
    %v4491 = vrot.slane %v4490, 4
    %v4492 = vadd.f32 %v4490, %v4491
    %v4493 = vrot.slane %v4492, 2
    %v4494 = vadd.f32 %v4492, %v4493
    %v4495 = vrot.slane %v4494, 1
    %v4496 = vadd.f32 %v4494, %v4495
    %v4497 = vsel %vm4213, %v4351, 0.0
    %v4498 = vrot.slane %v4497, 4
    %v4499 = vadd.f32 %v4497, %v4498
    %v4500 = vrot.slane %v4499, 2
    %v4501 = vadd.f32 %v4499, %v4500
    %v4502 = vrot.slane %v4501, 1
    %v4503 = vadd.f32 %v4501, %v4502
    %v4504 = vsel %vm4213, %v4352, 0.0
    %v4505 = vrot.slane %v4504, 4
    %v4506 = vadd.f32 %v4504, %v4505
    %v4507 = vrot.slane %v4506, 2
    %v4508 = vadd.f32 %v4506, %v4507
    %v4509 = vrot.slane %v4508, 1
    %v4510 = vadd.f32 %v4508, %v4509
    %v4511 = vsel %vm4213, %v4353, 0.0
    %v4512 = vrot.slane %v4511, 4
    %v4513 = vadd.f32 %v4511, %v4512
    %v4514 = vrot.slane %v4513, 2
    %v4515 = vadd.f32 %v4513, %v4514
    %v4516 = vrot.slane %v4515, 1
    %v4517 = vadd.f32 %v4515, %v4516
    %v4518 = vsel %vm4213, %v4354, 0.0
    %v4519 = vrot.slane %v4518, 4
    %v4520 = vadd.f32 %v4518, %v4519
    %v4521 = vrot.slane %v4520, 2
    %v4522 = vadd.f32 %v4520, %v4521
    %v4523 = vrot.slane %v4522, 1
    %v4524 = vadd.f32 %v4522, %v4523
    %v4525 = vsel %vm4213, %v4355, 0.0
    %v4526 = vrot.slane %v4525, 4
    %v4527 = vadd.f32 %v4525, %v4526
    %v4528 = vrot.slane %v4527, 2
    %v4529 = vadd.f32 %v4527, %v4528
    %v4530 = vrot.slane %v4529, 1
    %v4531 = vadd.f32 %v4529, %v4530
    %v4532 = vsel %vm4213, %v4356, 0.0
    %v4533 = vrot.slane %v4532, 4
    %v4534 = vadd.f32 %v4532, %v4533
    %v4535 = vrot.slane %v4534, 2
    %v4536 = vadd.f32 %v4534, %v4535
    %v4537 = vrot.slane %v4536, 1
    %v4538 = vadd.f32 %v4536, %v4537
    %v4539 = vsel %vm4213, %v4357, 0.0
    %v4540 = vrot.slane %v4539, 4
    %v4541 = vadd.f32 %v4539, %v4540
    %v4542 = vrot.slane %v4541, 2
    %v4543 = vadd.f32 %v4541, %v4542
    %v4544 = vrot.slane %v4543, 1
    %v4545 = vadd.f32 %v4543, %v4544
    %v4546 = vsel %vm4213, %v4358, 0.0
    %v4547 = vrot.slane %v4546, 4
    %v4548 = vadd.f32 %v4546, %v4547
    %v4549 = vrot.slane %v4548, 2
    %v4550 = vadd.f32 %v4548, %v4549
    %v4551 = vrot.slane %v4550, 1
    %v4552 = vadd.f32 %v4550, %v4551
    %v4553 = vsel %vm4213, %v4359, 0.0
    %v4554 = vrot.slane %v4553, 4
    %v4555 = vadd.f32 %v4553, %v4554
    %v4556 = vrot.slane %v4555, 2
    %v4557 = vadd.f32 %v4555, %v4556
    %v4558 = vrot.slane %v4557, 1
    %v4559 = vadd.f32 %v4557, %v4558
    %v4560 = vsel %vm4213, %v4360, 0.0
    %v4561 = vrot.slane %v4560, 4
    %v4562 = vadd.f32 %v4560, %v4561
    %v4563 = vrot.slane %v4562, 2
    %v4564 = vadd.f32 %v4562, %v4563
    %v4565 = vrot.slane %v4564, 1
    %v4566 = vadd.f32 %v4564, %v4565
    %v4567 = vsel %vm4213, %v4361, 0.0
    %v4568 = vrot.slane %v4567, 4
    %v4569 = vadd.f32 %v4567, %v4568
    %v4570 = vrot.slane %v4569, 2
    %v4571 = vadd.f32 %v4569, %v4570
    %v4572 = vrot.slane %v4571, 1
    %v4573 = vadd.f32 %v4571, %v4572
    %v4574 = vsel %vm4213, %v4362, 0.0
    %v4575 = vrot.slane %v4574, 4
    %v4576 = vadd.f32 %v4574, %v4575
    %v4577 = vrot.slane %v4576, 2
    %v4578 = vadd.f32 %v4576, %v4577
    %v4579 = vrot.slane %v4578, 1
    %v4580 = vadd.f32 %v4578, %v4579
    %v4581 = vsel %vm4213, %v4363, 0.0
    %v4582 = vrot.slane %v4581, 4
    %v4583 = vadd.f32 %v4581, %v4582
    %v4584 = vrot.slane %v4583, 2
    %v4585 = vadd.f32 %v4583, %v4584
    %v4586 = vrot.slane %v4585, 1
    %v4587 = vadd.f32 %v4585, %v4586
    %v4588 = vpack.c.bf16 %v4370, %v4370
    %v4589 = vpack.c.bf16 %v4377, %v4377
    %v4590 = vpack.c.bf16 %v4384, %v4384
    %v4591 = vpack.c.bf16 %v4391, %v4391
    %v4592 = vpack.c.bf16 %v4398, %v4398
    %v4593 = vpack.c.bf16 %v4405, %v4405
    %v4594 = vpack.c.bf16 %v4412, %v4412
    %v4595 = vpack.c.bf16 %v4419, %v4419
    %v4596 = vpack.c.bf16 %v4426, %v4426
    %v4597 = vpack.c.bf16 %v4433, %v4433
    %v4598 = vpack.c.bf16 %v4440, %v4440
    %v4599 = vpack.c.bf16 %v4447, %v4447
    %v4600 = vpack.c.bf16 %v4454, %v4454
    %v4601 = vpack.c.bf16 %v4461, %v4461
    %v4602 = vpack.c.bf16 %v4468, %v4468
    %v4603 = vpack.c.bf16 %v4475, %v4475
    %v4604 = vpack.c.bf16 %v4482, %v4482
    %v4605 = vpack.c.bf16 %v4489, %v4489
    %v4606 = vpack.c.bf16 %v4496, %v4496
    %v4607 = vpack.c.bf16 %v4503, %v4503
    %v4608 = vpack.c.bf16 %v4510, %v4510
    %v4609 = vpack.c.bf16 %v4517, %v4517
    %v4610 = vpack.c.bf16 %v4524, %v4524
    %v4611 = vpack.c.bf16 %v4531, %v4531
    %v4612 = vpack.c.bf16 %v4538, %v4538
    %v4613 = vpack.c.bf16 %v4545, %v4545
    %v4614 = vpack.c.bf16 %v4552, %v4552
    %v4615 = vpack.c.bf16 %v4559, %v4559
    %v4616 = vpack.c.bf16 %v4566, %v4566
    %v4617 = vpack.c.bf16 %v4573, %v4573
    %v4618 = vpack.c.bf16 %v4580, %v4580
    %v4619 = vpack.c.bf16 %v4587, %v4587
    %s4620 = sshll.u32 %s3604, 4
    %4621 = dma.done %s1930, %s4620
    %v4622 = vld [vmem:[#allocation4] sm:$0xff]
    %v4623 = vld [vmem:[#allocation4 + $0x8] sm:$0xff]
    %v4624 = vld [vmem:[#allocation4 + $0x10] sm:$0xff]
    %v4625 = vld [vmem:[#allocation4 + $0x18] sm:$0xff]
    %v4626 = vld [vmem:[#allocation4 + $0x20] sm:$0xff]
    %v4627 = vld [vmem:[#allocation4 + $0x28] sm:$0xff]
    %v4628 = vld [vmem:[#allocation4 + $0x30] sm:$0xff]
    %v4629 = vld [vmem:[#allocation4 + $0x38] sm:$0xff]
    %v4630 = vld [vmem:[#allocation4 + $0x40] sm:$0xff]
    %v4631 = vld [vmem:[#allocation4 + $0x48] sm:$0xff]
    %v4632 = vld [vmem:[#allocation4 + $0x50] sm:$0xff]
    %v4633 = vld [vmem:[#allocation4 + $0x58] sm:$0xff]
    %v4634 = vld [vmem:[#allocation4 + $0x60] sm:$0xff]
    %v4635 = vld [vmem:[#allocation4 + $0x68] sm:$0xff]
    %v4636 = vld [vmem:[#allocation4 + $0x70] sm:$0xff]
    %v4637 = vld [vmem:[#allocation4 + $0x78] sm:$0xff]
    %v4638 = vld [vmem:[#allocation4 + $0x80] sm:$0xff]
    %v4639 = vld [vmem:[#allocation4 + $0x88] sm:$0xff]
    %v4640 = vld [vmem:[#allocation4 + $0x90] sm:$0xff]
    %v4641 = vld [vmem:[#allocation4 + $0x98] sm:$0xff]
    %v4642 = vld [vmem:[#allocation4 + $0xa0] sm:$0xff]
    %v4643 = vld [vmem:[#allocation4 + $0xa8] sm:$0xff]
    %v4644 = vld [vmem:[#allocation4 + $0xb0] sm:$0xff]
    %v4645 = vld [vmem:[#allocation4 + $0xb8] sm:$0xff]
    %v4646 = vld [vmem:[#allocation4 + $0xc0] sm:$0xff]
    %v4647 = vld [vmem:[#allocation4 + $0xc8] sm:$0xff]
    %v4648 = vld [vmem:[#allocation4 + $0xd0] sm:$0xff]
    %v4649 = vld [vmem:[#allocation4 + $0xd8] sm:$0xff]
    %v4650 = vld [vmem:[#allocation4 + $0xe0] sm:$0xff]
    %v4651 = vld [vmem:[#allocation4 + $0xe8] sm:$0xff]
    %v4652 = vld [vmem:[#allocation4 + $0xf0] sm:$0xff]
    %v4653 = vld [vmem:[#allocation4 + $0xf8] sm:$0xff]
    %v4654 = vld [vmem:[#allocation4 + $0x100] sm:$0xff]
    %v4655 = vld [vmem:[#allocation4 + $0x108] sm:$0xff]
    %v4656 = vld [vmem:[#allocation4 + $0x110] sm:$0xff]
    %v4657 = vld [vmem:[#allocation4 + $0x118] sm:$0xff]
    %v4658 = vld [vmem:[#allocation4 + $0x120] sm:$0xff]
    %v4659 = vld [vmem:[#allocation4 + $0x128] sm:$0xff]
    %v4660 = vld [vmem:[#allocation4 + $0x130] sm:$0xff]
    %v4661 = vld [vmem:[#allocation4 + $0x138] sm:$0xff]
    %v4662 = vld [vmem:[#allocation4 + $0x140] sm:$0xff]
    %v4663 = vld [vmem:[#allocation4 + $0x148] sm:$0xff]
    %v4664 = vld [vmem:[#allocation4 + $0x150] sm:$0xff]
    %v4665 = vld [vmem:[#allocation4 + $0x158] sm:$0xff]
    %v4666 = vld [vmem:[#allocation4 + $0x160] sm:$0xff]
    %v4667 = vld [vmem:[#allocation4 + $0x168] sm:$0xff]
    %v4668 = vld [vmem:[#allocation4 + $0x170] sm:$0xff]
    %v4669 = vld [vmem:[#allocation4 + $0x178] sm:$0xff]
    %v4670 = vld [vmem:[#allocation4 + $0x180] sm:$0xff]
    %v4671 = vld [vmem:[#allocation4 + $0x188] sm:$0xff]
    %v4672 = vld [vmem:[#allocation4 + $0x190] sm:$0xff]
    %v4673 = vld [vmem:[#allocation4 + $0x198] sm:$0xff]
    %v4674 = vld [vmem:[#allocation4 + $0x1a0] sm:$0xff]
    %v4675 = vld [vmem:[#allocation4 + $0x1a8] sm:$0xff]
    %v4676 = vld [vmem:[#allocation4 + $0x1b0] sm:$0xff]
    %v4677 = vld [vmem:[#allocation4 + $0x1b8] sm:$0xff]
    %v4678 = vld [vmem:[#allocation4 + $0x1c0] sm:$0xff]
    %v4679 = vld [vmem:[#allocation4 + $0x1c8] sm:$0xff]
    %v4680 = vld [vmem:[#allocation4 + $0x1d0] sm:$0xff]
    %v4681 = vld [vmem:[#allocation4 + $0x1d8] sm:$0xff]
    %v4682 = vld [vmem:[#allocation4 + $0x1e0] sm:$0xff]
    %v4683 = vld [vmem:[#allocation4 + $0x1e8] sm:$0xff]
    %v4684 = vld [vmem:[#allocation4 + $0x1f0] sm:$0xff]
    %v4685 = vld [vmem:[#allocation4 + $0x1f8] sm:$0xff]
    %v4686 = vld [vmem:[#allocation4 + $0x200] sm:$0xff]
    %v4687 = vld [vmem:[#allocation4 + $0x208] sm:$0xff]
    %v4688 = vld [vmem:[#allocation4 + $0x210] sm:$0xff]
    %v4689 = vld [vmem:[#allocation4 + $0x218] sm:$0xff]
    %v4690 = vld [vmem:[#allocation4 + $0x220] sm:$0xff]
    %v4691 = vld [vmem:[#allocation4 + $0x228] sm:$0xff]
    %v4692 = vld [vmem:[#allocation4 + $0x230] sm:$0xff]
    %v4693 = vld [vmem:[#allocation4 + $0x238] sm:$0xff]
    %v4694 = vld [vmem:[#allocation4 + $0x240] sm:$0xff]
    %v4695 = vld [vmem:[#allocation4 + $0x248] sm:$0xff]
    %v4696 = vld [vmem:[#allocation4 + $0x250] sm:$0xff]
    %v4697 = vld [vmem:[#allocation4 + $0x258] sm:$0xff]
    %v4698 = vld [vmem:[#allocation4 + $0x260] sm:$0xff]
    %v4699 = vld [vmem:[#allocation4 + $0x268] sm:$0xff]
    %v4700 = vld [vmem:[#allocation4 + $0x270] sm:$0xff]
    %v4701 = vld [vmem:[#allocation4 + $0x278] sm:$0xff]
    %v4702 = vld [vmem:[#allocation4 + $0x280] sm:$0xff]
    %v4703 = vld [vmem:[#allocation4 + $0x288] sm:$0xff]
    %v4704 = vld [vmem:[#allocation4 + $0x290] sm:$0xff]
    %v4705 = vld [vmem:[#allocation4 + $0x298] sm:$0xff]
    %v4706 = vld [vmem:[#allocation4 + $0x2a0] sm:$0xff]
    %v4707 = vld [vmem:[#allocation4 + $0x2a8] sm:$0xff]
    %v4708 = vld [vmem:[#allocation4 + $0x2b0] sm:$0xff]
    %v4709 = vld [vmem:[#allocation4 + $0x2b8] sm:$0xff]
    %v4710 = vld [vmem:[#allocation4 + $0x2c0] sm:$0xff]
    %v4711 = vld [vmem:[#allocation4 + $0x2c8] sm:$0xff]
    %v4712 = vld [vmem:[#allocation4 + $0x2d0] sm:$0xff]
    %v4713 = vld [vmem:[#allocation4 + $0x2d8] sm:$0xff]
    %v4714 = vld [vmem:[#allocation4 + $0x2e0] sm:$0xff]
    %v4715 = vld [vmem:[#allocation4 + $0x2e8] sm:$0xff]
    %v4716 = vld [vmem:[#allocation4 + $0x2f0] sm:$0xff]
    %v4717 = vld [vmem:[#allocation4 + $0x2f8] sm:$0xff]
    %v4718 = vld [vmem:[#allocation4 + $0x300] sm:$0xff]
    %v4719 = vld [vmem:[#allocation4 + $0x308] sm:$0xff]
    %v4720 = vld [vmem:[#allocation4 + $0x310] sm:$0xff]
    %v4721 = vld [vmem:[#allocation4 + $0x318] sm:$0xff]
    %v4722 = vld [vmem:[#allocation4 + $0x320] sm:$0xff]
    %v4723 = vld [vmem:[#allocation4 + $0x328] sm:$0xff]
    %v4724 = vld [vmem:[#allocation4 + $0x330] sm:$0xff]
    %v4725 = vld [vmem:[#allocation4 + $0x338] sm:$0xff]
    %v4726 = vld [vmem:[#allocation4 + $0x340] sm:$0xff]
    %v4727 = vld [vmem:[#allocation4 + $0x348] sm:$0xff]
    %v4728 = vld [vmem:[#allocation4 + $0x350] sm:$0xff]
    %v4729 = vld [vmem:[#allocation4 + $0x358] sm:$0xff]
    %v4730 = vld [vmem:[#allocation4 + $0x360] sm:$0xff]
    %v4731 = vld [vmem:[#allocation4 + $0x368] sm:$0xff]
    %v4732 = vld [vmem:[#allocation4 + $0x370] sm:$0xff]
    %v4733 = vld [vmem:[#allocation4 + $0x378] sm:$0xff]
    %v4734 = vld [vmem:[#allocation4 + $0x380] sm:$0xff]
    %v4735 = vld [vmem:[#allocation4 + $0x388] sm:$0xff]
    %v4736 = vld [vmem:[#allocation4 + $0x390] sm:$0xff]
    %v4737 = vld [vmem:[#allocation4 + $0x398] sm:$0xff]
    %v4738 = vld [vmem:[#allocation4 + $0x3a0] sm:$0xff]
    %v4739 = vld [vmem:[#allocation4 + $0x3a8] sm:$0xff]
    %v4740 = vld [vmem:[#allocation4 + $0x3b0] sm:$0xff]
    %v4741 = vld [vmem:[#allocation4 + $0x3b8] sm:$0xff]
    %v4742 = vld [vmem:[#allocation4 + $0x3c0] sm:$0xff]
    %v4743 = vld [vmem:[#allocation4 + $0x3c8] sm:$0xff]
    %v4744 = vld [vmem:[#allocation4 + $0x3d0] sm:$0xff]
    %v4745 = vld [vmem:[#allocation4 + $0x3d8] sm:$0xff]
    %v4746 = vld [vmem:[#allocation4 + $0x3e0] sm:$0xff]
    %v4747 = vld [vmem:[#allocation4 + $0x3e8] sm:$0xff]
    %v4748 = vld [vmem:[#allocation4 + $0x3f0] sm:$0xff]
    %v4749 = vld [vmem:[#allocation4 + $0x3f8] sm:$0xff]
    %v4750 = vld [vmem:[%s11] sm:$0x1]
    %v4752 = vlaneseq
    %v4753 = vshrl.u32 %v4752, 7
    %v4754 = vsub.s32 0, %v4753
    %v4755 = vrot.slane %v4750, %v4754
    %v4789 = vunpack.c.l.b16 %v4588
    %v4790 = vunpack.c.l.b16 %v4589
    %v4791 = vunpack.c.l.b16 %v4590
    %v4792 = vunpack.c.l.b16 %v4591
    %v4793 = vunpack.c.l.b16 %v4592
    %v4794 = vunpack.c.l.b16 %v4593
    %v4795 = vunpack.c.l.b16 %v4594
    %v4796 = vunpack.c.l.b16 %v4595
    %v4797 = vunpack.c.l.b16 %v4596
    %v4798 = vunpack.c.l.b16 %v4597
    %v4799 = vunpack.c.l.b16 %v4598
    %v4800 = vunpack.c.l.b16 %v4599
    %v4801 = vunpack.c.l.b16 %v4600
    %v4802 = vunpack.c.l.b16 %v4601
    %v4803 = vunpack.c.l.b16 %v4602
    %v4804 = vunpack.c.l.b16 %v4603
    %v4805 = vunpack.c.l.b16 %v4604
    %v4806 = vunpack.c.l.b16 %v4605
    %v4807 = vunpack.c.l.b16 %v4606
    %v4808 = vunpack.c.l.b16 %v4607
    %v4809 = vunpack.c.l.b16 %v4608
    %v4810 = vunpack.c.l.b16 %v4609
    %v4811 = vunpack.c.l.b16 %v4610
    %v4812 = vunpack.c.l.b16 %v4611
    %v4813 = vunpack.c.l.b16 %v4612
    %v4814 = vunpack.c.l.b16 %v4613
    %v4815 = vunpack.c.l.b16 %v4614
    %v4816 = vunpack.c.l.b16 %v4615
    %v4817 = vunpack.c.l.b16 %v4616
    %v4818 = vunpack.c.l.b16 %v4617
    %v4819 = vunpack.c.l.b16 %v4618
    %v4820 = vunpack.c.l.b16 %v4619
    %vm4821 = vcmask 1041409
    %v4822 = vsel %vm4821, %v4805, %v4789
    %v4823 = vsel %vm4821, %v4806, %v4790
    %v4824 = vsel %vm4821, %v4807, %v4791
    %v4825 = vsel %vm4821, %v4808, %v4792
    %v4826 = vsel %vm4821, %v4809, %v4793
    %v4827 = vsel %vm4821, %v4810, %v4794
    %v4828 = vsel %vm4821, %v4811, %v4795
    %v4829 = vsel %vm4821, %v4812, %v4796
    %v4830 = vsel %vm4821, %v4813, %v4797
    %v4831 = vsel %vm4821, %v4814, %v4798
    %v4832 = vsel %vm4821, %v4815, %v4799
    %v4833 = vsel %vm4821, %v4816, %v4800
    %v4834 = vsel %vm4821, %v4817, %v4801
    %v4835 = vsel %vm4821, %v4818, %v4802
    %v4836 = vsel %vm4821, %v4819, %v4803
    %v4837 = vsel %vm4821, %v4820, %v4804
    %v4838 = vpack.c.b16 %v4822, %v4822
    %v4839 = vpack.c.b16 %v4823, %v4823
    %v4840 = vpack.c.b16 %v4824, %v4824
    %v4841 = vpack.c.b16 %v4825, %v4825
    %v4842 = vpack.c.b16 %v4826, %v4826
    %v4843 = vpack.c.b16 %v4827, %v4827
    %v4844 = vpack.c.b16 %v4828, %v4828
    %v4845 = vpack.c.b16 %v4829, %v4829
    %v4846 = vpack.c.b16 %v4830, %v4830
    %v4847 = vpack.c.b16 %v4831, %v4831
    %v4848 = vpack.c.b16 %v4832, %v4832
    %v4849 = vpack.c.b16 %v4833, %v4833
    %v4850 = vpack.c.b16 %v4834, %v4834
    %v4851 = vpack.c.b16 %v4835, %v4835
    %v4852 = vpack.c.b16 %v4836, %v4836
    %v4853 = vpack.c.b16 %v4837, %v4837
    %4870 = vmatprep.subr.bf16.mxu0 0
    %4871 = vmatpush1.bf16.msra.mxu0 %v4622
    %4872 = vmatprep.subr.bf16.mxu0 0
    %4873 = vmatpush1.bf16.msra.mxu0 %v4623
    %4874 = vmatprep.subr.bf16.mxu0 0
    %4875 = vmatpush1.bf16.msra.mxu0 %v4624
    %4876 = vmatprep.subr.bf16.mxu0 0
    %4877 = vmatpush1.bf16.msra.mxu0 %v4625
    %4878 = vmatprep.subr.bf16.mxu0 0
    %4879 = vmatpush1.bf16.msra.mxu0 %v4626
    %4880 = vmatprep.subr.bf16.mxu0 0
    %4881 = vmatpush1.bf16.msra.mxu0 %v4627
    %4882 = vmatprep.subr.bf16.mxu0 0
    %4883 = vmatpush1.bf16.msra.mxu0 %v4628
    %4884 = vmatprep.subr.bf16.mxu0 0
    %4885 = vmatpush1.bf16.msra.mxu0 %v4629
    %4886 = vmatprep.subr.bf16.mxu0 0
    %4887 = vmatpush1.bf16.msra.mxu0 %v4630
    %4888 = vmatprep.subr.bf16.mxu0 0
    %4889 = vmatpush1.bf16.msra.mxu0 %v4631
    %4890 = vmatprep.subr.bf16.mxu0 0
    %4891 = vmatpush1.bf16.msra.mxu0 %v4632
    %4892 = vmatprep.subr.bf16.mxu0 0
    %4893 = vmatpush1.bf16.msra.mxu0 %v4633
    %4894 = vmatprep.subr.bf16.mxu0 0
    %4895 = vmatpush1.bf16.msra.mxu0 %v4634
    %4896 = vmatprep.subr.bf16.mxu0 0
    %4897 = vmatpush1.bf16.msra.mxu0 %v4635
    %4898 = vmatprep.subr.bf16.mxu0 0
    %4899 = vmatpush1.bf16.msra.mxu0 %v4636
    %4900 = vmatprep.subr.bf16.mxu0 0
    %4901 = vmatpush1.bf16.msra.mxu0 %v4637
    %4902 = vmatprep.mubr.bf16.mxu0 %v4839
    %4903 = vmatmul.mubr.bf16.gmra.mrb[0].mxu0 %v4838
    %v4904 = vpop.f32.mrb[0].mxu0
    %v4905 = vadd.f32 %v4755, %v4904
    %v4906 = vpop.f32.mrb[0].mxu0
    %v4907 = vpop.f32.mrb[0].mxu0
    %v4908 = vpop.f32.mrb[0].mxu0
    %4909 = vdwg.mxu0
    %4910 = vmatprep.subr.bf16.mxu0 0
    %4911 = vmatpush1.bf16.msra.mxu0 %v4638
    %4912 = vmatprep.subr.bf16.mxu0 0
    %4913 = vmatpush1.bf16.msra.mxu0 %v4639
    %4914 = vmatprep.subr.bf16.mxu0 0
    %4915 = vmatpush1.bf16.msra.mxu0 %v4640
    %4916 = vmatprep.subr.bf16.mxu0 0
    %4917 = vmatpush1.bf16.msra.mxu0 %v4641
    %4918 = vmatprep.subr.bf16.mxu0 0
    %4919 = vmatpush1.bf16.msra.mxu0 %v4642
    %4920 = vmatprep.subr.bf16.mxu0 0
    %4921 = vmatpush1.bf16.msra.mxu0 %v4643
    %4922 = vmatprep.subr.bf16.mxu0 0
    %4923 = vmatpush1.bf16.msra.mxu0 %v4644
    %4924 = vmatprep.subr.bf16.mxu0 0
    %4925 = vmatpush1.bf16.msra.mxu0 %v4645
    %4926 = vmatprep.subr.bf16.mxu0 0
    %4927 = vmatpush1.bf16.msra.mxu0 %v4646
    %4928 = vmatprep.subr.bf16.mxu0 0
    %4929 = vmatpush1.bf16.msra.mxu0 %v4647
    %4930 = vmatprep.subr.bf16.mxu0 0
    %4931 = vmatpush1.bf16.msra.mxu0 %v4648
    %4932 = vmatprep.subr.bf16.mxu0 0
    %4933 = vmatpush1.bf16.msra.mxu0 %v4649
    %4934 = vmatprep.subr.bf16.mxu0 0
    %4935 = vmatpush1.bf16.msra.mxu0 %v4650
    %4936 = vmatprep.subr.bf16.mxu0 0
    %4937 = vmatpush1.bf16.msra.mxu0 %v4651
    %4938 = vmatprep.subr.bf16.mxu0 0
    %4939 = vmatpush1.bf16.msra.mxu0 %v4652
    %4940 = vmatprep.subr.bf16.mxu0 0
    %4941 = vmatpush1.bf16.msra.mxu0 %v4653
    %4942 = vmatprep.mubr.bf16.mxu0 %v4841
    %4943 = vmatmul.mubr.bf16.gmra.mrb[0].mxu0 %v4840
    %v4944 = vpop.f32.mrb[0].mxu0
    %v4945 = vadd.f32 %v4905, %v4944
    %v4946 = vpop.f32.mrb[0].mxu0
    %v4947 = vpop.f32.mrb[0].mxu0
    %v4948 = vpop.f32.mrb[0].mxu0
    %4949 = vdwg.mxu0
    %4950 = vmatprep.subr.bf16.mxu0 0
    %4951 = vmatpush1.bf16.msra.mxu0 %v4654
    %4952 = vmatprep.subr.bf16.mxu0 0
    %4953 = vmatpush1.bf16.msra.mxu0 %v4655
    %4954 = vmatprep.subr.bf16.mxu0 0
    %4955 = vmatpush1.bf16.msra.mxu0 %v4656
    %4956 = vmatprep.subr.bf16.mxu0 0
    %4957 = vmatpush1.bf16.msra.mxu0 %v4657
    %4958 = vmatprep.subr.bf16.mxu0 0
    %4959 = vmatpush1.bf16.msra.mxu0 %v4658
    %4960 = vmatprep.subr.bf16.mxu0 0
    %4961 = vmatpush1.bf16.msra.mxu0 %v4659
    %4962 = vmatprep.subr.bf16.mxu0 0
    %4963 = vmatpush1.bf16.msra.mxu0 %v4660
    %4964 = vmatprep.subr.bf16.mxu0 0
    %4965 = vmatpush1.bf16.msra.mxu0 %v4661
    %4966 = vmatprep.subr.bf16.mxu0 0
    %4967 = vmatpush1.bf16.msra.mxu0 %v4662
    %4968 = vmatprep.subr.bf16.mxu0 0
    %4969 = vmatpush1.bf16.msra.mxu0 %v4663
    %4970 = vmatprep.subr.bf16.mxu0 0
    %4971 = vmatpush1.bf16.msra.mxu0 %v4664
    %4972 = vmatprep.subr.bf16.mxu0 0
    %4973 = vmatpush1.bf16.msra.mxu0 %v4665
    %4974 = vmatprep.subr.bf16.mxu0 0
    %4975 = vmatpush1.bf16.msra.mxu0 %v4666
    %4976 = vmatprep.subr.bf16.mxu0 0
    %4977 = vmatpush1.bf16.msra.mxu0 %v4667
    %4978 = vmatprep.subr.bf16.mxu0 0
    %4979 = vmatpush1.bf16.msra.mxu0 %v4668
    %4980 = vmatprep.subr.bf16.mxu0 0
    %4981 = vmatpush1.bf16.msra.mxu0 %v4669
    %4982 = vmatprep.mubr.bf16.mxu0 %v4843
    %4983 = vmatmul.mubr.bf16.gmra.mrb[0].mxu0 %v4842
    %v4984 = vpop.f32.mrb[0].mxu0
    %v4985 = vadd.f32 %v4945, %v4984
    %v4986 = vpop.f32.mrb[0].mxu0
    %v4987 = vpop.f32.mrb[0].mxu0
    %v4988 = vpop.f32.mrb[0].mxu0
    %4989 = vdwg.mxu0
    %4990 = vmatprep.subr.bf16.mxu0 0
    %4991 = vmatpush1.bf16.msra.mxu0 %v4670
    %4992 = vmatprep.subr.bf16.mxu0 0
    %4993 = vmatpush1.bf16.msra.mxu0 %v4671
    %4994 = vmatprep.subr.bf16.mxu0 0
    %4995 = vmatpush1.bf16.msra.mxu0 %v4672
    %4996 = vmatprep.subr.bf16.mxu0 0
    %4997 = vmatpush1.bf16.msra.mxu0 %v4673
    %4998 = vmatprep.subr.bf16.mxu0 0
    %4999 = vmatpush1.bf16.msra.mxu0 %v4674
    %5000 = vmatprep.subr.bf16.mxu0 0
    %5001 = vmatpush1.bf16.msra.mxu0 %v4675
    %5002 = vmatprep.subr.bf16.mxu0 0
    %5003 = vmatpush1.bf16.msra.mxu0 %v4676
    %5004 = vmatprep.subr.bf16.mxu0 0
    %5005 = vmatpush1.bf16.msra.mxu0 %v4677
    %5006 = vmatprep.subr.bf16.mxu0 0
    %5007 = vmatpush1.bf16.msra.mxu0 %v4678
    %5008 = vmatprep.subr.bf16.mxu0 0
    %5009 = vmatpush1.bf16.msra.mxu0 %v4679
    %5010 = vmatprep.subr.bf16.mxu0 0
    %5011 = vmatpush1.bf16.msra.mxu0 %v4680
    %5012 = vmatprep.subr.bf16.mxu0 0
    %5013 = vmatpush1.bf16.msra.mxu0 %v4681
    %5014 = vmatprep.subr.bf16.mxu0 0
    %5015 = vmatpush1.bf16.msra.mxu0 %v4682
    %5016 = vmatprep.subr.bf16.mxu0 0
    %5017 = vmatpush1.bf16.msra.mxu0 %v4683
    %5018 = vmatprep.subr.bf16.mxu0 0
    %5019 = vmatpush1.bf16.msra.mxu0 %v4684
    %5020 = vmatprep.subr.bf16.mxu0 0
    %5021 = vmatpush1.bf16.msra.mxu0 %v4685
    %5022 = vmatprep.mubr.bf16.mxu0 %v4845
    %5023 = vmatmul.mubr.bf16.gmra.mrb[0].mxu0 %v4844
    %v5024 = vpop.f32.mrb[0].mxu0
    %v5025 = vadd.f32 %v4985, %v5024
    %v5026 = vpop.f32.mrb[0].mxu0
    %v5027 = vpop.f32.mrb[0].mxu0
    %v5028 = vpop.f32.mrb[0].mxu0
    %5029 = vdwg.mxu0
    %5030 = vmatprep.subr.bf16.mxu0 0
    %5031 = vmatpush1.bf16.msra.mxu0 %v4686
    %5032 = vmatprep.subr.bf16.mxu0 0
    %5033 = vmatpush1.bf16.msra.mxu0 %v4687
    %5034 = vmatprep.subr.bf16.mxu0 0
    %5035 = vmatpush1.bf16.msra.mxu0 %v4688
    %5036 = vmatprep.subr.bf16.mxu0 0
    %5037 = vmatpush1.bf16.msra.mxu0 %v4689
    %5038 = vmatprep.subr.bf16.mxu0 0
    %5039 = vmatpush1.bf16.msra.mxu0 %v4690
    %5040 = vmatprep.subr.bf16.mxu0 0
    %5041 = vmatpush1.bf16.msra.mxu0 %v4691
    %5042 = vmatprep.subr.bf16.mxu0 0
    %5043 = vmatpush1.bf16.msra.mxu0 %v4692
    %5044 = vmatprep.subr.bf16.mxu0 0
    %5045 = vmatpush1.bf16.msra.mxu0 %v4693
    %5046 = vmatprep.subr.bf16.mxu0 0
    %5047 = vmatpush1.bf16.msra.mxu0 %v4694
    %5048 = vmatprep.subr.bf16.mxu0 0
    %5049 = vmatpush1.bf16.msra.mxu0 %v4695
    %5050 = vmatprep.subr.bf16.mxu0 0
    %5051 = vmatpush1.bf16.msra.mxu0 %v4696
    %5052 = vmatprep.subr.bf16.mxu0 0
    %5053 = vmatpush1.bf16.msra.mxu0 %v4697
    %5054 = vmatprep.subr.bf16.mxu0 0
    %5055 = vmatpush1.bf16.msra.mxu0 %v4698
    %5056 = vmatprep.subr.bf16.mxu0 0
    %5057 = vmatpush1.bf16.msra.mxu0 %v4699
    %5058 = vmatprep.subr.bf16.mxu0 0
    %5059 = vmatpush1.bf16.msra.mxu0 %v4700
    %5060 = vmatprep.subr.bf16.mxu0 0
    %5061 = vmatpush1.bf16.msra.mxu0 %v4701
    %5062 = vmatprep.mubr.bf16.mxu0 %v4847
    %5063 = vmatmul.mubr.bf16.gmra.mrb[0].mxu0 %v4846
    %v5064 = vpop.f32.mrb[0].mxu0
    %v5065 = vadd.f32 %v5025, %v5064
    %v5066 = vpop.f32.mrb[0].mxu0
    %v5067 = vpop.f32.mrb[0].mxu0
    %v5068 = vpop.f32.mrb[0].mxu0
    %5069 = vdwg.mxu0
    %5070 = vmatprep.subr.bf16.mxu0 0
    %5071 = vmatpush1.bf16.msra.mxu0 %v4702
    %5072 = vmatprep.subr.bf16.mxu0 0
    %5073 = vmatpush1.bf16.msra.mxu0 %v4703
    %5074 = vmatprep.subr.bf16.mxu0 0
    %5075 = vmatpush1.bf16.msra.mxu0 %v4704
    %5076 = vmatprep.subr.bf16.mxu0 0
    %5077 = vmatpush1.bf16.msra.mxu0 %v4705
    %5078 = vmatprep.subr.bf16.mxu0 0
    %5079 = vmatpush1.bf16.msra.mxu0 %v4706
    %5080 = vmatprep.subr.bf16.mxu0 0
    %5081 = vmatpush1.bf16.msra.mxu0 %v4707
    %5082 = vmatprep.subr.bf16.mxu0 0
    %5083 = vmatpush1.bf16.msra.mxu0 %v4708
    %5084 = vmatprep.subr.bf16.mxu0 0
    %5085 = vmatpush1.bf16.msra.mxu0 %v4709
    %5086 = vmatprep.subr.bf16.mxu0 0
    %5087 = vmatpush1.bf16.msra.mxu0 %v4710
    %5088 = vmatprep.subr.bf16.mxu0 0
    %5089 = vmatpush1.bf16.msra.mxu0 %v4711
    %5090 = vmatprep.subr.bf16.mxu0 0
    %5091 = vmatpush1.bf16.msra.mxu0 %v4712
    %5092 = vmatprep.subr.bf16.mxu0 0
    %5093 = vmatpush1.bf16.msra.mxu0 %v4713
    %5094 = vmatprep.subr.bf16.mxu0 0
    %5095 = vmatpush1.bf16.msra.mxu0 %v4714
    %5096 = vmatprep.subr.bf16.mxu0 0
    %5097 = vmatpush1.bf16.msra.mxu0 %v4715
    %5098 = vmatprep.subr.bf16.mxu0 0
    %5099 = vmatpush1.bf16.msra.mxu0 %v4716
    %5100 = vmatprep.subr.bf16.mxu0 0
    %5101 = vmatpush1.bf16.msra.mxu0 %v4717
    %5102 = vmatprep.mubr.bf16.mxu0 %v4849
    %5103 = vmatmul.mubr.bf16.gmra.mrb[0].mxu0 %v4848
    %v5104 = vpop.f32.mrb[0].mxu0
    %v5105 = vadd.f32 %v5065, %v5104
    %v5106 = vpop.f32.mrb[0].mxu0
    %v5107 = vpop.f32.mrb[0].mxu0
    %v5108 = vpop.f32.mrb[0].mxu0
    %5109 = vdwg.mxu0
    %5110 = vmatprep.subr.bf16.mxu0 0
    %5111 = vmatpush1.bf16.msra.mxu0 %v4718
    %5112 = vmatprep.subr.bf16.mxu0 0
    %5113 = vmatpush1.bf16.msra.mxu0 %v4719
    %5114 = vmatprep.subr.bf16.mxu0 0
    %5115 = vmatpush1.bf16.msra.mxu0 %v4720
    %5116 = vmatprep.subr.bf16.mxu0 0
    %5117 = vmatpush1.bf16.msra.mxu0 %v4721
    %5118 = vmatprep.subr.bf16.mxu0 0
    %5119 = vmatpush1.bf16.msra.mxu0 %v4722
    %5120 = vmatprep.subr.bf16.mxu0 0
    %5121 = vmatpush1.bf16.msra.mxu0 %v4723
    %5122 = vmatprep.subr.bf16.mxu0 0
    %5123 = vmatpush1.bf16.msra.mxu0 %v4724
    %5124 = vmatprep.subr.bf16.mxu0 0
    %5125 = vmatpush1.bf16.msra.mxu0 %v4725
    %5126 = vmatprep.subr.bf16.mxu0 0
    %5127 = vmatpush1.bf16.msra.mxu0 %v4726
    %5128 = vmatprep.subr.bf16.mxu0 0
    %5129 = vmatpush1.bf16.msra.mxu0 %v4727
    %5130 = vmatprep.subr.bf16.mxu0 0
    %5131 = vmatpush1.bf16.msra.mxu0 %v4728
    %5132 = vmatprep.subr.bf16.mxu0 0
    %5133 = vmatpush1.bf16.msra.mxu0 %v4729
    %5134 = vmatprep.subr.bf16.mxu0 0
    %5135 = vmatpush1.bf16.msra.mxu0 %v4730
    %5136 = vmatprep.subr.bf16.mxu0 0
    %5137 = vmatpush1.bf16.msra.mxu0 %v4731
    %5138 = vmatprep.subr.bf16.mxu0 0
    %5139 = vmatpush1.bf16.msra.mxu0 %v4732
    %5140 = vmatprep.subr.bf16.mxu0 0
    %5141 = vmatpush1.bf16.msra.mxu0 %v4733
    %5142 = vmatprep.mubr.bf16.mxu0 %v4851
    %5143 = vmatmul.mubr.bf16.gmra.mrb[0].mxu0 %v4850
    %v5144 = vpop.f32.mrb[0].mxu0
    %v5145 = vadd.f32 %v5105, %v5144
    %v5146 = vpop.f32.mrb[0].mxu0
    %v5147 = vpop.f32.mrb[0].mxu0
    %v5148 = vpop.f32.mrb[0].mxu0
    %5149 = vdwg.mxu0
    %5150 = vmatprep.subr.bf16.mxu0 0
    %5151 = vmatpush1.bf16.msra.mxu0 %v4734
    %5152 = vmatprep.subr.bf16.mxu0 0
    %5153 = vmatpush1.bf16.msra.mxu0 %v4735
    %5154 = vmatprep.subr.bf16.mxu0 0
    %5155 = vmatpush1.bf16.msra.mxu0 %v4736
    %5156 = vmatprep.subr.bf16.mxu0 0
    %5157 = vmatpush1.bf16.msra.mxu0 %v4737
    %5158 = vmatprep.subr.bf16.mxu0 0
    %5159 = vmatpush1.bf16.msra.mxu0 %v4738
    %5160 = vmatprep.subr.bf16.mxu0 0
    %5161 = vmatpush1.bf16.msra.mxu0 %v4739
    %5162 = vmatprep.subr.bf16.mxu0 0
    %5163 = vmatpush1.bf16.msra.mxu0 %v4740
    %5164 = vmatprep.subr.bf16.mxu0 0
    %5165 = vmatpush1.bf16.msra.mxu0 %v4741
    %5166 = vmatprep.subr.bf16.mxu0 0
    %5167 = vmatpush1.bf16.msra.mxu0 %v4742
    %5168 = vmatprep.subr.bf16.mxu0 0
    %5169 = vmatpush1.bf16.msra.mxu0 %v4743
    %5170 = vmatprep.subr.bf16.mxu0 0
    %5171 = vmatpush1.bf16.msra.mxu0 %v4744
    %5172 = vmatprep.subr.bf16.mxu0 0
    %5173 = vmatpush1.bf16.msra.mxu0 %v4745
    %5174 = vmatprep.subr.bf16.mxu0 0
    %5175 = vmatpush1.bf16.msra.mxu0 %v4746
    %5176 = vmatprep.subr.bf16.mxu0 0
    %5177 = vmatpush1.bf16.msra.mxu0 %v4747
    %5178 = vmatprep.subr.bf16.mxu0 0
    %5179 = vmatpush1.bf16.msra.mxu0 %v4748
    %5180 = vmatprep.subr.bf16.mxu0 0
    %5181 = vmatpush1.bf16.msra.mxu0 %v4749
    %5182 = vmatprep.mubr.bf16.mxu0 %v4853
    %5183 = vmatmul.mubr.bf16.gmra.mrb[0].mxu0 %v4852
    %v5184 = vpop.f32.mrb[0].mxu0
    %v5185 = vadd.f32 %v5145, %v5184
    %v5186 = vpop.f32.mrb[0].mxu0
    %v5187 = vpop.f32.mrb[0].mxu0
    %v5188 = vpop.f32.mrb[0].mxu0
    %5189 = vdwg.mxu0
    %v5190 = vtanh.pop %v5185
    %v5191 = vpack.c.bf16 %v5190, %v5190
    %v5193 = vsel %vm2257, %v5191, 0
    %5195 = vmatprep.subr.bf16.mxu0 0
    %5196 = vmatpush1.bf16.msra.mxu0 %v2365
    %5197 = vmatprep.subr.bf16.mxu0 0
    %5198 = vmatpush1.bf16.msra.mxu0 %v2366
    %5199 = vmatprep.subr.bf16.mxu0 0
    %5200 = vmatpush1.bf16.msra.mxu0 0
    %5201 = vmatprep.subr.bf16.mxu0 0
    %5202 = vmatpush1.bf16.msra.mxu0 0
    %5203 = vmatprep.subr.bf16.mxu0 0
    %5204 = vmatpush1.bf16.msra.mxu0 0
    %5205 = vmatprep.subr.bf16.mxu0 0
    %5206 = vmatpush1.bf16.msra.mxu0 0
    %5207 = vmatprep.subr.bf16.mxu0 0
    %5208 = vmatpush1.bf16.msra.mxu0 0
    %5209 = vmatprep.subr.bf16.mxu0 0
    %5210 = vmatpush1.bf16.msra.mxu0 0
    %5211 = vmatprep.subr.bf16.mxu0 0
    %5212 = vmatpush1.bf16.msra.mxu0 0
    %5213 = vmatprep.subr.bf16.mxu0 0
    %5214 = vmatpush1.bf16.msra.mxu0 0
    %5215 = vmatprep.subr.bf16.mxu0 0
    %5216 = vmatpush1.bf16.msra.mxu0 0
    %5217 = vmatprep.subr.bf16.mxu0 0
    %5218 = vmatpush1.bf16.msra.mxu0 0
    %5219 = vmatprep.subr.bf16.mxu0 0
    %5220 = vmatpush1.bf16.msra.mxu0 0
    %5221 = vmatprep.subr.bf16.mxu0 0
    %5222 = vmatpush1.bf16.msra.mxu0 0
    %5223 = vmatprep.subr.bf16.mxu0 0
    %5224 = vmatpush1.bf16.msra.mxu0 0
    %5225 = vmatprep.subr.bf16.mxu0 0
    %5226 = vmatpush1.bf16.msra.mxu0 0
    %5227 = vmatprep.mubr.bf16.mxu0 0
    %5228 = vmatmul.mubr.bf16.gmra.mrb[0].mxu0 %v5193
    %v5229 = vpop.f32.mrb[0].mxu0
    %v5230 = vadd.f32 0.0, %v5229
    %v5231 = vpop.f32.mrb[0].mxu0
    %v5232 = vpop.f32.mrb[0].mxu0
    %v5233 = vpop.f32.mrb[0].mxu0
    %5234 = vdwg.mxu0
    %v5235 = vadd.f32 %v2311, %v5230
    %v5236 = vmul.f32 %v5235, %v2355
    %v5237 = vtanh.pop %v5236
    %v5238 = vmul.f32 %v5237, %v2355
    %v5239 = vadd.f32 %v5238, %v2356
    %v5240 = vmul.f32 %v5239, 0.0
    %5242 = vrot.lane.b32.xlu0 %v5239, 64
    %v5243 = vpop.permute.xlu0 %5242
    %v5245 = vmul.f32 %v5239, %v5243
    %5247 = vrot.lane.b32.xlu0 %v5245, 32
    %v5248 = vpop.permute.xlu0 %5247
    %v5250 = vadd.f32 %v5240, %v5248
    %v5251 = vtanh.pop %v5250
    %5253 = vrot.lane.b32.xlu0 %v5251, 64
    %v5254 = vpop.permute.xlu0 %5253
    %v5256 = vmul.f32 %v5239, %v5254
    %v5257 = vpack.c.bf16 %v5256, %v5256
    %5259 = vrot.lane.b32.xlu0 %v5257, 32
    %v5260 = vpop.permute.xlu0 %5259
    %v5262 = vsel %vm2257, %v5260, 0
    %5264 = vmatprep.subr.bf16.mxu0 0
    %5265 = vmatpush1.bf16.msra.mxu0 %v2365
    %5266 = vmatprep.subr.bf16.mxu0 0
    %5267 = vmatpush1.bf16.msra.mxu0 %v2366
    %5268 = vmatprep.subr.bf16.mxu0 0
    %5269 = vmatpush1.bf16.msra.mxu0 0
    %5270 = vmatprep.subr.bf16.mxu0 0
    %5271 = vmatpush1.bf16.msra.mxu0 0
    %5272 = vmatprep.subr.bf16.mxu0 0
    %5273 = vmatpush1.bf16.msra.mxu0 0
    %5274 = vmatprep.subr.bf16.mxu0 0
    %5275 = vmatpush1.bf16.msra.mxu0 0
    %5276 = vmatprep.subr.bf16.mxu0 0
    %5277 = vmatpush1.bf16.msra.mxu0 0
    %5278 = vmatprep.subr.bf16.mxu0 0
    %5279 = vmatpush1.bf16.msra.mxu0 0
    %5280 = vmatprep.subr.bf16.mxu0 0
    %5281 = vmatpush1.bf16.msra.mxu0 0
    %5282 = vmatprep.subr.bf16.mxu0 0
    %5283 = vmatpush1.bf16.msra.mxu0 0
    %5284 = vmatprep.subr.bf16.mxu0 0
    %5285 = vmatpush1.bf16.msra.mxu0 0
    %5286 = vmatprep.subr.bf16.mxu0 0
    %5287 = vmatpush1.bf16.msra.mxu0 0
    %5288 = vmatprep.subr.bf16.mxu0 0
    %5289 = vmatpush1.bf16.msra.mxu0 0
    %5290 = vmatprep.subr.bf16.mxu0 0
    %5291 = vmatpush1.bf16.msra.mxu0 0
    %5292 = vmatprep.subr.bf16.mxu0 0
    %5293 = vmatpush1.bf16.msra.mxu0 0
    %5294 = vmatprep.subr.bf16.mxu0 0
    %5295 = vmatpush1.bf16.msra.mxu0 0
    %5296 = vmatprep.mubr.bf16.mxu0 0
    %5297 = vmatmul.mubr.bf16.gmra.mrb[0].mxu0 %v5262
    %v5298 = vpop.f32.mrb[0].mxu0
    %v5299 = vadd.f32 0.0, %v5298
    %v5300 = vpop.f32.mrb[0].mxu0
    %v5301 = vpop.f32.mrb[0].mxu0
    %v5302 = vpop.f32.mrb[0].mxu0
    %5303 = vdwg.mxu0
    %v5304 = vadd.f32 %v2319, %v5299
    %v5305 = vmul.f32 %v5304, %v2355
    %v5306 = vtanh.pop %v5305
    %v5307 = vmul.f32 %v5306, %v2355
    %v5308 = vadd.f32 %v5307, %v2356
    %v5309 = vmul.f32 %v5308, %v5250
    %5311 = vrot.lane.b32.xlu0 %v5308, 64
    %v5312 = vpop.permute.xlu0 %5311
    %v5314 = vmul.f32 %v5308, %v5312
    %5316 = vrot.lane.b32.xlu0 %v5314, 32
    %v5317 = vpop.permute.xlu0 %5316
    %v5319 = vadd.f32 %v5309, %v5317
    %v5320 = vtanh.pop %v5319
    %5322 = vrot.lane.b32.xlu0 %v5320, 64
    %v5323 = vpop.permute.xlu0 %5322
    %v5325 = vmul.f32 %v5308, %v5323
    %v5326 = vpack.c.bf16 %v5325, %v5325
    %5328 = vrot.lane.b32.xlu0 %v5326, 32
    %v5329 = vpop.permute.xlu0 %5328
    %v5331 = vsel %vm2257, %v5329, 0
    %5333 = vmatprep.subr.bf16.mxu0 0
    %5334 = vmatpush1.bf16.msra.mxu0 %v2365
    %5335 = vmatprep.subr.bf16.mxu0 0
    %5336 = vmatpush1.bf16.msra.mxu0 %v2366
    %5337 = vmatprep.subr.bf16.mxu0 0
    %5338 = vmatpush1.bf16.msra.mxu0 0
    %5339 = vmatprep.subr.bf16.mxu0 0
    %5340 = vmatpush1.bf16.msra.mxu0 0
    %5341 = vmatprep.subr.bf16.mxu0 0
    %5342 = vmatpush1.bf16.msra.mxu0 0
    %5343 = vmatprep.subr.bf16.mxu0 0
    %5344 = vmatpush1.bf16.msra.mxu0 0
    %5345 = vmatprep.subr.bf16.mxu0 0
    %5346 = vmatpush1.bf16.msra.mxu0 0
    %5347 = vmatprep.subr.bf16.mxu0 0
    %5348 = vmatpush1.bf16.msra.mxu0 0
    %5349 = vmatprep.subr.bf16.mxu0 0
    %5350 = vmatpush1.bf16.msra.mxu0 0
    %5351 = vmatprep.subr.bf16.mxu0 0
    %5352 = vmatpush1.bf16.msra.mxu0 0
    %5353 = vmatprep.subr.bf16.mxu0 0
    %5354 = vmatpush1.bf16.msra.mxu0 0
    %5355 = vmatprep.subr.bf16.mxu0 0
    %5356 = vmatpush1.bf16.msra.mxu0 0
    %5357 = vmatprep.subr.bf16.mxu0 0
    %5358 = vmatpush1.bf16.msra.mxu0 0
    %5359 = vmatprep.subr.bf16.mxu0 0
    %5360 = vmatpush1.bf16.msra.mxu0 0
    %5361 = vmatprep.subr.bf16.mxu0 0
    %5362 = vmatpush1.bf16.msra.mxu0 0
    %5363 = vmatprep.subr.bf16.mxu0 0
    %5364 = vmatpush1.bf16.msra.mxu0 0
    %5365 = vmatprep.mubr.bf16.mxu0 0
    %5366 = vmatmul.mubr.bf16.gmra.mrb[0].mxu0 %v5331
    %v5367 = vpop.f32.mrb[0].mxu0
    %v5368 = vadd.f32 0.0, %v5367
    %v5369 = vpop.f32.mrb[0].mxu0
    %v5370 = vpop.f32.mrb[0].mxu0
    %v5371 = vpop.f32.mrb[0].mxu0
    %5372 = vdwg.mxu0
    %v5373 = vadd.f32 %v2318, %v5368
    %v5374 = vmul.f32 %v5373, %v2355
    %v5375 = vtanh.pop %v5374
    %v5376 = vmul.f32 %v5375, %v2355
    %v5377 = vadd.f32 %v5376, %v2356
    %v5378 = vmul.f32 %v5377, %v5319
    %5380 = vrot.lane.b32.xlu0 %v5377, 64
    %v5381 = vpop.permute.xlu0 %5380
    %v5383 = vmul.f32 %v5377, %v5381
    %5385 = vrot.lane.b32.xlu0 %v5383, 32
    %v5386 = vpop.permute.xlu0 %5385
    %v5388 = vadd.f32 %v5378, %v5386
    %v5389 = vtanh.pop %v5388
    %5391 = vrot.lane.b32.xlu0 %v5389, 64
    %v5392 = vpop.permute.xlu0 %5391
    %v5394 = vmul.f32 %v5377, %v5392
    %v5395 = vpack.c.bf16 %v5394, %v5394
    %5397 = vrot.lane.b32.xlu0 %v5395, 32
    %v5398 = vpop.permute.xlu0 %5397
    %v5400 = vsel %vm2257, %v5398, 0
    %5402 = vmatprep.subr.bf16.mxu0 0
    %5403 = vmatpush1.bf16.msra.mxu0 %v2365
    %5404 = vmatprep.subr.bf16.mxu0 0
    %5405 = vmatpush1.bf16.msra.mxu0 %v2366
    %5406 = vmatprep.subr.bf16.mxu0 0
    %5407 = vmatpush1.bf16.msra.mxu0 0
    %5408 = vmatprep.subr.bf16.mxu0 0
    %5409 = vmatpush1.bf16.msra.mxu0 0
    %5410 = vmatprep.subr.bf16.mxu0 0
    %5411 = vmatpush1.bf16.msra.mxu0 0
    %5412 = vmatprep.subr.bf16.mxu0 0
    %5413 = vmatpush1.bf16.msra.mxu0 0
    %5414 = vmatprep.subr.bf16.mxu0 0
    %5415 = vmatpush1.bf16.msra.mxu0 0
    %5416 = vmatprep.subr.bf16.mxu0 0
    %5417 = vmatpush1.bf16.msra.mxu0 0
    %5418 = vmatprep.subr.bf16.mxu0 0
    %5419 = vmatpush1.bf16.msra.mxu0 0
    %5420 = vmatprep.subr.bf16.mxu0 0
    %5421 = vmatpush1.bf16.msra.mxu0 0
    %5422 = vmatprep.subr.bf16.mxu0 0
    %5423 = vmatpush1.bf16.msra.mxu0 0
    %5424 = vmatprep.subr.bf16.mxu0 0
    %5425 = vmatpush1.bf16.msra.mxu0 0
    %5426 = vmatprep.subr.bf16.mxu0 0
    %5427 = vmatpush1.bf16.msra.mxu0 0
    %5428 = vmatprep.subr.bf16.mxu0 0
    %5429 = vmatpush1.bf16.msra.mxu0 0
    %5430 = vmatprep.subr.bf16.mxu0 0
    %5431 = vmatpush1.bf16.msra.mxu0 0
    %5432 = vmatprep.subr.bf16.mxu0 0
    %5433 = vmatpush1.bf16.msra.mxu0 0
    %5434 = vmatprep.mubr.bf16.mxu0 0
    %5435 = vmatmul.mubr.bf16.gmra.mrb[0].mxu0 %v5400
    %v5436 = vpop.f32.mrb[0].mxu0
    %v5437 = vadd.f32 0.0, %v5436
    %v5438 = vpop.f32.mrb[0].mxu0
    %v5439 = vpop.f32.mrb[0].mxu0
    %v5440 = vpop.f32.mrb[0].mxu0
    %5441 = vdwg.mxu0
    %v5442 = vadd.f32 %v2320, %v5437
    %v5443 = vmul.f32 %v5442, %v2355
    %v5444 = vtanh.pop %v5443
    %v5445 = vmul.f32 %v5444, %v2355
    %v5446 = vadd.f32 %v5445, %v2356
    %v5447 = vmul.f32 %v5446, %v5388
    %5449 = vrot.lane.b32.xlu0 %v5446, 64
    %v5450 = vpop.permute.xlu0 %5449
    %v5452 = vmul.f32 %v5446, %v5450
    %5454 = vrot.lane.b32.xlu0 %v5452, 32
    %v5455 = vpop.permute.xlu0 %5454
    %v5457 = vadd.f32 %v5447, %v5455
    %v5458 = vtanh.pop %v5457
    %5460 = vrot.lane.b32.xlu0 %v5458, 64
    %v5461 = vpop.permute.xlu0 %5460
    %v5463 = vmul.f32 %v5446, %v5461
    %v5464 = vpack.c.bf16 %v5463, %v5463
    %5466 = vrot.lane.b32.xlu0 %v5464, 32
    %v5467 = vpop.permute.xlu0 %5466
    %v5469 = vsel %vm2257, %v5467, 0
    %5471 = vmatprep.subr.bf16.mxu0 0
    %5472 = vmatpush1.bf16.msra.mxu0 %v2365
    %5473 = vmatprep.subr.bf16.mxu0 0
    %5474 = vmatpush1.bf16.msra.mxu0 %v2366
    %5475 = vmatprep.subr.bf16.mxu0 0
    %5476 = vmatpush1.bf16.msra.mxu0 0
    %5477 = vmatprep.subr.bf16.mxu0 0
    %5478 = vmatpush1.bf16.msra.mxu0 0
    %5479 = vmatprep.subr.bf16.mxu0 0
    %5480 = vmatpush1.bf16.msra.mxu0 0
    %5481 = vmatprep.subr.bf16.mxu0 0
    %5482 = vmatpush1.bf16.msra.mxu0 0
    %5483 = vmatprep.subr.bf16.mxu0 0
    %5484 = vmatpush1.bf16.msra.mxu0 0
    %5485 = vmatprep.subr.bf16.mxu0 0
    %5486 = vmatpush1.bf16.msra.mxu0 0
    %5487 = vmatprep.subr.bf16.mxu0 0
    %5488 = vmatpush1.bf16.msra.mxu0 0
    %5489 = vmatprep.subr.bf16.mxu0 0
    %5490 = vmatpush1.bf16.msra.mxu0 0
    %5491 = vmatprep.subr.bf16.mxu0 0
    %5492 = vmatpush1.bf16.msra.mxu0 0
    %5493 = vmatprep.subr.bf16.mxu0 0
    %5494 = vmatpush1.bf16.msra.mxu0 0
    %5495 = vmatprep.subr.bf16.mxu0 0
    %5496 = vmatpush1.bf16.msra.mxu0 0
    %5497 = vmatprep.subr.bf16.mxu0 0
    %5498 = vmatpush1.bf16.msra.mxu0 0
    %5499 = vmatprep.subr.bf16.mxu0 0
    %5500 = vmatpush1.bf16.msra.mxu0 0
    %5501 = vmatprep.subr.bf16.mxu0 0
    %5502 = vmatpush1.bf16.msra.mxu0 0
    %5503 = vmatprep.mubr.bf16.mxu0 0
    %5504 = vmatmul.mubr.bf16.gmra.mrb[0].mxu0 %v5469
    %v5505 = vpop.f32.mrb[0].mxu0
    %v5506 = vadd.f32 0.0, %v5505
    %v5507 = vpop.f32.mrb[0].mxu0
    %v5508 = vpop.f32.mrb[0].mxu0
    %v5509 = vpop.f32.mrb[0].mxu0
    %5510 = vdwg.mxu0
    %v5511 = vadd.f32 %v2328, %v5506
    %v5512 = vmul.f32 %v5511, %v2355
    %v5513 = vtanh.pop %v5512
    %v5514 = vmul.f32 %v5513, %v2355
    %v5515 = vadd.f32 %v5514, %v2356
    %v5516 = vmul.f32 %v5515, %v5457
    %5518 = vrot.lane.b32.xlu0 %v5515, 64
    %v5519 = vpop.permute.xlu0 %5518
    %v5521 = vmul.f32 %v5515, %v5519
    %5523 = vrot.lane.b32.xlu0 %v5521, 32
    %v5524 = vpop.permute.xlu0 %5523
    %v5526 = vadd.f32 %v5516, %v5524
    %v5527 = vtanh.pop %v5526
    %5529 = vrot.lane.b32.xlu0 %v5527, 64
    %v5530 = vpop.permute.xlu0 %5529
    %v5532 = vmul.f32 %v5515, %v5530
    %v5533 = vpack.c.bf16 %v5532, %v5532
    %5535 = vrot.lane.b32.xlu0 %v5533, 32
    %v5536 = vpop.permute.xlu0 %5535
    %v5538 = vsel %vm2257, %v5536, 0
    %5540 = vmatprep.subr.bf16.mxu0 0
    %5541 = vmatpush1.bf16.msra.mxu0 %v2365
    %5542 = vmatprep.subr.bf16.mxu0 0
    %5543 = vmatpush1.bf16.msra.mxu0 %v2366
    %5544 = vmatprep.subr.bf16.mxu0 0
    %5545 = vmatpush1.bf16.msra.mxu0 0
    %5546 = vmatprep.subr.bf16.mxu0 0
    %5547 = vmatpush1.bf16.msra.mxu0 0
    %5548 = vmatprep.subr.bf16.mxu0 0
    %5549 = vmatpush1.bf16.msra.mxu0 0
    %5550 = vmatprep.subr.bf16.mxu0 0
    %5551 = vmatpush1.bf16.msra.mxu0 0
    %5552 = vmatprep.subr.bf16.mxu0 0
    %5553 = vmatpush1.bf16.msra.mxu0 0
    %5554 = vmatprep.subr.bf16.mxu0 0
    %5555 = vmatpush1.bf16.msra.mxu0 0
    %5556 = vmatprep.subr.bf16.mxu0 0
    %5557 = vmatpush1.bf16.msra.mxu0 0
    %5558 = vmatprep.subr.bf16.mxu0 0
    %5559 = vmatpush1.bf16.msra.mxu0 0
    %5560 = vmatprep.subr.bf16.mxu0 0
    %5561 = vmatpush1.bf16.msra.mxu0 0
    %5562 = vmatprep.subr.bf16.mxu0 0
    %5563 = vmatpush1.bf16.msra.mxu0 0
    %5564 = vmatprep.subr.bf16.mxu0 0
    %5565 = vmatpush1.bf16.msra.mxu0 0
    %5566 = vmatprep.subr.bf16.mxu0 0
    %5567 = vmatpush1.bf16.msra.mxu0 0
    %5568 = vmatprep.subr.bf16.mxu0 0
    %5569 = vmatpush1.bf16.msra.mxu0 0
    %5570 = vmatprep.subr.bf16.mxu0 0
    %5571 = vmatpush1.bf16.msra.mxu0 0
    %5572 = vmatprep.mubr.bf16.mxu0 0
    %5573 = vmatmul.mubr.bf16.gmra.mrb[0].mxu0 %v5538
    %v5574 = vpop.f32.mrb[0].mxu0
    %v5575 = vadd.f32 0.0, %v5574
    %v5576 = vpop.f32.mrb[0].mxu0
    %v5577 = vpop.f32.mrb[0].mxu0
    %v5578 = vpop.f32.mrb[0].mxu0
    %5579 = vdwg.mxu0
    %v5580 = vadd.f32 %v2336, %v5575
    %v5581 = vmul.f32 %v5580, %v2355
    %v5582 = vtanh.pop %v5581
    %v5583 = vmul.f32 %v5582, %v2355
    %v5584 = vadd.f32 %v5583, %v2356
    %v5585 = vmul.f32 %v5584, %v5526
    %5587 = vrot.lane.b32.xlu0 %v5584, 64
    %v5588 = vpop.permute.xlu0 %5587
    %v5590 = vmul.f32 %v5584, %v5588
    %5592 = vrot.lane.b32.xlu0 %v5590, 32
    %v5593 = vpop.permute.xlu0 %5592
    %v5595 = vadd.f32 %v5585, %v5593
    %v5596 = vtanh.pop %v5595
    %5598 = vrot.lane.b32.xlu0 %v5596, 64
    %v5599 = vpop.permute.xlu0 %5598
    %v5601 = vmul.f32 %v5584, %v5599
    %v5602 = vpack.c.bf16 %v5601, %v5601
    %5604 = vrot.lane.b32.xlu0 %v5602, 32
    %v5605 = vpop.permute.xlu0 %5604
    %v5607 = vsel %vm2257, %v5605, 0
    %5609 = vmatprep.subr.bf16.mxu0 0
    %5610 = vmatpush1.bf16.msra.mxu0 %v2365
    %5611 = vmatprep.subr.bf16.mxu0 0
    %5612 = vmatpush1.bf16.msra.mxu0 %v2366
    %5613 = vmatprep.subr.bf16.mxu0 0
    %5614 = vmatpush1.bf16.msra.mxu0 0
    %5615 = vmatprep.subr.bf16.mxu0 0
    %5616 = vmatpush1.bf16.msra.mxu0 0
    %5617 = vmatprep.subr.bf16.mxu0 0
    %5618 = vmatpush1.bf16.msra.mxu0 0
    %5619 = vmatprep.subr.bf16.mxu0 0
    %5620 = vmatpush1.bf16.msra.mxu0 0
    %5621 = vmatprep.subr.bf16.mxu0 0
    %5622 = vmatpush1.bf16.msra.mxu0 0
    %5623 = vmatprep.subr.bf16.mxu0 0
    %5624 = vmatpush1.bf16.msra.mxu0 0
    %5625 = vmatprep.subr.bf16.mxu0 0
    %5626 = vmatpush1.bf16.msra.mxu0 0
    %5627 = vmatprep.subr.bf16.mxu0 0
    %5628 = vmatpush1.bf16.msra.mxu0 0
    %5629 = vmatprep.subr.bf16.mxu0 0
    %5630 = vmatpush1.bf16.msra.mxu0 0
    %5631 = vmatprep.subr.bf16.mxu0 0
    %5632 = vmatpush1.bf16.msra.mxu0 0
    %5633 = vmatprep.subr.bf16.mxu0 0
    %5634 = vmatpush1.bf16.msra.mxu0 0
    %5635 = vmatprep.subr.bf16.mxu0 0
    %5636 = vmatpush1.bf16.msra.mxu0 0
    %5637 = vmatprep.subr.bf16.mxu0 0
    %5638 = vmatpush1.bf16.msra.mxu0 0
    %5639 = vmatprep.subr.bf16.mxu0 0
    %5640 = vmatpush1.bf16.msra.mxu0 0
    %5641 = vmatprep.mubr.bf16.mxu0 0
    %5642 = vmatmul.mubr.bf16.gmra.mrb[0].mxu0 %v5607
    %v5643 = vpop.f32.mrb[0].mxu0
    %v5644 = vadd.f32 0.0, %v5643
    %v5645 = vpop.f32.mrb[0].mxu0
    %v5646 = vpop.f32.mrb[0].mxu0
    %v5647 = vpop.f32.mrb[0].mxu0
    %5648 = vdwg.mxu0
    %v5649 = vadd.f32 %v2335, %v5644
    %v5650 = vmul.f32 %v5649, %v2355
    %v5651 = vtanh.pop %v5650
    %v5652 = vmul.f32 %v5651, %v2355
    %v5653 = vadd.f32 %v5652, %v2356
    %v5654 = vmul.f32 %v5653, %v5595
    %5656 = vrot.lane.b32.xlu0 %v5653, 64
    %v5657 = vpop.permute.xlu0 %5656
    %v5659 = vmul.f32 %v5653, %v5657
    %5661 = vrot.lane.b32.xlu0 %v5659, 32
    %v5662 = vpop.permute.xlu0 %5661
    %v5664 = vadd.f32 %v5654, %v5662
    %v5665 = vtanh.pop %v5664
    %5667 = vrot.lane.b32.xlu0 %v5665, 64
    %v5668 = vpop.permute.xlu0 %5667
    %v5670 = vmul.f32 %v5653, %v5668
    %v5671 = vpack.c.bf16 %v5670, %v5670
    %5673 = vrot.lane.b32.xlu0 %v5671, 32
    %v5674 = vpop.permute.xlu0 %5673
    %v5676 = vsel %vm2257, %v5674, 0
    %5678 = vmatprep.subr.bf16.mxu0 0
    %5679 = vmatpush1.bf16.msra.mxu0 %v2365
    %5680 = vmatprep.subr.bf16.mxu0 0
    %5681 = vmatpush1.bf16.msra.mxu0 %v2366
    %5682 = vmatprep.subr.bf16.mxu0 0
    %5683 = vmatpush1.bf16.msra.mxu0 0
    %5684 = vmatprep.subr.bf16.mxu0 0
    %5685 = vmatpush1.bf16.msra.mxu0 0
    %5686 = vmatprep.subr.bf16.mxu0 0
    %5687 = vmatpush1.bf16.msra.mxu0 0
    %5688 = vmatprep.subr.bf16.mxu0 0
    %5689 = vmatpush1.bf16.msra.mxu0 0
    %5690 = vmatprep.subr.bf16.mxu0 0
    %5691 = vmatpush1.bf16.msra.mxu0 0
    %5692 = vmatprep.subr.bf16.mxu0 0
    %5693 = vmatpush1.bf16.msra.mxu0 0
    %5694 = vmatprep.subr.bf16.mxu0 0
    %5695 = vmatpush1.bf16.msra.mxu0 0
    %5696 = vmatprep.subr.bf16.mxu0 0
    %5697 = vmatpush1.bf16.msra.mxu0 0
    %5698 = vmatprep.subr.bf16.mxu0 0
    %5699 = vmatpush1.bf16.msra.mxu0 0
    %5700 = vmatprep.subr.bf16.mxu0 0
    %5701 = vmatpush1.bf16.msra.mxu0 0
    %5702 = vmatprep.subr.bf16.mxu0 0
    %5703 = vmatpush1.bf16.msra.mxu0 0
    %5704 = vmatprep.subr.bf16.mxu0 0
    %5705 = vmatpush1.bf16.msra.mxu0 0
    %5706 = vmatprep.subr.bf16.mxu0 0
    %5707 = vmatpush1.bf16.msra.mxu0 0
    %5708 = vmatprep.subr.bf16.mxu0 0
    %5709 = vmatpush1.bf16.msra.mxu0 0
    %5710 = vmatprep.mubr.bf16.mxu0 0
    %5711 = vmatmul.mubr.bf16.gmra.mrb[0].mxu0 %v5676
    %v5712 = vpop.f32.mrb[0].mxu0
    %v5713 = vadd.f32 0.0, %v5712
    %v5714 = vpop.f32.mrb[0].mxu0
    %v5715 = vpop.f32.mrb[0].mxu0
    %v5716 = vpop.f32.mrb[0].mxu0
    %5717 = vdwg.mxu0
    %v5718 = vadd.f32 %v2337, %v5713
    %v5719 = vmul.f32 %v5718, %v2355
    %v5720 = vtanh.pop %v5719
    %v5721 = vmul.f32 %v5720, %v2355
    %v5722 = vadd.f32 %v5721, %v2356
    %v5723 = vmul.f32 %v5722, %v5664
    %5725 = vrot.lane.b32.xlu0 %v5722, 64
    %v5726 = vpop.permute.xlu0 %5725
    %v5728 = vmul.f32 %v5722, %v5726
    %5730 = vrot.lane.b32.xlu0 %v5728, 32
    %v5731 = vpop.permute.xlu0 %5730
    %v5733 = vadd.f32 %v5723, %v5731
    %v5734 = vtanh.pop %v5733
    %5736 = vrot.lane.b32.xlu0 %v5734, 64
    %v5737 = vpop.permute.xlu0 %5736
    %v5739 = vmul.f32 %v5722, %v5737
    %v5740 = vld [vmem:[%s12] sm:$0xff]
    %v5741 = vld [vmem:[%s12 + $0x8] sm:$0xff]
    %v5742 = vld [vmem:[%s12 + $0x10] sm:$0xff]
    %v5743 = vld [vmem:[%s12 + $0x18] sm:$0xff]
    %v5744 = vld [vmem:[%s13] sm:$0x1]
    %v5746 = vlaneseq
    %v5747 = vshrl.u32 %v5746, 7
    %v5748 = vsub.s32 0, %v5747
    %v5749 = vrot.slane %v5744, %v5748
    %v5753 = vunpack.c.l.s4 1983009808
    %v5754 = vunpack.c.0.s8 %v5753
    %v5755 = vlaneseq
    %v5756 = vshrl.u32 %v5755, 7
    %v5757 = vsub.s32 %v5754, %v5756
    %v5758 = vrot.slane %v5739, %v5757
    %5759 = vrot.lane.b32.xlu0 %v5758, 32
    %v5760 = vpop.permute.xlu0 %5759
    %v5761 = vsel %vm2257, %v5760, 0
    %5763 = vmatprep.subr.mxu0 0.0
    %5764 = vmatpush1.msra.mxu0 %v5740
    %5765 = vmatprep.subr.mxu0 0.0
    %5766 = vmatpush1.msra.mxu0 %v5741
    %5767 = vmatprep.subr.mxu0 0.0
    %5768 = vmatpush1.msra.mxu0 %v5742
    %5769 = vmatprep.subr.mxu0 0.0
    %5770 = vmatpush1.msra.mxu0 %v5743
    %5771 = vmatprep.subr.mxu0 0.0
    %5772 = vmatpush1.msra.mxu0 0.0
    %5773 = vmatprep.subr.mxu0 0.0
    %5774 = vmatpush1.msra.mxu0 0.0
    %5775 = vmatprep.subr.mxu0 0.0
    %5776 = vmatpush1.msra.mxu0 0.0
    %5777 = vmatprep.subr.mxu0 0.0
    %5778 = vmatpush1.msra.mxu0 0.0
    %5779 = vmatprep.subr.mxu0 0.0
    %5780 = vmatpush1.msra.mxu0 0.0
    %5781 = vmatprep.subr.mxu0 0.0
    %5782 = vmatpush1.msra.mxu0 0.0
    %5783 = vmatprep.subr.mxu0 0.0
    %5784 = vmatpush1.msra.mxu0 0.0
    %5785 = vmatprep.subr.mxu0 0.0
    %5786 = vmatpush1.msra.mxu0 0.0
    %5787 = vmatprep.subr.mxu0 0.0
    %5788 = vmatpush1.msra.mxu0 0.0
    %5789 = vmatprep.subr.mxu0 0.0
    %5790 = vmatpush1.msra.mxu0 0.0
    %5791 = vmatprep.subr.mxu0 0.0
    %5792 = vmatpush1.msra.mxu0 0.0
    %5793 = vmatprep.subr.mxu0 0.0
    %5794 = vmatpush1.msra.mxu0 0.0
    %5795 = vmatprep.subr.mxu0 0.0
    %5796 = vmatpush1.msra.mxu0 0.0
    %5797 = vmatprep.subr.mxu0 0.0
    %5798 = vmatpush1.msra.mxu0 0.0
    %5799 = vmatprep.subr.mxu0 0.0
    %5800 = vmatpush1.msra.mxu0 0.0
    %5801 = vmatprep.subr.mxu0 0.0
    %5802 = vmatpush1.msra.mxu0 0.0
    %5803 = vmatprep.subr.mxu0 0.0
    %5804 = vmatpush1.msra.mxu0 0.0
    %5805 = vmatprep.subr.mxu0 0.0
    %5806 = vmatpush1.msra.mxu0 0.0
    %5807 = vmatprep.subr.mxu0 0.0
    %5808 = vmatpush1.msra.mxu0 0.0
    %5809 = vmatprep.subr.mxu0 0.0
    %5810 = vmatpush1.msra.mxu0 0.0
    %5811 = vmatprep.subr.mxu0 0.0
    %5812 = vmatpush1.msra.mxu0 0.0
    %5813 = vmatprep.subr.mxu0 0.0
    %5814 = vmatpush1.msra.mxu0 0.0
    %5815 = vmatprep.subr.mxu0 0.0
    %5816 = vmatpush1.msra.mxu0 0.0
    %5817 = vmatprep.subr.mxu0 0.0
    %5818 = vmatpush1.msra.mxu0 0.0
    %5819 = vmatprep.subr.mxu0 0.0
    %5820 = vmatpush1.msra.mxu0 0.0
    %5821 = vmatprep.subr.mxu0 0.0
    %5822 = vmatpush1.msra.mxu0 0.0
    %5823 = vmatprep.subr.mxu0 0.0
    %5824 = vmatpush1.msra.mxu0 0.0
    %5825 = vmatprep.subr.mxu0 0.0
    %5826 = vmatpush1.msra.mxu0 0.0
    %5827 = vmatprep.mubr.f32.mxu0 0.0
    %5828 = vmatmul.mubr.f32.gmra.mrb[0].mxu0 %v5761
    %v5829 = vpop.f32.mrb[0].mxu0
    %v5830 = vadd.f32 %v5749, %v5829
    %v5831 = vpop.f32.mrb[0].mxu0
    %5832 = vdwg.mxu0
    %v5833 = vtanh.pop %v5830
    %5835 = vrot.lane.b32.xlu0 %v5190, 96
    %v5836 = vpop.permute.xlu0 %5835
    %v5838 = vmul.f32 %v5833, %v5836
    %v5839 = vld [vmem:[%s14] sm:$0xff]
    %v5840 = vld [vmem:[%s14 + $0x8] sm:$0xff]
    %v5841 = vld [vmem:[%s14 + $0x10] sm:$0xff]
    %v5842 = vld [vmem:[%s14 + $0x18] sm:$0xff]
    %v5843 = vld [vmem:[%s15] sm:$0x1]
    %v5845 = vlaneseq
    %v5846 = vshrl.u32 %v5845, 7
    %v5847 = vsub.s32 0, %v5846
    %v5848 = vrot.slane %v5843, %v5847
    %v5851 = vsel %vm2257, %v5838, 0
    %5853 = vmatprep.subr.mxu0 0.0
    %5854 = vmatpush1.msra.mxu0 %v5839
    %5855 = vmatprep.subr.mxu0 0.0
    %5856 = vmatpush1.msra.mxu0 %v5840
    %5857 = vmatprep.subr.mxu0 0.0
    %5858 = vmatpush1.msra.mxu0 %v5841
    %5859 = vmatprep.subr.mxu0 0.0
    %5860 = vmatpush1.msra.mxu0 %v5842
    %5861 = vmatprep.subr.mxu0 0.0
    %5862 = vmatpush1.msra.mxu0 0.0
    %5863 = vmatprep.subr.mxu0 0.0
    %5864 = vmatpush1.msra.mxu0 0.0
    %5865 = vmatprep.subr.mxu0 0.0
    %5866 = vmatpush1.msra.mxu0 0.0
    %5867 = vmatprep.subr.mxu0 0.0
    %5868 = vmatpush1.msra.mxu0 0.0
    %5869 = vmatprep.subr.mxu0 0.0
    %5870 = vmatpush1.msra.mxu0 0.0
    %5871 = vmatprep.subr.mxu0 0.0
    %5872 = vmatpush1.msra.mxu0 0.0
    %5873 = vmatprep.subr.mxu0 0.0
    %5874 = vmatpush1.msra.mxu0 0.0
    %5875 = vmatprep.subr.mxu0 0.0
    %5876 = vmatpush1.msra.mxu0 0.0
    %5877 = vmatprep.subr.mxu0 0.0
    %5878 = vmatpush1.msra.mxu0 0.0
    %5879 = vmatprep.subr.mxu0 0.0
    %5880 = vmatpush1.msra.mxu0 0.0
    %5881 = vmatprep.subr.mxu0 0.0
    %5882 = vmatpush1.msra.mxu0 0.0
    %5883 = vmatprep.subr.mxu0 0.0
    %5884 = vmatpush1.msra.mxu0 0.0
    %5885 = vmatprep.subr.mxu0 0.0
    %5886 = vmatpush1.msra.mxu0 0.0
    %5887 = vmatprep.subr.mxu0 0.0
    %5888 = vmatpush1.msra.mxu0 0.0
    %5889 = vmatprep.subr.mxu0 0.0
    %5890 = vmatpush1.msra.mxu0 0.0
    %5891 = vmatprep.subr.mxu0 0.0
    %5892 = vmatpush1.msra.mxu0 0.0
    %5893 = vmatprep.subr.mxu0 0.0
    %5894 = vmatpush1.msra.mxu0 0.0
    %5895 = vmatprep.subr.mxu0 0.0
    %5896 = vmatpush1.msra.mxu0 0.0
    %5897 = vmatprep.subr.mxu0 0.0
    %5898 = vmatpush1.msra.mxu0 0.0
    %5899 = vmatprep.subr.mxu0 0.0
    %5900 = vmatpush1.msra.mxu0 0.0
    %5901 = vmatprep.subr.mxu0 0.0
    %5902 = vmatpush1.msra.mxu0 0.0
    %5903 = vmatprep.subr.mxu0 0.0
    %5904 = vmatpush1.msra.mxu0 0.0
    %5905 = vmatprep.subr.mxu0 0.0
    %5906 = vmatpush1.msra.mxu0 0.0
    %5907 = vmatprep.subr.mxu0 0.0
    %5908 = vmatpush1.msra.mxu0 0.0
    %5909 = vmatprep.subr.mxu0 0.0
    %5910 = vmatpush1.msra.mxu0 0.0
    %5911 = vmatprep.subr.mxu0 0.0
    %5912 = vmatpush1.msra.mxu0 0.0
    %5913 = vmatprep.subr.mxu0 0.0
    %5914 = vmatpush1.msra.mxu0 0.0
    %5915 = vmatprep.subr.mxu0 0.0
    %5916 = vmatpush1.msra.mxu0 0.0
    %5917 = vmatprep.mubr.f32.mxu0 0.0
    %5918 = vmatmul.mubr.f32.gmra.mrb[0].mxu0 %v5851
    %v5919 = vpop.f32.mrb[0].mxu0
    %v5920 = vadd.f32 %v5848, %v5919
    %v5921 = vpop.f32.mrb[0].mxu0
    %5922 = vdwg.mxu0
    %vm5923 = vcmask 74752
    %v5924 = vsel %vm5923, %v5920, -inf
    %5925 = vmax.xlane.f32.xlu0 %v5924
    %v5926 = vpop.xlane.xlu0 %5925
    %v5927 = vsub.f32 %v5920, %v5926
    %v5928 = vmul.f32 %v5927, 1.442695
    %v5929 = vpow.pop %v5928
    %v5930 = vsel %vm5923, %v5929, 0.0
    %5931 = vadd.xlane.f32.xlu0 %v5930
    %v5932 = vpop.xlane.xlu0 %5931
    %v5933 = vlog2.pop %v5932
    %v5934 = vmul.f32 %v5933, 0.6931472
    %v5935 = vsub.f32 %v5927, %v5934
    %5936 = vst.msk [vmem:[#allocation6] sm:$0x3] %vm5923, %v5935
    // Predicated region
    $region159: #{net_forward.1} parent=1 // pred_check
      _
    $region160: #{net_forward.1} parent=1 // pred_check_branch
      %5938 = sbr.rel (0) target = $region162
    $region161: #{net_forward.1} parent=1 // pred_region
      %s5940 = ssub.s32 32, 32
      %5941 = vsyncadd [#allocation7], %s5940
      %s5943 = sshll.u32 [#allocation6], 4
      %s5944 = int_to_ptr.vmem [resolvable:$true] %s5943
      %5946 = dma.vmem_to_hbm [thread:$0]  %s5944, 32, %s16, [#allocation7]
    $region162: #{net_forward.1} parent=1 // pred_fallthru
      _
    // Predicated region
    $region163: #{net_forward.1} parent=1 // pred_check
      _
    $region164: #{net_forward.1} parent=1 // pred_check_branch
      %5948 = sbr.rel (0) target = $region166
    $region165: #{net_forward.1} parent=1 // pred_region
      %5949 = dma.done [#allocation7], 32
    $region166: #{net_forward.1} parent=1 // pred_fallthru
      _
    %5950 = vsyncpa [#allocation7], 1
  %5951 = vsyncmov [#allocation5]
  %s5952 = vpop.sfrf %5951
  %p5953 = scmp.eq.s32.totalorder %s5952, 0
  %p5954 = pneg %p5953
  %5956 = shalt.err (%p5954)
  %s5957 = scalar_lea.sflag [#allocation5], 1
  %5958 = vsyncmov %s5957
  %s5959 = vpop.sfrf %5958
  %p5960 = scmp.eq.s32.totalorder %s5959, 0
  %p5961 = pneg %p5960
  %5963 = shalt.err (%p5961)
  %s5964 = scalar_lea.sflag [#allocation5], 2
  %5965 = vsyncmov %s5964
  %s5966 = vpop.sfrf %5965
  %p5967 = scmp.eq.s32.totalorder %s5966, 0
  %p5968 = pneg %p5967
  %5970 = shalt.err (%p5968)

</llo_original>
